<compile_context>
chip_gen: v7x
topology: tpu7x:2x2x1
jax: 0.10.0
libtpu: 0.0.40
codegen_flags: <defaults>
</compile_context>

<pallas_src>
import jax
import jax.numpy as jnp
from jax.experimental import pallas as pl
from jax.experimental.pallas import tpu as pltpu


# ------------------------------ fused kernel -------------------------------

def _pool2x2(t, h, w, c):
    """2x2 max pool, stride 2, on an (h, w, c) value.

    Uses only minor-dim-preserving reshapes + static leading/sublane indexing.
    """
    t = t.reshape(h // 2, 2, w, c)
    t = jnp.maximum(t[:, 0], t[:, 1])            # (h/2, w, c)
    t = t.reshape(h // 2, w // 2, 2, c)
    t = jnp.maximum(t[:, :, 0], t[:, :, 1])      # (h/2, w/2, c)
    return t


def cnn_fused_kernel(x_ref, w1_ref, b1_ref, w2_ref, b2_ref,
                     fw1_ref, fb1_ref, fw2_ref, fb2_ref, fw3_ref, fb3_ref,
                     o_ref):
    x = x_ref[0]                                 # (30, 30, 1) padded, channels-last
    w1 = w1_ref[...]                             # (9, 6), rows ordered (dy, dx)

    # conv1: 3x3 (padding already applied), 1 -> 6 channels.  VPU tap-accumulate
    # instead of a degenerate K=9 / N=6 MXU matmul.
    acc1 = jnp.zeros((28, 28, 6), jnp.float32)
    for dy in range(3):
        for dx in range(3):
            t = dy * 3 + dx
            acc1 = acc1 + x[dy:dy + 28, dx:dx + 28, :] * w1[t:t + 1, :]
    y1 = jnp.maximum(acc1 + b1_ref[...], 0.0)    # (28, 28, 6)

    h1 = _pool2x2(y1, 28, 28, 6)                 # (14, 14, 6)

    # conv2: 5x5 valid, 6 -> 16.  im2col built entirely in VMEM, one MXU matmul.
    cols = [h1[dy:dy + 10, dx:dx + 10, :] for dy in range(5) for dx in range(5)]
    patches = jnp.concatenate(cols, axis=-1)     # (10, 10, 150), order (dy, dx, ci)
    a2 = patches.reshape(100, 150)
    y2 = jnp.dot(a2, w2_ref[...], preferred_element_type=jnp.float32)
    y2 = jnp.maximum(y2 + b2_ref[...], 0.0)      # (100, 16)
    y2 = y2.reshape(10, 10, 16)

    h2 = _pool2x2(y2, 10, 10, 16)                # (5, 5, 16)

    # Flatten in (y, x, c) order; fc1 weights were pre-permuted at pack time to
    # match PyTorch's NCHW .view() ordering, so no in-kernel transpose is needed.
    h2r = h2.reshape(25, 16)
    flat = jnp.concatenate([h2r[p:p + 1, :] for p in range(25)], axis=1)  # (1, 400)

    # fc: 400 -> 120 -> 84 -> 10 (nn.Sequential(Linear, Linear, Linear): no ReLU)
    z = jnp.dot(flat, fw1_ref[...], preferred_element_type=jnp.float32) + fb1_ref[...]
    z = jnp.dot(z, fw2_ref[...], preferred_element_type=jnp.float32) + fb2_ref[...]
    z = jnp.dot(z, fw3_ref[...], preferred_element_type=jnp.float32) + fb3_ref[...]
    o_ref[0] = z                                 # (1, 10)


# --------------------------------- wrapper ---------------------------------

def _resident(arr):
    """Full-array BlockSpec with a constant index_map: fetched once, stays in VMEM."""
    nd = arr.ndim
    return pl.BlockSpec(arr.shape, lambda i, _nd=nd: (0,) * _nd)


def cnn_forward(x_nchw, p):
    n = x_nchw.shape[0]
    # Input-only layout prep: NCHW (N,1,28,28) -> padded channels-last (N,30,30,1).
    x = jnp.pad(x_nchw[:, 0, :, :], ((0, 0), (1, 1), (1, 1)))[..., None]

    weights = (p["cw1"], p["cb1"], p["cw2"], p["cb2"],
               p["fw1"], p["fb1"], p["fw2"], p["fb2"], p["fw3"], p["fb3"])

    out = pl.pallas_call(
        cnn_fused_kernel,
        out_shape=jax.ShapeDtypeStruct((n, 1, 10), jnp.float32),
        grid_spec=pltpu.PrefetchScalarGridSpec(
            num_scalar_prefetch=0,
            grid=(n,),
            in_specs=[pl.BlockSpec((1, 30, 30, 1), lambda i: (i, 0, 0, 0))]
                     + [_resident(w) for w in weights],
            out_specs=pl.BlockSpec((1, 1, 10), lambda i: (i, 0, 0)),
        ),
        compiler_params=pltpu.CompilerParams(
            dimension_semantics=("parallel",)),
    )(x, *weights)
    return out.reshape(n, 10)


# ---------------------- params (torch layout) + packing ---------------------

def init_torch_params(key):
    ks = jax.random.split(key, 10)

    def u(k, shape, fan_in):
        b = 1.0 / jnp.sqrt(jnp.float32(fan_in))
        return jax.random.uniform(k, shape, jnp.float32, -b, b)

    return {
        "cw1": u(ks[0], (6, 1, 3, 3), 9),    "cb1": u(ks[1], (6,), 9),
        "cw2": u(ks[2], (16, 6, 5, 5), 150), "cb2": u(ks[3], (16,), 150),
        "fw1": u(ks[4], (120, 400), 400),    "fb1": u(ks[5], (120,), 400),
        "fw2": u(ks[6], (84, 120), 120),     "fb2": u(ks[7], (84,), 120),
        "fw3": u(ks[8], (10, 84), 84),       "fb3": u(ks[9], (10,), 84),
    }


def pack_params(tp):
    # Conv weights: (out, in, kh, kw) -> (kh*kw*in, out), rows ordered (dy, dx, ci)
    cw1 = jnp.transpose(tp["cw1"], (2, 3, 1, 0)).reshape(9, 6)
    cw2 = jnp.transpose(tp["cw2"], (2, 3, 1, 0)).reshape(150, 16)
    # fc1: torch flattens (c, y, x); the kernel flattens (y, x, c) -> permute rows.
    fw1 = tp["fw1"].T.reshape(16, 25, 120).transpose(1, 0, 2).reshape(400, 120)
    return {
        "cw1": cw1, "cb1": tp["cb1"].reshape(1, 6),
        "cw2": cw2, "cb2": tp["cb2"].reshape(1, 16),
        "fw1": fw1, "fb1": tp["fb1"].reshape(1, 120),
        "fw2": tp["fw2"].T, "fb2": tp["fb2"].reshape(1, 84),
        "fw3": tp["fw3"].T, "fb3": tp["fb3"].reshape(1, 10),
    }


def torch_reference(x, tp):
    """Pure-JAX mirror of the PyTorch module (NCHW / OIHW), for validation."""
    y = jax.lax.conv_general_dilated(x, tp["cw1"], (1, 1), ((1, 1), (1, 1)),
                                     dimension_numbers=("NCHW", "OIHW", "NCHW"))
    y = jnp.maximum(y + tp["cb1"].reshape(1, 6, 1, 1), 0.0)
    y = jax.lax.reduce_window(y, -jnp.inf, jax.lax.max,
                              (1, 1, 2, 2), (1, 1, 2, 2), "VALID")
    y = jax.lax.conv_general_dilated(y, tp["cw2"], (1, 1), "VALID",
                                     dimension_numbers=("NCHW", "OIHW", "NCHW"))
    y = jnp.maximum(y + tp["cb2"].reshape(1, 16, 1, 1), 0.0)
    y = jax.lax.reduce_window(y, -jnp.inf, jax.lax.max,
                              (1, 1, 2, 2), (1, 1, 2, 2), "VALID")
    y = y.reshape(y.shape[0], -1)
    y = y @ tp["fw1"].T + tp["fb1"]
    y = y @ tp["fw2"].T + tp["fb2"]
    y = y @ tp["fw3"].T + tp["fb3"]
    return y


if __name__ == "__main__":
    key = jax.random.PRNGKey(0)
    k_x, k_p = jax.random.split(key)
    # Spatial size is fixed to 28x28 by the 16*5*5 flatten in the module.
    x = jax.random.normal(k_x, (2, 1, 28, 28), jnp.float32)
    tparams = init_torch_params(k_p)
    params = pack_params(tparams)

    out = jax.block_until_ready(jax.jit(cnn_forward)(x, params))
    assert out.shape == (2, 10) and out.dtype == jnp.float32

    ref = torch_reference(x, tparams)
    assert jnp.allclose(out, ref, atol=1e-4, rtol=1e-4), \
        float(jnp.max(jnp.abs(out - ref)))
    print("KERNEL_OK")
</pallas_src>

<mosaic_0001>
module attributes {stable_mosaic.version = 11 : i64} {
  func.func @cnn_fused_kernel(%arg0: i32, %arg1: memref<1x30x30x1xf32, #tpu.memory_space<vmem>>, %arg2: memref<9x6xf32, #tpu.memory_space<vmem>>, %arg3: memref<1x6xf32, #tpu.memory_space<vmem>>, %arg4: memref<150x16xf32, #tpu.memory_space<vmem>>, %arg5: memref<1x16xf32, #tpu.memory_space<vmem>>, %arg6: memref<400x120xf32, #tpu.memory_space<vmem>>, %arg7: memref<1x120xf32, #tpu.memory_space<vmem>>, %arg8: memref<120x84xf32, #tpu.memory_space<vmem>>, %arg9: memref<1x84xf32, #tpu.memory_space<vmem>>, %arg10: memref<84x10xf32, #tpu.memory_space<vmem>>, %arg11: memref<1x10xf32, #tpu.memory_space<vmem>>, %arg12: memref<1x1x10xf32, #tpu.memory_space<vmem>>) attributes {dimension_semantics = [#tpu.dimension_semantics<parallel>], iteration_bounds = array<i64: 2>, scalar_prefetch = 0 : i64, scratch_operands = 0 : i64, tpu.core_type = #tpu.core_type<tc>, window_params = [{transform_indices = @transform_0, window_bounds = array<i64: 1, 30, 30, 1>}, {pipeline_mode = #tpu.pipeline_mode<synchronous>, transform_indices = @transform_1, window_bounds = array<i64: 9, 6>}, {pipeline_mode = #tpu.pipeline_mode<synchronous>, transform_indices = @transform_2, window_bounds = array<i64: 1, 6>}, {pipeline_mode = #tpu.pipeline_mode<synchronous>, transform_indices = @transform_3, window_bounds = array<i64: 150, 16>}, {pipeline_mode = #tpu.pipeline_mode<synchronous>, transform_indices = @transform_4, window_bounds = array<i64: 1, 16>}, {pipeline_mode = #tpu.pipeline_mode<synchronous>, transform_indices = @transform_5, window_bounds = array<i64: 400, 120>}, {pipeline_mode = #tpu.pipeline_mode<synchronous>, transform_indices = @transform_6, window_bounds = array<i64: 1, 120>}, {pipeline_mode = #tpu.pipeline_mode<synchronous>, transform_indices = @transform_7, window_bounds = array<i64: 120, 84>}, {pipeline_mode = #tpu.pipeline_mode<synchronous>, transform_indices = @transform_8, window_bounds = array<i64: 1, 84>}, {pipeline_mode = #tpu.pipeline_mode<synchronous>, transform_indices = @transform_9, window_bounds = array<i64: 84, 10>}, {pipeline_mode = #tpu.pipeline_mode<synchronous>, transform_indices = @transform_10, window_bounds = array<i64: 1, 10>}, {transform_indices = @transform_11, window_bounds = array<i64: 1, 1, 10>}]} {
    %c0 = arith.constant 0 : index
    %c0_0 = arith.constant 0 : index
    %c0_1 = arith.constant 0 : index
    %c0_2 = arith.constant 0 : index
    %0 = vector.load %arg1[%c0, %c0_0, %c0_1, %c0_2] : memref<1x30x30x1xf32, #tpu.memory_space<vmem>>, vector<1x30x30x1xf32>
    %1 = vector.shape_cast %0 : vector<1x30x30x1xf32> to vector<30x30x1xf32>
    %c0_3 = arith.constant 0 : index
    %c0_4 = arith.constant 0 : index
    %2 = vector.load %arg2[%c0_3, %c0_4] : memref<9x6xf32, #tpu.memory_space<vmem>>, vector<9x6xf32>
    %cst = arith.constant 0.000000e+00 : f32
    %3 = vector.broadcast %cst : f32 to vector<28x28x6xf32>
    %4 = vector.extract_strided_slice %1 {offsets = [0, 0, 0], sizes = [28, 28, 1], strides = [1, 1, 1]} : vector<30x30x1xf32> to vector<28x28x1xf32>
    %5 = vector.extract_strided_slice %2 {offsets = [0, 0], sizes = [1, 6], strides = [1, 1]} : vector<9x6xf32> to vector<1x6xf32>
    %6 = vector.shape_cast %5 : vector<1x6xf32> to vector<1x1x6xf32>
    %7 = vector.broadcast %4 : vector<28x28x1xf32> to vector<28x28x6xf32>
    %8 = vector.broadcast %6 : vector<1x1x6xf32> to vector<28x28x6xf32>
    %9 = arith.mulf %7, %8 : vector<28x28x6xf32>
    %10 = arith.addf %3, %9 : vector<28x28x6xf32>
    %11 = vector.extract_strided_slice %1 {offsets = [0, 1, 0], sizes = [28, 28, 1], strides = [1, 1, 1]} : vector<30x30x1xf32> to vector<28x28x1xf32>
    %12 = vector.extract_strided_slice %2 {offsets = [1, 0], sizes = [1, 6], strides = [1, 1]} : vector<9x6xf32> to vector<1x6xf32>
    %13 = vector.shape_cast %12 : vector<1x6xf32> to vector<1x1x6xf32>
    %14 = vector.broadcast %11 : vector<28x28x1xf32> to vector<28x28x6xf32>
    %15 = vector.broadcast %13 : vector<1x1x6xf32> to vector<28x28x6xf32>
    %16 = arith.mulf %14, %15 : vector<28x28x6xf32>
    %17 = arith.addf %10, %16 : vector<28x28x6xf32>
    %18 = vector.extract_strided_slice %1 {offsets = [0, 2, 0], sizes = [28, 28, 1], strides = [1, 1, 1]} : vector<30x30x1xf32> to vector<28x28x1xf32>
    %19 = vector.extract_strided_slice %2 {offsets = [2, 0], sizes = [1, 6], strides = [1, 1]} : vector<9x6xf32> to vector<1x6xf32>
    %20 = vector.shape_cast %19 : vector<1x6xf32> to vector<1x1x6xf32>
    %21 = vector.broadcast %18 : vector<28x28x1xf32> to vector<28x28x6xf32>
    %22 = vector.broadcast %20 : vector<1x1x6xf32> to vector<28x28x6xf32>
    %23 = arith.mulf %21, %22 : vector<28x28x6xf32>
    %24 = arith.addf %17, %23 : vector<28x28x6xf32>
    %25 = vector.extract_strided_slice %1 {offsets = [1, 0, 0], sizes = [28, 28, 1], strides = [1, 1, 1]} : vector<30x30x1xf32> to vector<28x28x1xf32>
    %26 = vector.extract_strided_slice %2 {offsets = [3, 0], sizes = [1, 6], strides = [1, 1]} : vector<9x6xf32> to vector<1x6xf32>
    %27 = vector.shape_cast %26 : vector<1x6xf32> to vector<1x1x6xf32>
    %28 = vector.broadcast %25 : vector<28x28x1xf32> to vector<28x28x6xf32>
    %29 = vector.broadcast %27 : vector<1x1x6xf32> to vector<28x28x6xf32>
    %30 = arith.mulf %28, %29 : vector<28x28x6xf32>
    %31 = arith.addf %24, %30 : vector<28x28x6xf32>
    %32 = vector.extract_strided_slice %1 {offsets = [1, 1, 0], sizes = [28, 28, 1], strides = [1, 1, 1]} : vector<30x30x1xf32> to vector<28x28x1xf32>
    %33 = vector.extract_strided_slice %2 {offsets = [4, 0], sizes = [1, 6], strides = [1, 1]} : vector<9x6xf32> to vector<1x6xf32>
    %34 = vector.shape_cast %33 : vector<1x6xf32> to vector<1x1x6xf32>
    %35 = vector.broadcast %32 : vector<28x28x1xf32> to vector<28x28x6xf32>
    %36 = vector.broadcast %34 : vector<1x1x6xf32> to vector<28x28x6xf32>
    %37 = arith.mulf %35, %36 : vector<28x28x6xf32>
    %38 = arith.addf %31, %37 : vector<28x28x6xf32>
    %39 = vector.extract_strided_slice %1 {offsets = [1, 2, 0], sizes = [28, 28, 1], strides = [1, 1, 1]} : vector<30x30x1xf32> to vector<28x28x1xf32>
    %40 = vector.extract_strided_slice %2 {offsets = [5, 0], sizes = [1, 6], strides = [1, 1]} : vector<9x6xf32> to vector<1x6xf32>
    %41 = vector.shape_cast %40 : vector<1x6xf32> to vector<1x1x6xf32>
    %42 = vector.broadcast %39 : vector<28x28x1xf32> to vector<28x28x6xf32>
    %43 = vector.broadcast %41 : vector<1x1x6xf32> to vector<28x28x6xf32>
    %44 = arith.mulf %42, %43 : vector<28x28x6xf32>
    %45 = arith.addf %38, %44 : vector<28x28x6xf32>
    %46 = vector.extract_strided_slice %1 {offsets = [2, 0, 0], sizes = [28, 28, 1], strides = [1, 1, 1]} : vector<30x30x1xf32> to vector<28x28x1xf32>
    %47 = vector.extract_strided_slice %2 {offsets = [6, 0], sizes = [1, 6], strides = [1, 1]} : vector<9x6xf32> to vector<1x6xf32>
    %48 = vector.shape_cast %47 : vector<1x6xf32> to vector<1x1x6xf32>
    %49 = vector.broadcast %46 : vector<28x28x1xf32> to vector<28x28x6xf32>
    %50 = vector.broadcast %48 : vector<1x1x6xf32> to vector<28x28x6xf32>
    %51 = arith.mulf %49, %50 : vector<28x28x6xf32>
    %52 = arith.addf %45, %51 : vector<28x28x6xf32>
    %53 = vector.extract_strided_slice %1 {offsets = [2, 1, 0], sizes = [28, 28, 1], strides = [1, 1, 1]} : vector<30x30x1xf32> to vector<28x28x1xf32>
    %54 = vector.extract_strided_slice %2 {offsets = [7, 0], sizes = [1, 6], strides = [1, 1]} : vector<9x6xf32> to vector<1x6xf32>
    %55 = vector.shape_cast %54 : vector<1x6xf32> to vector<1x1x6xf32>
    %56 = vector.broadcast %53 : vector<28x28x1xf32> to vector<28x28x6xf32>
    %57 = vector.broadcast %55 : vector<1x1x6xf32> to vector<28x28x6xf32>
    %58 = arith.mulf %56, %57 : vector<28x28x6xf32>
    %59 = arith.addf %52, %58 : vector<28x28x6xf32>
    %60 = vector.extract_strided_slice %1 {offsets = [2, 2, 0], sizes = [28, 28, 1], strides = [1, 1, 1]} : vector<30x30x1xf32> to vector<28x28x1xf32>
    %61 = vector.extract_strided_slice %2 {offsets = [8, 0], sizes = [1, 6], strides = [1, 1]} : vector<9x6xf32> to vector<1x6xf32>
    %62 = vector.shape_cast %61 : vector<1x6xf32> to vector<1x1x6xf32>
    %63 = vector.broadcast %60 : vector<28x28x1xf32> to vector<28x28x6xf32>
    %64 = vector.broadcast %62 : vector<1x1x6xf32> to vector<28x28x6xf32>
    %65 = arith.mulf %63, %64 : vector<28x28x6xf32>
    %66 = arith.addf %59, %65 : vector<28x28x6xf32>
    %c0_5 = arith.constant 0 : index
    %c0_6 = arith.constant 0 : index
    %67 = vector.load %arg3[%c0_5, %c0_6] : memref<1x6xf32, #tpu.memory_space<vmem>>, vector<1x6xf32>
    %68 = vector.shape_cast %67 : vector<1x6xf32> to vector<1x1x6xf32>
    %69 = vector.broadcast %68 : vector<1x1x6xf32> to vector<28x28x6xf32>
    %70 = arith.addf %66, %69 : vector<28x28x6xf32>
    %cst_7 = arith.constant 0.000000e+00 : f32
    %71 = vector.broadcast %cst_7 : f32 to vector<28x28x6xf32>
    %72 = arith.maximumf %70, %71 : vector<28x28x6xf32>
    %73 = vector.shape_cast %72 : vector<28x28x6xf32> to vector<14x2x28x6xf32>
    %74 = vector.extract_strided_slice %73 {offsets = [0, 0, 0, 0], sizes = [14, 1, 28, 6], strides = [1, 1, 1, 1]} : vector<14x2x28x6xf32> to vector<14x1x28x6xf32>
    %75 = vector.shape_cast %74 : vector<14x1x28x6xf32> to vector<14x28x6xf32>
    %76 = vector.extract_strided_slice %73 {offsets = [0, 1, 0, 0], sizes = [14, 1, 28, 6], strides = [1, 1, 1, 1]} : vector<14x2x28x6xf32> to vector<14x1x28x6xf32>
    %77 = vector.shape_cast %76 : vector<14x1x28x6xf32> to vector<14x28x6xf32>
    %78 = arith.maximumf %75, %77 : vector<14x28x6xf32>
    %79 = vector.shape_cast %78 : vector<14x28x6xf32> to vector<14x14x2x6xf32>
    %80 = vector.extract_strided_slice %79 {offsets = [0, 0, 0, 0], sizes = [14, 14, 1, 6], strides = [1, 1, 1, 1]} : vector<14x14x2x6xf32> to vector<14x14x1x6xf32>
    %81 = vector.shape_cast %80 : vector<14x14x1x6xf32> to vector<14x14x6xf32>
    %82 = vector.extract_strided_slice %79 {offsets = [0, 0, 1, 0], sizes = [14, 14, 1, 6], strides = [1, 1, 1, 1]} : vector<14x14x2x6xf32> to vector<14x14x1x6xf32>
    %83 = vector.shape_cast %82 : vector<14x14x1x6xf32> to vector<14x14x6xf32>
    %84 = arith.maximumf %81, %83 : vector<14x14x6xf32>
    %85 = vector.extract_strided_slice %84 {offsets = [0, 0, 0], sizes = [10, 10, 6], strides = [1, 1, 1]} : vector<14x14x6xf32> to vector<10x10x6xf32>
    %86 = vector.extract_strided_slice %84 {offsets = [0, 1, 0], sizes = [10, 10, 6], strides = [1, 1, 1]} : vector<14x14x6xf32> to vector<10x10x6xf32>
    %87 = vector.extract_strided_slice %84 {offsets = [0, 2, 0], sizes = [10, 10, 6], strides = [1, 1, 1]} : vector<14x14x6xf32> to vector<10x10x6xf32>
    %88 = vector.extract_strided_slice %84 {offsets = [0, 3, 0], sizes = [10, 10, 6], strides = [1, 1, 1]} : vector<14x14x6xf32> to vector<10x10x6xf32>
    %89 = vector.extract_strided_slice %84 {offsets = [0, 4, 0], sizes = [10, 10, 6], strides = [1, 1, 1]} : vector<14x14x6xf32> to vector<10x10x6xf32>
    %90 = vector.extract_strided_slice %84 {offsets = [1, 0, 0], sizes = [10, 10, 6], strides = [1, 1, 1]} : vector<14x14x6xf32> to vector<10x10x6xf32>
    %91 = vector.extract_strided_slice %84 {offsets = [1, 1, 0], sizes = [10, 10, 6], strides = [1, 1, 1]} : vector<14x14x6xf32> to vector<10x10x6xf32>
    %92 = vector.extract_strided_slice %84 {offsets = [1, 2, 0], sizes = [10, 10, 6], strides = [1, 1, 1]} : vector<14x14x6xf32> to vector<10x10x6xf32>
    %93 = vector.extract_strided_slice %84 {offsets = [1, 3, 0], sizes = [10, 10, 6], strides = [1, 1, 1]} : vector<14x14x6xf32> to vector<10x10x6xf32>
    %94 = vector.extract_strided_slice %84 {offsets = [1, 4, 0], sizes = [10, 10, 6], strides = [1, 1, 1]} : vector<14x14x6xf32> to vector<10x10x6xf32>
    %95 = vector.extract_strided_slice %84 {offsets = [2, 0, 0], sizes = [10, 10, 6], strides = [1, 1, 1]} : vector<14x14x6xf32> to vector<10x10x6xf32>
    %96 = vector.extract_strided_slice %84 {offsets = [2, 1, 0], sizes = [10, 10, 6], strides = [1, 1, 1]} : vector<14x14x6xf32> to vector<10x10x6xf32>
    %97 = vector.extract_strided_slice %84 {offsets = [2, 2, 0], sizes = [10, 10, 6], strides = [1, 1, 1]} : vector<14x14x6xf32> to vector<10x10x6xf32>
    %98 = vector.extract_strided_slice %84 {offsets = [2, 3, 0], sizes = [10, 10, 6], strides = [1, 1, 1]} : vector<14x14x6xf32> to vector<10x10x6xf32>
    %99 = vector.extract_strided_slice %84 {offsets = [2, 4, 0], sizes = [10, 10, 6], strides = [1, 1, 1]} : vector<14x14x6xf32> to vector<10x10x6xf32>
    %100 = vector.extract_strided_slice %84 {offsets = [3, 0, 0], sizes = [10, 10, 6], strides = [1, 1, 1]} : vector<14x14x6xf32> to vector<10x10x6xf32>
    %101 = vector.extract_strided_slice %84 {offsets = [3, 1, 0], sizes = [10, 10, 6], strides = [1, 1, 1]} : vector<14x14x6xf32> to vector<10x10x6xf32>
    %102 = vector.extract_strided_slice %84 {offsets = [3, 2, 0], sizes = [10, 10, 6], strides = [1, 1, 1]} : vector<14x14x6xf32> to vector<10x10x6xf32>
    %103 = vector.extract_strided_slice %84 {offsets = [3, 3, 0], sizes = [10, 10, 6], strides = [1, 1, 1]} : vector<14x14x6xf32> to vector<10x10x6xf32>
    %104 = vector.extract_strided_slice %84 {offsets = [3, 4, 0], sizes = [10, 10, 6], strides = [1, 1, 1]} : vector<14x14x6xf32> to vector<10x10x6xf32>
    %105 = vector.extract_strided_slice %84 {offsets = [4, 0, 0], sizes = [10, 10, 6], strides = [1, 1, 1]} : vector<14x14x6xf32> to vector<10x10x6xf32>
    %106 = vector.extract_strided_slice %84 {offsets = [4, 1, 0], sizes = [10, 10, 6], strides = [1, 1, 1]} : vector<14x14x6xf32> to vector<10x10x6xf32>
    %107 = vector.extract_strided_slice %84 {offsets = [4, 2, 0], sizes = [10, 10, 6], strides = [1, 1, 1]} : vector<14x14x6xf32> to vector<10x10x6xf32>
    %108 = vector.extract_strided_slice %84 {offsets = [4, 3, 0], sizes = [10, 10, 6], strides = [1, 1, 1]} : vector<14x14x6xf32> to vector<10x10x6xf32>
    %109 = vector.extract_strided_slice %84 {offsets = [4, 4, 0], sizes = [10, 10, 6], strides = [1, 1, 1]} : vector<14x14x6xf32> to vector<10x10x6xf32>
    %110 = tpu.concatenate %85, %86, %87, %88, %89, %90, %91, %92, %93, %94, %95, %96, %97, %98, %99, %100 in 2 : vector<10x10x6xf32>, vector<10x10x6xf32>, vector<10x10x6xf32>, vector<10x10x6xf32>, vector<10x10x6xf32>, vector<10x10x6xf32>, vector<10x10x6xf32>, vector<10x10x6xf32>, vector<10x10x6xf32>, vector<10x10x6xf32>, vector<10x10x6xf32>, vector<10x10x6xf32>, vector<10x10x6xf32>, vector<10x10x6xf32>, vector<10x10x6xf32>, vector<10x10x6xf32> -> vector<10x10x96xf32>
    %111 = tpu.concatenate %101, %102, %103, %104, %105, %106, %107, %108, %109 in 2 : vector<10x10x6xf32>, vector<10x10x6xf32>, vector<10x10x6xf32>, vector<10x10x6xf32>, vector<10x10x6xf32>, vector<10x10x6xf32>, vector<10x10x6xf32>, vector<10x10x6xf32>, vector<10x10x6xf32> -> vector<10x10x54xf32>
    %112 = tpu.concatenate %110, %111 in 2 : vector<10x10x96xf32>, vector<10x10x54xf32> -> vector<10x10x150xf32>
    %113 = vector.shape_cast %112 : vector<10x10x150xf32> to vector<100x150xf32>
    %c0_8 = arith.constant 0 : index
    %c0_9 = arith.constant 0 : index
    %114 = vector.load %arg4[%c0_8, %c0_9] : memref<150x16xf32, #tpu.memory_space<vmem>>, vector<150x16xf32>
    %cst_10 = arith.constant dense<0.000000e+00> : vector<100x16xf32>
    %115 = tpu.matmul %113, %114, %cst_10 {dimension_numbers = #tpu.dot_dimension_numbers<[1], [0], [0], [1], [0, 0, 1, 1], [], []>} : vector<100x150xf32>, vector<150x16xf32>, vector<100x16xf32> -> vector<100x16xf32>
    %c0_11 = arith.constant 0 : index
    %c0_12 = arith.constant 0 : index
    %116 = vector.load %arg5[%c0_11, %c0_12] : memref<1x16xf32, #tpu.memory_space<vmem>>, vector<1x16xf32>
    %117 = vector.broadcast %116 : vector<1x16xf32> to vector<100x16xf32>
    %118 = arith.addf %115, %117 : vector<100x16xf32>
    %cst_13 = arith.constant 0.000000e+00 : f32
    %119 = vector.broadcast %cst_13 : f32 to vector<100x16xf32>
    %120 = arith.maximumf %118, %119 : vector<100x16xf32>
    %121 = vector.shape_cast %120 : vector<100x16xf32> to vector<10x10x16xf32>
    %122 = vector.shape_cast %121 : vector<10x10x16xf32> to vector<5x2x10x16xf32>
    %123 = vector.extract_strided_slice %122 {offsets = [0, 0, 0, 0], sizes = [5, 1, 10, 16], strides = [1, 1, 1, 1]} : vector<5x2x10x16xf32> to vector<5x1x10x16xf32>
    %124 = vector.shape_cast %123 : vector<5x1x10x16xf32> to vector<5x10x16xf32>
    %125 = vector.extract_strided_slice %122 {offsets = [0, 1, 0, 0], sizes = [5, 1, 10, 16], strides = [1, 1, 1, 1]} : vector<5x2x10x16xf32> to vector<5x1x10x16xf32>
    %126 = vector.shape_cast %125 : vector<5x1x10x16xf32> to vector<5x10x16xf32>
    %127 = arith.maximumf %124, %126 : vector<5x10x16xf32>
    %128 = vector.shape_cast %127 : vector<5x10x16xf32> to vector<5x5x2x16xf32>
    %129 = vector.extract_strided_slice %128 {offsets = [0, 0, 0, 0], sizes = [5, 5, 1, 16], strides = [1, 1, 1, 1]} : vector<5x5x2x16xf32> to vector<5x5x1x16xf32>
    %130 = vector.shape_cast %129 : vector<5x5x1x16xf32> to vector<5x5x16xf32>
    %131 = vector.extract_strided_slice %128 {offsets = [0, 0, 1, 0], sizes = [5, 5, 1, 16], strides = [1, 1, 1, 1]} : vector<5x5x2x16xf32> to vector<5x5x1x16xf32>
    %132 = vector.shape_cast %131 : vector<5x5x1x16xf32> to vector<5x5x16xf32>
    %133 = arith.maximumf %130, %132 : vector<5x5x16xf32>
    %134 = vector.shape_cast %133 : vector<5x5x16xf32> to vector<25x16xf32>
    %135 = vector.extract_strided_slice %134 {offsets = [0, 0], sizes = [1, 16], strides = [1, 1]} : vector<25x16xf32> to vector<1x16xf32>
    %136 = vector.extract_strided_slice %134 {offsets = [1, 0], sizes = [1, 16], strides = [1, 1]} : vector<25x16xf32> to vector<1x16xf32>
    %137 = vector.extract_strided_slice %134 {offsets = [2, 0], sizes = [1, 16], strides = [1, 1]} : vector<25x16xf32> to vector<1x16xf32>
    %138 = vector.extract_strided_slice %134 {offsets = [3, 0], sizes = [1, 16], strides = [1, 1]} : vector<25x16xf32> to vector<1x16xf32>
    %139 = vector.extract_strided_slice %134 {offsets = [4, 0], sizes = [1, 16], strides = [1, 1]} : vector<25x16xf32> to vector<1x16xf32>
    %140 = vector.extract_strided_slice %134 {offsets = [5, 0], sizes = [1, 16], strides = [1, 1]} : vector<25x16xf32> to vector<1x16xf32>
    %141 = vector.extract_strided_slice %134 {offsets = [6, 0], sizes = [1, 16], strides = [1, 1]} : vector<25x16xf32> to vector<1x16xf32>
    %142 = vector.extract_strided_slice %134 {offsets = [7, 0], sizes = [1, 16], strides = [1, 1]} : vector<25x16xf32> to vector<1x16xf32>
    %143 = vector.extract_strided_slice %134 {offsets = [8, 0], sizes = [1, 16], strides = [1, 1]} : vector<25x16xf32> to vector<1x16xf32>
    %144 = vector.extract_strided_slice %134 {offsets = [9, 0], sizes = [1, 16], strides = [1, 1]} : vector<25x16xf32> to vector<1x16xf32>
    %145 = vector.extract_strided_slice %134 {offsets = [10, 0], sizes = [1, 16], strides = [1, 1]} : vector<25x16xf32> to vector<1x16xf32>
    %146 = vector.extract_strided_slice %134 {offsets = [11, 0], sizes = [1, 16], strides = [1, 1]} : vector<25x16xf32> to vector<1x16xf32>
    %147 = vector.extract_strided_slice %134 {offsets = [12, 0], sizes = [1, 16], strides = [1, 1]} : vector<25x16xf32> to vector<1x16xf32>
    %148 = vector.extract_strided_slice %134 {offsets = [13, 0], sizes = [1, 16], strides = [1, 1]} : vector<25x16xf32> to vector<1x16xf32>
    %149 = vector.extract_strided_slice %134 {offsets = [14, 0], sizes = [1, 16], strides = [1, 1]} : vector<25x16xf32> to vector<1x16xf32>
    %150 = vector.extract_strided_slice %134 {offsets = [15, 0], sizes = [1, 16], strides = [1, 1]} : vector<25x16xf32> to vector<1x16xf32>
    %151 = vector.extract_strided_slice %134 {offsets = [16, 0], sizes = [1, 16], strides = [1, 1]} : vector<25x16xf32> to vector<1x16xf32>
    %152 = vector.extract_strided_slice %134 {offsets = [17, 0], sizes = [1, 16], strides = [1, 1]} : vector<25x16xf32> to vector<1x16xf32>
    %153 = vector.extract_strided_slice %134 {offsets = [18, 0], sizes = [1, 16], strides = [1, 1]} : vector<25x16xf32> to vector<1x16xf32>
    %154 = vector.extract_strided_slice %134 {offsets = [19, 0], sizes = [1, 16], strides = [1, 1]} : vector<25x16xf32> to vector<1x16xf32>
    %155 = vector.extract_strided_slice %134 {offsets = [20, 0], sizes = [1, 16], strides = [1, 1]} : vector<25x16xf32> to vector<1x16xf32>
    %156 = vector.extract_strided_slice %134 {offsets = [21, 0], sizes = [1, 16], strides = [1, 1]} : vector<25x16xf32> to vector<1x16xf32>
    %157 = vector.extract_strided_slice %134 {offsets = [22, 0], sizes = [1, 16], strides = [1, 1]} : vector<25x16xf32> to vector<1x16xf32>
    %158 = vector.extract_strided_slice %134 {offsets = [23, 0], sizes = [1, 16], strides = [1, 1]} : vector<25x16xf32> to vector<1x16xf32>
    %159 = vector.extract_strided_slice %134 {offsets = [24, 0], sizes = [1, 16], strides = [1, 1]} : vector<25x16xf32> to vector<1x16xf32>
    %160 = tpu.concatenate %135, %136, %137, %138, %139, %140, %141, %142, %143, %144, %145, %146, %147, %148, %149, %150 in 1 : vector<1x16xf32>, vector<1x16xf32>, vector<1x16xf32>, vector<1x16xf32>, vector<1x16xf32>, vector<1x16xf32>, vector<1x16xf32>, vector<1x16xf32>, vector<1x16xf32>, vector<1x16xf32>, vector<1x16xf32>, vector<1x16xf32>, vector<1x16xf32>, vector<1x16xf32>, vector<1x16xf32>, vector<1x16xf32> -> vector<1x256xf32>
    %161 = tpu.concatenate %151, %152, %153, %154, %155, %156, %157, %158, %159 in 1 : vector<1x16xf32>, vector<1x16xf32>, vector<1x16xf32>, vector<1x16xf32>, vector<1x16xf32>, vector<1x16xf32>, vector<1x16xf32>, vector<1x16xf32>, vector<1x16xf32> -> vector<1x144xf32>
    %162 = tpu.concatenate %160, %161 in 1 : vector<1x256xf32>, vector<1x144xf32> -> vector<1x400xf32>
    %c0_14 = arith.constant 0 : index
    %c0_15 = arith.constant 0 : index
    %163 = vector.load %arg6[%c0_14, %c0_15] : memref<400x120xf32, #tpu.memory_space<vmem>>, vector<400x120xf32>
    %cst_16 = arith.constant dense<0.000000e+00> : vector<1x120xf32>
    %164 = tpu.matmul %162, %163, %cst_16 {dimension_numbers = #tpu.dot_dimension_numbers<[1], [0], [0], [1], [0, 0, 1, 1], [], []>} : vector<1x400xf32>, vector<400x120xf32>, vector<1x120xf32> -> vector<1x120xf32>
    %c0_17 = arith.constant 0 : index
    %c0_18 = arith.constant 0 : index
    %165 = vector.load %arg7[%c0_17, %c0_18] : memref<1x120xf32, #tpu.memory_space<vmem>>, vector<1x120xf32>
    %166 = arith.addf %164, %165 : vector<1x120xf32>
    %c0_19 = arith.constant 0 : index
    %c0_20 = arith.constant 0 : index
    %167 = vector.load %arg8[%c0_19, %c0_20] : memref<120x84xf32, #tpu.memory_space<vmem>>, vector<120x84xf32>
    %cst_21 = arith.constant dense<0.000000e+00> : vector<1x84xf32>
    %168 = tpu.matmul %166, %167, %cst_21 {dimension_numbers = #tpu.dot_dimension_numbers<[1], [0], [0], [1], [0, 0, 1, 1], [], []>} : vector<1x120xf32>, vector<120x84xf32>, vector<1x84xf32> -> vector<1x84xf32>
    %c0_22 = arith.constant 0 : index
    %c0_23 = arith.constant 0 : index
    %169 = vector.load %arg9[%c0_22, %c0_23] : memref<1x84xf32, #tpu.memory_space<vmem>>, vector<1x84xf32>
    %170 = arith.addf %168, %169 : vector<1x84xf32>
    %c0_24 = arith.constant 0 : index
    %c0_25 = arith.constant 0 : index
    %171 = vector.load %arg10[%c0_24, %c0_25] : memref<84x10xf32, #tpu.memory_space<vmem>>, vector<84x10xf32>
    %cst_26 = arith.constant dense<0.000000e+00> : vector<1x10xf32>
    %172 = tpu.matmul %170, %171, %cst_26 {dimension_numbers = #tpu.dot_dimension_numbers<[1], [0], [0], [1], [0, 0, 1, 1], [], []>} : vector<1x84xf32>, vector<84x10xf32>, vector<1x10xf32> -> vector<1x10xf32>
    %c0_27 = arith.constant 0 : index
    %c0_28 = arith.constant 0 : index
    %173 = vector.load %arg11[%c0_27, %c0_28] : memref<1x10xf32, #tpu.memory_space<vmem>>, vector<1x10xf32>
    %174 = arith.addf %172, %173 : vector<1x10xf32>
    %c0_29 = arith.constant 0 : index
    %c0_30 = arith.constant 0 : index
    %c0_31 = arith.constant 0 : index
    %175 = vector.load %arg12[%c0_29, %c0_30, %c0_31] : memref<1x1x10xf32, #tpu.memory_space<vmem>>, vector<1x1x10xf32>
    %176 = vector.shape_cast %175 : vector<1x1x10xf32> to vector<1x10xf32>
    %177 = vector.shape_cast %174 : vector<1x10xf32> to vector<1x1x10xf32>
    tpu.vector_store %arg12[%c0_29, %c0_30, %c0_31], %177 {strides = array<i32>} : memref<1x1x10xf32, #tpu.memory_space<vmem>>, vector<1x1x10xf32>,
    return
  }
  func.func @transform_0(%arg0: i32) -> (i32, i32, i32, i32) {
    %c0_i32 = arith.constant 0 : i32
    %c0_i32_0 = arith.constant 0 : i32
    %c0_i32_1 = arith.constant 0 : i32
    %c0_i32_2 = arith.constant 0 : i32
    return %arg0, %c0_i32, %c0_i32_0, %c0_i32_1 : i32, i32, i32, i32
  }
  func.func @transform_1(%arg0: i32) -> (i32, i32) {
    %c0_i32 = arith.constant 0 : i32
    %c0_i32_0 = arith.constant 0 : i32
    %c0_i32_1 = arith.constant 0 : i32
    return %c0_i32, %c0_i32_0 : i32, i32
  }
  func.func @transform_2(%arg0: i32) -> (i32, i32) {
    %c0_i32 = arith.constant 0 : i32
    %c0_i32_0 = arith.constant 0 : i32
    %c0_i32_1 = arith.constant 0 : i32
    return %c0_i32, %c0_i32_0 : i32, i32
  }
  func.func @transform_3(%arg0: i32) -> (i32, i32) {
    %c0_i32 = arith.constant 0 : i32
    %c0_i32_0 = arith.constant 0 : i32
    %c0_i32_1 = arith.constant 0 : i32
    return %c0_i32, %c0_i32_0 : i32, i32
  }
  func.func @transform_4(%arg0: i32) -> (i32, i32) {
    %c0_i32 = arith.constant 0 : i32
    %c0_i32_0 = arith.constant 0 : i32
    %c0_i32_1 = arith.constant 0 : i32
    return %c0_i32, %c0_i32_0 : i32, i32
  }
  func.func @transform_5(%arg0: i32) -> (i32, i32) {
    %c0_i32 = arith.constant 0 : i32
    %c0_i32_0 = arith.constant 0 : i32
    %c0_i32_1 = arith.constant 0 : i32
    return %c0_i32, %c0_i32_0 : i32, i32
  }
  func.func @transform_6(%arg0: i32) -> (i32, i32) {
    %c0_i32 = arith.constant 0 : i32
    %c0_i32_0 = arith.constant 0 : i32
    %c0_i32_1 = arith.constant 0 : i32
    return %c0_i32, %c0_i32_0 : i32, i32
  }
  func.func @transform_7(%arg0: i32) -> (i32, i32) {
    %c0_i32 = arith.constant 0 : i32
    %c0_i32_0 = arith.constant 0 : i32
    %c0_i32_1 = arith.constant 0 : i32
    return %c0_i32, %c0_i32_0 : i32, i32
  }
  func.func @transform_8(%arg0: i32) -> (i32, i32) {
    %c0_i32 = arith.constant 0 : i32
    %c0_i32_0 = arith.constant 0 : i32
    %c0_i32_1 = arith.constant 0 : i32
    return %c0_i32, %c0_i32_0 : i32, i32
  }
  func.func @transform_9(%arg0: i32) -> (i32, i32) {
    %c0_i32 = arith.constant 0 : i32
    %c0_i32_0 = arith.constant 0 : i32
    %c0_i32_1 = arith.constant 0 : i32
    return %c0_i32, %c0_i32_0 : i32, i32
  }
  func.func @transform_10(%arg0: i32) -> (i32, i32) {
    %c0_i32 = arith.constant 0 : i32
    %c0_i32_0 = arith.constant 0 : i32
    %c0_i32_1 = arith.constant 0 : i32
    return %c0_i32, %c0_i32_0 : i32, i32
  }
  func.func @transform_11(%arg0: i32) -> (i32, i32, i32) {
    %c0_i32 = arith.constant 0 : i32
    %c0_i32_0 = arith.constant 0 : i32
    %c0_i32_1 = arith.constant 0 : i32
    return %arg0, %c0_i32, %c0_i32_0 : i32, i32, i32
  }
}

</mosaic_0001>

<llo_original>
// kernel: cnn_forward.1
$region0: #{cnn_forward.1}
  #allocation0 [shape = 'u32[]', space=smem, size = 0x4, offset = 0x4, fixed_abs, tag = 'smem constant byte address 0x4 - core index']
  #allocation1 [shape = 'u32[144,128]{1,0:T(1,128)}', space=vmem, size = 0x12000, scoped, tag = 'internal scratch']
  %s0 = inlined_call_operand.vmem [shape: f32[2,30,30,1], index: 0, kind: input, shape index: {}]
  %s1 = inlined_call_operand.vmem [shape: f32[9,6], index: 1, kind: input, shape index: {}]
  %s2 = inlined_call_operand.vmem [shape: f32[1,6], index: 2, kind: input, shape index: {}]
  %s3 = inlined_call_operand.vmem [shape: f32[150,16], index: 3, kind: input, shape index: {}]
  %s4 = inlined_call_operand.vmem [shape: f32[1,16], index: 4, kind: input, shape index: {}]
  %s5 = inlined_call_operand.vmem [shape: f32[400,120], index: 5, kind: input, shape index: {}]
  %s6 = inlined_call_operand.vmem [shape: f32[1,120], index: 6, kind: input, shape index: {}]
  %s7 = inlined_call_operand.vmem [shape: f32[120,84], index: 7, kind: input, shape index: {}]
  %s8 = inlined_call_operand.vmem [shape: f32[1,84], index: 8, kind: input, shape index: {}]
  %s9 = inlined_call_operand.vmem [shape: f32[84,10], index: 9, kind: input, shape index: {}]
  %s10 = inlined_call_operand.vmem [shape: f32[1,10], index: 10, kind: input, shape index: {}]
  %s11 = inlined_call_operand.hbm [shape: f32[2,1,10], index: 11, kind: output, shape index: {}]
  %s12 = sld [smem:[#allocation0]]
  $region77: #{cnn_forward.1} parent=0
    _
  %s14 = ssub.s32 1, %s12
  %s15 = scalar_select 0, %s14, %s12
  $region1: #{cnn_forward.1} parent=0
    #allocation2 [shape = 'u8[1024]{0}', space=vmem, size = 0x400, scoped, tag = 'output window, operand 0']
    #allocation3 [shape = 's32[2]{0}', space=sflag, size = 0x8, scoped, tag = 'scoped memory for cnn_forward.1']
    %16 = vsyncpa [#allocation3], 0
    %s17 = scalar_lea.sflag [#allocation3], 1
    %18 = vsyncpa %s17, 0
    loop: start=0, step=1, limit=4
    $region2: #{cnn_forward.1} parent=1 // loop_pre_header
      _
    $region3: #{cnn_forward.1} parent=1 // loop_header
      %s20 = sphi 0, %s24
      %p21 = scmp.ge.s32.totalorder %s20, 4
      %s30 = sphi 0, %s32
      %s33 = sphi 0, %s30
      %s34 = sphi 0, %s33
      %s50 = sphi 0, %s34
      %s54 = sphi 0, %s54
      %s56 = sphi 0, %s54
      %s57 = sphi 0, %s56
      %s71 = sphi 0, %s57
      %s75 = sphi 0, %s75
      %s77 = sphi 0, %s75
      %s78 = sphi 0, %s77
      %s92 = sphi 0, %s78
      %s96 = sphi 0, %s96
      %s98 = sphi 0, %s96
      %s99 = sphi 0, %s98
      %s113 = sphi 0, %s99
      %s117 = sphi 0, %s117
      %s119 = sphi 0, %s117
      %s120 = sphi 0, %s119
      %s134 = sphi 0, %s120
      %s138 = sphi 0, %s138
      %s140 = sphi 0, %s138
      %s141 = sphi 0, %s140
      %s155 = sphi 0, %s141
      %s159 = sphi 0, %s159
      %s161 = sphi 0, %s159
      %s162 = sphi 0, %s161
      %s176 = sphi 0, %s162
      %s180 = sphi 0, %s180
      %s182 = sphi 0, %s180
      %s183 = sphi 0, %s182
      %s197 = sphi 0, %s183
      %s201 = sphi 0, %s201
      %s203 = sphi 0, %s201
      %s204 = sphi 0, %s203
      %s218 = sphi 0, %s204
      %s222 = sphi 0, %s222
      %s224 = sphi 0, %s222
      %s225 = sphi 0, %s224
      %s239 = sphi 0, %s225
      %s243 = sphi 0, %s243
      %s245 = sphi 0, %s243
      %s246 = sphi 0, %s245
      %s260 = sphi 0, %s246
      %s266 = sphi 0, %s268
      %s269 = sphi 0, %s266
      %s270 = sphi 0, %s269
      %s286 = sphi 0, %s270
    $region4: #{cnn_forward.1} parent=1 // loop_header_branch
      %23 = sbr.rel (%p21) target = $region8
    $region5: #{cnn_forward.1} parent=1 // loop_body
      %s25 = ssub.s32 %s20, 1
      %s26 = ssub.s32 %s20, 2
      %s27 = sadd.s32 %s20, 1
      %s28 = ssub.s32 %s20, %s27
      %p29 = scmp.eq.s32.totalorder %s28, 0
      %s31 = sadd.s32 %s30, 1
      %s32 = scalar_select %p29, %s30, %s31
      %p35 = pneg %p29
      %p36 = scmp.eq.s32.totalorder %s20, 1
      %p37 = por %p35, %p36
      %p38 = scmp.ne.s32.totalorder %s30, %s33
      %p39 = scmp.eq.s32.totalorder %s20, 0
      %p40 = por %p38, %p39
      %p41 = scmp.ne.s32.totalorder %s30, %s33
      %p42 = scmp.eq.s32.totalorder %s25, 1
      %p43 = por %p41, %p42
      %p44 = scmp.ne.s32.totalorder %s33, %s34
      %p45 = scmp.eq.s32.totalorder %s25, 0
      %p46 = por %p44, %p45
      %p47 = scmp.ne.s32.totalorder %s33, %s34
      %p48 = scmp.eq.s32.totalorder %s26, 1
      %p49 = por %p47, %p48
      %p51 = scmp.ne.s32.totalorder %s34, %s50
      %p52 = scmp.eq.s32.totalorder %s26, 0
      %p53 = por %p51, %p52
      %s55 = sadd.s32 %s54, 1
      %p58 = scmp.eq.s32.totalorder %s20, 1
      %p59 = scmp.ne.s32.totalorder %s54, %s56
      %p60 = scmp.eq.s32.totalorder %s20, 0
      %p61 = por %p59, %p60
      %p62 = scmp.ne.s32.totalorder %s54, %s56
      %p63 = scmp.eq.s32.totalorder %s25, 1
      %p64 = por %p62, %p63
      %p65 = scmp.ne.s32.totalorder %s56, %s57
      %p66 = scmp.eq.s32.totalorder %s25, 0
      %p67 = por %p65, %p66
      %p68 = scmp.ne.s32.totalorder %s56, %s57
      %p69 = scmp.eq.s32.totalorder %s26, 1
      %p70 = por %p68, %p69
      %p72 = scmp.ne.s32.totalorder %s57, %s71
      %p73 = scmp.eq.s32.totalorder %s26, 0
      %p74 = por %p72, %p73
      %s76 = sadd.s32 %s75, 1
      %p79 = scmp.eq.s32.totalorder %s20, 1
      %p80 = scmp.ne.s32.totalorder %s75, %s77
      %p81 = scmp.eq.s32.totalorder %s20, 0
      %p82 = por %p80, %p81
      %p83 = scmp.ne.s32.totalorder %s75, %s77
      %p84 = scmp.eq.s32.totalorder %s25, 1
      %p85 = por %p83, %p84
      %p86 = scmp.ne.s32.totalorder %s77, %s78
      %p87 = scmp.eq.s32.totalorder %s25, 0
      %p88 = por %p86, %p87
      %p89 = scmp.ne.s32.totalorder %s77, %s78
      %p90 = scmp.eq.s32.totalorder %s26, 1
      %p91 = por %p89, %p90
      %p93 = scmp.ne.s32.totalorder %s78, %s92
      %p94 = scmp.eq.s32.totalorder %s26, 0
      %p95 = por %p93, %p94
      %s97 = sadd.s32 %s96, 1
      %p100 = scmp.eq.s32.totalorder %s20, 1
      %p101 = scmp.ne.s32.totalorder %s96, %s98
      %p102 = scmp.eq.s32.totalorder %s20, 0
      %p103 = por %p101, %p102
      %p104 = scmp.ne.s32.totalorder %s96, %s98
      %p105 = scmp.eq.s32.totalorder %s25, 1
      %p106 = por %p104, %p105
      %p107 = scmp.ne.s32.totalorder %s98, %s99
      %p108 = scmp.eq.s32.totalorder %s25, 0
      %p109 = por %p107, %p108
      %p110 = scmp.ne.s32.totalorder %s98, %s99
      %p111 = scmp.eq.s32.totalorder %s26, 1
      %p112 = por %p110, %p111
      %p114 = scmp.ne.s32.totalorder %s99, %s113
      %p115 = scmp.eq.s32.totalorder %s26, 0
      %p116 = por %p114, %p115
      %s118 = sadd.s32 %s117, 1
      %p121 = scmp.eq.s32.totalorder %s20, 1
      %p122 = scmp.ne.s32.totalorder %s117, %s119
      %p123 = scmp.eq.s32.totalorder %s20, 0
      %p124 = por %p122, %p123
      %p125 = scmp.ne.s32.totalorder %s117, %s119
      %p126 = scmp.eq.s32.totalorder %s25, 1
      %p127 = por %p125, %p126
      %p128 = scmp.ne.s32.totalorder %s119, %s120
      %p129 = scmp.eq.s32.totalorder %s25, 0
      %p130 = por %p128, %p129
      %p131 = scmp.ne.s32.totalorder %s119, %s120
      %p132 = scmp.eq.s32.totalorder %s26, 1
      %p133 = por %p131, %p132
      %p135 = scmp.ne.s32.totalorder %s120, %s134
      %p136 = scmp.eq.s32.totalorder %s26, 0
      %p137 = por %p135, %p136
      %s139 = sadd.s32 %s138, 1
      %p142 = scmp.eq.s32.totalorder %s20, 1
      %p143 = scmp.ne.s32.totalorder %s138, %s140
      %p144 = scmp.eq.s32.totalorder %s20, 0
      %p145 = por %p143, %p144
      %p146 = scmp.ne.s32.totalorder %s138, %s140
      %p147 = scmp.eq.s32.totalorder %s25, 1
      %p148 = por %p146, %p147
      %p149 = scmp.ne.s32.totalorder %s140, %s141
      %p150 = scmp.eq.s32.totalorder %s25, 0
      %p151 = por %p149, %p150
      %p152 = scmp.ne.s32.totalorder %s140, %s141
      %p153 = scmp.eq.s32.totalorder %s26, 1
      %p154 = por %p152, %p153
      %p156 = scmp.ne.s32.totalorder %s141, %s155
      %p157 = scmp.eq.s32.totalorder %s26, 0
      %p158 = por %p156, %p157
      %s160 = sadd.s32 %s159, 1
      %p163 = scmp.eq.s32.totalorder %s20, 1
      %p164 = scmp.ne.s32.totalorder %s159, %s161
      %p165 = scmp.eq.s32.totalorder %s20, 0
      %p166 = por %p164, %p165
      %p167 = scmp.ne.s32.totalorder %s159, %s161
      %p168 = scmp.eq.s32.totalorder %s25, 1
      %p169 = por %p167, %p168
      %p170 = scmp.ne.s32.totalorder %s161, %s162
      %p171 = scmp.eq.s32.totalorder %s25, 0
      %p172 = por %p170, %p171
      %p173 = scmp.ne.s32.totalorder %s161, %s162
      %p174 = scmp.eq.s32.totalorder %s26, 1
      %p175 = por %p173, %p174
      %p177 = scmp.ne.s32.totalorder %s162, %s176
      %p178 = scmp.eq.s32.totalorder %s26, 0
      %p179 = por %p177, %p178
      %s181 = sadd.s32 %s180, 1
      %p184 = scmp.eq.s32.totalorder %s20, 1
      %p185 = scmp.ne.s32.totalorder %s180, %s182
      %p186 = scmp.eq.s32.totalorder %s20, 0
      %p187 = por %p185, %p186
      %p188 = scmp.ne.s32.totalorder %s180, %s182
      %p189 = scmp.eq.s32.totalorder %s25, 1
      %p190 = por %p188, %p189
      %p191 = scmp.ne.s32.totalorder %s182, %s183
      %p192 = scmp.eq.s32.totalorder %s25, 0
      %p193 = por %p191, %p192
      %p194 = scmp.ne.s32.totalorder %s182, %s183
      %p195 = scmp.eq.s32.totalorder %s26, 1
      %p196 = por %p194, %p195
      %p198 = scmp.ne.s32.totalorder %s183, %s197
      %p199 = scmp.eq.s32.totalorder %s26, 0
      %p200 = por %p198, %p199
      %s202 = sadd.s32 %s201, 1
      %p205 = scmp.eq.s32.totalorder %s20, 1
      %p206 = scmp.ne.s32.totalorder %s201, %s203
      %p207 = scmp.eq.s32.totalorder %s20, 0
      %p208 = por %p206, %p207
      %p209 = scmp.ne.s32.totalorder %s201, %s203
      %p210 = scmp.eq.s32.totalorder %s25, 1
      %p211 = por %p209, %p210
      %p212 = scmp.ne.s32.totalorder %s203, %s204
      %p213 = scmp.eq.s32.totalorder %s25, 0
      %p214 = por %p212, %p213
      %p215 = scmp.ne.s32.totalorder %s203, %s204
      %p216 = scmp.eq.s32.totalorder %s26, 1
      %p217 = por %p215, %p216
      %p219 = scmp.ne.s32.totalorder %s204, %s218
      %p220 = scmp.eq.s32.totalorder %s26, 0
      %p221 = por %p219, %p220
      %s223 = sadd.s32 %s222, 1
      %p226 = scmp.eq.s32.totalorder %s20, 1
      %p227 = scmp.ne.s32.totalorder %s222, %s224
      %p228 = scmp.eq.s32.totalorder %s20, 0
      %p229 = por %p227, %p228
      %p230 = scmp.ne.s32.totalorder %s222, %s224
      %p231 = scmp.eq.s32.totalorder %s25, 1
      %p232 = por %p230, %p231
      %p233 = scmp.ne.s32.totalorder %s224, %s225
      %p234 = scmp.eq.s32.totalorder %s25, 0
      %p235 = por %p233, %p234
      %p236 = scmp.ne.s32.totalorder %s224, %s225
      %p237 = scmp.eq.s32.totalorder %s26, 1
      %p238 = por %p236, %p237
      %p240 = scmp.ne.s32.totalorder %s225, %s239
      %p241 = scmp.eq.s32.totalorder %s26, 0
      %p242 = por %p240, %p241
      %s244 = sadd.s32 %s243, 1
      %p247 = scmp.eq.s32.totalorder %s20, 1
      %p248 = scmp.ne.s32.totalorder %s243, %s245
      %p249 = scmp.eq.s32.totalorder %s20, 0
      %p250 = por %p248, %p249
      %p251 = scmp.ne.s32.totalorder %s243, %s245
      %p252 = scmp.eq.s32.totalorder %s25, 1
      %p253 = por %p251, %p252
      %p254 = scmp.ne.s32.totalorder %s245, %s246
      %p255 = scmp.eq.s32.totalorder %s25, 0
      %p256 = por %p254, %p255
      %p257 = scmp.ne.s32.totalorder %s245, %s246
      %p258 = scmp.eq.s32.totalorder %s26, 1
      %p259 = por %p257, %p258
      %p261 = scmp.ne.s32.totalorder %s246, %s260
      %p262 = scmp.eq.s32.totalorder %s26, 0
      %p263 = por %p261, %p262
      %s264 = ssub.s32 %s20, %s27
      %p265 = scmp.eq.s32.totalorder %s264, 0
      %s267 = sadd.s32 %s266, 1
      %s268 = scalar_select %p265, %s266, %s267
      %p271 = pneg %p265
      %p272 = scmp.eq.s32.totalorder %s20, 1
      %p273 = por %p271, %p272
      %p274 = scmp.ne.s32.totalorder %s266, %s269
      %p275 = scmp.eq.s32.totalorder %s20, 0
      %p276 = por %p274, %p275
      %p277 = scmp.ne.s32.totalorder %s266, %s269
      %p278 = scmp.eq.s32.totalorder %s25, 1
      %p279 = por %p277, %p278
      %p280 = scmp.ne.s32.totalorder %s269, %s270
      %p281 = scmp.eq.s32.totalorder %s25, 0
      %p282 = por %p280, %p281
      %p283 = scmp.ne.s32.totalorder %s269, %s270
      %p284 = scmp.eq.s32.totalorder %s26, 1
      %p285 = por %p283, %p284
      %p287 = scmp.ne.s32.totalorder %s270, %s286
      %p288 = scmp.eq.s32.totalorder %s26, 0
      %p289 = por %p287, %p288
      %p290 = scmp.le.s32.totalorder 1, %s20
      %p291 = scmp.lt.s32.totalorder %s20, 3
      %p292 = pnand %p290, %p291
      %p293 = pneg %p292
      // Predicated region
      $region9: #{cnn_forward.1} parent=5 // pred_check
        _
      $region10: #{cnn_forward.1} parent=5 // pred_check_branch
        %295 = sbr.rel (%p292) target = $region12
      $region11: #{cnn_forward.1} parent=5 // pred_region
        %s296 = ssub.s32 %s20, 1
        // Predicated region
        $region13: #{cnn_forward.1} parent=11 // pred_check
          %p297 = pneg %p67
        $region14: #{cnn_forward.1} parent=11 // pred_check_branch
          %299 = sbr.rel (%p297) target = $region16
        $region15: #{cnn_forward.1} parent=11 // pred_region
          _
        $region16: #{cnn_forward.1} parent=11 // pred_fallthru
          _
        // Predicated region
        $region17: #{cnn_forward.1} parent=11 // pred_check
          %p300 = pneg %p88
        $region18: #{cnn_forward.1} parent=11 // pred_check_branch
          %302 = sbr.rel (%p300) target = $region20
        $region19: #{cnn_forward.1} parent=11 // pred_region
          _
        $region20: #{cnn_forward.1} parent=11 // pred_fallthru
          _
        // Predicated region
        $region21: #{cnn_forward.1} parent=11 // pred_check
          %p303 = pneg %p109
        $region22: #{cnn_forward.1} parent=11 // pred_check_branch
          %305 = sbr.rel (%p303) target = $region24
        $region23: #{cnn_forward.1} parent=11 // pred_region
          _
        $region24: #{cnn_forward.1} parent=11 // pred_fallthru
          _
        // Predicated region
        $region25: #{cnn_forward.1} parent=11 // pred_check
          %p306 = pneg %p130
        $region26: #{cnn_forward.1} parent=11 // pred_check_branch
          %308 = sbr.rel (%p306) target = $region28
        $region27: #{cnn_forward.1} parent=11 // pred_region
          _
        $region28: #{cnn_forward.1} parent=11 // pred_fallthru
          _
        // Predicated region
        $region29: #{cnn_forward.1} parent=11 // pred_check
          %p309 = pneg %p151
        $region30: #{cnn_forward.1} parent=11 // pred_check_branch
          %311 = sbr.rel (%p309) target = $region32
        $region31: #{cnn_forward.1} parent=11 // pred_region
          _
        $region32: #{cnn_forward.1} parent=11 // pred_fallthru
          _
        // Predicated region
        $region33: #{cnn_forward.1} parent=11 // pred_check
          %p312 = pneg %p172
        $region34: #{cnn_forward.1} parent=11 // pred_check_branch
          %314 = sbr.rel (%p312) target = $region36
        $region35: #{cnn_forward.1} parent=11 // pred_region
          _
        $region36: #{cnn_forward.1} parent=11 // pred_fallthru
          _
        // Predicated region
        $region37: #{cnn_forward.1} parent=11 // pred_check
          %p315 = pneg %p193
        $region38: #{cnn_forward.1} parent=11 // pred_check_branch
          %317 = sbr.rel (%p315) target = $region40
        $region39: #{cnn_forward.1} parent=11 // pred_region
          _
        $region40: #{cnn_forward.1} parent=11 // pred_fallthru
          _
        // Predicated region
        $region41: #{cnn_forward.1} parent=11 // pred_check
          %p318 = pneg %p214
        $region42: #{cnn_forward.1} parent=11 // pred_check_branch
          %320 = sbr.rel (%p318) target = $region44
        $region43: #{cnn_forward.1} parent=11 // pred_region
          _
        $region44: #{cnn_forward.1} parent=11 // pred_fallthru
          _
        // Predicated region
        $region45: #{cnn_forward.1} parent=11 // pred_check
          %p321 = pneg %p235
        $region46: #{cnn_forward.1} parent=11 // pred_check_branch
          %323 = sbr.rel (%p321) target = $region48
        $region47: #{cnn_forward.1} parent=11 // pred_region
          _
        $region48: #{cnn_forward.1} parent=11 // pred_fallthru
          _
        // Predicated region
        $region49: #{cnn_forward.1} parent=11 // pred_check
          %p324 = pneg %p256
        $region50: #{cnn_forward.1} parent=11 // pred_check_branch
          %326 = sbr.rel (%p324) target = $region52
        $region51: #{cnn_forward.1} parent=11 // pred_region
          _
        $region52: #{cnn_forward.1} parent=11 // pred_fallthru
          _
      $region12: #{cnn_forward.1} parent=5 // pred_fallthru
        _
      %p327 = scmp.lt.s32.totalorder %s20, 2
      // Predicated region
      $region53: #{cnn_forward.1} parent=5 // pred_check
        %p328 = pneg %p327
      $region54: #{cnn_forward.1} parent=5 // pred_check_branch
        %330 = sbr.rel (%p328) target = $region56
      $region55: #{cnn_forward.1} parent=5 // pred_region
        // Predicated region
        $region57: #{cnn_forward.1} parent=55 // pred_check
          %p331 = pneg %p40
        $region58: #{cnn_forward.1} parent=55 // pred_check_branch
          %333 = sbr.rel (%p331) target = $region60
        $region59: #{cnn_forward.1} parent=55 // pred_region
          %p334 = scmp.lt.s32.totalorder %s20, 1
          %s335 = scalar_select %p334, %s20, 1
          %s336 = smul.addr %s335, 120
          %s337 = smul.addr %s336, 8
          %s338 = scalar_lea.vmem %s0, %s337
        $region60: #{cnn_forward.1} parent=55 // pred_fallthru
          _
      $region56: #{cnn_forward.1} parent=5 // pred_fallthru
        _
      %p339 = scmp.le.s32.totalorder 1, %s20
      %p340 = scmp.lt.s32.totalorder %s20, 3
      %p341 = pnand %p339, %p340
      %p342 = pneg %p341
      // Predicated region
      $region61: #{cnn_forward.1} parent=5 // pred_check
        _
      $region62: #{cnn_forward.1} parent=5 // pred_check_branch
        %344 = sbr.rel (%p341) target = $region64
      $region63: #{cnn_forward.1} parent=5 // pred_region
        %s345 = ssub.s32 %s20, 1
        %p346 = scmp.lt.s32.totalorder %s25, 1
        %s347 = scalar_select %p346, %s25, 1
        %s348 = smul.addr %s347, 120
        %s349 = smul.addr %s348, 8
        %s350 = scalar_lea.vmem %s0, %s349
        %p351 = pneg %p46
        %p352 = pneg %p43
        %p353 = pneg %p67
        %p354 = pneg %p64
        %p355 = pneg %p88
        %p356 = pneg %p85
        %p357 = pneg %p109
        %p358 = pneg %p106
        %p359 = pneg %p130
        %p360 = pneg %p127
        %p361 = pneg %p151
        %p362 = pneg %p148
        %p363 = pneg %p172
        %p364 = pneg %p169
        %p365 = pneg %p193
        %p366 = pneg %p190
        %p367 = pneg %p214
        %p368 = pneg %p211
        %p369 = pneg %p235
        %p370 = pneg %p232
        %p371 = pneg %p256
        %p372 = pneg %p253
        %p373 = pneg %p282
        %p374 = pneg %p279
        %s375 = sand.u32 %s269, 1
        %s376 = scalar_lea.sflag [#allocation3], %s375
        %s377 = sand.u32 %s269, 1
        %s378 = scalar_lea.vmem [#allocation2], %s377
        %p379 = scmp.lt.s32.totalorder %s25, 1
        %s380 = scalar_select %p379, %s25, 1
        %s381 = smul.addr %s380, 120
        %s382 = smul.addr %s381, 8
        %s383 = scalar_lea.vmem %s0, %s382
        %v384 = vld [vmem:[%s383] sm:$0xff]
        %v385 = vld [vmem:[%s383 + $0x8] sm:$0xff]
        %v386 = vld [vmem:[%s383 + $0x10] sm:$0xff]
        %v387 = vld [vmem:[%s383 + $0x18] sm:$0x3f]
        %v388 = vld [vmem:[%s383 + $0x20] sm:$0xff]
        %v389 = vld [vmem:[%s383 + $0x28] sm:$0xff]
        %v390 = vld [vmem:[%s383 + $0x30] sm:$0xff]
        %v391 = vld [vmem:[%s383 + $0x38] sm:$0x3f]
        %v392 = vld [vmem:[%s383 + $0x40] sm:$0xff]
        %v393 = vld [vmem:[%s383 + $0x48] sm:$0xff]
        %v394 = vld [vmem:[%s383 + $0x50] sm:$0xff]
        %v395 = vld [vmem:[%s383 + $0x58] sm:$0x3f]
        %v396 = vld [vmem:[%s383 + $0x60] sm:$0xff]
        %v397 = vld [vmem:[%s383 + $0x68] sm:$0xff]
        %v398 = vld [vmem:[%s383 + $0x70] sm:$0xff]
        %v399 = vld [vmem:[%s383 + $0x78] sm:$0x3f]
        %v400 = vld [vmem:[%s383 + $0x80] sm:$0xff]
        %v401 = vld [vmem:[%s383 + $0x88] sm:$0xff]
        %v402 = vld [vmem:[%s383 + $0x90] sm:$0xff]
        %v403 = vld [vmem:[%s383 + $0x98] sm:$0x3f]
        %v404 = vld [vmem:[%s383 + $0xa0] sm:$0xff]
        %v405 = vld [vmem:[%s383 + $0xa8] sm:$0xff]
        %v406 = vld [vmem:[%s383 + $0xb0] sm:$0xff]
        %v407 = vld [vmem:[%s383 + $0xb8] sm:$0x3f]
        %v408 = vld [vmem:[%s383 + $0xc0] sm:$0xff]
        %v409 = vld [vmem:[%s383 + $0xc8] sm:$0xff]
        %v410 = vld [vmem:[%s383 + $0xd0] sm:$0xff]
        %v411 = vld [vmem:[%s383 + $0xd8] sm:$0x3f]
        %v412 = vld [vmem:[%s383 + $0xe0] sm:$0xff]
        %v413 = vld [vmem:[%s383 + $0xe8] sm:$0xff]
        %v414 = vld [vmem:[%s383 + $0xf0] sm:$0xff]
        %v415 = vld [vmem:[%s383 + $0xf8] sm:$0x3f]
        %v416 = vld [vmem:[%s383 + $0x100] sm:$0xff]
        %v417 = vld [vmem:[%s383 + $0x108] sm:$0xff]
        %v418 = vld [vmem:[%s383 + $0x110] sm:$0xff]
        %v419 = vld [vmem:[%s383 + $0x118] sm:$0x3f]
        %v420 = vld [vmem:[%s383 + $0x120] sm:$0xff]
        %v421 = vld [vmem:[%s383 + $0x128] sm:$0xff]
        %v422 = vld [vmem:[%s383 + $0x130] sm:$0xff]
        %v423 = vld [vmem:[%s383 + $0x138] sm:$0x3f]
        %v424 = vld [vmem:[%s383 + $0x140] sm:$0xff]
        %v425 = vld [vmem:[%s383 + $0x148] sm:$0xff]
        %v426 = vld [vmem:[%s383 + $0x150] sm:$0xff]
        %v427 = vld [vmem:[%s383 + $0x158] sm:$0x3f]
        %v428 = vld [vmem:[%s383 + $0x160] sm:$0xff]
        %v429 = vld [vmem:[%s383 + $0x168] sm:$0xff]
        %v430 = vld [vmem:[%s383 + $0x170] sm:$0xff]
        %v431 = vld [vmem:[%s383 + $0x178] sm:$0x3f]
        %v432 = vld [vmem:[%s383 + $0x180] sm:$0xff]
        %v433 = vld [vmem:[%s383 + $0x188] sm:$0xff]
        %v434 = vld [vmem:[%s383 + $0x190] sm:$0xff]
        %v435 = vld [vmem:[%s383 + $0x198] sm:$0x3f]
        %v436 = vld [vmem:[%s383 + $0x1a0] sm:$0xff]
        %v437 = vld [vmem:[%s383 + $0x1a8] sm:$0xff]
        %v438 = vld [vmem:[%s383 + $0x1b0] sm:$0xff]
        %v439 = vld [vmem:[%s383 + $0x1b8] sm:$0x3f]
        %v440 = vld [vmem:[%s383 + $0x1c0] sm:$0xff]
        %v441 = vld [vmem:[%s383 + $0x1c8] sm:$0xff]
        %v442 = vld [vmem:[%s383 + $0x1d0] sm:$0xff]
        %v443 = vld [vmem:[%s383 + $0x1d8] sm:$0x3f]
        %v444 = vld [vmem:[%s383 + $0x1e0] sm:$0xff]
        %v445 = vld [vmem:[%s383 + $0x1e8] sm:$0xff]
        %v446 = vld [vmem:[%s383 + $0x1f0] sm:$0xff]
        %v447 = vld [vmem:[%s383 + $0x1f8] sm:$0x3f]
        %v448 = vld [vmem:[%s383 + $0x200] sm:$0xff]
        %v449 = vld [vmem:[%s383 + $0x208] sm:$0xff]
        %v450 = vld [vmem:[%s383 + $0x210] sm:$0xff]
        %v451 = vld [vmem:[%s383 + $0x218] sm:$0x3f]
        %v452 = vld [vmem:[%s383 + $0x220] sm:$0xff]
        %v453 = vld [vmem:[%s383 + $0x228] sm:$0xff]
        %v454 = vld [vmem:[%s383 + $0x230] sm:$0xff]
        %v455 = vld [vmem:[%s383 + $0x238] sm:$0x3f]
        %v456 = vld [vmem:[%s383 + $0x240] sm:$0xff]
        %v457 = vld [vmem:[%s383 + $0x248] sm:$0xff]
        %v458 = vld [vmem:[%s383 + $0x250] sm:$0xff]
        %v459 = vld [vmem:[%s383 + $0x258] sm:$0x3f]
        %v460 = vld [vmem:[%s383 + $0x260] sm:$0xff]
        %v461 = vld [vmem:[%s383 + $0x268] sm:$0xff]
        %v462 = vld [vmem:[%s383 + $0x270] sm:$0xff]
        %v463 = vld [vmem:[%s383 + $0x278] sm:$0x3f]
        %v464 = vld [vmem:[%s383 + $0x280] sm:$0xff]
        %v465 = vld [vmem:[%s383 + $0x288] sm:$0xff]
        %v466 = vld [vmem:[%s383 + $0x290] sm:$0xff]
        %v467 = vld [vmem:[%s383 + $0x298] sm:$0x3f]
        %v468 = vld [vmem:[%s383 + $0x2a0] sm:$0xff]
        %v469 = vld [vmem:[%s383 + $0x2a8] sm:$0xff]
        %v470 = vld [vmem:[%s383 + $0x2b0] sm:$0xff]
        %v471 = vld [vmem:[%s383 + $0x2b8] sm:$0x3f]
        %v472 = vld [vmem:[%s383 + $0x2c0] sm:$0xff]
        %v473 = vld [vmem:[%s383 + $0x2c8] sm:$0xff]
        %v474 = vld [vmem:[%s383 + $0x2d0] sm:$0xff]
        %v475 = vld [vmem:[%s383 + $0x2d8] sm:$0x3f]
        %v476 = vld [vmem:[%s383 + $0x2e0] sm:$0xff]
        %v477 = vld [vmem:[%s383 + $0x2e8] sm:$0xff]
        %v478 = vld [vmem:[%s383 + $0x2f0] sm:$0xff]
        %v479 = vld [vmem:[%s383 + $0x2f8] sm:$0x3f]
        %v480 = vld [vmem:[%s383 + $0x300] sm:$0xff]
        %v481 = vld [vmem:[%s383 + $0x308] sm:$0xff]
        %v482 = vld [vmem:[%s383 + $0x310] sm:$0xff]
        %v483 = vld [vmem:[%s383 + $0x318] sm:$0x3f]
        %v484 = vld [vmem:[%s383 + $0x320] sm:$0xff]
        %v485 = vld [vmem:[%s383 + $0x328] sm:$0xff]
        %v486 = vld [vmem:[%s383 + $0x330] sm:$0xff]
        %v487 = vld [vmem:[%s383 + $0x338] sm:$0x3f]
        %v488 = vld [vmem:[%s383 + $0x340] sm:$0xff]
        %v489 = vld [vmem:[%s383 + $0x348] sm:$0xff]
        %v490 = vld [vmem:[%s383 + $0x350] sm:$0xff]
        %v491 = vld [vmem:[%s383 + $0x358] sm:$0x3f]
        %v492 = vld [vmem:[%s383 + $0x360] sm:$0xff]
        %v493 = vld [vmem:[%s383 + $0x368] sm:$0xff]
        %v494 = vld [vmem:[%s383 + $0x370] sm:$0xff]
        %v495 = vld [vmem:[%s383 + $0x378] sm:$0x3f]
        %v496 = vld [vmem:[%s383 + $0x380] sm:$0xff]
        %v497 = vld [vmem:[%s383 + $0x388] sm:$0xff]
        %v498 = vld [vmem:[%s383 + $0x390] sm:$0xff]
        %v499 = vld [vmem:[%s383 + $0x398] sm:$0x3f]
        %v500 = vld [vmem:[%s383 + $0x3a0] sm:$0xff]
        %v501 = vld [vmem:[%s383 + $0x3a8] sm:$0xff]
        %v502 = vld [vmem:[%s383 + $0x3b0] sm:$0xff]
        %v503 = vld [vmem:[%s383 + $0x3b8] sm:$0x3f]
        %v504 = vld [vmem:[%s1] sm:$0xff]
        %v505 = vld [vmem:[%s1 + $0x8] sm:$0x1]
        %507 = vset.pattern.permute.xlu0 0
        %508 = vperm.xlu0 %507, %v384
        %v509 = vpop.permute.xlu0 %508
        %512 = vset.pattern.permute.xlu0 0
        %513 = vperm.xlu0 %512, %v385
        %v514 = vpop.permute.xlu0 %513
        %517 = vset.pattern.permute.xlu0 0
        %518 = vperm.xlu0 %517, %v386
        %v519 = vpop.permute.xlu0 %518
        %522 = vset.pattern.permute.xlu0 0
        %523 = vperm.xlu0 %522, %v387
        %v524 = vpop.permute.xlu0 %523
        %527 = vset.pattern.permute.xlu0 0
        %528 = vperm.xlu0 %527, %v388
        %v529 = vpop.permute.xlu0 %528
        %532 = vset.pattern.permute.xlu0 0
        %533 = vperm.xlu0 %532, %v389
        %v534 = vpop.permute.xlu0 %533
        %537 = vset.pattern.permute.xlu0 0
        %538 = vperm.xlu0 %537, %v390
        %v539 = vpop.permute.xlu0 %538
        %542 = vset.pattern.permute.xlu0 0
        %543 = vperm.xlu0 %542, %v391
        %v544 = vpop.permute.xlu0 %543
        %547 = vset.pattern.permute.xlu0 0
        %548 = vperm.xlu0 %547, %v392
        %v549 = vpop.permute.xlu0 %548
        %552 = vset.pattern.permute.xlu0 0
        %553 = vperm.xlu0 %552, %v393
        %v554 = vpop.permute.xlu0 %553
        %557 = vset.pattern.permute.xlu0 0
        %558 = vperm.xlu0 %557, %v394
        %v559 = vpop.permute.xlu0 %558
        %562 = vset.pattern.permute.xlu0 0
        %563 = vperm.xlu0 %562, %v395
        %v564 = vpop.permute.xlu0 %563
        %567 = vset.pattern.permute.xlu0 0
        %568 = vperm.xlu0 %567, %v396
        %v569 = vpop.permute.xlu0 %568
        %572 = vset.pattern.permute.xlu0 0
        %573 = vperm.xlu0 %572, %v397
        %v574 = vpop.permute.xlu0 %573
        %577 = vset.pattern.permute.xlu0 0
        %578 = vperm.xlu0 %577, %v398
        %v579 = vpop.permute.xlu0 %578
        %582 = vset.pattern.permute.xlu0 0
        %583 = vperm.xlu0 %582, %v399
        %v584 = vpop.permute.xlu0 %583
        %587 = vset.pattern.permute.xlu0 0
        %588 = vperm.xlu0 %587, %v400
        %v589 = vpop.permute.xlu0 %588
        %592 = vset.pattern.permute.xlu0 0
        %593 = vperm.xlu0 %592, %v401
        %v594 = vpop.permute.xlu0 %593
        %597 = vset.pattern.permute.xlu0 0
        %598 = vperm.xlu0 %597, %v402
        %v599 = vpop.permute.xlu0 %598
        %602 = vset.pattern.permute.xlu0 0
        %603 = vperm.xlu0 %602, %v403
        %v604 = vpop.permute.xlu0 %603
        %607 = vset.pattern.permute.xlu0 0
        %608 = vperm.xlu0 %607, %v404
        %v609 = vpop.permute.xlu0 %608
        %612 = vset.pattern.permute.xlu0 0
        %613 = vperm.xlu0 %612, %v405
        %v614 = vpop.permute.xlu0 %613
        %617 = vset.pattern.permute.xlu0 0
        %618 = vperm.xlu0 %617, %v406
        %v619 = vpop.permute.xlu0 %618
        %622 = vset.pattern.permute.xlu0 0
        %623 = vperm.xlu0 %622, %v407
        %v624 = vpop.permute.xlu0 %623
        %627 = vset.pattern.permute.xlu0 0
        %628 = vperm.xlu0 %627, %v408
        %v629 = vpop.permute.xlu0 %628
        %632 = vset.pattern.permute.xlu0 0
        %633 = vperm.xlu0 %632, %v409
        %v634 = vpop.permute.xlu0 %633
        %637 = vset.pattern.permute.xlu0 0
        %638 = vperm.xlu0 %637, %v410
        %v639 = vpop.permute.xlu0 %638
        %642 = vset.pattern.permute.xlu0 0
        %643 = vperm.xlu0 %642, %v411
        %v644 = vpop.permute.xlu0 %643
        %647 = vset.pattern.permute.xlu0 0
        %648 = vperm.xlu0 %647, %v412
        %v649 = vpop.permute.xlu0 %648
        %652 = vset.pattern.permute.xlu0 0
        %653 = vperm.xlu0 %652, %v413
        %v654 = vpop.permute.xlu0 %653
        %657 = vset.pattern.permute.xlu0 0
        %658 = vperm.xlu0 %657, %v414
        %v659 = vpop.permute.xlu0 %658
        %662 = vset.pattern.permute.xlu0 0
        %663 = vperm.xlu0 %662, %v415
        %v664 = vpop.permute.xlu0 %663
        %667 = vset.pattern.permute.xlu0 0
        %668 = vperm.xlu0 %667, %v416
        %v669 = vpop.permute.xlu0 %668
        %672 = vset.pattern.permute.xlu0 0
        %673 = vperm.xlu0 %672, %v417
        %v674 = vpop.permute.xlu0 %673
        %677 = vset.pattern.permute.xlu0 0
        %678 = vperm.xlu0 %677, %v418
        %v679 = vpop.permute.xlu0 %678
        %682 = vset.pattern.permute.xlu0 0
        %683 = vperm.xlu0 %682, %v419
        %v684 = vpop.permute.xlu0 %683
        %687 = vset.pattern.permute.xlu0 0
        %688 = vperm.xlu0 %687, %v420
        %v689 = vpop.permute.xlu0 %688
        %692 = vset.pattern.permute.xlu0 0
        %693 = vperm.xlu0 %692, %v421
        %v694 = vpop.permute.xlu0 %693
        %697 = vset.pattern.permute.xlu0 0
        %698 = vperm.xlu0 %697, %v422
        %v699 = vpop.permute.xlu0 %698
        %702 = vset.pattern.permute.xlu0 0
        %703 = vperm.xlu0 %702, %v423
        %v704 = vpop.permute.xlu0 %703
        %707 = vset.pattern.permute.xlu0 0
        %708 = vperm.xlu0 %707, %v424
        %v709 = vpop.permute.xlu0 %708
        %712 = vset.pattern.permute.xlu0 0
        %713 = vperm.xlu0 %712, %v425
        %v714 = vpop.permute.xlu0 %713
        %717 = vset.pattern.permute.xlu0 0
        %718 = vperm.xlu0 %717, %v426
        %v719 = vpop.permute.xlu0 %718
        %722 = vset.pattern.permute.xlu0 0
        %723 = vperm.xlu0 %722, %v427
        %v724 = vpop.permute.xlu0 %723
        %727 = vset.pattern.permute.xlu0 0
        %728 = vperm.xlu0 %727, %v428
        %v729 = vpop.permute.xlu0 %728
        %732 = vset.pattern.permute.xlu0 0
        %733 = vperm.xlu0 %732, %v429
        %v734 = vpop.permute.xlu0 %733
        %737 = vset.pattern.permute.xlu0 0
        %738 = vperm.xlu0 %737, %v430
        %v739 = vpop.permute.xlu0 %738
        %742 = vset.pattern.permute.xlu0 0
        %743 = vperm.xlu0 %742, %v431
        %v744 = vpop.permute.xlu0 %743
        %747 = vset.pattern.permute.xlu0 0
        %748 = vperm.xlu0 %747, %v432
        %v749 = vpop.permute.xlu0 %748
        %752 = vset.pattern.permute.xlu0 0
        %753 = vperm.xlu0 %752, %v433
        %v754 = vpop.permute.xlu0 %753
        %757 = vset.pattern.permute.xlu0 0
        %758 = vperm.xlu0 %757, %v434
        %v759 = vpop.permute.xlu0 %758
        %762 = vset.pattern.permute.xlu0 0
        %763 = vperm.xlu0 %762, %v435
        %v764 = vpop.permute.xlu0 %763
        %767 = vset.pattern.permute.xlu0 0
        %768 = vperm.xlu0 %767, %v436
        %v769 = vpop.permute.xlu0 %768
        %772 = vset.pattern.permute.xlu0 0
        %773 = vperm.xlu0 %772, %v437
        %v774 = vpop.permute.xlu0 %773
        %777 = vset.pattern.permute.xlu0 0
        %778 = vperm.xlu0 %777, %v438
        %v779 = vpop.permute.xlu0 %778
        %782 = vset.pattern.permute.xlu0 0
        %783 = vperm.xlu0 %782, %v439
        %v784 = vpop.permute.xlu0 %783
        %787 = vset.pattern.permute.xlu0 0
        %788 = vperm.xlu0 %787, %v440
        %v789 = vpop.permute.xlu0 %788
        %792 = vset.pattern.permute.xlu0 0
        %793 = vperm.xlu0 %792, %v441
        %v794 = vpop.permute.xlu0 %793
        %797 = vset.pattern.permute.xlu0 0
        %798 = vperm.xlu0 %797, %v442
        %v799 = vpop.permute.xlu0 %798
        %802 = vset.pattern.permute.xlu0 0
        %803 = vperm.xlu0 %802, %v443
        %v804 = vpop.permute.xlu0 %803
        %807 = vset.pattern.permute.xlu0 0
        %808 = vperm.xlu0 %807, %v444
        %v809 = vpop.permute.xlu0 %808
        %812 = vset.pattern.permute.xlu0 0
        %813 = vperm.xlu0 %812, %v445
        %v814 = vpop.permute.xlu0 %813
        %817 = vset.pattern.permute.xlu0 0
        %818 = vperm.xlu0 %817, %v446
        %v819 = vpop.permute.xlu0 %818
        %822 = vset.pattern.permute.xlu0 0
        %823 = vperm.xlu0 %822, %v447
        %v824 = vpop.permute.xlu0 %823
        %827 = vset.pattern.permute.xlu0 0
        %828 = vperm.xlu0 %827, %v448
        %v829 = vpop.permute.xlu0 %828
        %832 = vset.pattern.permute.xlu0 0
        %833 = vperm.xlu0 %832, %v449
        %v834 = vpop.permute.xlu0 %833
        %837 = vset.pattern.permute.xlu0 0
        %838 = vperm.xlu0 %837, %v450
        %v839 = vpop.permute.xlu0 %838
        %842 = vset.pattern.permute.xlu0 0
        %843 = vperm.xlu0 %842, %v451
        %v844 = vpop.permute.xlu0 %843
        %847 = vset.pattern.permute.xlu0 0
        %848 = vperm.xlu0 %847, %v452
        %v849 = vpop.permute.xlu0 %848
        %852 = vset.pattern.permute.xlu0 0
        %853 = vperm.xlu0 %852, %v453
        %v854 = vpop.permute.xlu0 %853
        %857 = vset.pattern.permute.xlu0 0
        %858 = vperm.xlu0 %857, %v454
        %v859 = vpop.permute.xlu0 %858
        %862 = vset.pattern.permute.xlu0 0
        %863 = vperm.xlu0 %862, %v455
        %v864 = vpop.permute.xlu0 %863
        %867 = vset.pattern.permute.xlu0 0
        %868 = vperm.xlu0 %867, %v456
        %v869 = vpop.permute.xlu0 %868
        %872 = vset.pattern.permute.xlu0 0
        %873 = vperm.xlu0 %872, %v457
        %v874 = vpop.permute.xlu0 %873
        %877 = vset.pattern.permute.xlu0 0
        %878 = vperm.xlu0 %877, %v458
        %v879 = vpop.permute.xlu0 %878
        %882 = vset.pattern.permute.xlu0 0
        %883 = vperm.xlu0 %882, %v459
        %v884 = vpop.permute.xlu0 %883
        %887 = vset.pattern.permute.xlu0 0
        %888 = vperm.xlu0 %887, %v460
        %v889 = vpop.permute.xlu0 %888
        %892 = vset.pattern.permute.xlu0 0
        %893 = vperm.xlu0 %892, %v461
        %v894 = vpop.permute.xlu0 %893
        %897 = vset.pattern.permute.xlu0 0
        %898 = vperm.xlu0 %897, %v462
        %v899 = vpop.permute.xlu0 %898
        %902 = vset.pattern.permute.xlu0 0
        %903 = vperm.xlu0 %902, %v463
        %v904 = vpop.permute.xlu0 %903
        %907 = vset.pattern.permute.xlu0 0
        %908 = vperm.xlu0 %907, %v464
        %v909 = vpop.permute.xlu0 %908
        %912 = vset.pattern.permute.xlu0 0
        %913 = vperm.xlu0 %912, %v465
        %v914 = vpop.permute.xlu0 %913
        %917 = vset.pattern.permute.xlu0 0
        %918 = vperm.xlu0 %917, %v466
        %v919 = vpop.permute.xlu0 %918
        %922 = vset.pattern.permute.xlu0 0
        %923 = vperm.xlu0 %922, %v467
        %v924 = vpop.permute.xlu0 %923
        %927 = vset.pattern.permute.xlu0 0
        %928 = vperm.xlu0 %927, %v468
        %v929 = vpop.permute.xlu0 %928
        %932 = vset.pattern.permute.xlu0 0
        %933 = vperm.xlu0 %932, %v469
        %v934 = vpop.permute.xlu0 %933
        %937 = vset.pattern.permute.xlu0 0
        %938 = vperm.xlu0 %937, %v470
        %v939 = vpop.permute.xlu0 %938
        %942 = vset.pattern.permute.xlu0 0
        %943 = vperm.xlu0 %942, %v471
        %v944 = vpop.permute.xlu0 %943
        %947 = vset.pattern.permute.xlu0 0
        %948 = vperm.xlu0 %947, %v472
        %v949 = vpop.permute.xlu0 %948
        %952 = vset.pattern.permute.xlu0 0
        %953 = vperm.xlu0 %952, %v473
        %v954 = vpop.permute.xlu0 %953
        %957 = vset.pattern.permute.xlu0 0
        %958 = vperm.xlu0 %957, %v474
        %v959 = vpop.permute.xlu0 %958
        %962 = vset.pattern.permute.xlu0 0
        %963 = vperm.xlu0 %962, %v475
        %v964 = vpop.permute.xlu0 %963
        %967 = vset.pattern.permute.xlu0 0
        %968 = vperm.xlu0 %967, %v476
        %v969 = vpop.permute.xlu0 %968
        %972 = vset.pattern.permute.xlu0 0
        %973 = vperm.xlu0 %972, %v477
        %v974 = vpop.permute.xlu0 %973
        %977 = vset.pattern.permute.xlu0 0
        %978 = vperm.xlu0 %977, %v478
        %v979 = vpop.permute.xlu0 %978
        %982 = vset.pattern.permute.xlu0 0
        %983 = vperm.xlu0 %982, %v479
        %v984 = vpop.permute.xlu0 %983
        %987 = vset.pattern.permute.xlu0 0
        %988 = vperm.xlu0 %987, %v480
        %v989 = vpop.permute.xlu0 %988
        %992 = vset.pattern.permute.xlu0 0
        %993 = vperm.xlu0 %992, %v481
        %v994 = vpop.permute.xlu0 %993
        %997 = vset.pattern.permute.xlu0 0
        %998 = vperm.xlu0 %997, %v482
        %v999 = vpop.permute.xlu0 %998
        %1002 = vset.pattern.permute.xlu0 0
        %1003 = vperm.xlu0 %1002, %v483
        %v1004 = vpop.permute.xlu0 %1003
        %1007 = vset.pattern.permute.xlu0 0
        %1008 = vperm.xlu0 %1007, %v484
        %v1009 = vpop.permute.xlu0 %1008
        %1012 = vset.pattern.permute.xlu0 0
        %1013 = vperm.xlu0 %1012, %v485
        %v1014 = vpop.permute.xlu0 %1013
        %1017 = vset.pattern.permute.xlu0 0
        %1018 = vperm.xlu0 %1017, %v486
        %v1019 = vpop.permute.xlu0 %1018
        %1022 = vset.pattern.permute.xlu0 0
        %1023 = vperm.xlu0 %1022, %v487
        %v1024 = vpop.permute.xlu0 %1023
        %1027 = vset.pattern.permute.xlu0 0
        %1028 = vperm.xlu0 %1027, %v488
        %v1029 = vpop.permute.xlu0 %1028
        %1032 = vset.pattern.permute.xlu0 0
        %1033 = vperm.xlu0 %1032, %v489
        %v1034 = vpop.permute.xlu0 %1033
        %1037 = vset.pattern.permute.xlu0 0
        %1038 = vperm.xlu0 %1037, %v490
        %v1039 = vpop.permute.xlu0 %1038
        %1042 = vset.pattern.permute.xlu0 0
        %1043 = vperm.xlu0 %1042, %v491
        %v1044 = vpop.permute.xlu0 %1043
        %1047 = vset.pattern.permute.xlu0 0
        %1048 = vperm.xlu0 %1047, %v492
        %v1049 = vpop.permute.xlu0 %1048
        %1052 = vset.pattern.permute.xlu0 0
        %1053 = vperm.xlu0 %1052, %v493
        %v1054 = vpop.permute.xlu0 %1053
        %1057 = vset.pattern.permute.xlu0 0
        %1058 = vperm.xlu0 %1057, %v494
        %v1059 = vpop.permute.xlu0 %1058
        %1062 = vset.pattern.permute.xlu0 0
        %1063 = vperm.xlu0 %1062, %v495
        %v1064 = vpop.permute.xlu0 %1063
        %v1066 = vlaneseq
        %v1067 = vshrl.u32 %v1066, 7
        %v1068 = vsub.s32 0, %v1067
        %v1069 = vrot.slane %v504, %v1068
        %v1070 = vmul.f32 %v509, %v1069
        %v1071 = vmul.f32 %v514, %v1069
        %v1072 = vmul.f32 %v519, %v1069
        %v1073 = vmul.f32 %v524, %v1069
        %v1074 = vmul.f32 %v529, %v1069
        %v1075 = vmul.f32 %v534, %v1069
        %v1076 = vmul.f32 %v539, %v1069
        %v1077 = vmul.f32 %v544, %v1069
        %v1078 = vmul.f32 %v549, %v1069
        %v1079 = vmul.f32 %v554, %v1069
        %v1080 = vmul.f32 %v559, %v1069
        %v1081 = vmul.f32 %v564, %v1069
        %v1082 = vmul.f32 %v569, %v1069
        %v1083 = vmul.f32 %v574, %v1069
        %v1084 = vmul.f32 %v579, %v1069
        %v1085 = vmul.f32 %v584, %v1069
        %v1086 = vmul.f32 %v589, %v1069
        %v1087 = vmul.f32 %v594, %v1069
        %v1088 = vmul.f32 %v599, %v1069
        %v1089 = vmul.f32 %v604, %v1069
        %v1090 = vmul.f32 %v609, %v1069
        %v1091 = vmul.f32 %v614, %v1069
        %v1092 = vmul.f32 %v619, %v1069
        %v1093 = vmul.f32 %v624, %v1069
        %v1094 = vmul.f32 %v629, %v1069
        %v1095 = vmul.f32 %v634, %v1069
        %v1096 = vmul.f32 %v639, %v1069
        %v1097 = vmul.f32 %v644, %v1069
        %v1098 = vmul.f32 %v649, %v1069
        %v1099 = vmul.f32 %v654, %v1069
        %v1100 = vmul.f32 %v659, %v1069
        %v1101 = vmul.f32 %v664, %v1069
        %v1102 = vmul.f32 %v669, %v1069
        %v1103 = vmul.f32 %v674, %v1069
        %v1104 = vmul.f32 %v679, %v1069
        %v1105 = vmul.f32 %v684, %v1069
        %v1106 = vmul.f32 %v689, %v1069
        %v1107 = vmul.f32 %v694, %v1069
        %v1108 = vmul.f32 %v699, %v1069
        %v1109 = vmul.f32 %v704, %v1069
        %v1110 = vmul.f32 %v709, %v1069
        %v1111 = vmul.f32 %v714, %v1069
        %v1112 = vmul.f32 %v719, %v1069
        %v1113 = vmul.f32 %v724, %v1069
        %v1114 = vmul.f32 %v729, %v1069
        %v1115 = vmul.f32 %v734, %v1069
        %v1116 = vmul.f32 %v739, %v1069
        %v1117 = vmul.f32 %v744, %v1069
        %v1118 = vmul.f32 %v749, %v1069
        %v1119 = vmul.f32 %v754, %v1069
        %v1120 = vmul.f32 %v759, %v1069
        %v1121 = vmul.f32 %v764, %v1069
        %v1122 = vmul.f32 %v769, %v1069
        %v1123 = vmul.f32 %v774, %v1069
        %v1124 = vmul.f32 %v779, %v1069
        %v1125 = vmul.f32 %v784, %v1069
        %v1126 = vmul.f32 %v789, %v1069
        %v1127 = vmul.f32 %v794, %v1069
        %v1128 = vmul.f32 %v799, %v1069
        %v1129 = vmul.f32 %v804, %v1069
        %v1130 = vmul.f32 %v809, %v1069
        %v1131 = vmul.f32 %v814, %v1069
        %v1132 = vmul.f32 %v819, %v1069
        %v1133 = vmul.f32 %v824, %v1069
        %v1134 = vmul.f32 %v829, %v1069
        %v1135 = vmul.f32 %v834, %v1069
        %v1136 = vmul.f32 %v839, %v1069
        %v1137 = vmul.f32 %v844, %v1069
        %v1138 = vmul.f32 %v849, %v1069
        %v1139 = vmul.f32 %v854, %v1069
        %v1140 = vmul.f32 %v859, %v1069
        %v1141 = vmul.f32 %v864, %v1069
        %v1142 = vmul.f32 %v869, %v1069
        %v1143 = vmul.f32 %v874, %v1069
        %v1144 = vmul.f32 %v879, %v1069
        %v1145 = vmul.f32 %v884, %v1069
        %v1146 = vmul.f32 %v889, %v1069
        %v1147 = vmul.f32 %v894, %v1069
        %v1148 = vmul.f32 %v899, %v1069
        %v1149 = vmul.f32 %v904, %v1069
        %v1150 = vmul.f32 %v909, %v1069
        %v1151 = vmul.f32 %v914, %v1069
        %v1152 = vmul.f32 %v919, %v1069
        %v1153 = vmul.f32 %v924, %v1069
        %v1154 = vmul.f32 %v929, %v1069
        %v1155 = vmul.f32 %v934, %v1069
        %v1156 = vmul.f32 %v939, %v1069
        %v1157 = vmul.f32 %v944, %v1069
        %v1158 = vmul.f32 %v949, %v1069
        %v1159 = vmul.f32 %v954, %v1069
        %v1160 = vmul.f32 %v959, %v1069
        %v1161 = vmul.f32 %v964, %v1069
        %v1162 = vmul.f32 %v969, %v1069
        %v1163 = vmul.f32 %v974, %v1069
        %v1164 = vmul.f32 %v979, %v1069
        %v1165 = vmul.f32 %v984, %v1069
        %v1166 = vmul.f32 %v989, %v1069
        %v1167 = vmul.f32 %v994, %v1069
        %v1168 = vmul.f32 %v999, %v1069
        %v1169 = vmul.f32 %v1004, %v1069
        %v1170 = vmul.f32 %v1009, %v1069
        %v1171 = vmul.f32 %v1014, %v1069
        %v1172 = vmul.f32 %v1019, %v1069
        %v1173 = vmul.f32 %v1024, %v1069
        %v1174 = vmul.f32 %v1029, %v1069
        %v1175 = vmul.f32 %v1034, %v1069
        %v1176 = vmul.f32 %v1039, %v1069
        %v1177 = vmul.f32 %v1044, %v1069
        %v1178 = vmul.f32 %v1049, %v1069
        %v1179 = vmul.f32 %v1054, %v1069
        %v1180 = vmul.f32 %v1059, %v1069
        %v1181 = vmul.f32 %v1064, %v1069
        %v1182 = vadd.f32 %v1070, 0.0
        %v1183 = vadd.f32 %v1071, 0.0
        %v1184 = vadd.f32 %v1072, 0.0
        %v1185 = vadd.f32 %v1073, 0.0
        %v1186 = vadd.f32 %v1074, 0.0
        %v1187 = vadd.f32 %v1075, 0.0
        %v1188 = vadd.f32 %v1076, 0.0
        %v1189 = vadd.f32 %v1077, 0.0
        %v1190 = vadd.f32 %v1078, 0.0
        %v1191 = vadd.f32 %v1079, 0.0
        %v1192 = vadd.f32 %v1080, 0.0
        %v1193 = vadd.f32 %v1081, 0.0
        %v1194 = vadd.f32 %v1082, 0.0
        %v1195 = vadd.f32 %v1083, 0.0
        %v1196 = vadd.f32 %v1084, 0.0
        %v1197 = vadd.f32 %v1085, 0.0
        %v1198 = vadd.f32 %v1086, 0.0
        %v1199 = vadd.f32 %v1087, 0.0
        %v1200 = vadd.f32 %v1088, 0.0
        %v1201 = vadd.f32 %v1089, 0.0
        %v1202 = vadd.f32 %v1090, 0.0
        %v1203 = vadd.f32 %v1091, 0.0
        %v1204 = vadd.f32 %v1092, 0.0
        %v1205 = vadd.f32 %v1093, 0.0
        %v1206 = vadd.f32 %v1094, 0.0
        %v1207 = vadd.f32 %v1095, 0.0
        %v1208 = vadd.f32 %v1096, 0.0
        %v1209 = vadd.f32 %v1097, 0.0
        %v1210 = vadd.f32 %v1098, 0.0
        %v1211 = vadd.f32 %v1099, 0.0
        %v1212 = vadd.f32 %v1100, 0.0
        %v1213 = vadd.f32 %v1101, 0.0
        %v1214 = vadd.f32 %v1102, 0.0
        %v1215 = vadd.f32 %v1103, 0.0
        %v1216 = vadd.f32 %v1104, 0.0
        %v1217 = vadd.f32 %v1105, 0.0
        %v1218 = vadd.f32 %v1106, 0.0
        %v1219 = vadd.f32 %v1107, 0.0
        %v1220 = vadd.f32 %v1108, 0.0
        %v1221 = vadd.f32 %v1109, 0.0
        %v1222 = vadd.f32 %v1110, 0.0
        %v1223 = vadd.f32 %v1111, 0.0
        %v1224 = vadd.f32 %v1112, 0.0
        %v1225 = vadd.f32 %v1113, 0.0
        %v1226 = vadd.f32 %v1114, 0.0
        %v1227 = vadd.f32 %v1115, 0.0
        %v1228 = vadd.f32 %v1116, 0.0
        %v1229 = vadd.f32 %v1117, 0.0
        %v1230 = vadd.f32 %v1118, 0.0
        %v1231 = vadd.f32 %v1119, 0.0
        %v1232 = vadd.f32 %v1120, 0.0
        %v1233 = vadd.f32 %v1121, 0.0
        %v1234 = vadd.f32 %v1122, 0.0
        %v1235 = vadd.f32 %v1123, 0.0
        %v1236 = vadd.f32 %v1124, 0.0
        %v1237 = vadd.f32 %v1125, 0.0
        %v1238 = vadd.f32 %v1126, 0.0
        %v1239 = vadd.f32 %v1127, 0.0
        %v1240 = vadd.f32 %v1128, 0.0
        %v1241 = vadd.f32 %v1129, 0.0
        %v1242 = vadd.f32 %v1130, 0.0
        %v1243 = vadd.f32 %v1131, 0.0
        %v1244 = vadd.f32 %v1132, 0.0
        %v1245 = vadd.f32 %v1133, 0.0
        %v1246 = vadd.f32 %v1134, 0.0
        %v1247 = vadd.f32 %v1135, 0.0
        %v1248 = vadd.f32 %v1136, 0.0
        %v1249 = vadd.f32 %v1137, 0.0
        %v1250 = vadd.f32 %v1138, 0.0
        %v1251 = vadd.f32 %v1139, 0.0
        %v1252 = vadd.f32 %v1140, 0.0
        %v1253 = vadd.f32 %v1141, 0.0
        %v1254 = vadd.f32 %v1142, 0.0
        %v1255 = vadd.f32 %v1143, 0.0
        %v1256 = vadd.f32 %v1144, 0.0
        %v1257 = vadd.f32 %v1145, 0.0
        %v1258 = vadd.f32 %v1146, 0.0
        %v1259 = vadd.f32 %v1147, 0.0
        %v1260 = vadd.f32 %v1148, 0.0
        %v1261 = vadd.f32 %v1149, 0.0
        %v1262 = vadd.f32 %v1150, 0.0
        %v1263 = vadd.f32 %v1151, 0.0
        %v1264 = vadd.f32 %v1152, 0.0
        %v1265 = vadd.f32 %v1153, 0.0
        %v1266 = vadd.f32 %v1154, 0.0
        %v1267 = vadd.f32 %v1155, 0.0
        %v1268 = vadd.f32 %v1156, 0.0
        %v1269 = vadd.f32 %v1157, 0.0
        %v1270 = vadd.f32 %v1158, 0.0
        %v1271 = vadd.f32 %v1159, 0.0
        %v1272 = vadd.f32 %v1160, 0.0
        %v1273 = vadd.f32 %v1161, 0.0
        %v1274 = vadd.f32 %v1162, 0.0
        %v1275 = vadd.f32 %v1163, 0.0
        %v1276 = vadd.f32 %v1164, 0.0
        %v1277 = vadd.f32 %v1165, 0.0
        %v1278 = vadd.f32 %v1166, 0.0
        %v1279 = vadd.f32 %v1167, 0.0
        %v1280 = vadd.f32 %v1168, 0.0
        %v1281 = vadd.f32 %v1169, 0.0
        %v1282 = vadd.f32 %v1170, 0.0
        %v1283 = vadd.f32 %v1171, 0.0
        %v1284 = vadd.f32 %v1172, 0.0
        %v1285 = vadd.f32 %v1173, 0.0
        %v1286 = vadd.f32 %v1174, 0.0
        %v1287 = vadd.f32 %v1175, 0.0
        %v1288 = vadd.f32 %v1176, 0.0
        %v1289 = vadd.f32 %v1177, 0.0
        %v1290 = vadd.f32 %v1178, 0.0
        %v1291 = vadd.f32 %v1179, 0.0
        %v1292 = vadd.f32 %v1180, 0.0
        %v1293 = vadd.f32 %v1181, 0.0
        %v1294 = vlaneseq
        %v1295 = vshrl.u32 %v1294, 7
        %v1296 = vsub.s32 1, %v1295
        %v1297 = vrot.slane %v504, %v1296
        %v1298 = vmul.f32 %v509, %v1297
        %v1299 = vmul.f32 %v514, %v1297
        %v1300 = vmul.f32 %v519, %v1297
        %v1301 = vmul.f32 %v524, %v1297
        %v1302 = vmul.f32 %v529, %v1297
        %v1303 = vmul.f32 %v534, %v1297
        %v1304 = vmul.f32 %v539, %v1297
        %v1305 = vmul.f32 %v544, %v1297
        %v1306 = vmul.f32 %v549, %v1297
        %v1307 = vmul.f32 %v554, %v1297
        %v1308 = vmul.f32 %v559, %v1297
        %v1309 = vmul.f32 %v564, %v1297
        %v1310 = vmul.f32 %v569, %v1297
        %v1311 = vmul.f32 %v574, %v1297
        %v1312 = vmul.f32 %v579, %v1297
        %v1313 = vmul.f32 %v584, %v1297
        %v1314 = vmul.f32 %v589, %v1297
        %v1315 = vmul.f32 %v594, %v1297
        %v1316 = vmul.f32 %v599, %v1297
        %v1317 = vmul.f32 %v604, %v1297
        %v1318 = vmul.f32 %v609, %v1297
        %v1319 = vmul.f32 %v614, %v1297
        %v1320 = vmul.f32 %v619, %v1297
        %v1321 = vmul.f32 %v624, %v1297
        %v1322 = vmul.f32 %v629, %v1297
        %v1323 = vmul.f32 %v634, %v1297
        %v1324 = vmul.f32 %v639, %v1297
        %v1325 = vmul.f32 %v644, %v1297
        %v1326 = vmul.f32 %v649, %v1297
        %v1327 = vmul.f32 %v654, %v1297
        %v1328 = vmul.f32 %v659, %v1297
        %v1329 = vmul.f32 %v664, %v1297
        %v1330 = vmul.f32 %v669, %v1297
        %v1331 = vmul.f32 %v674, %v1297
        %v1332 = vmul.f32 %v679, %v1297
        %v1333 = vmul.f32 %v684, %v1297
        %v1334 = vmul.f32 %v689, %v1297
        %v1335 = vmul.f32 %v694, %v1297
        %v1336 = vmul.f32 %v699, %v1297
        %v1337 = vmul.f32 %v704, %v1297
        %v1338 = vmul.f32 %v709, %v1297
        %v1339 = vmul.f32 %v714, %v1297
        %v1340 = vmul.f32 %v719, %v1297
        %v1341 = vmul.f32 %v724, %v1297
        %v1342 = vmul.f32 %v729, %v1297
        %v1343 = vmul.f32 %v734, %v1297
        %v1344 = vmul.f32 %v739, %v1297
        %v1345 = vmul.f32 %v744, %v1297
        %v1346 = vmul.f32 %v749, %v1297
        %v1347 = vmul.f32 %v754, %v1297
        %v1348 = vmul.f32 %v759, %v1297
        %v1349 = vmul.f32 %v764, %v1297
        %v1350 = vmul.f32 %v769, %v1297
        %v1351 = vmul.f32 %v774, %v1297
        %v1352 = vmul.f32 %v779, %v1297
        %v1353 = vmul.f32 %v784, %v1297
        %v1354 = vmul.f32 %v789, %v1297
        %v1355 = vmul.f32 %v794, %v1297
        %v1356 = vmul.f32 %v799, %v1297
        %v1357 = vmul.f32 %v804, %v1297
        %v1358 = vmul.f32 %v809, %v1297
        %v1359 = vmul.f32 %v814, %v1297
        %v1360 = vmul.f32 %v819, %v1297
        %v1361 = vmul.f32 %v824, %v1297
        %v1362 = vmul.f32 %v829, %v1297
        %v1363 = vmul.f32 %v834, %v1297
        %v1364 = vmul.f32 %v839, %v1297
        %v1365 = vmul.f32 %v844, %v1297
        %v1366 = vmul.f32 %v849, %v1297
        %v1367 = vmul.f32 %v854, %v1297
        %v1368 = vmul.f32 %v859, %v1297
        %v1369 = vmul.f32 %v864, %v1297
        %v1370 = vmul.f32 %v869, %v1297
        %v1371 = vmul.f32 %v874, %v1297
        %v1372 = vmul.f32 %v879, %v1297
        %v1373 = vmul.f32 %v884, %v1297
        %v1374 = vmul.f32 %v889, %v1297
        %v1375 = vmul.f32 %v894, %v1297
        %v1376 = vmul.f32 %v899, %v1297
        %v1377 = vmul.f32 %v904, %v1297
        %v1378 = vmul.f32 %v909, %v1297
        %v1379 = vmul.f32 %v914, %v1297
        %v1380 = vmul.f32 %v919, %v1297
        %v1381 = vmul.f32 %v924, %v1297
        %v1382 = vmul.f32 %v929, %v1297
        %v1383 = vmul.f32 %v934, %v1297
        %v1384 = vmul.f32 %v939, %v1297
        %v1385 = vmul.f32 %v944, %v1297
        %v1386 = vmul.f32 %v949, %v1297
        %v1387 = vmul.f32 %v954, %v1297
        %v1388 = vmul.f32 %v959, %v1297
        %v1389 = vmul.f32 %v964, %v1297
        %v1390 = vmul.f32 %v969, %v1297
        %v1391 = vmul.f32 %v974, %v1297
        %v1392 = vmul.f32 %v979, %v1297
        %v1393 = vmul.f32 %v984, %v1297
        %v1394 = vmul.f32 %v989, %v1297
        %v1395 = vmul.f32 %v994, %v1297
        %v1396 = vmul.f32 %v999, %v1297
        %v1397 = vmul.f32 %v1004, %v1297
        %v1398 = vmul.f32 %v1009, %v1297
        %v1399 = vmul.f32 %v1014, %v1297
        %v1400 = vmul.f32 %v1019, %v1297
        %v1401 = vmul.f32 %v1024, %v1297
        %v1402 = vmul.f32 %v1029, %v1297
        %v1403 = vmul.f32 %v1034, %v1297
        %v1404 = vmul.f32 %v1039, %v1297
        %v1405 = vmul.f32 %v1044, %v1297
        %v1406 = vmul.f32 %v1049, %v1297
        %v1407 = vmul.f32 %v1054, %v1297
        %v1408 = vmul.f32 %v1059, %v1297
        %v1409 = vmul.f32 %v1064, %v1297
        %vm1522 = vcmask 1046528
        %v1523 = vrot.slane %v1298, 1
        %v1524 = vrot.slane %v1299, 1
        %v1525 = vsel %vm1522, %v1523, %v1524
        %v1526 = vrot.slane %v1300, 1
        %v1527 = vsel %vm1522, %v1524, %v1526
        %v1528 = vrot.slane %v1301, 1
        %v1529 = vsel %vm1522, %v1526, %v1528
        %v1530 = vrot.slane %v1302, 1
        %v1531 = vrot.slane %v1303, 1
        %v1532 = vsel %vm1522, %v1530, %v1531
        %v1533 = vrot.slane %v1304, 1
        %v1534 = vsel %vm1522, %v1531, %v1533
        %v1535 = vrot.slane %v1305, 1
        %v1536 = vsel %vm1522, %v1533, %v1535
        %v1537 = vrot.slane %v1306, 1
        %v1538 = vrot.slane %v1307, 1
        %v1539 = vsel %vm1522, %v1537, %v1538
        %v1540 = vrot.slane %v1308, 1
        %v1541 = vsel %vm1522, %v1538, %v1540
        %v1542 = vrot.slane %v1309, 1
        %v1543 = vsel %vm1522, %v1540, %v1542
        %v1544 = vrot.slane %v1310, 1
        %v1545 = vrot.slane %v1311, 1
        %v1546 = vsel %vm1522, %v1544, %v1545
        %v1547 = vrot.slane %v1312, 1
        %v1548 = vsel %vm1522, %v1545, %v1547
        %v1549 = vrot.slane %v1313, 1
        %v1550 = vsel %vm1522, %v1547, %v1549
        %v1551 = vrot.slane %v1314, 1
        %v1552 = vrot.slane %v1315, 1
        %v1553 = vsel %vm1522, %v1551, %v1552
        %v1554 = vrot.slane %v1316, 1
        %v1555 = vsel %vm1522, %v1552, %v1554
        %v1556 = vrot.slane %v1317, 1
        %v1557 = vsel %vm1522, %v1554, %v1556
        %v1558 = vrot.slane %v1318, 1
        %v1559 = vrot.slane %v1319, 1
        %v1560 = vsel %vm1522, %v1558, %v1559
        %v1561 = vrot.slane %v1320, 1
        %v1562 = vsel %vm1522, %v1559, %v1561
        %v1563 = vrot.slane %v1321, 1
        %v1564 = vsel %vm1522, %v1561, %v1563
        %v1565 = vrot.slane %v1322, 1
        %v1566 = vrot.slane %v1323, 1
        %v1567 = vsel %vm1522, %v1565, %v1566
        %v1568 = vrot.slane %v1324, 1
        %v1569 = vsel %vm1522, %v1566, %v1568
        %v1570 = vrot.slane %v1325, 1
        %v1571 = vsel %vm1522, %v1568, %v1570
        %v1572 = vrot.slane %v1326, 1
        %v1573 = vrot.slane %v1327, 1
        %v1574 = vsel %vm1522, %v1572, %v1573
        %v1575 = vrot.slane %v1328, 1
        %v1576 = vsel %vm1522, %v1573, %v1575
        %v1577 = vrot.slane %v1329, 1
        %v1578 = vsel %vm1522, %v1575, %v1577
        %v1579 = vrot.slane %v1330, 1
        %v1580 = vrot.slane %v1331, 1
        %v1581 = vsel %vm1522, %v1579, %v1580
        %v1582 = vrot.slane %v1332, 1
        %v1583 = vsel %vm1522, %v1580, %v1582
        %v1584 = vrot.slane %v1333, 1
        %v1585 = vsel %vm1522, %v1582, %v1584
        %v1586 = vrot.slane %v1334, 1
        %v1587 = vrot.slane %v1335, 1
        %v1588 = vsel %vm1522, %v1586, %v1587
        %v1589 = vrot.slane %v1336, 1
        %v1590 = vsel %vm1522, %v1587, %v1589
        %v1591 = vrot.slane %v1337, 1
        %v1592 = vsel %vm1522, %v1589, %v1591
        %v1593 = vrot.slane %v1338, 1
        %v1594 = vrot.slane %v1339, 1
        %v1595 = vsel %vm1522, %v1593, %v1594
        %v1596 = vrot.slane %v1340, 1
        %v1597 = vsel %vm1522, %v1594, %v1596
        %v1598 = vrot.slane %v1341, 1
        %v1599 = vsel %vm1522, %v1596, %v1598
        %v1600 = vrot.slane %v1342, 1
        %v1601 = vrot.slane %v1343, 1
        %v1602 = vsel %vm1522, %v1600, %v1601
        %v1603 = vrot.slane %v1344, 1
        %v1604 = vsel %vm1522, %v1601, %v1603
        %v1605 = vrot.slane %v1345, 1
        %v1606 = vsel %vm1522, %v1603, %v1605
        %v1607 = vrot.slane %v1346, 1
        %v1608 = vrot.slane %v1347, 1
        %v1609 = vsel %vm1522, %v1607, %v1608
        %v1610 = vrot.slane %v1348, 1
        %v1611 = vsel %vm1522, %v1608, %v1610
        %v1612 = vrot.slane %v1349, 1
        %v1613 = vsel %vm1522, %v1610, %v1612
        %v1614 = vrot.slane %v1350, 1
        %v1615 = vrot.slane %v1351, 1
        %v1616 = vsel %vm1522, %v1614, %v1615
        %v1617 = vrot.slane %v1352, 1
        %v1618 = vsel %vm1522, %v1615, %v1617
        %v1619 = vrot.slane %v1353, 1
        %v1620 = vsel %vm1522, %v1617, %v1619
        %v1621 = vrot.slane %v1354, 1
        %v1622 = vrot.slane %v1355, 1
        %v1623 = vsel %vm1522, %v1621, %v1622
        %v1624 = vrot.slane %v1356, 1
        %v1625 = vsel %vm1522, %v1622, %v1624
        %v1626 = vrot.slane %v1357, 1
        %v1627 = vsel %vm1522, %v1624, %v1626
        %v1628 = vrot.slane %v1358, 1
        %v1629 = vrot.slane %v1359, 1
        %v1630 = vsel %vm1522, %v1628, %v1629
        %v1631 = vrot.slane %v1360, 1
        %v1632 = vsel %vm1522, %v1629, %v1631
        %v1633 = vrot.slane %v1361, 1
        %v1634 = vsel %vm1522, %v1631, %v1633
        %v1635 = vrot.slane %v1362, 1
        %v1636 = vrot.slane %v1363, 1
        %v1637 = vsel %vm1522, %v1635, %v1636
        %v1638 = vrot.slane %v1364, 1
        %v1639 = vsel %vm1522, %v1636, %v1638
        %v1640 = vrot.slane %v1365, 1
        %v1641 = vsel %vm1522, %v1638, %v1640
        %v1642 = vrot.slane %v1366, 1
        %v1643 = vrot.slane %v1367, 1
        %v1644 = vsel %vm1522, %v1642, %v1643
        %v1645 = vrot.slane %v1368, 1
        %v1646 = vsel %vm1522, %v1643, %v1645
        %v1647 = vrot.slane %v1369, 1
        %v1648 = vsel %vm1522, %v1645, %v1647
        %v1649 = vrot.slane %v1370, 1
        %v1650 = vrot.slane %v1371, 1
        %v1651 = vsel %vm1522, %v1649, %v1650
        %v1652 = vrot.slane %v1372, 1
        %v1653 = vsel %vm1522, %v1650, %v1652
        %v1654 = vrot.slane %v1373, 1
        %v1655 = vsel %vm1522, %v1652, %v1654
        %v1656 = vrot.slane %v1374, 1
        %v1657 = vrot.slane %v1375, 1
        %v1658 = vsel %vm1522, %v1656, %v1657
        %v1659 = vrot.slane %v1376, 1
        %v1660 = vsel %vm1522, %v1657, %v1659
        %v1661 = vrot.slane %v1377, 1
        %v1662 = vsel %vm1522, %v1659, %v1661
        %v1663 = vrot.slane %v1378, 1
        %v1664 = vrot.slane %v1379, 1
        %v1665 = vsel %vm1522, %v1663, %v1664
        %v1666 = vrot.slane %v1380, 1
        %v1667 = vsel %vm1522, %v1664, %v1666
        %v1668 = vrot.slane %v1381, 1
        %v1669 = vsel %vm1522, %v1666, %v1668
        %v1670 = vrot.slane %v1382, 1
        %v1671 = vrot.slane %v1383, 1
        %v1672 = vsel %vm1522, %v1670, %v1671
        %v1673 = vrot.slane %v1384, 1
        %v1674 = vsel %vm1522, %v1671, %v1673
        %v1675 = vrot.slane %v1385, 1
        %v1676 = vsel %vm1522, %v1673, %v1675
        %v1677 = vrot.slane %v1386, 1
        %v1678 = vrot.slane %v1387, 1
        %v1679 = vsel %vm1522, %v1677, %v1678
        %v1680 = vrot.slane %v1388, 1
        %v1681 = vsel %vm1522, %v1678, %v1680
        %v1682 = vrot.slane %v1389, 1
        %v1683 = vsel %vm1522, %v1680, %v1682
        %v1684 = vrot.slane %v1390, 1
        %v1685 = vrot.slane %v1391, 1
        %v1686 = vsel %vm1522, %v1684, %v1685
        %v1687 = vrot.slane %v1392, 1
        %v1688 = vsel %vm1522, %v1685, %v1687
        %v1689 = vrot.slane %v1393, 1
        %v1690 = vsel %vm1522, %v1687, %v1689
        %v1691 = vrot.slane %v1394, 1
        %v1692 = vrot.slane %v1395, 1
        %v1693 = vsel %vm1522, %v1691, %v1692
        %v1694 = vrot.slane %v1396, 1
        %v1695 = vsel %vm1522, %v1692, %v1694
        %v1696 = vrot.slane %v1397, 1
        %v1697 = vsel %vm1522, %v1694, %v1696
        %v1698 = vrot.slane %v1398, 1
        %v1699 = vrot.slane %v1399, 1
        %v1700 = vsel %vm1522, %v1698, %v1699
        %v1701 = vrot.slane %v1400, 1
        %v1702 = vsel %vm1522, %v1699, %v1701
        %v1703 = vrot.slane %v1401, 1
        %v1704 = vsel %vm1522, %v1701, %v1703
        %v1705 = vrot.slane %v1402, 1
        %v1706 = vrot.slane %v1403, 1
        %v1707 = vsel %vm1522, %v1705, %v1706
        %v1708 = vrot.slane %v1404, 1
        %v1709 = vsel %vm1522, %v1706, %v1708
        %v1710 = vrot.slane %v1405, 1
        %v1711 = vsel %vm1522, %v1708, %v1710
        %v1712 = vrot.slane %v1406, 1
        %v1713 = vrot.slane %v1407, 1
        %v1714 = vsel %vm1522, %v1712, %v1713
        %v1715 = vrot.slane %v1408, 1
        %v1716 = vsel %vm1522, %v1713, %v1715
        %v1717 = vrot.slane %v1409, 1
        %v1718 = vsel %vm1522, %v1715, %v1717
        %v1831 = vadd.f32 %v1182, %v1525
        %v1832 = vadd.f32 %v1183, %v1527
        %v1833 = vadd.f32 %v1184, %v1529
        %v1834 = vadd.f32 %v1185, %v1528
        %v1835 = vadd.f32 %v1186, %v1532
        %v1836 = vadd.f32 %v1187, %v1534
        %v1837 = vadd.f32 %v1188, %v1536
        %v1838 = vadd.f32 %v1189, %v1535
        %v1839 = vadd.f32 %v1190, %v1539
        %v1840 = vadd.f32 %v1191, %v1541
        %v1841 = vadd.f32 %v1192, %v1543
        %v1842 = vadd.f32 %v1193, %v1542
        %v1843 = vadd.f32 %v1194, %v1546
        %v1844 = vadd.f32 %v1195, %v1548
        %v1845 = vadd.f32 %v1196, %v1550
        %v1846 = vadd.f32 %v1197, %v1549
        %v1847 = vadd.f32 %v1198, %v1553
        %v1848 = vadd.f32 %v1199, %v1555
        %v1849 = vadd.f32 %v1200, %v1557
        %v1850 = vadd.f32 %v1201, %v1556
        %v1851 = vadd.f32 %v1202, %v1560
        %v1852 = vadd.f32 %v1203, %v1562
        %v1853 = vadd.f32 %v1204, %v1564
        %v1854 = vadd.f32 %v1205, %v1563
        %v1855 = vadd.f32 %v1206, %v1567
        %v1856 = vadd.f32 %v1207, %v1569
        %v1857 = vadd.f32 %v1208, %v1571
        %v1858 = vadd.f32 %v1209, %v1570
        %v1859 = vadd.f32 %v1210, %v1574
        %v1860 = vadd.f32 %v1211, %v1576
        %v1861 = vadd.f32 %v1212, %v1578
        %v1862 = vadd.f32 %v1213, %v1577
        %v1863 = vadd.f32 %v1214, %v1581
        %v1864 = vadd.f32 %v1215, %v1583
        %v1865 = vadd.f32 %v1216, %v1585
        %v1866 = vadd.f32 %v1217, %v1584
        %v1867 = vadd.f32 %v1218, %v1588
        %v1868 = vadd.f32 %v1219, %v1590
        %v1869 = vadd.f32 %v1220, %v1592
        %v1870 = vadd.f32 %v1221, %v1591
        %v1871 = vadd.f32 %v1222, %v1595
        %v1872 = vadd.f32 %v1223, %v1597
        %v1873 = vadd.f32 %v1224, %v1599
        %v1874 = vadd.f32 %v1225, %v1598
        %v1875 = vadd.f32 %v1226, %v1602
        %v1876 = vadd.f32 %v1227, %v1604
        %v1877 = vadd.f32 %v1228, %v1606
        %v1878 = vadd.f32 %v1229, %v1605
        %v1879 = vadd.f32 %v1230, %v1609
        %v1880 = vadd.f32 %v1231, %v1611
        %v1881 = vadd.f32 %v1232, %v1613
        %v1882 = vadd.f32 %v1233, %v1612
        %v1883 = vadd.f32 %v1234, %v1616
        %v1884 = vadd.f32 %v1235, %v1618
        %v1885 = vadd.f32 %v1236, %v1620
        %v1886 = vadd.f32 %v1237, %v1619
        %v1887 = vadd.f32 %v1238, %v1623
        %v1888 = vadd.f32 %v1239, %v1625
        %v1889 = vadd.f32 %v1240, %v1627
        %v1890 = vadd.f32 %v1241, %v1626
        %v1891 = vadd.f32 %v1242, %v1630
        %v1892 = vadd.f32 %v1243, %v1632
        %v1893 = vadd.f32 %v1244, %v1634
        %v1894 = vadd.f32 %v1245, %v1633
        %v1895 = vadd.f32 %v1246, %v1637
        %v1896 = vadd.f32 %v1247, %v1639
        %v1897 = vadd.f32 %v1248, %v1641
        %v1898 = vadd.f32 %v1249, %v1640
        %v1899 = vadd.f32 %v1250, %v1644
        %v1900 = vadd.f32 %v1251, %v1646
        %v1901 = vadd.f32 %v1252, %v1648
        %v1902 = vadd.f32 %v1253, %v1647
        %v1903 = vadd.f32 %v1254, %v1651
        %v1904 = vadd.f32 %v1255, %v1653
        %v1905 = vadd.f32 %v1256, %v1655
        %v1906 = vadd.f32 %v1257, %v1654
        %v1907 = vadd.f32 %v1258, %v1658
        %v1908 = vadd.f32 %v1259, %v1660
        %v1909 = vadd.f32 %v1260, %v1662
        %v1910 = vadd.f32 %v1261, %v1661
        %v1911 = vadd.f32 %v1262, %v1665
        %v1912 = vadd.f32 %v1263, %v1667
        %v1913 = vadd.f32 %v1264, %v1669
        %v1914 = vadd.f32 %v1265, %v1668
        %v1915 = vadd.f32 %v1266, %v1672
        %v1916 = vadd.f32 %v1267, %v1674
        %v1917 = vadd.f32 %v1268, %v1676
        %v1918 = vadd.f32 %v1269, %v1675
        %v1919 = vadd.f32 %v1270, %v1679
        %v1920 = vadd.f32 %v1271, %v1681
        %v1921 = vadd.f32 %v1272, %v1683
        %v1922 = vadd.f32 %v1273, %v1682
        %v1923 = vadd.f32 %v1274, %v1686
        %v1924 = vadd.f32 %v1275, %v1688
        %v1925 = vadd.f32 %v1276, %v1690
        %v1926 = vadd.f32 %v1277, %v1689
        %v1927 = vadd.f32 %v1278, %v1693
        %v1928 = vadd.f32 %v1279, %v1695
        %v1929 = vadd.f32 %v1280, %v1697
        %v1930 = vadd.f32 %v1281, %v1696
        %v1931 = vadd.f32 %v1282, %v1700
        %v1932 = vadd.f32 %v1283, %v1702
        %v1933 = vadd.f32 %v1284, %v1704
        %v1934 = vadd.f32 %v1285, %v1703
        %v1935 = vadd.f32 %v1286, %v1707
        %v1936 = vadd.f32 %v1287, %v1709
        %v1937 = vadd.f32 %v1288, %v1711
        %v1938 = vadd.f32 %v1289, %v1710
        %v1939 = vadd.f32 %v1290, %v1714
        %v1940 = vadd.f32 %v1291, %v1716
        %v1941 = vadd.f32 %v1292, %v1718
        %v1942 = vadd.f32 %v1293, %v1717
        %v1943 = vlaneseq
        %v1944 = vshrl.u32 %v1943, 7
        %v1945 = vsub.s32 2, %v1944
        %v1946 = vrot.slane %v504, %v1945
        %v1947 = vmul.f32 %v509, %v1946
        %v1948 = vmul.f32 %v514, %v1946
        %v1949 = vmul.f32 %v519, %v1946
        %v1950 = vmul.f32 %v524, %v1946
        %v1951 = vmul.f32 %v529, %v1946
        %v1952 = vmul.f32 %v534, %v1946
        %v1953 = vmul.f32 %v539, %v1946
        %v1954 = vmul.f32 %v544, %v1946
        %v1955 = vmul.f32 %v549, %v1946
        %v1956 = vmul.f32 %v554, %v1946
        %v1957 = vmul.f32 %v559, %v1946
        %v1958 = vmul.f32 %v564, %v1946
        %v1959 = vmul.f32 %v569, %v1946
        %v1960 = vmul.f32 %v574, %v1946
        %v1961 = vmul.f32 %v579, %v1946
        %v1962 = vmul.f32 %v584, %v1946
        %v1963 = vmul.f32 %v589, %v1946
        %v1964 = vmul.f32 %v594, %v1946
        %v1965 = vmul.f32 %v599, %v1946
        %v1966 = vmul.f32 %v604, %v1946
        %v1967 = vmul.f32 %v609, %v1946
        %v1968 = vmul.f32 %v614, %v1946
        %v1969 = vmul.f32 %v619, %v1946
        %v1970 = vmul.f32 %v624, %v1946
        %v1971 = vmul.f32 %v629, %v1946
        %v1972 = vmul.f32 %v634, %v1946
        %v1973 = vmul.f32 %v639, %v1946
        %v1974 = vmul.f32 %v644, %v1946
        %v1975 = vmul.f32 %v649, %v1946
        %v1976 = vmul.f32 %v654, %v1946
        %v1977 = vmul.f32 %v659, %v1946
        %v1978 = vmul.f32 %v664, %v1946
        %v1979 = vmul.f32 %v669, %v1946
        %v1980 = vmul.f32 %v674, %v1946
        %v1981 = vmul.f32 %v679, %v1946
        %v1982 = vmul.f32 %v684, %v1946
        %v1983 = vmul.f32 %v689, %v1946
        %v1984 = vmul.f32 %v694, %v1946
        %v1985 = vmul.f32 %v699, %v1946
        %v1986 = vmul.f32 %v704, %v1946
        %v1987 = vmul.f32 %v709, %v1946
        %v1988 = vmul.f32 %v714, %v1946
        %v1989 = vmul.f32 %v719, %v1946
        %v1990 = vmul.f32 %v724, %v1946
        %v1991 = vmul.f32 %v729, %v1946
        %v1992 = vmul.f32 %v734, %v1946
        %v1993 = vmul.f32 %v739, %v1946
        %v1994 = vmul.f32 %v744, %v1946
        %v1995 = vmul.f32 %v749, %v1946
        %v1996 = vmul.f32 %v754, %v1946
        %v1997 = vmul.f32 %v759, %v1946
        %v1998 = vmul.f32 %v764, %v1946
        %v1999 = vmul.f32 %v769, %v1946
        %v2000 = vmul.f32 %v774, %v1946
        %v2001 = vmul.f32 %v779, %v1946
        %v2002 = vmul.f32 %v784, %v1946
        %v2003 = vmul.f32 %v789, %v1946
        %v2004 = vmul.f32 %v794, %v1946
        %v2005 = vmul.f32 %v799, %v1946
        %v2006 = vmul.f32 %v804, %v1946
        %v2007 = vmul.f32 %v809, %v1946
        %v2008 = vmul.f32 %v814, %v1946
        %v2009 = vmul.f32 %v819, %v1946
        %v2010 = vmul.f32 %v824, %v1946
        %v2011 = vmul.f32 %v829, %v1946
        %v2012 = vmul.f32 %v834, %v1946
        %v2013 = vmul.f32 %v839, %v1946
        %v2014 = vmul.f32 %v844, %v1946
        %v2015 = vmul.f32 %v849, %v1946
        %v2016 = vmul.f32 %v854, %v1946
        %v2017 = vmul.f32 %v859, %v1946
        %v2018 = vmul.f32 %v864, %v1946
        %v2019 = vmul.f32 %v869, %v1946
        %v2020 = vmul.f32 %v874, %v1946
        %v2021 = vmul.f32 %v879, %v1946
        %v2022 = vmul.f32 %v884, %v1946
        %v2023 = vmul.f32 %v889, %v1946
        %v2024 = vmul.f32 %v894, %v1946
        %v2025 = vmul.f32 %v899, %v1946
        %v2026 = vmul.f32 %v904, %v1946
        %v2027 = vmul.f32 %v909, %v1946
        %v2028 = vmul.f32 %v914, %v1946
        %v2029 = vmul.f32 %v919, %v1946
        %v2030 = vmul.f32 %v924, %v1946
        %v2031 = vmul.f32 %v929, %v1946
        %v2032 = vmul.f32 %v934, %v1946
        %v2033 = vmul.f32 %v939, %v1946
        %v2034 = vmul.f32 %v944, %v1946
        %v2035 = vmul.f32 %v949, %v1946
        %v2036 = vmul.f32 %v954, %v1946
        %v2037 = vmul.f32 %v959, %v1946
        %v2038 = vmul.f32 %v964, %v1946
        %v2039 = vmul.f32 %v969, %v1946
        %v2040 = vmul.f32 %v974, %v1946
        %v2041 = vmul.f32 %v979, %v1946
        %v2042 = vmul.f32 %v984, %v1946
        %v2043 = vmul.f32 %v989, %v1946
        %v2044 = vmul.f32 %v994, %v1946
        %v2045 = vmul.f32 %v999, %v1946
        %v2046 = vmul.f32 %v1004, %v1946
        %v2047 = vmul.f32 %v1009, %v1946
        %v2048 = vmul.f32 %v1014, %v1946
        %v2049 = vmul.f32 %v1019, %v1946
        %v2050 = vmul.f32 %v1024, %v1946
        %v2051 = vmul.f32 %v1029, %v1946
        %v2052 = vmul.f32 %v1034, %v1946
        %v2053 = vmul.f32 %v1039, %v1946
        %v2054 = vmul.f32 %v1044, %v1946
        %v2055 = vmul.f32 %v1049, %v1946
        %v2056 = vmul.f32 %v1054, %v1946
        %v2057 = vmul.f32 %v1059, %v1946
        %v2058 = vmul.f32 %v1064, %v1946
        %vm2171 = vcmask 1045504
        %v2172 = vrot.slane %v1947, 2
        %v2173 = vrot.slane %v1948, 2
        %v2174 = vsel %vm2171, %v2172, %v2173
        %v2175 = vrot.slane %v1949, 2
        %v2176 = vsel %vm2171, %v2173, %v2175
        %v2177 = vrot.slane %v1950, 2
        %v2178 = vsel %vm2171, %v2175, %v2177
        %v2179 = vrot.slane %v1951, 2
        %v2180 = vrot.slane %v1952, 2
        %v2181 = vsel %vm2171, %v2179, %v2180
        %v2182 = vrot.slane %v1953, 2
        %v2183 = vsel %vm2171, %v2180, %v2182
        %v2184 = vrot.slane %v1954, 2
        %v2185 = vsel %vm2171, %v2182, %v2184
        %v2186 = vrot.slane %v1955, 2
        %v2187 = vrot.slane %v1956, 2
        %v2188 = vsel %vm2171, %v2186, %v2187
        %v2189 = vrot.slane %v1957, 2
        %v2190 = vsel %vm2171, %v2187, %v2189
        %v2191 = vrot.slane %v1958, 2
        %v2192 = vsel %vm2171, %v2189, %v2191
        %v2193 = vrot.slane %v1959, 2
        %v2194 = vrot.slane %v1960, 2
        %v2195 = vsel %vm2171, %v2193, %v2194
        %v2196 = vrot.slane %v1961, 2
        %v2197 = vsel %vm2171, %v2194, %v2196
        %v2198 = vrot.slane %v1962, 2
        %v2199 = vsel %vm2171, %v2196, %v2198
        %v2200 = vrot.slane %v1963, 2
        %v2201 = vrot.slane %v1964, 2
        %v2202 = vsel %vm2171, %v2200, %v2201
        %v2203 = vrot.slane %v1965, 2
        %v2204 = vsel %vm2171, %v2201, %v2203
        %v2205 = vrot.slane %v1966, 2
        %v2206 = vsel %vm2171, %v2203, %v2205
        %v2207 = vrot.slane %v1967, 2
        %v2208 = vrot.slane %v1968, 2
        %v2209 = vsel %vm2171, %v2207, %v2208
        %v2210 = vrot.slane %v1969, 2
        %v2211 = vsel %vm2171, %v2208, %v2210
        %v2212 = vrot.slane %v1970, 2
        %v2213 = vsel %vm2171, %v2210, %v2212
        %v2214 = vrot.slane %v1971, 2
        %v2215 = vrot.slane %v1972, 2
        %v2216 = vsel %vm2171, %v2214, %v2215
        %v2217 = vrot.slane %v1973, 2
        %v2218 = vsel %vm2171, %v2215, %v2217
        %v2219 = vrot.slane %v1974, 2
        %v2220 = vsel %vm2171, %v2217, %v2219
        %v2221 = vrot.slane %v1975, 2
        %v2222 = vrot.slane %v1976, 2
        %v2223 = vsel %vm2171, %v2221, %v2222
        %v2224 = vrot.slane %v1977, 2
        %v2225 = vsel %vm2171, %v2222, %v2224
        %v2226 = vrot.slane %v1978, 2
        %v2227 = vsel %vm2171, %v2224, %v2226
        %v2228 = vrot.slane %v1979, 2
        %v2229 = vrot.slane %v1980, 2
        %v2230 = vsel %vm2171, %v2228, %v2229
        %v2231 = vrot.slane %v1981, 2
        %v2232 = vsel %vm2171, %v2229, %v2231
        %v2233 = vrot.slane %v1982, 2
        %v2234 = vsel %vm2171, %v2231, %v2233
        %v2235 = vrot.slane %v1983, 2
        %v2236 = vrot.slane %v1984, 2
        %v2237 = vsel %vm2171, %v2235, %v2236
        %v2238 = vrot.slane %v1985, 2
        %v2239 = vsel %vm2171, %v2236, %v2238
        %v2240 = vrot.slane %v1986, 2
        %v2241 = vsel %vm2171, %v2238, %v2240
        %v2242 = vrot.slane %v1987, 2
        %v2243 = vrot.slane %v1988, 2
        %v2244 = vsel %vm2171, %v2242, %v2243
        %v2245 = vrot.slane %v1989, 2
        %v2246 = vsel %vm2171, %v2243, %v2245
        %v2247 = vrot.slane %v1990, 2
        %v2248 = vsel %vm2171, %v2245, %v2247
        %v2249 = vrot.slane %v1991, 2
        %v2250 = vrot.slane %v1992, 2
        %v2251 = vsel %vm2171, %v2249, %v2250
        %v2252 = vrot.slane %v1993, 2
        %v2253 = vsel %vm2171, %v2250, %v2252
        %v2254 = vrot.slane %v1994, 2
        %v2255 = vsel %vm2171, %v2252, %v2254
        %v2256 = vrot.slane %v1995, 2
        %v2257 = vrot.slane %v1996, 2
        %v2258 = vsel %vm2171, %v2256, %v2257
        %v2259 = vrot.slane %v1997, 2
        %v2260 = vsel %vm2171, %v2257, %v2259
        %v2261 = vrot.slane %v1998, 2
        %v2262 = vsel %vm2171, %v2259, %v2261
        %v2263 = vrot.slane %v1999, 2
        %v2264 = vrot.slane %v2000, 2
        %v2265 = vsel %vm2171, %v2263, %v2264
        %v2266 = vrot.slane %v2001, 2
        %v2267 = vsel %vm2171, %v2264, %v2266
        %v2268 = vrot.slane %v2002, 2
        %v2269 = vsel %vm2171, %v2266, %v2268
        %v2270 = vrot.slane %v2003, 2
        %v2271 = vrot.slane %v2004, 2
        %v2272 = vsel %vm2171, %v2270, %v2271
        %v2273 = vrot.slane %v2005, 2
        %v2274 = vsel %vm2171, %v2271, %v2273
        %v2275 = vrot.slane %v2006, 2
        %v2276 = vsel %vm2171, %v2273, %v2275
        %v2277 = vrot.slane %v2007, 2
        %v2278 = vrot.slane %v2008, 2
        %v2279 = vsel %vm2171, %v2277, %v2278
        %v2280 = vrot.slane %v2009, 2
        %v2281 = vsel %vm2171, %v2278, %v2280
        %v2282 = vrot.slane %v2010, 2
        %v2283 = vsel %vm2171, %v2280, %v2282
        %v2284 = vrot.slane %v2011, 2
        %v2285 = vrot.slane %v2012, 2
        %v2286 = vsel %vm2171, %v2284, %v2285
        %v2287 = vrot.slane %v2013, 2
        %v2288 = vsel %vm2171, %v2285, %v2287
        %v2289 = vrot.slane %v2014, 2
        %v2290 = vsel %vm2171, %v2287, %v2289
        %v2291 = vrot.slane %v2015, 2
        %v2292 = vrot.slane %v2016, 2
        %v2293 = vsel %vm2171, %v2291, %v2292
        %v2294 = vrot.slane %v2017, 2
        %v2295 = vsel %vm2171, %v2292, %v2294
        %v2296 = vrot.slane %v2018, 2
        %v2297 = vsel %vm2171, %v2294, %v2296
        %v2298 = vrot.slane %v2019, 2
        %v2299 = vrot.slane %v2020, 2
        %v2300 = vsel %vm2171, %v2298, %v2299
        %v2301 = vrot.slane %v2021, 2
        %v2302 = vsel %vm2171, %v2299, %v2301
        %v2303 = vrot.slane %v2022, 2
        %v2304 = vsel %vm2171, %v2301, %v2303
        %v2305 = vrot.slane %v2023, 2
        %v2306 = vrot.slane %v2024, 2
        %v2307 = vsel %vm2171, %v2305, %v2306
        %v2308 = vrot.slane %v2025, 2
        %v2309 = vsel %vm2171, %v2306, %v2308
        %v2310 = vrot.slane %v2026, 2
        %v2311 = vsel %vm2171, %v2308, %v2310
        %v2312 = vrot.slane %v2027, 2
        %v2313 = vrot.slane %v2028, 2
        %v2314 = vsel %vm2171, %v2312, %v2313
        %v2315 = vrot.slane %v2029, 2
        %v2316 = vsel %vm2171, %v2313, %v2315
        %v2317 = vrot.slane %v2030, 2
        %v2318 = vsel %vm2171, %v2315, %v2317
        %v2319 = vrot.slane %v2031, 2
        %v2320 = vrot.slane %v2032, 2
        %v2321 = vsel %vm2171, %v2319, %v2320
        %v2322 = vrot.slane %v2033, 2
        %v2323 = vsel %vm2171, %v2320, %v2322
        %v2324 = vrot.slane %v2034, 2
        %v2325 = vsel %vm2171, %v2322, %v2324
        %v2326 = vrot.slane %v2035, 2
        %v2327 = vrot.slane %v2036, 2
        %v2328 = vsel %vm2171, %v2326, %v2327
        %v2329 = vrot.slane %v2037, 2
        %v2330 = vsel %vm2171, %v2327, %v2329
        %v2331 = vrot.slane %v2038, 2
        %v2332 = vsel %vm2171, %v2329, %v2331
        %v2333 = vrot.slane %v2039, 2
        %v2334 = vrot.slane %v2040, 2
        %v2335 = vsel %vm2171, %v2333, %v2334
        %v2336 = vrot.slane %v2041, 2
        %v2337 = vsel %vm2171, %v2334, %v2336
        %v2338 = vrot.slane %v2042, 2
        %v2339 = vsel %vm2171, %v2336, %v2338
        %v2340 = vrot.slane %v2043, 2
        %v2341 = vrot.slane %v2044, 2
        %v2342 = vsel %vm2171, %v2340, %v2341
        %v2343 = vrot.slane %v2045, 2
        %v2344 = vsel %vm2171, %v2341, %v2343
        %v2345 = vrot.slane %v2046, 2
        %v2346 = vsel %vm2171, %v2343, %v2345
        %v2347 = vrot.slane %v2047, 2
        %v2348 = vrot.slane %v2048, 2
        %v2349 = vsel %vm2171, %v2347, %v2348
        %v2350 = vrot.slane %v2049, 2
        %v2351 = vsel %vm2171, %v2348, %v2350
        %v2352 = vrot.slane %v2050, 2
        %v2353 = vsel %vm2171, %v2350, %v2352
        %v2354 = vrot.slane %v2051, 2
        %v2355 = vrot.slane %v2052, 2
        %v2356 = vsel %vm2171, %v2354, %v2355
        %v2357 = vrot.slane %v2053, 2
        %v2358 = vsel %vm2171, %v2355, %v2357
        %v2359 = vrot.slane %v2054, 2
        %v2360 = vsel %vm2171, %v2357, %v2359
        %v2361 = vrot.slane %v2055, 2
        %v2362 = vrot.slane %v2056, 2
        %v2363 = vsel %vm2171, %v2361, %v2362
        %v2364 = vrot.slane %v2057, 2
        %v2365 = vsel %vm2171, %v2362, %v2364
        %v2366 = vrot.slane %v2058, 2
        %v2367 = vsel %vm2171, %v2364, %v2366
        %v2480 = vadd.f32 %v1831, %v2174
        %v2481 = vadd.f32 %v1832, %v2176
        %v2482 = vadd.f32 %v1833, %v2178
        %v2483 = vadd.f32 %v1834, %v2177
        %v2484 = vadd.f32 %v1835, %v2181
        %v2485 = vadd.f32 %v1836, %v2183
        %v2486 = vadd.f32 %v1837, %v2185
        %v2487 = vadd.f32 %v1838, %v2184
        %v2488 = vadd.f32 %v1839, %v2188
        %v2489 = vadd.f32 %v1840, %v2190
        %v2490 = vadd.f32 %v1841, %v2192
        %v2491 = vadd.f32 %v1842, %v2191
        %v2492 = vadd.f32 %v1843, %v2195
        %v2493 = vadd.f32 %v1844, %v2197
        %v2494 = vadd.f32 %v1845, %v2199
        %v2495 = vadd.f32 %v1846, %v2198
        %v2496 = vadd.f32 %v1847, %v2202
        %v2497 = vadd.f32 %v1848, %v2204
        %v2498 = vadd.f32 %v1849, %v2206
        %v2499 = vadd.f32 %v1850, %v2205
        %v2500 = vadd.f32 %v1851, %v2209
        %v2501 = vadd.f32 %v1852, %v2211
        %v2502 = vadd.f32 %v1853, %v2213
        %v2503 = vadd.f32 %v1854, %v2212
        %v2504 = vadd.f32 %v1855, %v2216
        %v2505 = vadd.f32 %v1856, %v2218
        %v2506 = vadd.f32 %v1857, %v2220
        %v2507 = vadd.f32 %v1858, %v2219
        %v2508 = vadd.f32 %v1859, %v2223
        %v2509 = vadd.f32 %v1860, %v2225
        %v2510 = vadd.f32 %v1861, %v2227
        %v2511 = vadd.f32 %v1862, %v2226
        %v2512 = vadd.f32 %v1863, %v2230
        %v2513 = vadd.f32 %v1864, %v2232
        %v2514 = vadd.f32 %v1865, %v2234
        %v2515 = vadd.f32 %v1866, %v2233
        %v2516 = vadd.f32 %v1867, %v2237
        %v2517 = vadd.f32 %v1868, %v2239
        %v2518 = vadd.f32 %v1869, %v2241
        %v2519 = vadd.f32 %v1870, %v2240
        %v2520 = vadd.f32 %v1871, %v2244
        %v2521 = vadd.f32 %v1872, %v2246
        %v2522 = vadd.f32 %v1873, %v2248
        %v2523 = vadd.f32 %v1874, %v2247
        %v2524 = vadd.f32 %v1875, %v2251
        %v2525 = vadd.f32 %v1876, %v2253
        %v2526 = vadd.f32 %v1877, %v2255
        %v2527 = vadd.f32 %v1878, %v2254
        %v2528 = vadd.f32 %v1879, %v2258
        %v2529 = vadd.f32 %v1880, %v2260
        %v2530 = vadd.f32 %v1881, %v2262
        %v2531 = vadd.f32 %v1882, %v2261
        %v2532 = vadd.f32 %v1883, %v2265
        %v2533 = vadd.f32 %v1884, %v2267
        %v2534 = vadd.f32 %v1885, %v2269
        %v2535 = vadd.f32 %v1886, %v2268
        %v2536 = vadd.f32 %v1887, %v2272
        %v2537 = vadd.f32 %v1888, %v2274
        %v2538 = vadd.f32 %v1889, %v2276
        %v2539 = vadd.f32 %v1890, %v2275
        %v2540 = vadd.f32 %v1891, %v2279
        %v2541 = vadd.f32 %v1892, %v2281
        %v2542 = vadd.f32 %v1893, %v2283
        %v2543 = vadd.f32 %v1894, %v2282
        %v2544 = vadd.f32 %v1895, %v2286
        %v2545 = vadd.f32 %v1896, %v2288
        %v2546 = vadd.f32 %v1897, %v2290
        %v2547 = vadd.f32 %v1898, %v2289
        %v2548 = vadd.f32 %v1899, %v2293
        %v2549 = vadd.f32 %v1900, %v2295
        %v2550 = vadd.f32 %v1901, %v2297
        %v2551 = vadd.f32 %v1902, %v2296
        %v2552 = vadd.f32 %v1903, %v2300
        %v2553 = vadd.f32 %v1904, %v2302
        %v2554 = vadd.f32 %v1905, %v2304
        %v2555 = vadd.f32 %v1906, %v2303
        %v2556 = vadd.f32 %v1907, %v2307
        %v2557 = vadd.f32 %v1908, %v2309
        %v2558 = vadd.f32 %v1909, %v2311
        %v2559 = vadd.f32 %v1910, %v2310
        %v2560 = vadd.f32 %v1911, %v2314
        %v2561 = vadd.f32 %v1912, %v2316
        %v2562 = vadd.f32 %v1913, %v2318
        %v2563 = vadd.f32 %v1914, %v2317
        %v2564 = vadd.f32 %v1915, %v2321
        %v2565 = vadd.f32 %v1916, %v2323
        %v2566 = vadd.f32 %v1917, %v2325
        %v2567 = vadd.f32 %v1918, %v2324
        %v2568 = vadd.f32 %v1919, %v2328
        %v2569 = vadd.f32 %v1920, %v2330
        %v2570 = vadd.f32 %v1921, %v2332
        %v2571 = vadd.f32 %v1922, %v2331
        %v2572 = vadd.f32 %v1923, %v2335
        %v2573 = vadd.f32 %v1924, %v2337
        %v2574 = vadd.f32 %v1925, %v2339
        %v2575 = vadd.f32 %v1926, %v2338
        %v2576 = vadd.f32 %v1927, %v2342
        %v2577 = vadd.f32 %v1928, %v2344
        %v2578 = vadd.f32 %v1929, %v2346
        %v2579 = vadd.f32 %v1930, %v2345
        %v2580 = vadd.f32 %v1931, %v2349
        %v2581 = vadd.f32 %v1932, %v2351
        %v2582 = vadd.f32 %v1933, %v2353
        %v2583 = vadd.f32 %v1934, %v2352
        %v2584 = vadd.f32 %v1935, %v2356
        %v2585 = vadd.f32 %v1936, %v2358
        %v2586 = vadd.f32 %v1937, %v2360
        %v2587 = vadd.f32 %v1938, %v2359
        %v2588 = vadd.f32 %v1939, %v2363
        %v2589 = vadd.f32 %v1940, %v2365
        %v2590 = vadd.f32 %v1941, %v2367
        %v2591 = vadd.f32 %v1942, %v2366
        %2593 = vset.pattern.permute.xlu0 0
        %2594 = vperm.xlu0 %2593, %v496
        %v2595 = vpop.permute.xlu0 %2594
        %2598 = vset.pattern.permute.xlu0 0
        %2599 = vperm.xlu0 %2598, %v497
        %v2600 = vpop.permute.xlu0 %2599
        %2603 = vset.pattern.permute.xlu0 0
        %2604 = vperm.xlu0 %2603, %v498
        %v2605 = vpop.permute.xlu0 %2604
        %2608 = vset.pattern.permute.xlu0 0
        %2609 = vperm.xlu0 %2608, %v499
        %v2610 = vpop.permute.xlu0 %2609
        %v2612 = vlaneseq
        %v2613 = vshrl.u32 %v2612, 7
        %v2614 = vsub.s32 3, %v2613
        %v2615 = vrot.slane %v504, %v2614
        %v2616 = vmul.f32 %v529, %v2615
        %v2617 = vmul.f32 %v534, %v2615
        %v2618 = vmul.f32 %v539, %v2615
        %v2619 = vmul.f32 %v544, %v2615
        %v2620 = vmul.f32 %v549, %v2615
        %v2621 = vmul.f32 %v554, %v2615
        %v2622 = vmul.f32 %v559, %v2615
        %v2623 = vmul.f32 %v564, %v2615
        %v2624 = vmul.f32 %v569, %v2615
        %v2625 = vmul.f32 %v574, %v2615
        %v2626 = vmul.f32 %v579, %v2615
        %v2627 = vmul.f32 %v584, %v2615
        %v2628 = vmul.f32 %v589, %v2615
        %v2629 = vmul.f32 %v594, %v2615
        %v2630 = vmul.f32 %v599, %v2615
        %v2631 = vmul.f32 %v604, %v2615
        %v2632 = vmul.f32 %v609, %v2615
        %v2633 = vmul.f32 %v614, %v2615
        %v2634 = vmul.f32 %v619, %v2615
        %v2635 = vmul.f32 %v624, %v2615
        %v2636 = vmul.f32 %v629, %v2615
        %v2637 = vmul.f32 %v634, %v2615
        %v2638 = vmul.f32 %v639, %v2615
        %v2639 = vmul.f32 %v644, %v2615
        %v2640 = vmul.f32 %v649, %v2615
        %v2641 = vmul.f32 %v654, %v2615
        %v2642 = vmul.f32 %v659, %v2615
        %v2643 = vmul.f32 %v664, %v2615
        %v2644 = vmul.f32 %v669, %v2615
        %v2645 = vmul.f32 %v674, %v2615
        %v2646 = vmul.f32 %v679, %v2615
        %v2647 = vmul.f32 %v684, %v2615
        %v2648 = vmul.f32 %v689, %v2615
        %v2649 = vmul.f32 %v694, %v2615
        %v2650 = vmul.f32 %v699, %v2615
        %v2651 = vmul.f32 %v704, %v2615
        %v2652 = vmul.f32 %v709, %v2615
        %v2653 = vmul.f32 %v714, %v2615
        %v2654 = vmul.f32 %v719, %v2615
        %v2655 = vmul.f32 %v724, %v2615
        %v2656 = vmul.f32 %v729, %v2615
        %v2657 = vmul.f32 %v734, %v2615
        %v2658 = vmul.f32 %v739, %v2615
        %v2659 = vmul.f32 %v744, %v2615
        %v2660 = vmul.f32 %v749, %v2615
        %v2661 = vmul.f32 %v754, %v2615
        %v2662 = vmul.f32 %v759, %v2615
        %v2663 = vmul.f32 %v764, %v2615
        %v2664 = vmul.f32 %v769, %v2615
        %v2665 = vmul.f32 %v774, %v2615
        %v2666 = vmul.f32 %v779, %v2615
        %v2667 = vmul.f32 %v784, %v2615
        %v2668 = vmul.f32 %v789, %v2615
        %v2669 = vmul.f32 %v794, %v2615
        %v2670 = vmul.f32 %v799, %v2615
        %v2671 = vmul.f32 %v804, %v2615
        %v2672 = vmul.f32 %v809, %v2615
        %v2673 = vmul.f32 %v814, %v2615
        %v2674 = vmul.f32 %v819, %v2615
        %v2675 = vmul.f32 %v824, %v2615
        %v2676 = vmul.f32 %v829, %v2615
        %v2677 = vmul.f32 %v834, %v2615
        %v2678 = vmul.f32 %v839, %v2615
        %v2679 = vmul.f32 %v844, %v2615
        %v2680 = vmul.f32 %v849, %v2615
        %v2681 = vmul.f32 %v854, %v2615
        %v2682 = vmul.f32 %v859, %v2615
        %v2683 = vmul.f32 %v864, %v2615
        %v2684 = vmul.f32 %v869, %v2615
        %v2685 = vmul.f32 %v874, %v2615
        %v2686 = vmul.f32 %v879, %v2615
        %v2687 = vmul.f32 %v884, %v2615
        %v2688 = vmul.f32 %v889, %v2615
        %v2689 = vmul.f32 %v894, %v2615
        %v2690 = vmul.f32 %v899, %v2615
        %v2691 = vmul.f32 %v904, %v2615
        %v2692 = vmul.f32 %v909, %v2615
        %v2693 = vmul.f32 %v914, %v2615
        %v2694 = vmul.f32 %v919, %v2615
        %v2695 = vmul.f32 %v924, %v2615
        %v2696 = vmul.f32 %v929, %v2615
        %v2697 = vmul.f32 %v934, %v2615
        %v2698 = vmul.f32 %v939, %v2615
        %v2699 = vmul.f32 %v944, %v2615
        %v2700 = vmul.f32 %v949, %v2615
        %v2701 = vmul.f32 %v954, %v2615
        %v2702 = vmul.f32 %v959, %v2615
        %v2703 = vmul.f32 %v964, %v2615
        %v2704 = vmul.f32 %v969, %v2615
        %v2705 = vmul.f32 %v974, %v2615
        %v2706 = vmul.f32 %v979, %v2615
        %v2707 = vmul.f32 %v984, %v2615
        %v2708 = vmul.f32 %v989, %v2615
        %v2709 = vmul.f32 %v994, %v2615
        %v2710 = vmul.f32 %v999, %v2615
        %v2711 = vmul.f32 %v1004, %v2615
        %v2712 = vmul.f32 %v1009, %v2615
        %v2713 = vmul.f32 %v1014, %v2615
        %v2714 = vmul.f32 %v1019, %v2615
        %v2715 = vmul.f32 %v1024, %v2615
        %v2716 = vmul.f32 %v1029, %v2615
        %v2717 = vmul.f32 %v1034, %v2615
        %v2718 = vmul.f32 %v1039, %v2615
        %v2719 = vmul.f32 %v1044, %v2615
        %v2720 = vmul.f32 %v1049, %v2615
        %v2721 = vmul.f32 %v1054, %v2615
        %v2722 = vmul.f32 %v1059, %v2615
        %v2723 = vmul.f32 %v1064, %v2615
        %v2724 = vmul.f32 %v2595, %v2615
        %v2725 = vmul.f32 %v2600, %v2615
        %v2726 = vmul.f32 %v2605, %v2615
        %v2727 = vmul.f32 %v2610, %v2615
        %v2728 = vadd.f32 %v2480, %v2616
        %v2729 = vadd.f32 %v2481, %v2617
        %v2730 = vadd.f32 %v2482, %v2618
        %v2731 = vadd.f32 %v2483, %v2619
        %v2732 = vadd.f32 %v2484, %v2620
        %v2733 = vadd.f32 %v2485, %v2621
        %v2734 = vadd.f32 %v2486, %v2622
        %v2735 = vadd.f32 %v2487, %v2623
        %v2736 = vadd.f32 %v2488, %v2624
        %v2737 = vadd.f32 %v2489, %v2625
        %v2738 = vadd.f32 %v2490, %v2626
        %v2739 = vadd.f32 %v2491, %v2627
        %v2740 = vadd.f32 %v2492, %v2628
        %v2741 = vadd.f32 %v2493, %v2629
        %v2742 = vadd.f32 %v2494, %v2630
        %v2743 = vadd.f32 %v2495, %v2631
        %v2744 = vadd.f32 %v2496, %v2632
        %v2745 = vadd.f32 %v2497, %v2633
        %v2746 = vadd.f32 %v2498, %v2634
        %v2747 = vadd.f32 %v2499, %v2635
        %v2748 = vadd.f32 %v2500, %v2636
        %v2749 = vadd.f32 %v2501, %v2637
        %v2750 = vadd.f32 %v2502, %v2638
        %v2751 = vadd.f32 %v2503, %v2639
        %v2752 = vadd.f32 %v2504, %v2640
        %v2753 = vadd.f32 %v2505, %v2641
        %v2754 = vadd.f32 %v2506, %v2642
        %v2755 = vadd.f32 %v2507, %v2643
        %v2756 = vadd.f32 %v2508, %v2644
        %v2757 = vadd.f32 %v2509, %v2645
        %v2758 = vadd.f32 %v2510, %v2646
        %v2759 = vadd.f32 %v2511, %v2647
        %v2760 = vadd.f32 %v2512, %v2648
        %v2761 = vadd.f32 %v2513, %v2649
        %v2762 = vadd.f32 %v2514, %v2650
        %v2763 = vadd.f32 %v2515, %v2651
        %v2764 = vadd.f32 %v2516, %v2652
        %v2765 = vadd.f32 %v2517, %v2653
        %v2766 = vadd.f32 %v2518, %v2654
        %v2767 = vadd.f32 %v2519, %v2655
        %v2768 = vadd.f32 %v2520, %v2656
        %v2769 = vadd.f32 %v2521, %v2657
        %v2770 = vadd.f32 %v2522, %v2658
        %v2771 = vadd.f32 %v2523, %v2659
        %v2772 = vadd.f32 %v2524, %v2660
        %v2773 = vadd.f32 %v2525, %v2661
        %v2774 = vadd.f32 %v2526, %v2662
        %v2775 = vadd.f32 %v2527, %v2663
        %v2776 = vadd.f32 %v2528, %v2664
        %v2777 = vadd.f32 %v2529, %v2665
        %v2778 = vadd.f32 %v2530, %v2666
        %v2779 = vadd.f32 %v2531, %v2667
        %v2780 = vadd.f32 %v2532, %v2668
        %v2781 = vadd.f32 %v2533, %v2669
        %v2782 = vadd.f32 %v2534, %v2670
        %v2783 = vadd.f32 %v2535, %v2671
        %v2784 = vadd.f32 %v2536, %v2672
        %v2785 = vadd.f32 %v2537, %v2673
        %v2786 = vadd.f32 %v2538, %v2674
        %v2787 = vadd.f32 %v2539, %v2675
        %v2788 = vadd.f32 %v2540, %v2676
        %v2789 = vadd.f32 %v2541, %v2677
        %v2790 = vadd.f32 %v2542, %v2678
        %v2791 = vadd.f32 %v2543, %v2679
        %v2792 = vadd.f32 %v2544, %v2680
        %v2793 = vadd.f32 %v2545, %v2681
        %v2794 = vadd.f32 %v2546, %v2682
        %v2795 = vadd.f32 %v2547, %v2683
        %v2796 = vadd.f32 %v2548, %v2684
        %v2797 = vadd.f32 %v2549, %v2685
        %v2798 = vadd.f32 %v2550, %v2686
        %v2799 = vadd.f32 %v2551, %v2687
        %v2800 = vadd.f32 %v2552, %v2688
        %v2801 = vadd.f32 %v2553, %v2689
        %v2802 = vadd.f32 %v2554, %v2690
        %v2803 = vadd.f32 %v2555, %v2691
        %v2804 = vadd.f32 %v2556, %v2692
        %v2805 = vadd.f32 %v2557, %v2693
        %v2806 = vadd.f32 %v2558, %v2694
        %v2807 = vadd.f32 %v2559, %v2695
        %v2808 = vadd.f32 %v2560, %v2696
        %v2809 = vadd.f32 %v2561, %v2697
        %v2810 = vadd.f32 %v2562, %v2698
        %v2811 = vadd.f32 %v2563, %v2699
        %v2812 = vadd.f32 %v2564, %v2700
        %v2813 = vadd.f32 %v2565, %v2701
        %v2814 = vadd.f32 %v2566, %v2702
        %v2815 = vadd.f32 %v2567, %v2703
        %v2816 = vadd.f32 %v2568, %v2704
        %v2817 = vadd.f32 %v2569, %v2705
        %v2818 = vadd.f32 %v2570, %v2706
        %v2819 = vadd.f32 %v2571, %v2707
        %v2820 = vadd.f32 %v2572, %v2708
        %v2821 = vadd.f32 %v2573, %v2709
        %v2822 = vadd.f32 %v2574, %v2710
        %v2823 = vadd.f32 %v2575, %v2711
        %v2824 = vadd.f32 %v2576, %v2712
        %v2825 = vadd.f32 %v2577, %v2713
        %v2826 = vadd.f32 %v2578, %v2714
        %v2827 = vadd.f32 %v2579, %v2715
        %v2828 = vadd.f32 %v2580, %v2716
        %v2829 = vadd.f32 %v2581, %v2717
        %v2830 = vadd.f32 %v2582, %v2718
        %v2831 = vadd.f32 %v2583, %v2719
        %v2832 = vadd.f32 %v2584, %v2720
        %v2833 = vadd.f32 %v2585, %v2721
        %v2834 = vadd.f32 %v2586, %v2722
        %v2835 = vadd.f32 %v2587, %v2723
        %v2836 = vadd.f32 %v2588, %v2724
        %v2837 = vadd.f32 %v2589, %v2725
        %v2838 = vadd.f32 %v2590, %v2726
        %v2839 = vadd.f32 %v2591, %v2727
        %v2840 = vlaneseq
        %v2841 = vshrl.u32 %v2840, 7
        %v2842 = vsub.s32 4, %v2841
        %v2843 = vrot.slane %v504, %v2842
        %v2844 = vmul.f32 %v529, %v2843
        %v2845 = vmul.f32 %v534, %v2843
        %v2846 = vmul.f32 %v539, %v2843
        %v2847 = vmul.f32 %v544, %v2843
        %v2848 = vmul.f32 %v549, %v2843
        %v2849 = vmul.f32 %v554, %v2843
        %v2850 = vmul.f32 %v559, %v2843
        %v2851 = vmul.f32 %v564, %v2843
        %v2852 = vmul.f32 %v569, %v2843
        %v2853 = vmul.f32 %v574, %v2843
        %v2854 = vmul.f32 %v579, %v2843
        %v2855 = vmul.f32 %v584, %v2843
        %v2856 = vmul.f32 %v589, %v2843
        %v2857 = vmul.f32 %v594, %v2843
        %v2858 = vmul.f32 %v599, %v2843
        %v2859 = vmul.f32 %v604, %v2843
        %v2860 = vmul.f32 %v609, %v2843
        %v2861 = vmul.f32 %v614, %v2843
        %v2862 = vmul.f32 %v619, %v2843
        %v2863 = vmul.f32 %v624, %v2843
        %v2864 = vmul.f32 %v629, %v2843
        %v2865 = vmul.f32 %v634, %v2843
        %v2866 = vmul.f32 %v639, %v2843
        %v2867 = vmul.f32 %v644, %v2843
        %v2868 = vmul.f32 %v649, %v2843
        %v2869 = vmul.f32 %v654, %v2843
        %v2870 = vmul.f32 %v659, %v2843
        %v2871 = vmul.f32 %v664, %v2843
        %v2872 = vmul.f32 %v669, %v2843
        %v2873 = vmul.f32 %v674, %v2843
        %v2874 = vmul.f32 %v679, %v2843
        %v2875 = vmul.f32 %v684, %v2843
        %v2876 = vmul.f32 %v689, %v2843
        %v2877 = vmul.f32 %v694, %v2843
        %v2878 = vmul.f32 %v699, %v2843
        %v2879 = vmul.f32 %v704, %v2843
        %v2880 = vmul.f32 %v709, %v2843
        %v2881 = vmul.f32 %v714, %v2843
        %v2882 = vmul.f32 %v719, %v2843
        %v2883 = vmul.f32 %v724, %v2843
        %v2884 = vmul.f32 %v729, %v2843
        %v2885 = vmul.f32 %v734, %v2843
        %v2886 = vmul.f32 %v739, %v2843
        %v2887 = vmul.f32 %v744, %v2843
        %v2888 = vmul.f32 %v749, %v2843
        %v2889 = vmul.f32 %v754, %v2843
        %v2890 = vmul.f32 %v759, %v2843
        %v2891 = vmul.f32 %v764, %v2843
        %v2892 = vmul.f32 %v769, %v2843
        %v2893 = vmul.f32 %v774, %v2843
        %v2894 = vmul.f32 %v779, %v2843
        %v2895 = vmul.f32 %v784, %v2843
        %v2896 = vmul.f32 %v789, %v2843
        %v2897 = vmul.f32 %v794, %v2843
        %v2898 = vmul.f32 %v799, %v2843
        %v2899 = vmul.f32 %v804, %v2843
        %v2900 = vmul.f32 %v809, %v2843
        %v2901 = vmul.f32 %v814, %v2843
        %v2902 = vmul.f32 %v819, %v2843
        %v2903 = vmul.f32 %v824, %v2843
        %v2904 = vmul.f32 %v829, %v2843
        %v2905 = vmul.f32 %v834, %v2843
        %v2906 = vmul.f32 %v839, %v2843
        %v2907 = vmul.f32 %v844, %v2843
        %v2908 = vmul.f32 %v849, %v2843
        %v2909 = vmul.f32 %v854, %v2843
        %v2910 = vmul.f32 %v859, %v2843
        %v2911 = vmul.f32 %v864, %v2843
        %v2912 = vmul.f32 %v869, %v2843
        %v2913 = vmul.f32 %v874, %v2843
        %v2914 = vmul.f32 %v879, %v2843
        %v2915 = vmul.f32 %v884, %v2843
        %v2916 = vmul.f32 %v889, %v2843
        %v2917 = vmul.f32 %v894, %v2843
        %v2918 = vmul.f32 %v899, %v2843
        %v2919 = vmul.f32 %v904, %v2843
        %v2920 = vmul.f32 %v909, %v2843
        %v2921 = vmul.f32 %v914, %v2843
        %v2922 = vmul.f32 %v919, %v2843
        %v2923 = vmul.f32 %v924, %v2843
        %v2924 = vmul.f32 %v929, %v2843
        %v2925 = vmul.f32 %v934, %v2843
        %v2926 = vmul.f32 %v939, %v2843
        %v2927 = vmul.f32 %v944, %v2843
        %v2928 = vmul.f32 %v949, %v2843
        %v2929 = vmul.f32 %v954, %v2843
        %v2930 = vmul.f32 %v959, %v2843
        %v2931 = vmul.f32 %v964, %v2843
        %v2932 = vmul.f32 %v969, %v2843
        %v2933 = vmul.f32 %v974, %v2843
        %v2934 = vmul.f32 %v979, %v2843
        %v2935 = vmul.f32 %v984, %v2843
        %v2936 = vmul.f32 %v989, %v2843
        %v2937 = vmul.f32 %v994, %v2843
        %v2938 = vmul.f32 %v999, %v2843
        %v2939 = vmul.f32 %v1004, %v2843
        %v2940 = vmul.f32 %v1009, %v2843
        %v2941 = vmul.f32 %v1014, %v2843
        %v2942 = vmul.f32 %v1019, %v2843
        %v2943 = vmul.f32 %v1024, %v2843
        %v2944 = vmul.f32 %v1029, %v2843
        %v2945 = vmul.f32 %v1034, %v2843
        %v2946 = vmul.f32 %v1039, %v2843
        %v2947 = vmul.f32 %v1044, %v2843
        %v2948 = vmul.f32 %v1049, %v2843
        %v2949 = vmul.f32 %v1054, %v2843
        %v2950 = vmul.f32 %v1059, %v2843
        %v2951 = vmul.f32 %v1064, %v2843
        %v2952 = vmul.f32 %v2595, %v2843
        %v2953 = vmul.f32 %v2600, %v2843
        %v2954 = vmul.f32 %v2605, %v2843
        %v2955 = vmul.f32 %v2610, %v2843
        %v3068 = vrot.slane %v2844, 1
        %v3069 = vrot.slane %v2845, 1
        %v3070 = vsel %vm1522, %v3068, %v3069
        %v3071 = vrot.slane %v2846, 1
        %v3072 = vsel %vm1522, %v3069, %v3071
        %v3073 = vrot.slane %v2847, 1
        %v3074 = vsel %vm1522, %v3071, %v3073
        %v3075 = vrot.slane %v2848, 1
        %v3076 = vrot.slane %v2849, 1
        %v3077 = vsel %vm1522, %v3075, %v3076
        %v3078 = vrot.slane %v2850, 1
        %v3079 = vsel %vm1522, %v3076, %v3078
        %v3080 = vrot.slane %v2851, 1
        %v3081 = vsel %vm1522, %v3078, %v3080
        %v3082 = vrot.slane %v2852, 1
        %v3083 = vrot.slane %v2853, 1
        %v3084 = vsel %vm1522, %v3082, %v3083
        %v3085 = vrot.slane %v2854, 1
        %v3086 = vsel %vm1522, %v3083, %v3085
        %v3087 = vrot.slane %v2855, 1
        %v3088 = vsel %vm1522, %v3085, %v3087
        %v3089 = vrot.slane %v2856, 1
        %v3090 = vrot.slane %v2857, 1
        %v3091 = vsel %vm1522, %v3089, %v3090
        %v3092 = vrot.slane %v2858, 1
        %v3093 = vsel %vm1522, %v3090, %v3092
        %v3094 = vrot.slane %v2859, 1
        %v3095 = vsel %vm1522, %v3092, %v3094
        %v3096 = vrot.slane %v2860, 1
        %v3097 = vrot.slane %v2861, 1
        %v3098 = vsel %vm1522, %v3096, %v3097
        %v3099 = vrot.slane %v2862, 1
        %v3100 = vsel %vm1522, %v3097, %v3099
        %v3101 = vrot.slane %v2863, 1
        %v3102 = vsel %vm1522, %v3099, %v3101
        %v3103 = vrot.slane %v2864, 1
        %v3104 = vrot.slane %v2865, 1
        %v3105 = vsel %vm1522, %v3103, %v3104
        %v3106 = vrot.slane %v2866, 1
        %v3107 = vsel %vm1522, %v3104, %v3106
        %v3108 = vrot.slane %v2867, 1
        %v3109 = vsel %vm1522, %v3106, %v3108
        %v3110 = vrot.slane %v2868, 1
        %v3111 = vrot.slane %v2869, 1
        %v3112 = vsel %vm1522, %v3110, %v3111
        %v3113 = vrot.slane %v2870, 1
        %v3114 = vsel %vm1522, %v3111, %v3113
        %v3115 = vrot.slane %v2871, 1
        %v3116 = vsel %vm1522, %v3113, %v3115
        %v3117 = vrot.slane %v2872, 1
        %v3118 = vrot.slane %v2873, 1
        %v3119 = vsel %vm1522, %v3117, %v3118
        %v3120 = vrot.slane %v2874, 1
        %v3121 = vsel %vm1522, %v3118, %v3120
        %v3122 = vrot.slane %v2875, 1
        %v3123 = vsel %vm1522, %v3120, %v3122
        %v3124 = vrot.slane %v2876, 1
        %v3125 = vrot.slane %v2877, 1
        %v3126 = vsel %vm1522, %v3124, %v3125
        %v3127 = vrot.slane %v2878, 1
        %v3128 = vsel %vm1522, %v3125, %v3127
        %v3129 = vrot.slane %v2879, 1
        %v3130 = vsel %vm1522, %v3127, %v3129
        %v3131 = vrot.slane %v2880, 1
        %v3132 = vrot.slane %v2881, 1
        %v3133 = vsel %vm1522, %v3131, %v3132
        %v3134 = vrot.slane %v2882, 1
        %v3135 = vsel %vm1522, %v3132, %v3134
        %v3136 = vrot.slane %v2883, 1
        %v3137 = vsel %vm1522, %v3134, %v3136
        %v3138 = vrot.slane %v2884, 1
        %v3139 = vrot.slane %v2885, 1
        %v3140 = vsel %vm1522, %v3138, %v3139
        %v3141 = vrot.slane %v2886, 1
        %v3142 = vsel %vm1522, %v3139, %v3141
        %v3143 = vrot.slane %v2887, 1
        %v3144 = vsel %vm1522, %v3141, %v3143
        %v3145 = vrot.slane %v2888, 1
        %v3146 = vrot.slane %v2889, 1
        %v3147 = vsel %vm1522, %v3145, %v3146
        %v3148 = vrot.slane %v2890, 1
        %v3149 = vsel %vm1522, %v3146, %v3148
        %v3150 = vrot.slane %v2891, 1
        %v3151 = vsel %vm1522, %v3148, %v3150
        %v3152 = vrot.slane %v2892, 1
        %v3153 = vrot.slane %v2893, 1
        %v3154 = vsel %vm1522, %v3152, %v3153
        %v3155 = vrot.slane %v2894, 1
        %v3156 = vsel %vm1522, %v3153, %v3155
        %v3157 = vrot.slane %v2895, 1
        %v3158 = vsel %vm1522, %v3155, %v3157
        %v3159 = vrot.slane %v2896, 1
        %v3160 = vrot.slane %v2897, 1
        %v3161 = vsel %vm1522, %v3159, %v3160
        %v3162 = vrot.slane %v2898, 1
        %v3163 = vsel %vm1522, %v3160, %v3162
        %v3164 = vrot.slane %v2899, 1
        %v3165 = vsel %vm1522, %v3162, %v3164
        %v3166 = vrot.slane %v2900, 1
        %v3167 = vrot.slane %v2901, 1
        %v3168 = vsel %vm1522, %v3166, %v3167
        %v3169 = vrot.slane %v2902, 1
        %v3170 = vsel %vm1522, %v3167, %v3169
        %v3171 = vrot.slane %v2903, 1
        %v3172 = vsel %vm1522, %v3169, %v3171
        %v3173 = vrot.slane %v2904, 1
        %v3174 = vrot.slane %v2905, 1
        %v3175 = vsel %vm1522, %v3173, %v3174
        %v3176 = vrot.slane %v2906, 1
        %v3177 = vsel %vm1522, %v3174, %v3176
        %v3178 = vrot.slane %v2907, 1
        %v3179 = vsel %vm1522, %v3176, %v3178
        %v3180 = vrot.slane %v2908, 1
        %v3181 = vrot.slane %v2909, 1
        %v3182 = vsel %vm1522, %v3180, %v3181
        %v3183 = vrot.slane %v2910, 1
        %v3184 = vsel %vm1522, %v3181, %v3183
        %v3185 = vrot.slane %v2911, 1
        %v3186 = vsel %vm1522, %v3183, %v3185
        %v3187 = vrot.slane %v2912, 1
        %v3188 = vrot.slane %v2913, 1
        %v3189 = vsel %vm1522, %v3187, %v3188
        %v3190 = vrot.slane %v2914, 1
        %v3191 = vsel %vm1522, %v3188, %v3190
        %v3192 = vrot.slane %v2915, 1
        %v3193 = vsel %vm1522, %v3190, %v3192
        %v3194 = vrot.slane %v2916, 1
        %v3195 = vrot.slane %v2917, 1
        %v3196 = vsel %vm1522, %v3194, %v3195
        %v3197 = vrot.slane %v2918, 1
        %v3198 = vsel %vm1522, %v3195, %v3197
        %v3199 = vrot.slane %v2919, 1
        %v3200 = vsel %vm1522, %v3197, %v3199
        %v3201 = vrot.slane %v2920, 1
        %v3202 = vrot.slane %v2921, 1
        %v3203 = vsel %vm1522, %v3201, %v3202
        %v3204 = vrot.slane %v2922, 1
        %v3205 = vsel %vm1522, %v3202, %v3204
        %v3206 = vrot.slane %v2923, 1
        %v3207 = vsel %vm1522, %v3204, %v3206
        %v3208 = vrot.slane %v2924, 1
        %v3209 = vrot.slane %v2925, 1
        %v3210 = vsel %vm1522, %v3208, %v3209
        %v3211 = vrot.slane %v2926, 1
        %v3212 = vsel %vm1522, %v3209, %v3211
        %v3213 = vrot.slane %v2927, 1
        %v3214 = vsel %vm1522, %v3211, %v3213
        %v3215 = vrot.slane %v2928, 1
        %v3216 = vrot.slane %v2929, 1
        %v3217 = vsel %vm1522, %v3215, %v3216
        %v3218 = vrot.slane %v2930, 1
        %v3219 = vsel %vm1522, %v3216, %v3218
        %v3220 = vrot.slane %v2931, 1
        %v3221 = vsel %vm1522, %v3218, %v3220
        %v3222 = vrot.slane %v2932, 1
        %v3223 = vrot.slane %v2933, 1
        %v3224 = vsel %vm1522, %v3222, %v3223
        %v3225 = vrot.slane %v2934, 1
        %v3226 = vsel %vm1522, %v3223, %v3225
        %v3227 = vrot.slane %v2935, 1
        %v3228 = vsel %vm1522, %v3225, %v3227
        %v3229 = vrot.slane %v2936, 1
        %v3230 = vrot.slane %v2937, 1
        %v3231 = vsel %vm1522, %v3229, %v3230
        %v3232 = vrot.slane %v2938, 1
        %v3233 = vsel %vm1522, %v3230, %v3232
        %v3234 = vrot.slane %v2939, 1
        %v3235 = vsel %vm1522, %v3232, %v3234
        %v3236 = vrot.slane %v2940, 1
        %v3237 = vrot.slane %v2941, 1
        %v3238 = vsel %vm1522, %v3236, %v3237
        %v3239 = vrot.slane %v2942, 1
        %v3240 = vsel %vm1522, %v3237, %v3239
        %v3241 = vrot.slane %v2943, 1
        %v3242 = vsel %vm1522, %v3239, %v3241
        %v3243 = vrot.slane %v2944, 1
        %v3244 = vrot.slane %v2945, 1
        %v3245 = vsel %vm1522, %v3243, %v3244
        %v3246 = vrot.slane %v2946, 1
        %v3247 = vsel %vm1522, %v3244, %v3246
        %v3248 = vrot.slane %v2947, 1
        %v3249 = vsel %vm1522, %v3246, %v3248
        %v3250 = vrot.slane %v2948, 1
        %v3251 = vrot.slane %v2949, 1
        %v3252 = vsel %vm1522, %v3250, %v3251
        %v3253 = vrot.slane %v2950, 1
        %v3254 = vsel %vm1522, %v3251, %v3253
        %v3255 = vrot.slane %v2951, 1
        %v3256 = vsel %vm1522, %v3253, %v3255
        %v3257 = vrot.slane %v2952, 1
        %v3258 = vrot.slane %v2953, 1
        %v3259 = vsel %vm1522, %v3257, %v3258
        %v3260 = vrot.slane %v2954, 1
        %v3261 = vsel %vm1522, %v3258, %v3260
        %v3262 = vrot.slane %v2955, 1
        %v3263 = vsel %vm1522, %v3260, %v3262
        %v3376 = vadd.f32 %v2728, %v3070
        %v3377 = vadd.f32 %v2729, %v3072
        %v3378 = vadd.f32 %v2730, %v3074
        %v3379 = vadd.f32 %v2731, %v3073
        %v3380 = vadd.f32 %v2732, %v3077
        %v3381 = vadd.f32 %v2733, %v3079
        %v3382 = vadd.f32 %v2734, %v3081
        %v3383 = vadd.f32 %v2735, %v3080
        %v3384 = vadd.f32 %v2736, %v3084
        %v3385 = vadd.f32 %v2737, %v3086
        %v3386 = vadd.f32 %v2738, %v3088
        %v3387 = vadd.f32 %v2739, %v3087
        %v3388 = vadd.f32 %v2740, %v3091
        %v3389 = vadd.f32 %v2741, %v3093
        %v3390 = vadd.f32 %v2742, %v3095
        %v3391 = vadd.f32 %v2743, %v3094
        %v3392 = vadd.f32 %v2744, %v3098
        %v3393 = vadd.f32 %v2745, %v3100
        %v3394 = vadd.f32 %v2746, %v3102
        %v3395 = vadd.f32 %v2747, %v3101
        %v3396 = vadd.f32 %v2748, %v3105
        %v3397 = vadd.f32 %v2749, %v3107
        %v3398 = vadd.f32 %v2750, %v3109
        %v3399 = vadd.f32 %v2751, %v3108
        %v3400 = vadd.f32 %v2752, %v3112
        %v3401 = vadd.f32 %v2753, %v3114
        %v3402 = vadd.f32 %v2754, %v3116
        %v3403 = vadd.f32 %v2755, %v3115
        %v3404 = vadd.f32 %v2756, %v3119
        %v3405 = vadd.f32 %v2757, %v3121
        %v3406 = vadd.f32 %v2758, %v3123
        %v3407 = vadd.f32 %v2759, %v3122
        %v3408 = vadd.f32 %v2760, %v3126
        %v3409 = vadd.f32 %v2761, %v3128
        %v3410 = vadd.f32 %v2762, %v3130
        %v3411 = vadd.f32 %v2763, %v3129
        %v3412 = vadd.f32 %v2764, %v3133
        %v3413 = vadd.f32 %v2765, %v3135
        %v3414 = vadd.f32 %v2766, %v3137
        %v3415 = vadd.f32 %v2767, %v3136
        %v3416 = vadd.f32 %v2768, %v3140
        %v3417 = vadd.f32 %v2769, %v3142
        %v3418 = vadd.f32 %v2770, %v3144
        %v3419 = vadd.f32 %v2771, %v3143
        %v3420 = vadd.f32 %v2772, %v3147
        %v3421 = vadd.f32 %v2773, %v3149
        %v3422 = vadd.f32 %v2774, %v3151
        %v3423 = vadd.f32 %v2775, %v3150
        %v3424 = vadd.f32 %v2776, %v3154
        %v3425 = vadd.f32 %v2777, %v3156
        %v3426 = vadd.f32 %v2778, %v3158
        %v3427 = vadd.f32 %v2779, %v3157
        %v3428 = vadd.f32 %v2780, %v3161
        %v3429 = vadd.f32 %v2781, %v3163
        %v3430 = vadd.f32 %v2782, %v3165
        %v3431 = vadd.f32 %v2783, %v3164
        %v3432 = vadd.f32 %v2784, %v3168
        %v3433 = vadd.f32 %v2785, %v3170
        %v3434 = vadd.f32 %v2786, %v3172
        %v3435 = vadd.f32 %v2787, %v3171
        %v3436 = vadd.f32 %v2788, %v3175
        %v3437 = vadd.f32 %v2789, %v3177
        %v3438 = vadd.f32 %v2790, %v3179
        %v3439 = vadd.f32 %v2791, %v3178
        %v3440 = vadd.f32 %v2792, %v3182
        %v3441 = vadd.f32 %v2793, %v3184
        %v3442 = vadd.f32 %v2794, %v3186
        %v3443 = vadd.f32 %v2795, %v3185
        %v3444 = vadd.f32 %v2796, %v3189
        %v3445 = vadd.f32 %v2797, %v3191
        %v3446 = vadd.f32 %v2798, %v3193
        %v3447 = vadd.f32 %v2799, %v3192
        %v3448 = vadd.f32 %v2800, %v3196
        %v3449 = vadd.f32 %v2801, %v3198
        %v3450 = vadd.f32 %v2802, %v3200
        %v3451 = vadd.f32 %v2803, %v3199
        %v3452 = vadd.f32 %v2804, %v3203
        %v3453 = vadd.f32 %v2805, %v3205
        %v3454 = vadd.f32 %v2806, %v3207
        %v3455 = vadd.f32 %v2807, %v3206
        %v3456 = vadd.f32 %v2808, %v3210
        %v3457 = vadd.f32 %v2809, %v3212
        %v3458 = vadd.f32 %v2810, %v3214
        %v3459 = vadd.f32 %v2811, %v3213
        %v3460 = vadd.f32 %v2812, %v3217
        %v3461 = vadd.f32 %v2813, %v3219
        %v3462 = vadd.f32 %v2814, %v3221
        %v3463 = vadd.f32 %v2815, %v3220
        %v3464 = vadd.f32 %v2816, %v3224
        %v3465 = vadd.f32 %v2817, %v3226
        %v3466 = vadd.f32 %v2818, %v3228
        %v3467 = vadd.f32 %v2819, %v3227
        %v3468 = vadd.f32 %v2820, %v3231
        %v3469 = vadd.f32 %v2821, %v3233
        %v3470 = vadd.f32 %v2822, %v3235
        %v3471 = vadd.f32 %v2823, %v3234
        %v3472 = vadd.f32 %v2824, %v3238
        %v3473 = vadd.f32 %v2825, %v3240
        %v3474 = vadd.f32 %v2826, %v3242
        %v3475 = vadd.f32 %v2827, %v3241
        %v3476 = vadd.f32 %v2828, %v3245
        %v3477 = vadd.f32 %v2829, %v3247
        %v3478 = vadd.f32 %v2830, %v3249
        %v3479 = vadd.f32 %v2831, %v3248
        %v3480 = vadd.f32 %v2832, %v3252
        %v3481 = vadd.f32 %v2833, %v3254
        %v3482 = vadd.f32 %v2834, %v3256
        %v3483 = vadd.f32 %v2835, %v3255
        %v3484 = vadd.f32 %v2836, %v3259
        %v3485 = vadd.f32 %v2837, %v3261
        %v3486 = vadd.f32 %v2838, %v3263
        %v3487 = vadd.f32 %v2839, %v3262
        %v3488 = vlaneseq
        %v3489 = vshrl.u32 %v3488, 7
        %v3490 = vsub.s32 5, %v3489
        %v3491 = vrot.slane %v504, %v3490
        %v3492 = vmul.f32 %v529, %v3491
        %v3493 = vmul.f32 %v534, %v3491
        %v3494 = vmul.f32 %v539, %v3491
        %v3495 = vmul.f32 %v544, %v3491
        %v3496 = vmul.f32 %v549, %v3491
        %v3497 = vmul.f32 %v554, %v3491
        %v3498 = vmul.f32 %v559, %v3491
        %v3499 = vmul.f32 %v564, %v3491
        %v3500 = vmul.f32 %v569, %v3491
        %v3501 = vmul.f32 %v574, %v3491
        %v3502 = vmul.f32 %v579, %v3491
        %v3503 = vmul.f32 %v584, %v3491
        %v3504 = vmul.f32 %v589, %v3491
        %v3505 = vmul.f32 %v594, %v3491
        %v3506 = vmul.f32 %v599, %v3491
        %v3507 = vmul.f32 %v604, %v3491
        %v3508 = vmul.f32 %v609, %v3491
        %v3509 = vmul.f32 %v614, %v3491
        %v3510 = vmul.f32 %v619, %v3491
        %v3511 = vmul.f32 %v624, %v3491
        %v3512 = vmul.f32 %v629, %v3491
        %v3513 = vmul.f32 %v634, %v3491
        %v3514 = vmul.f32 %v639, %v3491
        %v3515 = vmul.f32 %v644, %v3491
        %v3516 = vmul.f32 %v649, %v3491
        %v3517 = vmul.f32 %v654, %v3491
        %v3518 = vmul.f32 %v659, %v3491
        %v3519 = vmul.f32 %v664, %v3491
        %v3520 = vmul.f32 %v669, %v3491
        %v3521 = vmul.f32 %v674, %v3491
        %v3522 = vmul.f32 %v679, %v3491
        %v3523 = vmul.f32 %v684, %v3491
        %v3524 = vmul.f32 %v689, %v3491
        %v3525 = vmul.f32 %v694, %v3491
        %v3526 = vmul.f32 %v699, %v3491
        %v3527 = vmul.f32 %v704, %v3491
        %v3528 = vmul.f32 %v709, %v3491
        %v3529 = vmul.f32 %v714, %v3491
        %v3530 = vmul.f32 %v719, %v3491
        %v3531 = vmul.f32 %v724, %v3491
        %v3532 = vmul.f32 %v729, %v3491
        %v3533 = vmul.f32 %v734, %v3491
        %v3534 = vmul.f32 %v739, %v3491
        %v3535 = vmul.f32 %v744, %v3491
        %v3536 = vmul.f32 %v749, %v3491
        %v3537 = vmul.f32 %v754, %v3491
        %v3538 = vmul.f32 %v759, %v3491
        %v3539 = vmul.f32 %v764, %v3491
        %v3540 = vmul.f32 %v769, %v3491
        %v3541 = vmul.f32 %v774, %v3491
        %v3542 = vmul.f32 %v779, %v3491
        %v3543 = vmul.f32 %v784, %v3491
        %v3544 = vmul.f32 %v789, %v3491
        %v3545 = vmul.f32 %v794, %v3491
        %v3546 = vmul.f32 %v799, %v3491
        %v3547 = vmul.f32 %v804, %v3491
        %v3548 = vmul.f32 %v809, %v3491
        %v3549 = vmul.f32 %v814, %v3491
        %v3550 = vmul.f32 %v819, %v3491
        %v3551 = vmul.f32 %v824, %v3491
        %v3552 = vmul.f32 %v829, %v3491
        %v3553 = vmul.f32 %v834, %v3491
        %v3554 = vmul.f32 %v839, %v3491
        %v3555 = vmul.f32 %v844, %v3491
        %v3556 = vmul.f32 %v849, %v3491
        %v3557 = vmul.f32 %v854, %v3491
        %v3558 = vmul.f32 %v859, %v3491
        %v3559 = vmul.f32 %v864, %v3491
        %v3560 = vmul.f32 %v869, %v3491
        %v3561 = vmul.f32 %v874, %v3491
        %v3562 = vmul.f32 %v879, %v3491
        %v3563 = vmul.f32 %v884, %v3491
        %v3564 = vmul.f32 %v889, %v3491
        %v3565 = vmul.f32 %v894, %v3491
        %v3566 = vmul.f32 %v899, %v3491
        %v3567 = vmul.f32 %v904, %v3491
        %v3568 = vmul.f32 %v909, %v3491
        %v3569 = vmul.f32 %v914, %v3491
        %v3570 = vmul.f32 %v919, %v3491
        %v3571 = vmul.f32 %v924, %v3491
        %v3572 = vmul.f32 %v929, %v3491
        %v3573 = vmul.f32 %v934, %v3491
        %v3574 = vmul.f32 %v939, %v3491
        %v3575 = vmul.f32 %v944, %v3491
        %v3576 = vmul.f32 %v949, %v3491
        %v3577 = vmul.f32 %v954, %v3491
        %v3578 = vmul.f32 %v959, %v3491
        %v3579 = vmul.f32 %v964, %v3491
        %v3580 = vmul.f32 %v969, %v3491
        %v3581 = vmul.f32 %v974, %v3491
        %v3582 = vmul.f32 %v979, %v3491
        %v3583 = vmul.f32 %v984, %v3491
        %v3584 = vmul.f32 %v989, %v3491
        %v3585 = vmul.f32 %v994, %v3491
        %v3586 = vmul.f32 %v999, %v3491
        %v3587 = vmul.f32 %v1004, %v3491
        %v3588 = vmul.f32 %v1009, %v3491
        %v3589 = vmul.f32 %v1014, %v3491
        %v3590 = vmul.f32 %v1019, %v3491
        %v3591 = vmul.f32 %v1024, %v3491
        %v3592 = vmul.f32 %v1029, %v3491
        %v3593 = vmul.f32 %v1034, %v3491
        %v3594 = vmul.f32 %v1039, %v3491
        %v3595 = vmul.f32 %v1044, %v3491
        %v3596 = vmul.f32 %v1049, %v3491
        %v3597 = vmul.f32 %v1054, %v3491
        %v3598 = vmul.f32 %v1059, %v3491
        %v3599 = vmul.f32 %v1064, %v3491
        %v3600 = vmul.f32 %v2595, %v3491
        %v3601 = vmul.f32 %v2600, %v3491
        %v3602 = vmul.f32 %v2605, %v3491
        %v3603 = vmul.f32 %v2610, %v3491
        %v3716 = vrot.slane %v3492, 2
        %v3717 = vrot.slane %v3493, 2
        %v3718 = vsel %vm2171, %v3716, %v3717
        %v3719 = vrot.slane %v3494, 2
        %v3720 = vsel %vm2171, %v3717, %v3719
        %v3721 = vrot.slane %v3495, 2
        %v3722 = vsel %vm2171, %v3719, %v3721
        %v3723 = vrot.slane %v3496, 2
        %v3724 = vrot.slane %v3497, 2
        %v3725 = vsel %vm2171, %v3723, %v3724
        %v3726 = vrot.slane %v3498, 2
        %v3727 = vsel %vm2171, %v3724, %v3726
        %v3728 = vrot.slane %v3499, 2
        %v3729 = vsel %vm2171, %v3726, %v3728
        %v3730 = vrot.slane %v3500, 2
        %v3731 = vrot.slane %v3501, 2
        %v3732 = vsel %vm2171, %v3730, %v3731
        %v3733 = vrot.slane %v3502, 2
        %v3734 = vsel %vm2171, %v3731, %v3733
        %v3735 = vrot.slane %v3503, 2
        %v3736 = vsel %vm2171, %v3733, %v3735
        %v3737 = vrot.slane %v3504, 2
        %v3738 = vrot.slane %v3505, 2
        %v3739 = vsel %vm2171, %v3737, %v3738
        %v3740 = vrot.slane %v3506, 2
        %v3741 = vsel %vm2171, %v3738, %v3740
        %v3742 = vrot.slane %v3507, 2
        %v3743 = vsel %vm2171, %v3740, %v3742
        %v3744 = vrot.slane %v3508, 2
        %v3745 = vrot.slane %v3509, 2
        %v3746 = vsel %vm2171, %v3744, %v3745
        %v3747 = vrot.slane %v3510, 2
        %v3748 = vsel %vm2171, %v3745, %v3747
        %v3749 = vrot.slane %v3511, 2
        %v3750 = vsel %vm2171, %v3747, %v3749
        %v3751 = vrot.slane %v3512, 2
        %v3752 = vrot.slane %v3513, 2
        %v3753 = vsel %vm2171, %v3751, %v3752
        %v3754 = vrot.slane %v3514, 2
        %v3755 = vsel %vm2171, %v3752, %v3754
        %v3756 = vrot.slane %v3515, 2
        %v3757 = vsel %vm2171, %v3754, %v3756
        %v3758 = vrot.slane %v3516, 2
        %v3759 = vrot.slane %v3517, 2
        %v3760 = vsel %vm2171, %v3758, %v3759
        %v3761 = vrot.slane %v3518, 2
        %v3762 = vsel %vm2171, %v3759, %v3761
        %v3763 = vrot.slane %v3519, 2
        %v3764 = vsel %vm2171, %v3761, %v3763
        %v3765 = vrot.slane %v3520, 2
        %v3766 = vrot.slane %v3521, 2
        %v3767 = vsel %vm2171, %v3765, %v3766
        %v3768 = vrot.slane %v3522, 2
        %v3769 = vsel %vm2171, %v3766, %v3768
        %v3770 = vrot.slane %v3523, 2
        %v3771 = vsel %vm2171, %v3768, %v3770
        %v3772 = vrot.slane %v3524, 2
        %v3773 = vrot.slane %v3525, 2
        %v3774 = vsel %vm2171, %v3772, %v3773
        %v3775 = vrot.slane %v3526, 2
        %v3776 = vsel %vm2171, %v3773, %v3775
        %v3777 = vrot.slane %v3527, 2
        %v3778 = vsel %vm2171, %v3775, %v3777
        %v3779 = vrot.slane %v3528, 2
        %v3780 = vrot.slane %v3529, 2
        %v3781 = vsel %vm2171, %v3779, %v3780
        %v3782 = vrot.slane %v3530, 2
        %v3783 = vsel %vm2171, %v3780, %v3782
        %v3784 = vrot.slane %v3531, 2
        %v3785 = vsel %vm2171, %v3782, %v3784
        %v3786 = vrot.slane %v3532, 2
        %v3787 = vrot.slane %v3533, 2
        %v3788 = vsel %vm2171, %v3786, %v3787
        %v3789 = vrot.slane %v3534, 2
        %v3790 = vsel %vm2171, %v3787, %v3789
        %v3791 = vrot.slane %v3535, 2
        %v3792 = vsel %vm2171, %v3789, %v3791
        %v3793 = vrot.slane %v3536, 2
        %v3794 = vrot.slane %v3537, 2
        %v3795 = vsel %vm2171, %v3793, %v3794
        %v3796 = vrot.slane %v3538, 2
        %v3797 = vsel %vm2171, %v3794, %v3796
        %v3798 = vrot.slane %v3539, 2
        %v3799 = vsel %vm2171, %v3796, %v3798
        %v3800 = vrot.slane %v3540, 2
        %v3801 = vrot.slane %v3541, 2
        %v3802 = vsel %vm2171, %v3800, %v3801
        %v3803 = vrot.slane %v3542, 2
        %v3804 = vsel %vm2171, %v3801, %v3803
        %v3805 = vrot.slane %v3543, 2
        %v3806 = vsel %vm2171, %v3803, %v3805
        %v3807 = vrot.slane %v3544, 2
        %v3808 = vrot.slane %v3545, 2
        %v3809 = vsel %vm2171, %v3807, %v3808
        %v3810 = vrot.slane %v3546, 2
        %v3811 = vsel %vm2171, %v3808, %v3810
        %v3812 = vrot.slane %v3547, 2
        %v3813 = vsel %vm2171, %v3810, %v3812
        %v3814 = vrot.slane %v3548, 2
        %v3815 = vrot.slane %v3549, 2
        %v3816 = vsel %vm2171, %v3814, %v3815
        %v3817 = vrot.slane %v3550, 2
        %v3818 = vsel %vm2171, %v3815, %v3817
        %v3819 = vrot.slane %v3551, 2
        %v3820 = vsel %vm2171, %v3817, %v3819
        %v3821 = vrot.slane %v3552, 2
        %v3822 = vrot.slane %v3553, 2
        %v3823 = vsel %vm2171, %v3821, %v3822
        %v3824 = vrot.slane %v3554, 2
        %v3825 = vsel %vm2171, %v3822, %v3824
        %v3826 = vrot.slane %v3555, 2
        %v3827 = vsel %vm2171, %v3824, %v3826
        %v3828 = vrot.slane %v3556, 2
        %v3829 = vrot.slane %v3557, 2
        %v3830 = vsel %vm2171, %v3828, %v3829
        %v3831 = vrot.slane %v3558, 2
        %v3832 = vsel %vm2171, %v3829, %v3831
        %v3833 = vrot.slane %v3559, 2
        %v3834 = vsel %vm2171, %v3831, %v3833
        %v3835 = vrot.slane %v3560, 2
        %v3836 = vrot.slane %v3561, 2
        %v3837 = vsel %vm2171, %v3835, %v3836
        %v3838 = vrot.slane %v3562, 2
        %v3839 = vsel %vm2171, %v3836, %v3838
        %v3840 = vrot.slane %v3563, 2
        %v3841 = vsel %vm2171, %v3838, %v3840
        %v3842 = vrot.slane %v3564, 2
        %v3843 = vrot.slane %v3565, 2
        %v3844 = vsel %vm2171, %v3842, %v3843
        %v3845 = vrot.slane %v3566, 2
        %v3846 = vsel %vm2171, %v3843, %v3845
        %v3847 = vrot.slane %v3567, 2
        %v3848 = vsel %vm2171, %v3845, %v3847
        %v3849 = vrot.slane %v3568, 2
        %v3850 = vrot.slane %v3569, 2
        %v3851 = vsel %vm2171, %v3849, %v3850
        %v3852 = vrot.slane %v3570, 2
        %v3853 = vsel %vm2171, %v3850, %v3852
        %v3854 = vrot.slane %v3571, 2
        %v3855 = vsel %vm2171, %v3852, %v3854
        %v3856 = vrot.slane %v3572, 2
        %v3857 = vrot.slane %v3573, 2
        %v3858 = vsel %vm2171, %v3856, %v3857
        %v3859 = vrot.slane %v3574, 2
        %v3860 = vsel %vm2171, %v3857, %v3859
        %v3861 = vrot.slane %v3575, 2
        %v3862 = vsel %vm2171, %v3859, %v3861
        %v3863 = vrot.slane %v3576, 2
        %v3864 = vrot.slane %v3577, 2
        %v3865 = vsel %vm2171, %v3863, %v3864
        %v3866 = vrot.slane %v3578, 2
        %v3867 = vsel %vm2171, %v3864, %v3866
        %v3868 = vrot.slane %v3579, 2
        %v3869 = vsel %vm2171, %v3866, %v3868
        %v3870 = vrot.slane %v3580, 2
        %v3871 = vrot.slane %v3581, 2
        %v3872 = vsel %vm2171, %v3870, %v3871
        %v3873 = vrot.slane %v3582, 2
        %v3874 = vsel %vm2171, %v3871, %v3873
        %v3875 = vrot.slane %v3583, 2
        %v3876 = vsel %vm2171, %v3873, %v3875
        %v3877 = vrot.slane %v3584, 2
        %v3878 = vrot.slane %v3585, 2
        %v3879 = vsel %vm2171, %v3877, %v3878
        %v3880 = vrot.slane %v3586, 2
        %v3881 = vsel %vm2171, %v3878, %v3880
        %v3882 = vrot.slane %v3587, 2
        %v3883 = vsel %vm2171, %v3880, %v3882
        %v3884 = vrot.slane %v3588, 2
        %v3885 = vrot.slane %v3589, 2
        %v3886 = vsel %vm2171, %v3884, %v3885
        %v3887 = vrot.slane %v3590, 2
        %v3888 = vsel %vm2171, %v3885, %v3887
        %v3889 = vrot.slane %v3591, 2
        %v3890 = vsel %vm2171, %v3887, %v3889
        %v3891 = vrot.slane %v3592, 2
        %v3892 = vrot.slane %v3593, 2
        %v3893 = vsel %vm2171, %v3891, %v3892
        %v3894 = vrot.slane %v3594, 2
        %v3895 = vsel %vm2171, %v3892, %v3894
        %v3896 = vrot.slane %v3595, 2
        %v3897 = vsel %vm2171, %v3894, %v3896
        %v3898 = vrot.slane %v3596, 2
        %v3899 = vrot.slane %v3597, 2
        %v3900 = vsel %vm2171, %v3898, %v3899
        %v3901 = vrot.slane %v3598, 2
        %v3902 = vsel %vm2171, %v3899, %v3901
        %v3903 = vrot.slane %v3599, 2
        %v3904 = vsel %vm2171, %v3901, %v3903
        %v3905 = vrot.slane %v3600, 2
        %v3906 = vrot.slane %v3601, 2
        %v3907 = vsel %vm2171, %v3905, %v3906
        %v3908 = vrot.slane %v3602, 2
        %v3909 = vsel %vm2171, %v3906, %v3908
        %v3910 = vrot.slane %v3603, 2
        %v3911 = vsel %vm2171, %v3908, %v3910
        %v4024 = vadd.f32 %v3376, %v3718
        %v4025 = vadd.f32 %v3377, %v3720
        %v4026 = vadd.f32 %v3378, %v3722
        %v4027 = vadd.f32 %v3379, %v3721
        %v4028 = vadd.f32 %v3380, %v3725
        %v4029 = vadd.f32 %v3381, %v3727
        %v4030 = vadd.f32 %v3382, %v3729
        %v4031 = vadd.f32 %v3383, %v3728
        %v4032 = vadd.f32 %v3384, %v3732
        %v4033 = vadd.f32 %v3385, %v3734
        %v4034 = vadd.f32 %v3386, %v3736
        %v4035 = vadd.f32 %v3387, %v3735
        %v4036 = vadd.f32 %v3388, %v3739
        %v4037 = vadd.f32 %v3389, %v3741
        %v4038 = vadd.f32 %v3390, %v3743
        %v4039 = vadd.f32 %v3391, %v3742
        %v4040 = vadd.f32 %v3392, %v3746
        %v4041 = vadd.f32 %v3393, %v3748
        %v4042 = vadd.f32 %v3394, %v3750
        %v4043 = vadd.f32 %v3395, %v3749
        %v4044 = vadd.f32 %v3396, %v3753
        %v4045 = vadd.f32 %v3397, %v3755
        %v4046 = vadd.f32 %v3398, %v3757
        %v4047 = vadd.f32 %v3399, %v3756
        %v4048 = vadd.f32 %v3400, %v3760
        %v4049 = vadd.f32 %v3401, %v3762
        %v4050 = vadd.f32 %v3402, %v3764
        %v4051 = vadd.f32 %v3403, %v3763
        %v4052 = vadd.f32 %v3404, %v3767
        %v4053 = vadd.f32 %v3405, %v3769
        %v4054 = vadd.f32 %v3406, %v3771
        %v4055 = vadd.f32 %v3407, %v3770
        %v4056 = vadd.f32 %v3408, %v3774
        %v4057 = vadd.f32 %v3409, %v3776
        %v4058 = vadd.f32 %v3410, %v3778
        %v4059 = vadd.f32 %v3411, %v3777
        %v4060 = vadd.f32 %v3412, %v3781
        %v4061 = vadd.f32 %v3413, %v3783
        %v4062 = vadd.f32 %v3414, %v3785
        %v4063 = vadd.f32 %v3415, %v3784
        %v4064 = vadd.f32 %v3416, %v3788
        %v4065 = vadd.f32 %v3417, %v3790
        %v4066 = vadd.f32 %v3418, %v3792
        %v4067 = vadd.f32 %v3419, %v3791
        %v4068 = vadd.f32 %v3420, %v3795
        %v4069 = vadd.f32 %v3421, %v3797
        %v4070 = vadd.f32 %v3422, %v3799
        %v4071 = vadd.f32 %v3423, %v3798
        %v4072 = vadd.f32 %v3424, %v3802
        %v4073 = vadd.f32 %v3425, %v3804
        %v4074 = vadd.f32 %v3426, %v3806
        %v4075 = vadd.f32 %v3427, %v3805
        %v4076 = vadd.f32 %v3428, %v3809
        %v4077 = vadd.f32 %v3429, %v3811
        %v4078 = vadd.f32 %v3430, %v3813
        %v4079 = vadd.f32 %v3431, %v3812
        %v4080 = vadd.f32 %v3432, %v3816
        %v4081 = vadd.f32 %v3433, %v3818
        %v4082 = vadd.f32 %v3434, %v3820
        %v4083 = vadd.f32 %v3435, %v3819
        %v4084 = vadd.f32 %v3436, %v3823
        %v4085 = vadd.f32 %v3437, %v3825
        %v4086 = vadd.f32 %v3438, %v3827
        %v4087 = vadd.f32 %v3439, %v3826
        %v4088 = vadd.f32 %v3440, %v3830
        %v4089 = vadd.f32 %v3441, %v3832
        %v4090 = vadd.f32 %v3442, %v3834
        %v4091 = vadd.f32 %v3443, %v3833
        %v4092 = vadd.f32 %v3444, %v3837
        %v4093 = vadd.f32 %v3445, %v3839
        %v4094 = vadd.f32 %v3446, %v3841
        %v4095 = vadd.f32 %v3447, %v3840
        %v4096 = vadd.f32 %v3448, %v3844
        %v4097 = vadd.f32 %v3449, %v3846
        %v4098 = vadd.f32 %v3450, %v3848
        %v4099 = vadd.f32 %v3451, %v3847
        %v4100 = vadd.f32 %v3452, %v3851
        %v4101 = vadd.f32 %v3453, %v3853
        %v4102 = vadd.f32 %v3454, %v3855
        %v4103 = vadd.f32 %v3455, %v3854
        %v4104 = vadd.f32 %v3456, %v3858
        %v4105 = vadd.f32 %v3457, %v3860
        %v4106 = vadd.f32 %v3458, %v3862
        %v4107 = vadd.f32 %v3459, %v3861
        %v4108 = vadd.f32 %v3460, %v3865
        %v4109 = vadd.f32 %v3461, %v3867
        %v4110 = vadd.f32 %v3462, %v3869
        %v4111 = vadd.f32 %v3463, %v3868
        %v4112 = vadd.f32 %v3464, %v3872
        %v4113 = vadd.f32 %v3465, %v3874
        %v4114 = vadd.f32 %v3466, %v3876
        %v4115 = vadd.f32 %v3467, %v3875
        %v4116 = vadd.f32 %v3468, %v3879
        %v4117 = vadd.f32 %v3469, %v3881
        %v4118 = vadd.f32 %v3470, %v3883
        %v4119 = vadd.f32 %v3471, %v3882
        %v4120 = vadd.f32 %v3472, %v3886
        %v4121 = vadd.f32 %v3473, %v3888
        %v4122 = vadd.f32 %v3474, %v3890
        %v4123 = vadd.f32 %v3475, %v3889
        %v4124 = vadd.f32 %v3476, %v3893
        %v4125 = vadd.f32 %v3477, %v3895
        %v4126 = vadd.f32 %v3478, %v3897
        %v4127 = vadd.f32 %v3479, %v3896
        %v4128 = vadd.f32 %v3480, %v3900
        %v4129 = vadd.f32 %v3481, %v3902
        %v4130 = vadd.f32 %v3482, %v3904
        %v4131 = vadd.f32 %v3483, %v3903
        %v4132 = vadd.f32 %v3484, %v3907
        %v4133 = vadd.f32 %v3485, %v3909
        %v4134 = vadd.f32 %v3486, %v3911
        %v4135 = vadd.f32 %v3487, %v3910
        %4137 = vset.pattern.permute.xlu0 0
        %4138 = vperm.xlu0 %4137, %v500
        %v4139 = vpop.permute.xlu0 %4138
        %4142 = vset.pattern.permute.xlu0 0
        %4143 = vperm.xlu0 %4142, %v501
        %v4144 = vpop.permute.xlu0 %4143
        %4147 = vset.pattern.permute.xlu0 0
        %4148 = vperm.xlu0 %4147, %v502
        %v4149 = vpop.permute.xlu0 %4148
        %4152 = vset.pattern.permute.xlu0 0
        %4153 = vperm.xlu0 %4152, %v503
        %v4154 = vpop.permute.xlu0 %4153
        %v4156 = vlaneseq
        %v4157 = vshrl.u32 %v4156, 7
        %v4158 = vsub.s32 6, %v4157
        %v4159 = vrot.slane %v504, %v4158
        %v4160 = vmul.f32 %v549, %v4159
        %v4161 = vmul.f32 %v554, %v4159
        %v4162 = vmul.f32 %v559, %v4159
        %v4163 = vmul.f32 %v564, %v4159
        %v4164 = vmul.f32 %v569, %v4159
        %v4165 = vmul.f32 %v574, %v4159
        %v4166 = vmul.f32 %v579, %v4159
        %v4167 = vmul.f32 %v584, %v4159
        %v4168 = vmul.f32 %v589, %v4159
        %v4169 = vmul.f32 %v594, %v4159
        %v4170 = vmul.f32 %v599, %v4159
        %v4171 = vmul.f32 %v604, %v4159
        %v4172 = vmul.f32 %v609, %v4159
        %v4173 = vmul.f32 %v614, %v4159
        %v4174 = vmul.f32 %v619, %v4159
        %v4175 = vmul.f32 %v624, %v4159
        %v4176 = vmul.f32 %v629, %v4159
        %v4177 = vmul.f32 %v634, %v4159
        %v4178 = vmul.f32 %v639, %v4159
        %v4179 = vmul.f32 %v644, %v4159
        %v4180 = vmul.f32 %v649, %v4159
        %v4181 = vmul.f32 %v654, %v4159
        %v4182 = vmul.f32 %v659, %v4159
        %v4183 = vmul.f32 %v664, %v4159
        %v4184 = vmul.f32 %v669, %v4159
        %v4185 = vmul.f32 %v674, %v4159
        %v4186 = vmul.f32 %v679, %v4159
        %v4187 = vmul.f32 %v684, %v4159
        %v4188 = vmul.f32 %v689, %v4159
        %v4189 = vmul.f32 %v694, %v4159
        %v4190 = vmul.f32 %v699, %v4159
        %v4191 = vmul.f32 %v704, %v4159
        %v4192 = vmul.f32 %v709, %v4159
        %v4193 = vmul.f32 %v714, %v4159
        %v4194 = vmul.f32 %v719, %v4159
        %v4195 = vmul.f32 %v724, %v4159
        %v4196 = vmul.f32 %v729, %v4159
        %v4197 = vmul.f32 %v734, %v4159
        %v4198 = vmul.f32 %v739, %v4159
        %v4199 = vmul.f32 %v744, %v4159
        %v4200 = vmul.f32 %v749, %v4159
        %v4201 = vmul.f32 %v754, %v4159
        %v4202 = vmul.f32 %v759, %v4159
        %v4203 = vmul.f32 %v764, %v4159
        %v4204 = vmul.f32 %v769, %v4159
        %v4205 = vmul.f32 %v774, %v4159
        %v4206 = vmul.f32 %v779, %v4159
        %v4207 = vmul.f32 %v784, %v4159
        %v4208 = vmul.f32 %v789, %v4159
        %v4209 = vmul.f32 %v794, %v4159
        %v4210 = vmul.f32 %v799, %v4159
        %v4211 = vmul.f32 %v804, %v4159
        %v4212 = vmul.f32 %v809, %v4159
        %v4213 = vmul.f32 %v814, %v4159
        %v4214 = vmul.f32 %v819, %v4159
        %v4215 = vmul.f32 %v824, %v4159
        %v4216 = vmul.f32 %v829, %v4159
        %v4217 = vmul.f32 %v834, %v4159
        %v4218 = vmul.f32 %v839, %v4159
        %v4219 = vmul.f32 %v844, %v4159
        %v4220 = vmul.f32 %v849, %v4159
        %v4221 = vmul.f32 %v854, %v4159
        %v4222 = vmul.f32 %v859, %v4159
        %v4223 = vmul.f32 %v864, %v4159
        %v4224 = vmul.f32 %v869, %v4159
        %v4225 = vmul.f32 %v874, %v4159
        %v4226 = vmul.f32 %v879, %v4159
        %v4227 = vmul.f32 %v884, %v4159
        %v4228 = vmul.f32 %v889, %v4159
        %v4229 = vmul.f32 %v894, %v4159
        %v4230 = vmul.f32 %v899, %v4159
        %v4231 = vmul.f32 %v904, %v4159
        %v4232 = vmul.f32 %v909, %v4159
        %v4233 = vmul.f32 %v914, %v4159
        %v4234 = vmul.f32 %v919, %v4159
        %v4235 = vmul.f32 %v924, %v4159
        %v4236 = vmul.f32 %v929, %v4159
        %v4237 = vmul.f32 %v934, %v4159
        %v4238 = vmul.f32 %v939, %v4159
        %v4239 = vmul.f32 %v944, %v4159
        %v4240 = vmul.f32 %v949, %v4159
        %v4241 = vmul.f32 %v954, %v4159
        %v4242 = vmul.f32 %v959, %v4159
        %v4243 = vmul.f32 %v964, %v4159
        %v4244 = vmul.f32 %v969, %v4159
        %v4245 = vmul.f32 %v974, %v4159
        %v4246 = vmul.f32 %v979, %v4159
        %v4247 = vmul.f32 %v984, %v4159
        %v4248 = vmul.f32 %v989, %v4159
        %v4249 = vmul.f32 %v994, %v4159
        %v4250 = vmul.f32 %v999, %v4159
        %v4251 = vmul.f32 %v1004, %v4159
        %v4252 = vmul.f32 %v1009, %v4159
        %v4253 = vmul.f32 %v1014, %v4159
        %v4254 = vmul.f32 %v1019, %v4159
        %v4255 = vmul.f32 %v1024, %v4159
        %v4256 = vmul.f32 %v1029, %v4159
        %v4257 = vmul.f32 %v1034, %v4159
        %v4258 = vmul.f32 %v1039, %v4159
        %v4259 = vmul.f32 %v1044, %v4159
        %v4260 = vmul.f32 %v1049, %v4159
        %v4261 = vmul.f32 %v1054, %v4159
        %v4262 = vmul.f32 %v1059, %v4159
        %v4263 = vmul.f32 %v1064, %v4159
        %v4264 = vmul.f32 %v2595, %v4159
        %v4265 = vmul.f32 %v2600, %v4159
        %v4266 = vmul.f32 %v2605, %v4159
        %v4267 = vmul.f32 %v2610, %v4159
        %v4268 = vmul.f32 %v4139, %v4159
        %v4269 = vmul.f32 %v4144, %v4159
        %v4270 = vmul.f32 %v4149, %v4159
        %v4271 = vmul.f32 %v4154, %v4159
        %v4272 = vadd.f32 %v4024, %v4160
        %v4273 = vadd.f32 %v4025, %v4161
        %v4274 = vadd.f32 %v4026, %v4162
        %v4275 = vadd.f32 %v4027, %v4163
        %v4276 = vadd.f32 %v4028, %v4164
        %v4277 = vadd.f32 %v4029, %v4165
        %v4278 = vadd.f32 %v4030, %v4166
        %v4279 = vadd.f32 %v4031, %v4167
        %v4280 = vadd.f32 %v4032, %v4168
        %v4281 = vadd.f32 %v4033, %v4169
        %v4282 = vadd.f32 %v4034, %v4170
        %v4283 = vadd.f32 %v4035, %v4171
        %v4284 = vadd.f32 %v4036, %v4172
        %v4285 = vadd.f32 %v4037, %v4173
        %v4286 = vadd.f32 %v4038, %v4174
        %v4287 = vadd.f32 %v4039, %v4175
        %v4288 = vadd.f32 %v4040, %v4176
        %v4289 = vadd.f32 %v4041, %v4177
        %v4290 = vadd.f32 %v4042, %v4178
        %v4291 = vadd.f32 %v4043, %v4179
        %v4292 = vadd.f32 %v4044, %v4180
        %v4293 = vadd.f32 %v4045, %v4181
        %v4294 = vadd.f32 %v4046, %v4182
        %v4295 = vadd.f32 %v4047, %v4183
        %v4296 = vadd.f32 %v4048, %v4184
        %v4297 = vadd.f32 %v4049, %v4185
        %v4298 = vadd.f32 %v4050, %v4186
        %v4299 = vadd.f32 %v4051, %v4187
        %v4300 = vadd.f32 %v4052, %v4188
        %v4301 = vadd.f32 %v4053, %v4189
        %v4302 = vadd.f32 %v4054, %v4190
        %v4303 = vadd.f32 %v4055, %v4191
        %v4304 = vadd.f32 %v4056, %v4192
        %v4305 = vadd.f32 %v4057, %v4193
        %v4306 = vadd.f32 %v4058, %v4194
        %v4307 = vadd.f32 %v4059, %v4195
        %v4308 = vadd.f32 %v4060, %v4196
        %v4309 = vadd.f32 %v4061, %v4197
        %v4310 = vadd.f32 %v4062, %v4198
        %v4311 = vadd.f32 %v4063, %v4199
        %v4312 = vadd.f32 %v4064, %v4200
        %v4313 = vadd.f32 %v4065, %v4201
        %v4314 = vadd.f32 %v4066, %v4202
        %v4315 = vadd.f32 %v4067, %v4203
        %v4316 = vadd.f32 %v4068, %v4204
        %v4317 = vadd.f32 %v4069, %v4205
        %v4318 = vadd.f32 %v4070, %v4206
        %v4319 = vadd.f32 %v4071, %v4207
        %v4320 = vadd.f32 %v4072, %v4208
        %v4321 = vadd.f32 %v4073, %v4209
        %v4322 = vadd.f32 %v4074, %v4210
        %v4323 = vadd.f32 %v4075, %v4211
        %v4324 = vadd.f32 %v4076, %v4212
        %v4325 = vadd.f32 %v4077, %v4213
        %v4326 = vadd.f32 %v4078, %v4214
        %v4327 = vadd.f32 %v4079, %v4215
        %v4328 = vadd.f32 %v4080, %v4216
        %v4329 = vadd.f32 %v4081, %v4217
        %v4330 = vadd.f32 %v4082, %v4218
        %v4331 = vadd.f32 %v4083, %v4219
        %v4332 = vadd.f32 %v4084, %v4220
        %v4333 = vadd.f32 %v4085, %v4221
        %v4334 = vadd.f32 %v4086, %v4222
        %v4335 = vadd.f32 %v4087, %v4223
        %v4336 = vadd.f32 %v4088, %v4224
        %v4337 = vadd.f32 %v4089, %v4225
        %v4338 = vadd.f32 %v4090, %v4226
        %v4339 = vadd.f32 %v4091, %v4227
        %v4340 = vadd.f32 %v4092, %v4228
        %v4341 = vadd.f32 %v4093, %v4229
        %v4342 = vadd.f32 %v4094, %v4230
        %v4343 = vadd.f32 %v4095, %v4231
        %v4344 = vadd.f32 %v4096, %v4232
        %v4345 = vadd.f32 %v4097, %v4233
        %v4346 = vadd.f32 %v4098, %v4234
        %v4347 = vadd.f32 %v4099, %v4235
        %v4348 = vadd.f32 %v4100, %v4236
        %v4349 = vadd.f32 %v4101, %v4237
        %v4350 = vadd.f32 %v4102, %v4238
        %v4351 = vadd.f32 %v4103, %v4239
        %v4352 = vadd.f32 %v4104, %v4240
        %v4353 = vadd.f32 %v4105, %v4241
        %v4354 = vadd.f32 %v4106, %v4242
        %v4355 = vadd.f32 %v4107, %v4243
        %v4356 = vadd.f32 %v4108, %v4244
        %v4357 = vadd.f32 %v4109, %v4245
        %v4358 = vadd.f32 %v4110, %v4246
        %v4359 = vadd.f32 %v4111, %v4247
        %v4360 = vadd.f32 %v4112, %v4248
        %v4361 = vadd.f32 %v4113, %v4249
        %v4362 = vadd.f32 %v4114, %v4250
        %v4363 = vadd.f32 %v4115, %v4251
        %v4364 = vadd.f32 %v4116, %v4252
        %v4365 = vadd.f32 %v4117, %v4253
        %v4366 = vadd.f32 %v4118, %v4254
        %v4367 = vadd.f32 %v4119, %v4255
        %v4368 = vadd.f32 %v4120, %v4256
        %v4369 = vadd.f32 %v4121, %v4257
        %v4370 = vadd.f32 %v4122, %v4258
        %v4371 = vadd.f32 %v4123, %v4259
        %v4372 = vadd.f32 %v4124, %v4260
        %v4373 = vadd.f32 %v4125, %v4261
        %v4374 = vadd.f32 %v4126, %v4262
        %v4375 = vadd.f32 %v4127, %v4263
        %v4376 = vadd.f32 %v4128, %v4264
        %v4377 = vadd.f32 %v4129, %v4265
        %v4378 = vadd.f32 %v4130, %v4266
        %v4379 = vadd.f32 %v4131, %v4267
        %v4380 = vadd.f32 %v4132, %v4268
        %v4381 = vadd.f32 %v4133, %v4269
        %v4382 = vadd.f32 %v4134, %v4270
        %v4383 = vadd.f32 %v4135, %v4271
        %v4384 = vlaneseq
        %v4385 = vshrl.u32 %v4384, 7
        %v4386 = vsub.s32 7, %v4385
        %v4387 = vrot.slane %v504, %v4386
        %v4388 = vmul.f32 %v549, %v4387
        %v4389 = vmul.f32 %v554, %v4387
        %v4390 = vmul.f32 %v559, %v4387
        %v4391 = vmul.f32 %v564, %v4387
        %v4392 = vmul.f32 %v569, %v4387
        %v4393 = vmul.f32 %v574, %v4387
        %v4394 = vmul.f32 %v579, %v4387
        %v4395 = vmul.f32 %v584, %v4387
        %v4396 = vmul.f32 %v589, %v4387
        %v4397 = vmul.f32 %v594, %v4387
        %v4398 = vmul.f32 %v599, %v4387
        %v4399 = vmul.f32 %v604, %v4387
        %v4400 = vmul.f32 %v609, %v4387
        %v4401 = vmul.f32 %v614, %v4387
        %v4402 = vmul.f32 %v619, %v4387
        %v4403 = vmul.f32 %v624, %v4387
        %v4404 = vmul.f32 %v629, %v4387
        %v4405 = vmul.f32 %v634, %v4387
        %v4406 = vmul.f32 %v639, %v4387
        %v4407 = vmul.f32 %v644, %v4387
        %v4408 = vmul.f32 %v649, %v4387
        %v4409 = vmul.f32 %v654, %v4387
        %v4410 = vmul.f32 %v659, %v4387
        %v4411 = vmul.f32 %v664, %v4387
        %v4412 = vmul.f32 %v669, %v4387
        %v4413 = vmul.f32 %v674, %v4387
        %v4414 = vmul.f32 %v679, %v4387
        %v4415 = vmul.f32 %v684, %v4387
        %v4416 = vmul.f32 %v689, %v4387
        %v4417 = vmul.f32 %v694, %v4387
        %v4418 = vmul.f32 %v699, %v4387
        %v4419 = vmul.f32 %v704, %v4387
        %v4420 = vmul.f32 %v709, %v4387
        %v4421 = vmul.f32 %v714, %v4387
        %v4422 = vmul.f32 %v719, %v4387
        %v4423 = vmul.f32 %v724, %v4387
        %v4424 = vmul.f32 %v729, %v4387
        %v4425 = vmul.f32 %v734, %v4387
        %v4426 = vmul.f32 %v739, %v4387
        %v4427 = vmul.f32 %v744, %v4387
        %v4428 = vmul.f32 %v749, %v4387
        %v4429 = vmul.f32 %v754, %v4387
        %v4430 = vmul.f32 %v759, %v4387
        %v4431 = vmul.f32 %v764, %v4387
        %v4432 = vmul.f32 %v769, %v4387
        %v4433 = vmul.f32 %v774, %v4387
        %v4434 = vmul.f32 %v779, %v4387
        %v4435 = vmul.f32 %v784, %v4387
        %v4436 = vmul.f32 %v789, %v4387
        %v4437 = vmul.f32 %v794, %v4387
        %v4438 = vmul.f32 %v799, %v4387
        %v4439 = vmul.f32 %v804, %v4387
        %v4440 = vmul.f32 %v809, %v4387
        %v4441 = vmul.f32 %v814, %v4387
        %v4442 = vmul.f32 %v819, %v4387
        %v4443 = vmul.f32 %v824, %v4387
        %v4444 = vmul.f32 %v829, %v4387
        %v4445 = vmul.f32 %v834, %v4387
        %v4446 = vmul.f32 %v839, %v4387
        %v4447 = vmul.f32 %v844, %v4387
        %v4448 = vmul.f32 %v849, %v4387
        %v4449 = vmul.f32 %v854, %v4387
        %v4450 = vmul.f32 %v859, %v4387
        %v4451 = vmul.f32 %v864, %v4387
        %v4452 = vmul.f32 %v869, %v4387
        %v4453 = vmul.f32 %v874, %v4387
        %v4454 = vmul.f32 %v879, %v4387
        %v4455 = vmul.f32 %v884, %v4387
        %v4456 = vmul.f32 %v889, %v4387
        %v4457 = vmul.f32 %v894, %v4387
        %v4458 = vmul.f32 %v899, %v4387
        %v4459 = vmul.f32 %v904, %v4387
        %v4460 = vmul.f32 %v909, %v4387
        %v4461 = vmul.f32 %v914, %v4387
        %v4462 = vmul.f32 %v919, %v4387
        %v4463 = vmul.f32 %v924, %v4387
        %v4464 = vmul.f32 %v929, %v4387
        %v4465 = vmul.f32 %v934, %v4387
        %v4466 = vmul.f32 %v939, %v4387
        %v4467 = vmul.f32 %v944, %v4387
        %v4468 = vmul.f32 %v949, %v4387
        %v4469 = vmul.f32 %v954, %v4387
        %v4470 = vmul.f32 %v959, %v4387
        %v4471 = vmul.f32 %v964, %v4387
        %v4472 = vmul.f32 %v969, %v4387
        %v4473 = vmul.f32 %v974, %v4387
        %v4474 = vmul.f32 %v979, %v4387
        %v4475 = vmul.f32 %v984, %v4387
        %v4476 = vmul.f32 %v989, %v4387
        %v4477 = vmul.f32 %v994, %v4387
        %v4478 = vmul.f32 %v999, %v4387
        %v4479 = vmul.f32 %v1004, %v4387
        %v4480 = vmul.f32 %v1009, %v4387
        %v4481 = vmul.f32 %v1014, %v4387
        %v4482 = vmul.f32 %v1019, %v4387
        %v4483 = vmul.f32 %v1024, %v4387
        %v4484 = vmul.f32 %v1029, %v4387
        %v4485 = vmul.f32 %v1034, %v4387
        %v4486 = vmul.f32 %v1039, %v4387
        %v4487 = vmul.f32 %v1044, %v4387
        %v4488 = vmul.f32 %v1049, %v4387
        %v4489 = vmul.f32 %v1054, %v4387
        %v4490 = vmul.f32 %v1059, %v4387
        %v4491 = vmul.f32 %v1064, %v4387
        %v4492 = vmul.f32 %v2595, %v4387
        %v4493 = vmul.f32 %v2600, %v4387
        %v4494 = vmul.f32 %v2605, %v4387
        %v4495 = vmul.f32 %v2610, %v4387
        %v4496 = vmul.f32 %v4139, %v4387
        %v4497 = vmul.f32 %v4144, %v4387
        %v4498 = vmul.f32 %v4149, %v4387
        %v4499 = vmul.f32 %v4154, %v4387
        %v4612 = vrot.slane %v4388, 1
        %v4613 = vrot.slane %v4389, 1
        %v4614 = vsel %vm1522, %v4612, %v4613
        %v4615 = vrot.slane %v4390, 1
        %v4616 = vsel %vm1522, %v4613, %v4615
        %v4617 = vrot.slane %v4391, 1
        %v4618 = vsel %vm1522, %v4615, %v4617
        %v4619 = vrot.slane %v4392, 1
        %v4620 = vrot.slane %v4393, 1
        %v4621 = vsel %vm1522, %v4619, %v4620
        %v4622 = vrot.slane %v4394, 1
        %v4623 = vsel %vm1522, %v4620, %v4622
        %v4624 = vrot.slane %v4395, 1
        %v4625 = vsel %vm1522, %v4622, %v4624
        %v4626 = vrot.slane %v4396, 1
        %v4627 = vrot.slane %v4397, 1
        %v4628 = vsel %vm1522, %v4626, %v4627
        %v4629 = vrot.slane %v4398, 1
        %v4630 = vsel %vm1522, %v4627, %v4629
        %v4631 = vrot.slane %v4399, 1
        %v4632 = vsel %vm1522, %v4629, %v4631
        %v4633 = vrot.slane %v4400, 1
        %v4634 = vrot.slane %v4401, 1
        %v4635 = vsel %vm1522, %v4633, %v4634
        %v4636 = vrot.slane %v4402, 1
        %v4637 = vsel %vm1522, %v4634, %v4636
        %v4638 = vrot.slane %v4403, 1
        %v4639 = vsel %vm1522, %v4636, %v4638
        %v4640 = vrot.slane %v4404, 1
        %v4641 = vrot.slane %v4405, 1
        %v4642 = vsel %vm1522, %v4640, %v4641
        %v4643 = vrot.slane %v4406, 1
        %v4644 = vsel %vm1522, %v4641, %v4643
        %v4645 = vrot.slane %v4407, 1
        %v4646 = vsel %vm1522, %v4643, %v4645
        %v4647 = vrot.slane %v4408, 1
        %v4648 = vrot.slane %v4409, 1
        %v4649 = vsel %vm1522, %v4647, %v4648
        %v4650 = vrot.slane %v4410, 1
        %v4651 = vsel %vm1522, %v4648, %v4650
        %v4652 = vrot.slane %v4411, 1
        %v4653 = vsel %vm1522, %v4650, %v4652
        %v4654 = vrot.slane %v4412, 1
        %v4655 = vrot.slane %v4413, 1
        %v4656 = vsel %vm1522, %v4654, %v4655
        %v4657 = vrot.slane %v4414, 1
        %v4658 = vsel %vm1522, %v4655, %v4657
        %v4659 = vrot.slane %v4415, 1
        %v4660 = vsel %vm1522, %v4657, %v4659
        %v4661 = vrot.slane %v4416, 1
        %v4662 = vrot.slane %v4417, 1
        %v4663 = vsel %vm1522, %v4661, %v4662
        %v4664 = vrot.slane %v4418, 1
        %v4665 = vsel %vm1522, %v4662, %v4664
        %v4666 = vrot.slane %v4419, 1
        %v4667 = vsel %vm1522, %v4664, %v4666
        %v4668 = vrot.slane %v4420, 1
        %v4669 = vrot.slane %v4421, 1
        %v4670 = vsel %vm1522, %v4668, %v4669
        %v4671 = vrot.slane %v4422, 1
        %v4672 = vsel %vm1522, %v4669, %v4671
        %v4673 = vrot.slane %v4423, 1
        %v4674 = vsel %vm1522, %v4671, %v4673
        %v4675 = vrot.slane %v4424, 1
        %v4676 = vrot.slane %v4425, 1
        %v4677 = vsel %vm1522, %v4675, %v4676
        %v4678 = vrot.slane %v4426, 1
        %v4679 = vsel %vm1522, %v4676, %v4678
        %v4680 = vrot.slane %v4427, 1
        %v4681 = vsel %vm1522, %v4678, %v4680
        %v4682 = vrot.slane %v4428, 1
        %v4683 = vrot.slane %v4429, 1
        %v4684 = vsel %vm1522, %v4682, %v4683
        %v4685 = vrot.slane %v4430, 1
        %v4686 = vsel %vm1522, %v4683, %v4685
        %v4687 = vrot.slane %v4431, 1
        %v4688 = vsel %vm1522, %v4685, %v4687
        %v4689 = vrot.slane %v4432, 1
        %v4690 = vrot.slane %v4433, 1
        %v4691 = vsel %vm1522, %v4689, %v4690
        %v4692 = vrot.slane %v4434, 1
        %v4693 = vsel %vm1522, %v4690, %v4692
        %v4694 = vrot.slane %v4435, 1
        %v4695 = vsel %vm1522, %v4692, %v4694
        %v4696 = vrot.slane %v4436, 1
        %v4697 = vrot.slane %v4437, 1
        %v4698 = vsel %vm1522, %v4696, %v4697
        %v4699 = vrot.slane %v4438, 1
        %v4700 = vsel %vm1522, %v4697, %v4699
        %v4701 = vrot.slane %v4439, 1
        %v4702 = vsel %vm1522, %v4699, %v4701
        %v4703 = vrot.slane %v4440, 1
        %v4704 = vrot.slane %v4441, 1
        %v4705 = vsel %vm1522, %v4703, %v4704
        %v4706 = vrot.slane %v4442, 1
        %v4707 = vsel %vm1522, %v4704, %v4706
        %v4708 = vrot.slane %v4443, 1
        %v4709 = vsel %vm1522, %v4706, %v4708
        %v4710 = vrot.slane %v4444, 1
        %v4711 = vrot.slane %v4445, 1
        %v4712 = vsel %vm1522, %v4710, %v4711
        %v4713 = vrot.slane %v4446, 1
        %v4714 = vsel %vm1522, %v4711, %v4713
        %v4715 = vrot.slane %v4447, 1
        %v4716 = vsel %vm1522, %v4713, %v4715
        %v4717 = vrot.slane %v4448, 1
        %v4718 = vrot.slane %v4449, 1
        %v4719 = vsel %vm1522, %v4717, %v4718
        %v4720 = vrot.slane %v4450, 1
        %v4721 = vsel %vm1522, %v4718, %v4720
        %v4722 = vrot.slane %v4451, 1
        %v4723 = vsel %vm1522, %v4720, %v4722
        %v4724 = vrot.slane %v4452, 1
        %v4725 = vrot.slane %v4453, 1
        %v4726 = vsel %vm1522, %v4724, %v4725
        %v4727 = vrot.slane %v4454, 1
        %v4728 = vsel %vm1522, %v4725, %v4727
        %v4729 = vrot.slane %v4455, 1
        %v4730 = vsel %vm1522, %v4727, %v4729
        %v4731 = vrot.slane %v4456, 1
        %v4732 = vrot.slane %v4457, 1
        %v4733 = vsel %vm1522, %v4731, %v4732
        %v4734 = vrot.slane %v4458, 1
        %v4735 = vsel %vm1522, %v4732, %v4734
        %v4736 = vrot.slane %v4459, 1
        %v4737 = vsel %vm1522, %v4734, %v4736
        %v4738 = vrot.slane %v4460, 1
        %v4739 = vrot.slane %v4461, 1
        %v4740 = vsel %vm1522, %v4738, %v4739
        %v4741 = vrot.slane %v4462, 1
        %v4742 = vsel %vm1522, %v4739, %v4741
        %v4743 = vrot.slane %v4463, 1
        %v4744 = vsel %vm1522, %v4741, %v4743
        %v4745 = vrot.slane %v4464, 1
        %v4746 = vrot.slane %v4465, 1
        %v4747 = vsel %vm1522, %v4745, %v4746
        %v4748 = vrot.slane %v4466, 1
        %v4749 = vsel %vm1522, %v4746, %v4748
        %v4750 = vrot.slane %v4467, 1
        %v4751 = vsel %vm1522, %v4748, %v4750
        %v4752 = vrot.slane %v4468, 1
        %v4753 = vrot.slane %v4469, 1
        %v4754 = vsel %vm1522, %v4752, %v4753
        %v4755 = vrot.slane %v4470, 1
        %v4756 = vsel %vm1522, %v4753, %v4755
        %v4757 = vrot.slane %v4471, 1
        %v4758 = vsel %vm1522, %v4755, %v4757
        %v4759 = vrot.slane %v4472, 1
        %v4760 = vrot.slane %v4473, 1
        %v4761 = vsel %vm1522, %v4759, %v4760
        %v4762 = vrot.slane %v4474, 1
        %v4763 = vsel %vm1522, %v4760, %v4762
        %v4764 = vrot.slane %v4475, 1
        %v4765 = vsel %vm1522, %v4762, %v4764
        %v4766 = vrot.slane %v4476, 1
        %v4767 = vrot.slane %v4477, 1
        %v4768 = vsel %vm1522, %v4766, %v4767
        %v4769 = vrot.slane %v4478, 1
        %v4770 = vsel %vm1522, %v4767, %v4769
        %v4771 = vrot.slane %v4479, 1
        %v4772 = vsel %vm1522, %v4769, %v4771
        %v4773 = vrot.slane %v4480, 1
        %v4774 = vrot.slane %v4481, 1
        %v4775 = vsel %vm1522, %v4773, %v4774
        %v4776 = vrot.slane %v4482, 1
        %v4777 = vsel %vm1522, %v4774, %v4776
        %v4778 = vrot.slane %v4483, 1
        %v4779 = vsel %vm1522, %v4776, %v4778
        %v4780 = vrot.slane %v4484, 1
        %v4781 = vrot.slane %v4485, 1
        %v4782 = vsel %vm1522, %v4780, %v4781
        %v4783 = vrot.slane %v4486, 1
        %v4784 = vsel %vm1522, %v4781, %v4783
        %v4785 = vrot.slane %v4487, 1
        %v4786 = vsel %vm1522, %v4783, %v4785
        %v4787 = vrot.slane %v4488, 1
        %v4788 = vrot.slane %v4489, 1
        %v4789 = vsel %vm1522, %v4787, %v4788
        %v4790 = vrot.slane %v4490, 1
        %v4791 = vsel %vm1522, %v4788, %v4790
        %v4792 = vrot.slane %v4491, 1
        %v4793 = vsel %vm1522, %v4790, %v4792
        %v4794 = vrot.slane %v4492, 1
        %v4795 = vrot.slane %v4493, 1
        %v4796 = vsel %vm1522, %v4794, %v4795
        %v4797 = vrot.slane %v4494, 1
        %v4798 = vsel %vm1522, %v4795, %v4797
        %v4799 = vrot.slane %v4495, 1
        %v4800 = vsel %vm1522, %v4797, %v4799
        %v4801 = vrot.slane %v4496, 1
        %v4802 = vrot.slane %v4497, 1
        %v4803 = vsel %vm1522, %v4801, %v4802
        %v4804 = vrot.slane %v4498, 1
        %v4805 = vsel %vm1522, %v4802, %v4804
        %v4806 = vrot.slane %v4499, 1
        %v4807 = vsel %vm1522, %v4804, %v4806
        %v4920 = vadd.f32 %v4272, %v4614
        %v4921 = vadd.f32 %v4273, %v4616
        %v4922 = vadd.f32 %v4274, %v4618
        %v4923 = vadd.f32 %v4275, %v4617
        %v4924 = vadd.f32 %v4276, %v4621
        %v4925 = vadd.f32 %v4277, %v4623
        %v4926 = vadd.f32 %v4278, %v4625
        %v4927 = vadd.f32 %v4279, %v4624
        %v4928 = vadd.f32 %v4280, %v4628
        %v4929 = vadd.f32 %v4281, %v4630
        %v4930 = vadd.f32 %v4282, %v4632
        %v4931 = vadd.f32 %v4283, %v4631
        %v4932 = vadd.f32 %v4284, %v4635
        %v4933 = vadd.f32 %v4285, %v4637
        %v4934 = vadd.f32 %v4286, %v4639
        %v4935 = vadd.f32 %v4287, %v4638
        %v4936 = vadd.f32 %v4288, %v4642
        %v4937 = vadd.f32 %v4289, %v4644
        %v4938 = vadd.f32 %v4290, %v4646
        %v4939 = vadd.f32 %v4291, %v4645
        %v4940 = vadd.f32 %v4292, %v4649
        %v4941 = vadd.f32 %v4293, %v4651
        %v4942 = vadd.f32 %v4294, %v4653
        %v4943 = vadd.f32 %v4295, %v4652
        %v4944 = vadd.f32 %v4296, %v4656
        %v4945 = vadd.f32 %v4297, %v4658
        %v4946 = vadd.f32 %v4298, %v4660
        %v4947 = vadd.f32 %v4299, %v4659
        %v4948 = vadd.f32 %v4300, %v4663
        %v4949 = vadd.f32 %v4301, %v4665
        %v4950 = vadd.f32 %v4302, %v4667
        %v4951 = vadd.f32 %v4303, %v4666
        %v4952 = vadd.f32 %v4304, %v4670
        %v4953 = vadd.f32 %v4305, %v4672
        %v4954 = vadd.f32 %v4306, %v4674
        %v4955 = vadd.f32 %v4307, %v4673
        %v4956 = vadd.f32 %v4308, %v4677
        %v4957 = vadd.f32 %v4309, %v4679
        %v4958 = vadd.f32 %v4310, %v4681
        %v4959 = vadd.f32 %v4311, %v4680
        %v4960 = vadd.f32 %v4312, %v4684
        %v4961 = vadd.f32 %v4313, %v4686
        %v4962 = vadd.f32 %v4314, %v4688
        %v4963 = vadd.f32 %v4315, %v4687
        %v4964 = vadd.f32 %v4316, %v4691
        %v4965 = vadd.f32 %v4317, %v4693
        %v4966 = vadd.f32 %v4318, %v4695
        %v4967 = vadd.f32 %v4319, %v4694
        %v4968 = vadd.f32 %v4320, %v4698
        %v4969 = vadd.f32 %v4321, %v4700
        %v4970 = vadd.f32 %v4322, %v4702
        %v4971 = vadd.f32 %v4323, %v4701
        %v4972 = vadd.f32 %v4324, %v4705
        %v4973 = vadd.f32 %v4325, %v4707
        %v4974 = vadd.f32 %v4326, %v4709
        %v4975 = vadd.f32 %v4327, %v4708
        %v4976 = vadd.f32 %v4328, %v4712
        %v4977 = vadd.f32 %v4329, %v4714
        %v4978 = vadd.f32 %v4330, %v4716
        %v4979 = vadd.f32 %v4331, %v4715
        %v4980 = vadd.f32 %v4332, %v4719
        %v4981 = vadd.f32 %v4333, %v4721
        %v4982 = vadd.f32 %v4334, %v4723
        %v4983 = vadd.f32 %v4335, %v4722
        %v4984 = vadd.f32 %v4336, %v4726
        %v4985 = vadd.f32 %v4337, %v4728
        %v4986 = vadd.f32 %v4338, %v4730
        %v4987 = vadd.f32 %v4339, %v4729
        %v4988 = vadd.f32 %v4340, %v4733
        %v4989 = vadd.f32 %v4341, %v4735
        %v4990 = vadd.f32 %v4342, %v4737
        %v4991 = vadd.f32 %v4343, %v4736
        %v4992 = vadd.f32 %v4344, %v4740
        %v4993 = vadd.f32 %v4345, %v4742
        %v4994 = vadd.f32 %v4346, %v4744
        %v4995 = vadd.f32 %v4347, %v4743
        %v4996 = vadd.f32 %v4348, %v4747
        %v4997 = vadd.f32 %v4349, %v4749
        %v4998 = vadd.f32 %v4350, %v4751
        %v4999 = vadd.f32 %v4351, %v4750
        %v5000 = vadd.f32 %v4352, %v4754
        %v5001 = vadd.f32 %v4353, %v4756
        %v5002 = vadd.f32 %v4354, %v4758
        %v5003 = vadd.f32 %v4355, %v4757
        %v5004 = vadd.f32 %v4356, %v4761
        %v5005 = vadd.f32 %v4357, %v4763
        %v5006 = vadd.f32 %v4358, %v4765
        %v5007 = vadd.f32 %v4359, %v4764
        %v5008 = vadd.f32 %v4360, %v4768
        %v5009 = vadd.f32 %v4361, %v4770
        %v5010 = vadd.f32 %v4362, %v4772
        %v5011 = vadd.f32 %v4363, %v4771
        %v5012 = vadd.f32 %v4364, %v4775
        %v5013 = vadd.f32 %v4365, %v4777
        %v5014 = vadd.f32 %v4366, %v4779
        %v5015 = vadd.f32 %v4367, %v4778
        %v5016 = vadd.f32 %v4368, %v4782
        %v5017 = vadd.f32 %v4369, %v4784
        %v5018 = vadd.f32 %v4370, %v4786
        %v5019 = vadd.f32 %v4371, %v4785
        %v5020 = vadd.f32 %v4372, %v4789
        %v5021 = vadd.f32 %v4373, %v4791
        %v5022 = vadd.f32 %v4374, %v4793
        %v5023 = vadd.f32 %v4375, %v4792
        %v5024 = vadd.f32 %v4376, %v4796
        %v5025 = vadd.f32 %v4377, %v4798
        %v5026 = vadd.f32 %v4378, %v4800
        %v5027 = vadd.f32 %v4379, %v4799
        %v5028 = vadd.f32 %v4380, %v4803
        %v5029 = vadd.f32 %v4381, %v4805
        %v5030 = vadd.f32 %v4382, %v4807
        %v5031 = vadd.f32 %v4383, %v4806
        %v5032 = vlaneseq
        %v5033 = vshrl.u32 %v5032, 7
        %v5034 = vsub.s32 0, %v5033
        %v5035 = vrot.slane %v505, %v5034
        %v5036 = vmul.f32 %v549, %v5035
        %v5037 = vmul.f32 %v554, %v5035
        %v5038 = vmul.f32 %v559, %v5035
        %v5039 = vmul.f32 %v564, %v5035
        %v5040 = vmul.f32 %v569, %v5035
        %v5041 = vmul.f32 %v574, %v5035
        %v5042 = vmul.f32 %v579, %v5035
        %v5043 = vmul.f32 %v584, %v5035
        %v5044 = vmul.f32 %v589, %v5035
        %v5045 = vmul.f32 %v594, %v5035
        %v5046 = vmul.f32 %v599, %v5035
        %v5047 = vmul.f32 %v604, %v5035
        %v5048 = vmul.f32 %v609, %v5035
        %v5049 = vmul.f32 %v614, %v5035
        %v5050 = vmul.f32 %v619, %v5035
        %v5051 = vmul.f32 %v624, %v5035
        %v5052 = vmul.f32 %v629, %v5035
        %v5053 = vmul.f32 %v634, %v5035
        %v5054 = vmul.f32 %v639, %v5035
        %v5055 = vmul.f32 %v644, %v5035
        %v5056 = vmul.f32 %v649, %v5035
        %v5057 = vmul.f32 %v654, %v5035
        %v5058 = vmul.f32 %v659, %v5035
        %v5059 = vmul.f32 %v664, %v5035
        %v5060 = vmul.f32 %v669, %v5035
        %v5061 = vmul.f32 %v674, %v5035
        %v5062 = vmul.f32 %v679, %v5035
        %v5063 = vmul.f32 %v684, %v5035
        %v5064 = vmul.f32 %v689, %v5035
        %v5065 = vmul.f32 %v694, %v5035
        %v5066 = vmul.f32 %v699, %v5035
        %v5067 = vmul.f32 %v704, %v5035
        %v5068 = vmul.f32 %v709, %v5035
        %v5069 = vmul.f32 %v714, %v5035
        %v5070 = vmul.f32 %v719, %v5035
        %v5071 = vmul.f32 %v724, %v5035
        %v5072 = vmul.f32 %v729, %v5035
        %v5073 = vmul.f32 %v734, %v5035
        %v5074 = vmul.f32 %v739, %v5035
        %v5075 = vmul.f32 %v744, %v5035
        %v5076 = vmul.f32 %v749, %v5035
        %v5077 = vmul.f32 %v754, %v5035
        %v5078 = vmul.f32 %v759, %v5035
        %v5079 = vmul.f32 %v764, %v5035
        %v5080 = vmul.f32 %v769, %v5035
        %v5081 = vmul.f32 %v774, %v5035
        %v5082 = vmul.f32 %v779, %v5035
        %v5083 = vmul.f32 %v784, %v5035
        %v5084 = vmul.f32 %v789, %v5035
        %v5085 = vmul.f32 %v794, %v5035
        %v5086 = vmul.f32 %v799, %v5035
        %v5087 = vmul.f32 %v804, %v5035
        %v5088 = vmul.f32 %v809, %v5035
        %v5089 = vmul.f32 %v814, %v5035
        %v5090 = vmul.f32 %v819, %v5035
        %v5091 = vmul.f32 %v824, %v5035
        %v5092 = vmul.f32 %v829, %v5035
        %v5093 = vmul.f32 %v834, %v5035
        %v5094 = vmul.f32 %v839, %v5035
        %v5095 = vmul.f32 %v844, %v5035
        %v5096 = vmul.f32 %v849, %v5035
        %v5097 = vmul.f32 %v854, %v5035
        %v5098 = vmul.f32 %v859, %v5035
        %v5099 = vmul.f32 %v864, %v5035
        %v5100 = vmul.f32 %v869, %v5035
        %v5101 = vmul.f32 %v874, %v5035
        %v5102 = vmul.f32 %v879, %v5035
        %v5103 = vmul.f32 %v884, %v5035
        %v5104 = vmul.f32 %v889, %v5035
        %v5105 = vmul.f32 %v894, %v5035
        %v5106 = vmul.f32 %v899, %v5035
        %v5107 = vmul.f32 %v904, %v5035
        %v5108 = vmul.f32 %v909, %v5035
        %v5109 = vmul.f32 %v914, %v5035
        %v5110 = vmul.f32 %v919, %v5035
        %v5111 = vmul.f32 %v924, %v5035
        %v5112 = vmul.f32 %v929, %v5035
        %v5113 = vmul.f32 %v934, %v5035
        %v5114 = vmul.f32 %v939, %v5035
        %v5115 = vmul.f32 %v944, %v5035
        %v5116 = vmul.f32 %v949, %v5035
        %v5117 = vmul.f32 %v954, %v5035
        %v5118 = vmul.f32 %v959, %v5035
        %v5119 = vmul.f32 %v964, %v5035
        %v5120 = vmul.f32 %v969, %v5035
        %v5121 = vmul.f32 %v974, %v5035
        %v5122 = vmul.f32 %v979, %v5035
        %v5123 = vmul.f32 %v984, %v5035
        %v5124 = vmul.f32 %v989, %v5035
        %v5125 = vmul.f32 %v994, %v5035
        %v5126 = vmul.f32 %v999, %v5035
        %v5127 = vmul.f32 %v1004, %v5035
        %v5128 = vmul.f32 %v1009, %v5035
        %v5129 = vmul.f32 %v1014, %v5035
        %v5130 = vmul.f32 %v1019, %v5035
        %v5131 = vmul.f32 %v1024, %v5035
        %v5132 = vmul.f32 %v1029, %v5035
        %v5133 = vmul.f32 %v1034, %v5035
        %v5134 = vmul.f32 %v1039, %v5035
        %v5135 = vmul.f32 %v1044, %v5035
        %v5136 = vmul.f32 %v1049, %v5035
        %v5137 = vmul.f32 %v1054, %v5035
        %v5138 = vmul.f32 %v1059, %v5035
        %v5139 = vmul.f32 %v1064, %v5035
        %v5140 = vmul.f32 %v2595, %v5035
        %v5141 = vmul.f32 %v2600, %v5035
        %v5142 = vmul.f32 %v2605, %v5035
        %v5143 = vmul.f32 %v2610, %v5035
        %v5144 = vmul.f32 %v4139, %v5035
        %v5145 = vmul.f32 %v4144, %v5035
        %v5146 = vmul.f32 %v4149, %v5035
        %v5147 = vmul.f32 %v4154, %v5035
        %v5260 = vrot.slane %v5036, 2
        %v5261 = vrot.slane %v5037, 2
        %v5262 = vsel %vm2171, %v5260, %v5261
        %v5263 = vrot.slane %v5038, 2
        %v5264 = vsel %vm2171, %v5261, %v5263
        %v5265 = vrot.slane %v5039, 2
        %v5266 = vsel %vm2171, %v5263, %v5265
        %v5267 = vrot.slane %v5040, 2
        %v5268 = vrot.slane %v5041, 2
        %v5269 = vsel %vm2171, %v5267, %v5268
        %v5270 = vrot.slane %v5042, 2
        %v5271 = vsel %vm2171, %v5268, %v5270
        %v5272 = vrot.slane %v5043, 2
        %v5273 = vsel %vm2171, %v5270, %v5272
        %v5274 = vrot.slane %v5044, 2
        %v5275 = vrot.slane %v5045, 2
        %v5276 = vsel %vm2171, %v5274, %v5275
        %v5277 = vrot.slane %v5046, 2
        %v5278 = vsel %vm2171, %v5275, %v5277
        %v5279 = vrot.slane %v5047, 2
        %v5280 = vsel %vm2171, %v5277, %v5279
        %v5281 = vrot.slane %v5048, 2
        %v5282 = vrot.slane %v5049, 2
        %v5283 = vsel %vm2171, %v5281, %v5282
        %v5284 = vrot.slane %v5050, 2
        %v5285 = vsel %vm2171, %v5282, %v5284
        %v5286 = vrot.slane %v5051, 2
        %v5287 = vsel %vm2171, %v5284, %v5286
        %v5288 = vrot.slane %v5052, 2
        %v5289 = vrot.slane %v5053, 2
        %v5290 = vsel %vm2171, %v5288, %v5289
        %v5291 = vrot.slane %v5054, 2
        %v5292 = vsel %vm2171, %v5289, %v5291
        %v5293 = vrot.slane %v5055, 2
        %v5294 = vsel %vm2171, %v5291, %v5293
        %v5295 = vrot.slane %v5056, 2
        %v5296 = vrot.slane %v5057, 2
        %v5297 = vsel %vm2171, %v5295, %v5296
        %v5298 = vrot.slane %v5058, 2
        %v5299 = vsel %vm2171, %v5296, %v5298
        %v5300 = vrot.slane %v5059, 2
        %v5301 = vsel %vm2171, %v5298, %v5300
        %v5302 = vrot.slane %v5060, 2
        %v5303 = vrot.slane %v5061, 2
        %v5304 = vsel %vm2171, %v5302, %v5303
        %v5305 = vrot.slane %v5062, 2
        %v5306 = vsel %vm2171, %v5303, %v5305
        %v5307 = vrot.slane %v5063, 2
        %v5308 = vsel %vm2171, %v5305, %v5307
        %v5309 = vrot.slane %v5064, 2
        %v5310 = vrot.slane %v5065, 2
        %v5311 = vsel %vm2171, %v5309, %v5310
        %v5312 = vrot.slane %v5066, 2
        %v5313 = vsel %vm2171, %v5310, %v5312
        %v5314 = vrot.slane %v5067, 2
        %v5315 = vsel %vm2171, %v5312, %v5314
        %v5316 = vrot.slane %v5068, 2
        %v5317 = vrot.slane %v5069, 2
        %v5318 = vsel %vm2171, %v5316, %v5317
        %v5319 = vrot.slane %v5070, 2
        %v5320 = vsel %vm2171, %v5317, %v5319
        %v5321 = vrot.slane %v5071, 2
        %v5322 = vsel %vm2171, %v5319, %v5321
        %v5323 = vrot.slane %v5072, 2
        %v5324 = vrot.slane %v5073, 2
        %v5325 = vsel %vm2171, %v5323, %v5324
        %v5326 = vrot.slane %v5074, 2
        %v5327 = vsel %vm2171, %v5324, %v5326
        %v5328 = vrot.slane %v5075, 2
        %v5329 = vsel %vm2171, %v5326, %v5328
        %v5330 = vrot.slane %v5076, 2
        %v5331 = vrot.slane %v5077, 2
        %v5332 = vsel %vm2171, %v5330, %v5331
        %v5333 = vrot.slane %v5078, 2
        %v5334 = vsel %vm2171, %v5331, %v5333
        %v5335 = vrot.slane %v5079, 2
        %v5336 = vsel %vm2171, %v5333, %v5335
        %v5337 = vrot.slane %v5080, 2
        %v5338 = vrot.slane %v5081, 2
        %v5339 = vsel %vm2171, %v5337, %v5338
        %v5340 = vrot.slane %v5082, 2
        %v5341 = vsel %vm2171, %v5338, %v5340
        %v5342 = vrot.slane %v5083, 2
        %v5343 = vsel %vm2171, %v5340, %v5342
        %v5344 = vrot.slane %v5084, 2
        %v5345 = vrot.slane %v5085, 2
        %v5346 = vsel %vm2171, %v5344, %v5345
        %v5347 = vrot.slane %v5086, 2
        %v5348 = vsel %vm2171, %v5345, %v5347
        %v5349 = vrot.slane %v5087, 2
        %v5350 = vsel %vm2171, %v5347, %v5349
        %v5351 = vrot.slane %v5088, 2
        %v5352 = vrot.slane %v5089, 2
        %v5353 = vsel %vm2171, %v5351, %v5352
        %v5354 = vrot.slane %v5090, 2
        %v5355 = vsel %vm2171, %v5352, %v5354
        %v5356 = vrot.slane %v5091, 2
        %v5357 = vsel %vm2171, %v5354, %v5356
        %v5358 = vrot.slane %v5092, 2
        %v5359 = vrot.slane %v5093, 2
        %v5360 = vsel %vm2171, %v5358, %v5359
        %v5361 = vrot.slane %v5094, 2
        %v5362 = vsel %vm2171, %v5359, %v5361
        %v5363 = vrot.slane %v5095, 2
        %v5364 = vsel %vm2171, %v5361, %v5363
        %v5365 = vrot.slane %v5096, 2
        %v5366 = vrot.slane %v5097, 2
        %v5367 = vsel %vm2171, %v5365, %v5366
        %v5368 = vrot.slane %v5098, 2
        %v5369 = vsel %vm2171, %v5366, %v5368
        %v5370 = vrot.slane %v5099, 2
        %v5371 = vsel %vm2171, %v5368, %v5370
        %v5372 = vrot.slane %v5100, 2
        %v5373 = vrot.slane %v5101, 2
        %v5374 = vsel %vm2171, %v5372, %v5373
        %v5375 = vrot.slane %v5102, 2
        %v5376 = vsel %vm2171, %v5373, %v5375
        %v5377 = vrot.slane %v5103, 2
        %v5378 = vsel %vm2171, %v5375, %v5377
        %v5379 = vrot.slane %v5104, 2
        %v5380 = vrot.slane %v5105, 2
        %v5381 = vsel %vm2171, %v5379, %v5380
        %v5382 = vrot.slane %v5106, 2
        %v5383 = vsel %vm2171, %v5380, %v5382
        %v5384 = vrot.slane %v5107, 2
        %v5385 = vsel %vm2171, %v5382, %v5384
        %v5386 = vrot.slane %v5108, 2
        %v5387 = vrot.slane %v5109, 2
        %v5388 = vsel %vm2171, %v5386, %v5387
        %v5389 = vrot.slane %v5110, 2
        %v5390 = vsel %vm2171, %v5387, %v5389
        %v5391 = vrot.slane %v5111, 2
        %v5392 = vsel %vm2171, %v5389, %v5391
        %v5393 = vrot.slane %v5112, 2
        %v5394 = vrot.slane %v5113, 2
        %v5395 = vsel %vm2171, %v5393, %v5394
        %v5396 = vrot.slane %v5114, 2
        %v5397 = vsel %vm2171, %v5394, %v5396
        %v5398 = vrot.slane %v5115, 2
        %v5399 = vsel %vm2171, %v5396, %v5398
        %v5400 = vrot.slane %v5116, 2
        %v5401 = vrot.slane %v5117, 2
        %v5402 = vsel %vm2171, %v5400, %v5401
        %v5403 = vrot.slane %v5118, 2
        %v5404 = vsel %vm2171, %v5401, %v5403
        %v5405 = vrot.slane %v5119, 2
        %v5406 = vsel %vm2171, %v5403, %v5405
        %v5407 = vrot.slane %v5120, 2
        %v5408 = vrot.slane %v5121, 2
        %v5409 = vsel %vm2171, %v5407, %v5408
        %v5410 = vrot.slane %v5122, 2
        %v5411 = vsel %vm2171, %v5408, %v5410
        %v5412 = vrot.slane %v5123, 2
        %v5413 = vsel %vm2171, %v5410, %v5412
        %v5414 = vrot.slane %v5124, 2
        %v5415 = vrot.slane %v5125, 2
        %v5416 = vsel %vm2171, %v5414, %v5415
        %v5417 = vrot.slane %v5126, 2
        %v5418 = vsel %vm2171, %v5415, %v5417
        %v5419 = vrot.slane %v5127, 2
        %v5420 = vsel %vm2171, %v5417, %v5419
        %v5421 = vrot.slane %v5128, 2
        %v5422 = vrot.slane %v5129, 2
        %v5423 = vsel %vm2171, %v5421, %v5422
        %v5424 = vrot.slane %v5130, 2
        %v5425 = vsel %vm2171, %v5422, %v5424
        %v5426 = vrot.slane %v5131, 2
        %v5427 = vsel %vm2171, %v5424, %v5426
        %v5428 = vrot.slane %v5132, 2
        %v5429 = vrot.slane %v5133, 2
        %v5430 = vsel %vm2171, %v5428, %v5429
        %v5431 = vrot.slane %v5134, 2
        %v5432 = vsel %vm2171, %v5429, %v5431
        %v5433 = vrot.slane %v5135, 2
        %v5434 = vsel %vm2171, %v5431, %v5433
        %v5435 = vrot.slane %v5136, 2
        %v5436 = vrot.slane %v5137, 2
        %v5437 = vsel %vm2171, %v5435, %v5436
        %v5438 = vrot.slane %v5138, 2
        %v5439 = vsel %vm2171, %v5436, %v5438
        %v5440 = vrot.slane %v5139, 2
        %v5441 = vsel %vm2171, %v5438, %v5440
        %v5442 = vrot.slane %v5140, 2
        %v5443 = vrot.slane %v5141, 2
        %v5444 = vsel %vm2171, %v5442, %v5443
        %v5445 = vrot.slane %v5142, 2
        %v5446 = vsel %vm2171, %v5443, %v5445
        %v5447 = vrot.slane %v5143, 2
        %v5448 = vsel %vm2171, %v5445, %v5447
        %v5449 = vrot.slane %v5144, 2
        %v5450 = vrot.slane %v5145, 2
        %v5451 = vsel %vm2171, %v5449, %v5450
        %v5452 = vrot.slane %v5146, 2
        %v5453 = vsel %vm2171, %v5450, %v5452
        %v5454 = vrot.slane %v5147, 2
        %v5455 = vsel %vm2171, %v5452, %v5454
        %v5568 = vadd.f32 %v4920, %v5262
        %v5569 = vadd.f32 %v4921, %v5264
        %v5570 = vadd.f32 %v4922, %v5266
        %v5571 = vadd.f32 %v4923, %v5265
        %v5572 = vadd.f32 %v4924, %v5269
        %v5573 = vadd.f32 %v4925, %v5271
        %v5574 = vadd.f32 %v4926, %v5273
        %v5575 = vadd.f32 %v4927, %v5272
        %v5576 = vadd.f32 %v4928, %v5276
        %v5577 = vadd.f32 %v4929, %v5278
        %v5578 = vadd.f32 %v4930, %v5280
        %v5579 = vadd.f32 %v4931, %v5279
        %v5580 = vadd.f32 %v4932, %v5283
        %v5581 = vadd.f32 %v4933, %v5285
        %v5582 = vadd.f32 %v4934, %v5287
        %v5583 = vadd.f32 %v4935, %v5286
        %v5584 = vadd.f32 %v4936, %v5290
        %v5585 = vadd.f32 %v4937, %v5292
        %v5586 = vadd.f32 %v4938, %v5294
        %v5587 = vadd.f32 %v4939, %v5293
        %v5588 = vadd.f32 %v4940, %v5297
        %v5589 = vadd.f32 %v4941, %v5299
        %v5590 = vadd.f32 %v4942, %v5301
        %v5591 = vadd.f32 %v4943, %v5300
        %v5592 = vadd.f32 %v4944, %v5304
        %v5593 = vadd.f32 %v4945, %v5306
        %v5594 = vadd.f32 %v4946, %v5308
        %v5595 = vadd.f32 %v4947, %v5307
        %v5596 = vadd.f32 %v4948, %v5311
        %v5597 = vadd.f32 %v4949, %v5313
        %v5598 = vadd.f32 %v4950, %v5315
        %v5599 = vadd.f32 %v4951, %v5314
        %v5600 = vadd.f32 %v4952, %v5318
        %v5601 = vadd.f32 %v4953, %v5320
        %v5602 = vadd.f32 %v4954, %v5322
        %v5603 = vadd.f32 %v4955, %v5321
        %v5604 = vadd.f32 %v4956, %v5325
        %v5605 = vadd.f32 %v4957, %v5327
        %v5606 = vadd.f32 %v4958, %v5329
        %v5607 = vadd.f32 %v4959, %v5328
        %v5608 = vadd.f32 %v4960, %v5332
        %v5609 = vadd.f32 %v4961, %v5334
        %v5610 = vadd.f32 %v4962, %v5336
        %v5611 = vadd.f32 %v4963, %v5335
        %v5612 = vadd.f32 %v4964, %v5339
        %v5613 = vadd.f32 %v4965, %v5341
        %v5614 = vadd.f32 %v4966, %v5343
        %v5615 = vadd.f32 %v4967, %v5342
        %v5616 = vadd.f32 %v4968, %v5346
        %v5617 = vadd.f32 %v4969, %v5348
        %v5618 = vadd.f32 %v4970, %v5350
        %v5619 = vadd.f32 %v4971, %v5349
        %v5620 = vadd.f32 %v4972, %v5353
        %v5621 = vadd.f32 %v4973, %v5355
        %v5622 = vadd.f32 %v4974, %v5357
        %v5623 = vadd.f32 %v4975, %v5356
        %v5624 = vadd.f32 %v4976, %v5360
        %v5625 = vadd.f32 %v4977, %v5362
        %v5626 = vadd.f32 %v4978, %v5364
        %v5627 = vadd.f32 %v4979, %v5363
        %v5628 = vadd.f32 %v4980, %v5367
        %v5629 = vadd.f32 %v4981, %v5369
        %v5630 = vadd.f32 %v4982, %v5371
        %v5631 = vadd.f32 %v4983, %v5370
        %v5632 = vadd.f32 %v4984, %v5374
        %v5633 = vadd.f32 %v4985, %v5376
        %v5634 = vadd.f32 %v4986, %v5378
        %v5635 = vadd.f32 %v4987, %v5377
        %v5636 = vadd.f32 %v4988, %v5381
        %v5637 = vadd.f32 %v4989, %v5383
        %v5638 = vadd.f32 %v4990, %v5385
        %v5639 = vadd.f32 %v4991, %v5384
        %v5640 = vadd.f32 %v4992, %v5388
        %v5641 = vadd.f32 %v4993, %v5390
        %v5642 = vadd.f32 %v4994, %v5392
        %v5643 = vadd.f32 %v4995, %v5391
        %v5644 = vadd.f32 %v4996, %v5395
        %v5645 = vadd.f32 %v4997, %v5397
        %v5646 = vadd.f32 %v4998, %v5399
        %v5647 = vadd.f32 %v4999, %v5398
        %v5648 = vadd.f32 %v5000, %v5402
        %v5649 = vadd.f32 %v5001, %v5404
        %v5650 = vadd.f32 %v5002, %v5406
        %v5651 = vadd.f32 %v5003, %v5405
        %v5652 = vadd.f32 %v5004, %v5409
        %v5653 = vadd.f32 %v5005, %v5411
        %v5654 = vadd.f32 %v5006, %v5413
        %v5655 = vadd.f32 %v5007, %v5412
        %v5656 = vadd.f32 %v5008, %v5416
        %v5657 = vadd.f32 %v5009, %v5418
        %v5658 = vadd.f32 %v5010, %v5420
        %v5659 = vadd.f32 %v5011, %v5419
        %v5660 = vadd.f32 %v5012, %v5423
        %v5661 = vadd.f32 %v5013, %v5425
        %v5662 = vadd.f32 %v5014, %v5427
        %v5663 = vadd.f32 %v5015, %v5426
        %v5664 = vadd.f32 %v5016, %v5430
        %v5665 = vadd.f32 %v5017, %v5432
        %v5666 = vadd.f32 %v5018, %v5434
        %v5667 = vadd.f32 %v5019, %v5433
        %v5668 = vadd.f32 %v5020, %v5437
        %v5669 = vadd.f32 %v5021, %v5439
        %v5670 = vadd.f32 %v5022, %v5441
        %v5671 = vadd.f32 %v5023, %v5440
        %v5672 = vadd.f32 %v5024, %v5444
        %v5673 = vadd.f32 %v5025, %v5446
        %v5674 = vadd.f32 %v5026, %v5448
        %v5675 = vadd.f32 %v5027, %v5447
        %v5676 = vadd.f32 %v5028, %v5451
        %v5677 = vadd.f32 %v5029, %v5453
        %v5678 = vadd.f32 %v5030, %v5455
        %v5679 = vadd.f32 %v5031, %v5454
        %v5680 = vld [vmem:[%s2] sm:$0x1]
        %v5682 = vlaneseq
        %v5683 = vshrl.u32 %v5682, 7
        %v5684 = vsub.s32 0, %v5683
        %v5685 = vrot.slane %v5680, %v5684
        %v5687 = vadd.f32 %v5568, %v5685
        %v5688 = vadd.f32 %v5569, %v5685
        %v5689 = vadd.f32 %v5570, %v5685
        %v5690 = vadd.f32 %v5571, %v5685
        %v5691 = vadd.f32 %v5572, %v5685
        %v5692 = vadd.f32 %v5573, %v5685
        %v5693 = vadd.f32 %v5574, %v5685
        %v5694 = vadd.f32 %v5575, %v5685
        %v5695 = vadd.f32 %v5576, %v5685
        %v5696 = vadd.f32 %v5577, %v5685
        %v5697 = vadd.f32 %v5578, %v5685
        %v5698 = vadd.f32 %v5579, %v5685
        %v5699 = vadd.f32 %v5580, %v5685
        %v5700 = vadd.f32 %v5581, %v5685
        %v5701 = vadd.f32 %v5582, %v5685
        %v5702 = vadd.f32 %v5583, %v5685
        %v5703 = vadd.f32 %v5584, %v5685
        %v5704 = vadd.f32 %v5585, %v5685
        %v5705 = vadd.f32 %v5586, %v5685
        %v5706 = vadd.f32 %v5587, %v5685
        %v5707 = vadd.f32 %v5588, %v5685
        %v5708 = vadd.f32 %v5589, %v5685
        %v5709 = vadd.f32 %v5590, %v5685
        %v5710 = vadd.f32 %v5591, %v5685
        %v5711 = vadd.f32 %v5592, %v5685
        %v5712 = vadd.f32 %v5593, %v5685
        %v5713 = vadd.f32 %v5594, %v5685
        %v5714 = vadd.f32 %v5595, %v5685
        %v5715 = vadd.f32 %v5596, %v5685
        %v5716 = vadd.f32 %v5597, %v5685
        %v5717 = vadd.f32 %v5598, %v5685
        %v5718 = vadd.f32 %v5599, %v5685
        %v5719 = vadd.f32 %v5600, %v5685
        %v5720 = vadd.f32 %v5601, %v5685
        %v5721 = vadd.f32 %v5602, %v5685
        %v5722 = vadd.f32 %v5603, %v5685
        %v5723 = vadd.f32 %v5604, %v5685
        %v5724 = vadd.f32 %v5605, %v5685
        %v5725 = vadd.f32 %v5606, %v5685
        %v5726 = vadd.f32 %v5607, %v5685
        %v5727 = vadd.f32 %v5608, %v5685
        %v5728 = vadd.f32 %v5609, %v5685
        %v5729 = vadd.f32 %v5610, %v5685
        %v5730 = vadd.f32 %v5611, %v5685
        %v5731 = vadd.f32 %v5612, %v5685
        %v5732 = vadd.f32 %v5613, %v5685
        %v5733 = vadd.f32 %v5614, %v5685
        %v5734 = vadd.f32 %v5615, %v5685
        %v5735 = vadd.f32 %v5616, %v5685
        %v5736 = vadd.f32 %v5617, %v5685
        %v5737 = vadd.f32 %v5618, %v5685
        %v5738 = vadd.f32 %v5619, %v5685
        %v5739 = vadd.f32 %v5620, %v5685
        %v5740 = vadd.f32 %v5621, %v5685
        %v5741 = vadd.f32 %v5622, %v5685
        %v5742 = vadd.f32 %v5623, %v5685
        %v5743 = vadd.f32 %v5624, %v5685
        %v5744 = vadd.f32 %v5625, %v5685
        %v5745 = vadd.f32 %v5626, %v5685
        %v5746 = vadd.f32 %v5627, %v5685
        %v5747 = vadd.f32 %v5628, %v5685
        %v5748 = vadd.f32 %v5629, %v5685
        %v5749 = vadd.f32 %v5630, %v5685
        %v5750 = vadd.f32 %v5631, %v5685
        %v5751 = vadd.f32 %v5632, %v5685
        %v5752 = vadd.f32 %v5633, %v5685
        %v5753 = vadd.f32 %v5634, %v5685
        %v5754 = vadd.f32 %v5635, %v5685
        %v5755 = vadd.f32 %v5636, %v5685
        %v5756 = vadd.f32 %v5637, %v5685
        %v5757 = vadd.f32 %v5638, %v5685
        %v5758 = vadd.f32 %v5639, %v5685
        %v5759 = vadd.f32 %v5640, %v5685
        %v5760 = vadd.f32 %v5641, %v5685
        %v5761 = vadd.f32 %v5642, %v5685
        %v5762 = vadd.f32 %v5643, %v5685
        %v5763 = vadd.f32 %v5644, %v5685
        %v5764 = vadd.f32 %v5645, %v5685
        %v5765 = vadd.f32 %v5646, %v5685
        %v5766 = vadd.f32 %v5647, %v5685
        %v5767 = vadd.f32 %v5648, %v5685
        %v5768 = vadd.f32 %v5649, %v5685
        %v5769 = vadd.f32 %v5650, %v5685
        %v5770 = vadd.f32 %v5651, %v5685
        %v5771 = vadd.f32 %v5652, %v5685
        %v5772 = vadd.f32 %v5653, %v5685
        %v5773 = vadd.f32 %v5654, %v5685
        %v5774 = vadd.f32 %v5655, %v5685
        %v5775 = vadd.f32 %v5656, %v5685
        %v5776 = vadd.f32 %v5657, %v5685
        %v5777 = vadd.f32 %v5658, %v5685
        %v5778 = vadd.f32 %v5659, %v5685
        %v5779 = vadd.f32 %v5660, %v5685
        %v5780 = vadd.f32 %v5661, %v5685
        %v5781 = vadd.f32 %v5662, %v5685
        %v5782 = vadd.f32 %v5663, %v5685
        %v5783 = vadd.f32 %v5664, %v5685
        %v5784 = vadd.f32 %v5665, %v5685
        %v5785 = vadd.f32 %v5666, %v5685
        %v5786 = vadd.f32 %v5667, %v5685
        %v5787 = vadd.f32 %v5668, %v5685
        %v5788 = vadd.f32 %v5669, %v5685
        %v5789 = vadd.f32 %v5670, %v5685
        %v5790 = vadd.f32 %v5671, %v5685
        %v5791 = vadd.f32 %v5672, %v5685
        %v5792 = vadd.f32 %v5673, %v5685
        %v5793 = vadd.f32 %v5674, %v5685
        %v5794 = vadd.f32 %v5675, %v5685
        %v5795 = vadd.f32 %v5676, %v5685
        %v5796 = vadd.f32 %v5677, %v5685
        %v5797 = vadd.f32 %v5678, %v5685
        %v5798 = vadd.f32 %v5679, %v5685
        %v5799 = vmax.f32 %v5687, 0.0
        %v5800 = vmax.f32 %v5688, 0.0
        %v5801 = vmax.f32 %v5689, 0.0
        %v5802 = vmax.f32 %v5690, 0.0
        %v5803 = vmax.f32 %v5691, 0.0
        %v5804 = vmax.f32 %v5692, 0.0
        %v5805 = vmax.f32 %v5693, 0.0
        %v5806 = vmax.f32 %v5694, 0.0
        %v5807 = vmax.f32 %v5695, 0.0
        %v5808 = vmax.f32 %v5696, 0.0
        %v5809 = vmax.f32 %v5697, 0.0
        %v5810 = vmax.f32 %v5698, 0.0
        %v5811 = vmax.f32 %v5699, 0.0
        %v5812 = vmax.f32 %v5700, 0.0
        %v5813 = vmax.f32 %v5701, 0.0
        %v5814 = vmax.f32 %v5702, 0.0
        %v5815 = vmax.f32 %v5703, 0.0
        %v5816 = vmax.f32 %v5704, 0.0
        %v5817 = vmax.f32 %v5705, 0.0
        %v5818 = vmax.f32 %v5706, 0.0
        %v5819 = vmax.f32 %v5707, 0.0
        %v5820 = vmax.f32 %v5708, 0.0
        %v5821 = vmax.f32 %v5709, 0.0
        %v5822 = vmax.f32 %v5710, 0.0
        %v5823 = vmax.f32 %v5711, 0.0
        %v5824 = vmax.f32 %v5712, 0.0
        %v5825 = vmax.f32 %v5713, 0.0
        %v5826 = vmax.f32 %v5714, 0.0
        %v5827 = vmax.f32 %v5715, 0.0
        %v5828 = vmax.f32 %v5716, 0.0
        %v5829 = vmax.f32 %v5717, 0.0
        %v5830 = vmax.f32 %v5718, 0.0
        %v5831 = vmax.f32 %v5719, 0.0
        %v5832 = vmax.f32 %v5720, 0.0
        %v5833 = vmax.f32 %v5721, 0.0
        %v5834 = vmax.f32 %v5722, 0.0
        %v5835 = vmax.f32 %v5723, 0.0
        %v5836 = vmax.f32 %v5724, 0.0
        %v5837 = vmax.f32 %v5725, 0.0
        %v5838 = vmax.f32 %v5726, 0.0
        %v5839 = vmax.f32 %v5727, 0.0
        %v5840 = vmax.f32 %v5728, 0.0
        %v5841 = vmax.f32 %v5729, 0.0
        %v5842 = vmax.f32 %v5730, 0.0
        %v5843 = vmax.f32 %v5731, 0.0
        %v5844 = vmax.f32 %v5732, 0.0
        %v5845 = vmax.f32 %v5733, 0.0
        %v5846 = vmax.f32 %v5734, 0.0
        %v5847 = vmax.f32 %v5735, 0.0
        %v5848 = vmax.f32 %v5736, 0.0
        %v5849 = vmax.f32 %v5737, 0.0
        %v5850 = vmax.f32 %v5738, 0.0
        %v5851 = vmax.f32 %v5739, 0.0
        %v5852 = vmax.f32 %v5740, 0.0
        %v5853 = vmax.f32 %v5741, 0.0
        %v5854 = vmax.f32 %v5742, 0.0
        %v5855 = vmax.f32 %v5743, 0.0
        %v5856 = vmax.f32 %v5744, 0.0
        %v5857 = vmax.f32 %v5745, 0.0
        %v5858 = vmax.f32 %v5746, 0.0
        %v5859 = vmax.f32 %v5747, 0.0
        %v5860 = vmax.f32 %v5748, 0.0
        %v5861 = vmax.f32 %v5749, 0.0
        %v5862 = vmax.f32 %v5750, 0.0
        %v5863 = vmax.f32 %v5751, 0.0
        %v5864 = vmax.f32 %v5752, 0.0
        %v5865 = vmax.f32 %v5753, 0.0
        %v5866 = vmax.f32 %v5754, 0.0
        %v5867 = vmax.f32 %v5755, 0.0
        %v5868 = vmax.f32 %v5756, 0.0
        %v5869 = vmax.f32 %v5757, 0.0
        %v5870 = vmax.f32 %v5758, 0.0
        %v5871 = vmax.f32 %v5759, 0.0
        %v5872 = vmax.f32 %v5760, 0.0
        %v5873 = vmax.f32 %v5761, 0.0
        %v5874 = vmax.f32 %v5762, 0.0
        %v5875 = vmax.f32 %v5763, 0.0
        %v5876 = vmax.f32 %v5764, 0.0
        %v5877 = vmax.f32 %v5765, 0.0
        %v5878 = vmax.f32 %v5766, 0.0
        %v5879 = vmax.f32 %v5767, 0.0
        %v5880 = vmax.f32 %v5768, 0.0
        %v5881 = vmax.f32 %v5769, 0.0
        %v5882 = vmax.f32 %v5770, 0.0
        %v5883 = vmax.f32 %v5771, 0.0
        %v5884 = vmax.f32 %v5772, 0.0
        %v5885 = vmax.f32 %v5773, 0.0
        %v5886 = vmax.f32 %v5774, 0.0
        %v5887 = vmax.f32 %v5775, 0.0
        %v5888 = vmax.f32 %v5776, 0.0
        %v5889 = vmax.f32 %v5777, 0.0
        %v5890 = vmax.f32 %v5778, 0.0
        %v5891 = vmax.f32 %v5779, 0.0
        %v5892 = vmax.f32 %v5780, 0.0
        %v5893 = vmax.f32 %v5781, 0.0
        %v5894 = vmax.f32 %v5782, 0.0
        %v5895 = vmax.f32 %v5783, 0.0
        %v5896 = vmax.f32 %v5784, 0.0
        %v5897 = vmax.f32 %v5785, 0.0
        %v5898 = vmax.f32 %v5786, 0.0
        %v5899 = vmax.f32 %v5787, 0.0
        %v5900 = vmax.f32 %v5788, 0.0
        %v5901 = vmax.f32 %v5789, 0.0
        %v5902 = vmax.f32 %v5790, 0.0
        %v5903 = vmax.f32 %v5791, 0.0
        %v5904 = vmax.f32 %v5792, 0.0
        %v5905 = vmax.f32 %v5793, 0.0
        %v5906 = vmax.f32 %v5794, 0.0
        %v5907 = vmax.f32 %v5795, 0.0
        %v5908 = vmax.f32 %v5796, 0.0
        %v5909 = vmax.f32 %v5797, 0.0
        %v5910 = vmax.f32 %v5798, 0.0
        %v5911 = vmax.f32 %v5799, %v5803
        %v5912 = vmax.f32 %v5800, %v5804
        %v5913 = vmax.f32 %v5801, %v5805
        %v5914 = vmax.f32 %v5802, %v5806
        %v5915 = vmax.f32 %v5807, %v5811
        %v5916 = vmax.f32 %v5808, %v5812
        %v5917 = vmax.f32 %v5809, %v5813
        %v5918 = vmax.f32 %v5810, %v5814
        %v5919 = vmax.f32 %v5815, %v5819
        %v5920 = vmax.f32 %v5816, %v5820
        %v5921 = vmax.f32 %v5817, %v5821
        %v5922 = vmax.f32 %v5818, %v5822
        %v5923 = vmax.f32 %v5823, %v5827
        %v5924 = vmax.f32 %v5824, %v5828
        %v5925 = vmax.f32 %v5825, %v5829
        %v5926 = vmax.f32 %v5826, %v5830
        %v5927 = vmax.f32 %v5831, %v5835
        %v5928 = vmax.f32 %v5832, %v5836
        %v5929 = vmax.f32 %v5833, %v5837
        %v5930 = vmax.f32 %v5834, %v5838
        %v5931 = vmax.f32 %v5839, %v5843
        %v5932 = vmax.f32 %v5840, %v5844
        %v5933 = vmax.f32 %v5841, %v5845
        %v5934 = vmax.f32 %v5842, %v5846
        %v5935 = vmax.f32 %v5847, %v5851
        %v5936 = vmax.f32 %v5848, %v5852
        %v5937 = vmax.f32 %v5849, %v5853
        %v5938 = vmax.f32 %v5850, %v5854
        %v5939 = vmax.f32 %v5855, %v5859
        %v5940 = vmax.f32 %v5856, %v5860
        %v5941 = vmax.f32 %v5857, %v5861
        %v5942 = vmax.f32 %v5858, %v5862
        %v5943 = vmax.f32 %v5863, %v5867
        %v5944 = vmax.f32 %v5864, %v5868
        %v5945 = vmax.f32 %v5865, %v5869
        %v5946 = vmax.f32 %v5866, %v5870
        %v5947 = vmax.f32 %v5871, %v5875
        %v5948 = vmax.f32 %v5872, %v5876
        %v5949 = vmax.f32 %v5873, %v5877
        %v5950 = vmax.f32 %v5874, %v5878
        %v5951 = vmax.f32 %v5879, %v5883
        %v5952 = vmax.f32 %v5880, %v5884
        %v5953 = vmax.f32 %v5881, %v5885
        %v5954 = vmax.f32 %v5882, %v5886
        %v5955 = vmax.f32 %v5887, %v5891
        %v5956 = vmax.f32 %v5888, %v5892
        %v5957 = vmax.f32 %v5889, %v5893
        %v5958 = vmax.f32 %v5890, %v5894
        %v5959 = vmax.f32 %v5895, %v5899
        %v5960 = vmax.f32 %v5896, %v5900
        %v5961 = vmax.f32 %v5897, %v5901
        %v5962 = vmax.f32 %v5898, %v5902
        %v5963 = vmax.f32 %v5903, %v5907
        %v5964 = vmax.f32 %v5904, %v5908
        %v5965 = vmax.f32 %v5905, %v5909
        %v5966 = vmax.f32 %v5906, %v5910
        %v6023 = vcombine.high %v5911, %v5911
        %v6025 = vunpack.c.l.s4 1983009808
        %v6026 = vunpack.c.0.s8 %v6025
        %v6027 = vlaneseq
        %v6028 = vshrl.u32 %v6027, 7
        %v6029 = vsub.s32 %v6026, %v6028
        %v6030 = vrot.slane %v5911, %v6029
        %v6032 = vunpack.c.l.s4 1983009808
        %v6033 = vunpack.c.0.s8 %v6032
        %v6034 = vlaneseq
        %v6035 = vshrl.u32 %v6034, 7
        %v6036 = vsub.s32 %v6033, %v6035
        %v6037 = vrot.slane %v6023, %v6036
        %v6038 = vcombine.high %v6030, %v6030
        %v6039 = vcombine.high %v6037, %v6037
        %v6040 = vcombine.high %v5912, %v5912
        %v6042 = vunpack.c.l.s4 1983009808
        %v6043 = vunpack.c.0.s8 %v6042
        %v6044 = vlaneseq
        %v6045 = vshrl.u32 %v6044, 7
        %v6046 = vsub.s32 %v6043, %v6045
        %v6047 = vrot.slane %v5912, %v6046
        %v6049 = vunpack.c.l.s4 1983009808
        %v6050 = vunpack.c.0.s8 %v6049
        %v6051 = vlaneseq
        %v6052 = vshrl.u32 %v6051, 7
        %v6053 = vsub.s32 %v6050, %v6052
        %v6054 = vrot.slane %v6040, %v6053
        %v6055 = vcombine.high %v6047, %v6047
        %v6056 = vcombine.high %v6054, %v6054
        %v6057 = vcombine.high %v5913, %v5913
        %v6059 = vunpack.c.l.s4 1983009808
        %v6060 = vunpack.c.0.s8 %v6059
        %v6061 = vlaneseq
        %v6062 = vshrl.u32 %v6061, 7
        %v6063 = vsub.s32 %v6060, %v6062
        %v6064 = vrot.slane %v5913, %v6063
        %v6066 = vunpack.c.l.s4 1983009808
        %v6067 = vunpack.c.0.s8 %v6066
        %v6068 = vlaneseq
        %v6069 = vshrl.u32 %v6068, 7
        %v6070 = vsub.s32 %v6067, %v6069
        %v6071 = vrot.slane %v6057, %v6070
        %v6072 = vcombine.high %v6064, %v6064
        %v6073 = vcombine.high %v6071, %v6071
        %v6075 = vunpack.c.l.s4 1983009808
        %v6076 = vunpack.c.0.s8 %v6075
        %v6077 = vlaneseq
        %v6078 = vshrl.u32 %v6077, 7
        %v6079 = vsub.s32 %v6076, %v6078
        %v6080 = vrot.slane %v5914, %v6079
        %v6081 = vcombine.high %v6080, %v6080
        %v6082 = vcombine.high %v5915, %v5915
        %v6084 = vunpack.c.l.s4 1983009808
        %v6085 = vunpack.c.0.s8 %v6084
        %v6086 = vlaneseq
        %v6087 = vshrl.u32 %v6086, 7
        %v6088 = vsub.s32 %v6085, %v6087
        %v6089 = vrot.slane %v5915, %v6088
        %v6091 = vunpack.c.l.s4 1983009808
        %v6092 = vunpack.c.0.s8 %v6091
        %v6093 = vlaneseq
        %v6094 = vshrl.u32 %v6093, 7
        %v6095 = vsub.s32 %v6092, %v6094
        %v6096 = vrot.slane %v6082, %v6095
        %v6097 = vcombine.high %v6089, %v6089
        %v6098 = vcombine.high %v6096, %v6096
        %v6099 = vcombine.high %v5916, %v5916
        %v6101 = vunpack.c.l.s4 1983009808
        %v6102 = vunpack.c.0.s8 %v6101
        %v6103 = vlaneseq
        %v6104 = vshrl.u32 %v6103, 7
        %v6105 = vsub.s32 %v6102, %v6104
        %v6106 = vrot.slane %v5916, %v6105
        %v6108 = vunpack.c.l.s4 1983009808
        %v6109 = vunpack.c.0.s8 %v6108
        %v6110 = vlaneseq
        %v6111 = vshrl.u32 %v6110, 7
        %v6112 = vsub.s32 %v6109, %v6111
        %v6113 = vrot.slane %v6099, %v6112
        %v6114 = vcombine.high %v6106, %v6106
        %v6115 = vcombine.high %v6113, %v6113
        %v6116 = vcombine.high %v5917, %v5917
        %v6118 = vunpack.c.l.s4 1983009808
        %v6119 = vunpack.c.0.s8 %v6118
        %v6120 = vlaneseq
        %v6121 = vshrl.u32 %v6120, 7
        %v6122 = vsub.s32 %v6119, %v6121
        %v6123 = vrot.slane %v5917, %v6122
        %v6125 = vunpack.c.l.s4 1983009808
        %v6126 = vunpack.c.0.s8 %v6125
        %v6127 = vlaneseq
        %v6128 = vshrl.u32 %v6127, 7
        %v6129 = vsub.s32 %v6126, %v6128
        %v6130 = vrot.slane %v6116, %v6129
        %v6131 = vcombine.high %v6123, %v6123
        %v6132 = vcombine.high %v6130, %v6130
        %v6134 = vunpack.c.l.s4 1983009808
        %v6135 = vunpack.c.0.s8 %v6134
        %v6136 = vlaneseq
        %v6137 = vshrl.u32 %v6136, 7
        %v6138 = vsub.s32 %v6135, %v6137
        %v6139 = vrot.slane %v5918, %v6138
        %v6140 = vcombine.high %v6139, %v6139
        %v6141 = vcombine.high %v5919, %v5919
        %v6143 = vunpack.c.l.s4 1983009808
        %v6144 = vunpack.c.0.s8 %v6143
        %v6145 = vlaneseq
        %v6146 = vshrl.u32 %v6145, 7
        %v6147 = vsub.s32 %v6144, %v6146
        %v6148 = vrot.slane %v5919, %v6147
        %v6150 = vunpack.c.l.s4 1983009808
        %v6151 = vunpack.c.0.s8 %v6150
        %v6152 = vlaneseq
        %v6153 = vshrl.u32 %v6152, 7
        %v6154 = vsub.s32 %v6151, %v6153
        %v6155 = vrot.slane %v6141, %v6154
        %v6156 = vcombine.high %v6148, %v6148
        %v6157 = vcombine.high %v6155, %v6155
        %v6158 = vcombine.high %v5920, %v5920
        %v6160 = vunpack.c.l.s4 1983009808
        %v6161 = vunpack.c.0.s8 %v6160
        %v6162 = vlaneseq
        %v6163 = vshrl.u32 %v6162, 7
        %v6164 = vsub.s32 %v6161, %v6163
        %v6165 = vrot.slane %v5920, %v6164
        %v6167 = vunpack.c.l.s4 1983009808
        %v6168 = vunpack.c.0.s8 %v6167
        %v6169 = vlaneseq
        %v6170 = vshrl.u32 %v6169, 7
        %v6171 = vsub.s32 %v6168, %v6170
        %v6172 = vrot.slane %v6158, %v6171
        %v6173 = vcombine.high %v6165, %v6165
        %v6174 = vcombine.high %v6172, %v6172
        %v6175 = vcombine.high %v5921, %v5921
        %v6177 = vunpack.c.l.s4 1983009808
        %v6178 = vunpack.c.0.s8 %v6177
        %v6179 = vlaneseq
        %v6180 = vshrl.u32 %v6179, 7
        %v6181 = vsub.s32 %v6178, %v6180
        %v6182 = vrot.slane %v5921, %v6181
        %v6184 = vunpack.c.l.s4 1983009808
        %v6185 = vunpack.c.0.s8 %v6184
        %v6186 = vlaneseq
        %v6187 = vshrl.u32 %v6186, 7
        %v6188 = vsub.s32 %v6185, %v6187
        %v6189 = vrot.slane %v6175, %v6188
        %v6190 = vcombine.high %v6182, %v6182
        %v6191 = vcombine.high %v6189, %v6189
        %v6193 = vunpack.c.l.s4 1983009808
        %v6194 = vunpack.c.0.s8 %v6193
        %v6195 = vlaneseq
        %v6196 = vshrl.u32 %v6195, 7
        %v6197 = vsub.s32 %v6194, %v6196
        %v6198 = vrot.slane %v5922, %v6197
        %v6199 = vcombine.high %v6198, %v6198
        %v6200 = vcombine.high %v5923, %v5923
        %v6202 = vunpack.c.l.s4 1983009808
        %v6203 = vunpack.c.0.s8 %v6202
        %v6204 = vlaneseq
        %v6205 = vshrl.u32 %v6204, 7
        %v6206 = vsub.s32 %v6203, %v6205
        %v6207 = vrot.slane %v5923, %v6206
        %v6209 = vunpack.c.l.s4 1983009808
        %v6210 = vunpack.c.0.s8 %v6209
        %v6211 = vlaneseq
        %v6212 = vshrl.u32 %v6211, 7
        %v6213 = vsub.s32 %v6210, %v6212
        %v6214 = vrot.slane %v6200, %v6213
        %v6215 = vcombine.high %v6207, %v6207
        %v6216 = vcombine.high %v6214, %v6214
        %v6217 = vcombine.high %v5924, %v5924
        %v6219 = vunpack.c.l.s4 1983009808
        %v6220 = vunpack.c.0.s8 %v6219
        %v6221 = vlaneseq
        %v6222 = vshrl.u32 %v6221, 7
        %v6223 = vsub.s32 %v6220, %v6222
        %v6224 = vrot.slane %v5924, %v6223
        %v6226 = vunpack.c.l.s4 1983009808
        %v6227 = vunpack.c.0.s8 %v6226
        %v6228 = vlaneseq
        %v6229 = vshrl.u32 %v6228, 7
        %v6230 = vsub.s32 %v6227, %v6229
        %v6231 = vrot.slane %v6217, %v6230
        %v6232 = vcombine.high %v6224, %v6224
        %v6233 = vcombine.high %v6231, %v6231
        %v6234 = vcombine.high %v5925, %v5925
        %v6236 = vunpack.c.l.s4 1983009808
        %v6237 = vunpack.c.0.s8 %v6236
        %v6238 = vlaneseq
        %v6239 = vshrl.u32 %v6238, 7
        %v6240 = vsub.s32 %v6237, %v6239
        %v6241 = vrot.slane %v5925, %v6240
        %v6243 = vunpack.c.l.s4 1983009808
        %v6244 = vunpack.c.0.s8 %v6243
        %v6245 = vlaneseq
        %v6246 = vshrl.u32 %v6245, 7
        %v6247 = vsub.s32 %v6244, %v6246
        %v6248 = vrot.slane %v6234, %v6247
        %v6249 = vcombine.high %v6241, %v6241
        %v6250 = vcombine.high %v6248, %v6248
        %v6252 = vunpack.c.l.s4 1983009808
        %v6253 = vunpack.c.0.s8 %v6252
        %v6254 = vlaneseq
        %v6255 = vshrl.u32 %v6254, 7
        %v6256 = vsub.s32 %v6253, %v6255
        %v6257 = vrot.slane %v5926, %v6256
        %v6258 = vcombine.high %v6257, %v6257
        %v6259 = vcombine.high %v5927, %v5927
        %v6261 = vunpack.c.l.s4 1983009808
        %v6262 = vunpack.c.0.s8 %v6261
        %v6263 = vlaneseq
        %v6264 = vshrl.u32 %v6263, 7
        %v6265 = vsub.s32 %v6262, %v6264
        %v6266 = vrot.slane %v5927, %v6265
        %v6268 = vunpack.c.l.s4 1983009808
        %v6269 = vunpack.c.0.s8 %v6268
        %v6270 = vlaneseq
        %v6271 = vshrl.u32 %v6270, 7
        %v6272 = vsub.s32 %v6269, %v6271
        %v6273 = vrot.slane %v6259, %v6272
        %v6274 = vcombine.high %v6266, %v6266
        %v6275 = vcombine.high %v6273, %v6273
        %v6276 = vcombine.high %v5928, %v5928
        %v6278 = vunpack.c.l.s4 1983009808
        %v6279 = vunpack.c.0.s8 %v6278
        %v6280 = vlaneseq
        %v6281 = vshrl.u32 %v6280, 7
        %v6282 = vsub.s32 %v6279, %v6281
        %v6283 = vrot.slane %v5928, %v6282
        %v6285 = vunpack.c.l.s4 1983009808
        %v6286 = vunpack.c.0.s8 %v6285
        %v6287 = vlaneseq
        %v6288 = vshrl.u32 %v6287, 7
        %v6289 = vsub.s32 %v6286, %v6288
        %v6290 = vrot.slane %v6276, %v6289
        %v6291 = vcombine.high %v6283, %v6283
        %v6292 = vcombine.high %v6290, %v6290
        %v6293 = vcombine.high %v5929, %v5929
        %v6295 = vunpack.c.l.s4 1983009808
        %v6296 = vunpack.c.0.s8 %v6295
        %v6297 = vlaneseq
        %v6298 = vshrl.u32 %v6297, 7
        %v6299 = vsub.s32 %v6296, %v6298
        %v6300 = vrot.slane %v5929, %v6299
        %v6302 = vunpack.c.l.s4 1983009808
        %v6303 = vunpack.c.0.s8 %v6302
        %v6304 = vlaneseq
        %v6305 = vshrl.u32 %v6304, 7
        %v6306 = vsub.s32 %v6303, %v6305
        %v6307 = vrot.slane %v6293, %v6306
        %v6308 = vcombine.high %v6300, %v6300
        %v6309 = vcombine.high %v6307, %v6307
        %v6311 = vunpack.c.l.s4 1983009808
        %v6312 = vunpack.c.0.s8 %v6311
        %v6313 = vlaneseq
        %v6314 = vshrl.u32 %v6313, 7
        %v6315 = vsub.s32 %v6312, %v6314
        %v6316 = vrot.slane %v5930, %v6315
        %v6317 = vcombine.high %v6316, %v6316
        %v6318 = vcombine.high %v5931, %v5931
        %v6320 = vunpack.c.l.s4 1983009808
        %v6321 = vunpack.c.0.s8 %v6320
        %v6322 = vlaneseq
        %v6323 = vshrl.u32 %v6322, 7
        %v6324 = vsub.s32 %v6321, %v6323
        %v6325 = vrot.slane %v5931, %v6324
        %v6327 = vunpack.c.l.s4 1983009808
        %v6328 = vunpack.c.0.s8 %v6327
        %v6329 = vlaneseq
        %v6330 = vshrl.u32 %v6329, 7
        %v6331 = vsub.s32 %v6328, %v6330
        %v6332 = vrot.slane %v6318, %v6331
        %v6333 = vcombine.high %v6325, %v6325
        %v6334 = vcombine.high %v6332, %v6332
        %v6335 = vcombine.high %v5932, %v5932
        %v6337 = vunpack.c.l.s4 1983009808
        %v6338 = vunpack.c.0.s8 %v6337
        %v6339 = vlaneseq
        %v6340 = vshrl.u32 %v6339, 7
        %v6341 = vsub.s32 %v6338, %v6340
        %v6342 = vrot.slane %v5932, %v6341
        %v6344 = vunpack.c.l.s4 1983009808
        %v6345 = vunpack.c.0.s8 %v6344
        %v6346 = vlaneseq
        %v6347 = vshrl.u32 %v6346, 7
        %v6348 = vsub.s32 %v6345, %v6347
        %v6349 = vrot.slane %v6335, %v6348
        %v6350 = vcombine.high %v6342, %v6342
        %v6351 = vcombine.high %v6349, %v6349
        %v6352 = vcombine.high %v5933, %v5933
        %v6354 = vunpack.c.l.s4 1983009808
        %v6355 = vunpack.c.0.s8 %v6354
        %v6356 = vlaneseq
        %v6357 = vshrl.u32 %v6356, 7
        %v6358 = vsub.s32 %v6355, %v6357
        %v6359 = vrot.slane %v5933, %v6358
        %v6361 = vunpack.c.l.s4 1983009808
        %v6362 = vunpack.c.0.s8 %v6361
        %v6363 = vlaneseq
        %v6364 = vshrl.u32 %v6363, 7
        %v6365 = vsub.s32 %v6362, %v6364
        %v6366 = vrot.slane %v6352, %v6365
        %v6367 = vcombine.high %v6359, %v6359
        %v6368 = vcombine.high %v6366, %v6366
        %v6370 = vunpack.c.l.s4 1983009808
        %v6371 = vunpack.c.0.s8 %v6370
        %v6372 = vlaneseq
        %v6373 = vshrl.u32 %v6372, 7
        %v6374 = vsub.s32 %v6371, %v6373
        %v6375 = vrot.slane %v5934, %v6374
        %v6376 = vcombine.high %v6375, %v6375
        %v6377 = vcombine.high %v5935, %v5935
        %v6379 = vunpack.c.l.s4 1983009808
        %v6380 = vunpack.c.0.s8 %v6379
        %v6381 = vlaneseq
        %v6382 = vshrl.u32 %v6381, 7
        %v6383 = vsub.s32 %v6380, %v6382
        %v6384 = vrot.slane %v5935, %v6383
        %v6386 = vunpack.c.l.s4 1983009808
        %v6387 = vunpack.c.0.s8 %v6386
        %v6388 = vlaneseq
        %v6389 = vshrl.u32 %v6388, 7
        %v6390 = vsub.s32 %v6387, %v6389
        %v6391 = vrot.slane %v6377, %v6390
        %v6392 = vcombine.high %v6384, %v6384
        %v6393 = vcombine.high %v6391, %v6391
        %v6394 = vcombine.high %v5936, %v5936
        %v6396 = vunpack.c.l.s4 1983009808
        %v6397 = vunpack.c.0.s8 %v6396
        %v6398 = vlaneseq
        %v6399 = vshrl.u32 %v6398, 7
        %v6400 = vsub.s32 %v6397, %v6399
        %v6401 = vrot.slane %v5936, %v6400
        %v6403 = vunpack.c.l.s4 1983009808
        %v6404 = vunpack.c.0.s8 %v6403
        %v6405 = vlaneseq
        %v6406 = vshrl.u32 %v6405, 7
        %v6407 = vsub.s32 %v6404, %v6406
        %v6408 = vrot.slane %v6394, %v6407
        %v6409 = vcombine.high %v6401, %v6401
        %v6410 = vcombine.high %v6408, %v6408
        %v6411 = vcombine.high %v5937, %v5937
        %v6413 = vunpack.c.l.s4 1983009808
        %v6414 = vunpack.c.0.s8 %v6413
        %v6415 = vlaneseq
        %v6416 = vshrl.u32 %v6415, 7
        %v6417 = vsub.s32 %v6414, %v6416
        %v6418 = vrot.slane %v5937, %v6417
        %v6420 = vunpack.c.l.s4 1983009808
        %v6421 = vunpack.c.0.s8 %v6420
        %v6422 = vlaneseq
        %v6423 = vshrl.u32 %v6422, 7
        %v6424 = vsub.s32 %v6421, %v6423
        %v6425 = vrot.slane %v6411, %v6424
        %v6426 = vcombine.high %v6418, %v6418
        %v6427 = vcombine.high %v6425, %v6425
        %v6429 = vunpack.c.l.s4 1983009808
        %v6430 = vunpack.c.0.s8 %v6429
        %v6431 = vlaneseq
        %v6432 = vshrl.u32 %v6431, 7
        %v6433 = vsub.s32 %v6430, %v6432
        %v6434 = vrot.slane %v5938, %v6433
        %v6435 = vcombine.high %v6434, %v6434
        %v6436 = vcombine.high %v5939, %v5939
        %v6438 = vunpack.c.l.s4 1983009808
        %v6439 = vunpack.c.0.s8 %v6438
        %v6440 = vlaneseq
        %v6441 = vshrl.u32 %v6440, 7
        %v6442 = vsub.s32 %v6439, %v6441
        %v6443 = vrot.slane %v5939, %v6442
        %v6445 = vunpack.c.l.s4 1983009808
        %v6446 = vunpack.c.0.s8 %v6445
        %v6447 = vlaneseq
        %v6448 = vshrl.u32 %v6447, 7
        %v6449 = vsub.s32 %v6446, %v6448
        %v6450 = vrot.slane %v6436, %v6449
        %v6451 = vcombine.high %v6443, %v6443
        %v6452 = vcombine.high %v6450, %v6450
        %v6453 = vcombine.high %v5940, %v5940
        %v6455 = vunpack.c.l.s4 1983009808
        %v6456 = vunpack.c.0.s8 %v6455
        %v6457 = vlaneseq
        %v6458 = vshrl.u32 %v6457, 7
        %v6459 = vsub.s32 %v6456, %v6458
        %v6460 = vrot.slane %v5940, %v6459
        %v6462 = vunpack.c.l.s4 1983009808
        %v6463 = vunpack.c.0.s8 %v6462
        %v6464 = vlaneseq
        %v6465 = vshrl.u32 %v6464, 7
        %v6466 = vsub.s32 %v6463, %v6465
        %v6467 = vrot.slane %v6453, %v6466
        %v6468 = vcombine.high %v6460, %v6460
        %v6469 = vcombine.high %v6467, %v6467
        %v6470 = vcombine.high %v5941, %v5941
        %v6472 = vunpack.c.l.s4 1983009808
        %v6473 = vunpack.c.0.s8 %v6472
        %v6474 = vlaneseq
        %v6475 = vshrl.u32 %v6474, 7
        %v6476 = vsub.s32 %v6473, %v6475
        %v6477 = vrot.slane %v5941, %v6476
        %v6479 = vunpack.c.l.s4 1983009808
        %v6480 = vunpack.c.0.s8 %v6479
        %v6481 = vlaneseq
        %v6482 = vshrl.u32 %v6481, 7
        %v6483 = vsub.s32 %v6480, %v6482
        %v6484 = vrot.slane %v6470, %v6483
        %v6485 = vcombine.high %v6477, %v6477
        %v6486 = vcombine.high %v6484, %v6484
        %v6488 = vunpack.c.l.s4 1983009808
        %v6489 = vunpack.c.0.s8 %v6488
        %v6490 = vlaneseq
        %v6491 = vshrl.u32 %v6490, 7
        %v6492 = vsub.s32 %v6489, %v6491
        %v6493 = vrot.slane %v5942, %v6492
        %v6494 = vcombine.high %v6493, %v6493
        %v6495 = vcombine.high %v5943, %v5943
        %v6497 = vunpack.c.l.s4 1983009808
        %v6498 = vunpack.c.0.s8 %v6497
        %v6499 = vlaneseq
        %v6500 = vshrl.u32 %v6499, 7
        %v6501 = vsub.s32 %v6498, %v6500
        %v6502 = vrot.slane %v5943, %v6501
        %v6504 = vunpack.c.l.s4 1983009808
        %v6505 = vunpack.c.0.s8 %v6504
        %v6506 = vlaneseq
        %v6507 = vshrl.u32 %v6506, 7
        %v6508 = vsub.s32 %v6505, %v6507
        %v6509 = vrot.slane %v6495, %v6508
        %v6510 = vcombine.high %v6502, %v6502
        %v6511 = vcombine.high %v6509, %v6509
        %v6512 = vcombine.high %v5944, %v5944
        %v6514 = vunpack.c.l.s4 1983009808
        %v6515 = vunpack.c.0.s8 %v6514
        %v6516 = vlaneseq
        %v6517 = vshrl.u32 %v6516, 7
        %v6518 = vsub.s32 %v6515, %v6517
        %v6519 = vrot.slane %v5944, %v6518
        %v6521 = vunpack.c.l.s4 1983009808
        %v6522 = vunpack.c.0.s8 %v6521
        %v6523 = vlaneseq
        %v6524 = vshrl.u32 %v6523, 7
        %v6525 = vsub.s32 %v6522, %v6524
        %v6526 = vrot.slane %v6512, %v6525
        %v6527 = vcombine.high %v6519, %v6519
        %v6528 = vcombine.high %v6526, %v6526
        %v6529 = vcombine.high %v5945, %v5945
        %v6531 = vunpack.c.l.s4 1983009808
        %v6532 = vunpack.c.0.s8 %v6531
        %v6533 = vlaneseq
        %v6534 = vshrl.u32 %v6533, 7
        %v6535 = vsub.s32 %v6532, %v6534
        %v6536 = vrot.slane %v5945, %v6535
        %v6538 = vunpack.c.l.s4 1983009808
        %v6539 = vunpack.c.0.s8 %v6538
        %v6540 = vlaneseq
        %v6541 = vshrl.u32 %v6540, 7
        %v6542 = vsub.s32 %v6539, %v6541
        %v6543 = vrot.slane %v6529, %v6542
        %v6544 = vcombine.high %v6536, %v6536
        %v6545 = vcombine.high %v6543, %v6543
        %v6547 = vunpack.c.l.s4 1983009808
        %v6548 = vunpack.c.0.s8 %v6547
        %v6549 = vlaneseq
        %v6550 = vshrl.u32 %v6549, 7
        %v6551 = vsub.s32 %v6548, %v6550
        %v6552 = vrot.slane %v5946, %v6551
        %v6553 = vcombine.high %v6552, %v6552
        %v6554 = vcombine.high %v5947, %v5947
        %v6556 = vunpack.c.l.s4 1983009808
        %v6557 = vunpack.c.0.s8 %v6556
        %v6558 = vlaneseq
        %v6559 = vshrl.u32 %v6558, 7
        %v6560 = vsub.s32 %v6557, %v6559
        %v6561 = vrot.slane %v5947, %v6560
        %v6563 = vunpack.c.l.s4 1983009808
        %v6564 = vunpack.c.0.s8 %v6563
        %v6565 = vlaneseq
        %v6566 = vshrl.u32 %v6565, 7
        %v6567 = vsub.s32 %v6564, %v6566
        %v6568 = vrot.slane %v6554, %v6567
        %v6569 = vcombine.high %v6561, %v6561
        %v6570 = vcombine.high %v6568, %v6568
        %v6571 = vcombine.high %v5948, %v5948
        %v6573 = vunpack.c.l.s4 1983009808
        %v6574 = vunpack.c.0.s8 %v6573
        %v6575 = vlaneseq
        %v6576 = vshrl.u32 %v6575, 7
        %v6577 = vsub.s32 %v6574, %v6576
        %v6578 = vrot.slane %v5948, %v6577
        %v6580 = vunpack.c.l.s4 1983009808
        %v6581 = vunpack.c.0.s8 %v6580
        %v6582 = vlaneseq
        %v6583 = vshrl.u32 %v6582, 7
        %v6584 = vsub.s32 %v6581, %v6583
        %v6585 = vrot.slane %v6571, %v6584
        %v6586 = vcombine.high %v6578, %v6578
        %v6587 = vcombine.high %v6585, %v6585
        %v6588 = vcombine.high %v5949, %v5949
        %v6590 = vunpack.c.l.s4 1983009808
        %v6591 = vunpack.c.0.s8 %v6590
        %v6592 = vlaneseq
        %v6593 = vshrl.u32 %v6592, 7
        %v6594 = vsub.s32 %v6591, %v6593
        %v6595 = vrot.slane %v5949, %v6594
        %v6597 = vunpack.c.l.s4 1983009808
        %v6598 = vunpack.c.0.s8 %v6597
        %v6599 = vlaneseq
        %v6600 = vshrl.u32 %v6599, 7
        %v6601 = vsub.s32 %v6598, %v6600
        %v6602 = vrot.slane %v6588, %v6601
        %v6603 = vcombine.high %v6595, %v6595
        %v6604 = vcombine.high %v6602, %v6602
        %v6606 = vunpack.c.l.s4 1983009808
        %v6607 = vunpack.c.0.s8 %v6606
        %v6608 = vlaneseq
        %v6609 = vshrl.u32 %v6608, 7
        %v6610 = vsub.s32 %v6607, %v6609
        %v6611 = vrot.slane %v5950, %v6610
        %v6612 = vcombine.high %v6611, %v6611
        %v6613 = vcombine.high %v5951, %v5951
        %v6615 = vunpack.c.l.s4 1983009808
        %v6616 = vunpack.c.0.s8 %v6615
        %v6617 = vlaneseq
        %v6618 = vshrl.u32 %v6617, 7
        %v6619 = vsub.s32 %v6616, %v6618
        %v6620 = vrot.slane %v5951, %v6619
        %v6622 = vunpack.c.l.s4 1983009808
        %v6623 = vunpack.c.0.s8 %v6622
        %v6624 = vlaneseq
        %v6625 = vshrl.u32 %v6624, 7
        %v6626 = vsub.s32 %v6623, %v6625
        %v6627 = vrot.slane %v6613, %v6626
        %v6628 = vcombine.high %v6620, %v6620
        %v6629 = vcombine.high %v6627, %v6627
        %v6630 = vcombine.high %v5952, %v5952
        %v6632 = vunpack.c.l.s4 1983009808
        %v6633 = vunpack.c.0.s8 %v6632
        %v6634 = vlaneseq
        %v6635 = vshrl.u32 %v6634, 7
        %v6636 = vsub.s32 %v6633, %v6635
        %v6637 = vrot.slane %v5952, %v6636
        %v6639 = vunpack.c.l.s4 1983009808
        %v6640 = vunpack.c.0.s8 %v6639
        %v6641 = vlaneseq
        %v6642 = vshrl.u32 %v6641, 7
        %v6643 = vsub.s32 %v6640, %v6642
        %v6644 = vrot.slane %v6630, %v6643
        %v6645 = vcombine.high %v6637, %v6637
        %v6646 = vcombine.high %v6644, %v6644
        %v6647 = vcombine.high %v5953, %v5953
        %v6649 = vunpack.c.l.s4 1983009808
        %v6650 = vunpack.c.0.s8 %v6649
        %v6651 = vlaneseq
        %v6652 = vshrl.u32 %v6651, 7
        %v6653 = vsub.s32 %v6650, %v6652
        %v6654 = vrot.slane %v5953, %v6653
        %v6656 = vunpack.c.l.s4 1983009808
        %v6657 = vunpack.c.0.s8 %v6656
        %v6658 = vlaneseq
        %v6659 = vshrl.u32 %v6658, 7
        %v6660 = vsub.s32 %v6657, %v6659
        %v6661 = vrot.slane %v6647, %v6660
        %v6662 = vcombine.high %v6654, %v6654
        %v6663 = vcombine.high %v6661, %v6661
        %v6665 = vunpack.c.l.s4 1983009808
        %v6666 = vunpack.c.0.s8 %v6665
        %v6667 = vlaneseq
        %v6668 = vshrl.u32 %v6667, 7
        %v6669 = vsub.s32 %v6666, %v6668
        %v6670 = vrot.slane %v5954, %v6669
        %v6671 = vcombine.high %v6670, %v6670
        %v6672 = vcombine.high %v5955, %v5955
        %v6674 = vunpack.c.l.s4 1983009808
        %v6675 = vunpack.c.0.s8 %v6674
        %v6676 = vlaneseq
        %v6677 = vshrl.u32 %v6676, 7
        %v6678 = vsub.s32 %v6675, %v6677
        %v6679 = vrot.slane %v5955, %v6678
        %v6681 = vunpack.c.l.s4 1983009808
        %v6682 = vunpack.c.0.s8 %v6681
        %v6683 = vlaneseq
        %v6684 = vshrl.u32 %v6683, 7
        %v6685 = vsub.s32 %v6682, %v6684
        %v6686 = vrot.slane %v6672, %v6685
        %v6687 = vcombine.high %v6679, %v6679
        %v6688 = vcombine.high %v6686, %v6686
        %v6689 = vcombine.high %v5956, %v5956
        %v6691 = vunpack.c.l.s4 1983009808
        %v6692 = vunpack.c.0.s8 %v6691
        %v6693 = vlaneseq
        %v6694 = vshrl.u32 %v6693, 7
        %v6695 = vsub.s32 %v6692, %v6694
        %v6696 = vrot.slane %v5956, %v6695
        %v6698 = vunpack.c.l.s4 1983009808
        %v6699 = vunpack.c.0.s8 %v6698
        %v6700 = vlaneseq
        %v6701 = vshrl.u32 %v6700, 7
        %v6702 = vsub.s32 %v6699, %v6701
        %v6703 = vrot.slane %v6689, %v6702
        %v6704 = vcombine.high %v6696, %v6696
        %v6705 = vcombine.high %v6703, %v6703
        %v6706 = vcombine.high %v5957, %v5957
        %v6708 = vunpack.c.l.s4 1983009808
        %v6709 = vunpack.c.0.s8 %v6708
        %v6710 = vlaneseq
        %v6711 = vshrl.u32 %v6710, 7
        %v6712 = vsub.s32 %v6709, %v6711
        %v6713 = vrot.slane %v5957, %v6712
        %v6715 = vunpack.c.l.s4 1983009808
        %v6716 = vunpack.c.0.s8 %v6715
        %v6717 = vlaneseq
        %v6718 = vshrl.u32 %v6717, 7
        %v6719 = vsub.s32 %v6716, %v6718
        %v6720 = vrot.slane %v6706, %v6719
        %v6721 = vcombine.high %v6713, %v6713
        %v6722 = vcombine.high %v6720, %v6720
        %v6724 = vunpack.c.l.s4 1983009808
        %v6725 = vunpack.c.0.s8 %v6724
        %v6726 = vlaneseq
        %v6727 = vshrl.u32 %v6726, 7
        %v6728 = vsub.s32 %v6725, %v6727
        %v6729 = vrot.slane %v5958, %v6728
        %v6730 = vcombine.high %v6729, %v6729
        %v6731 = vcombine.high %v5959, %v5959
        %v6733 = vunpack.c.l.s4 1983009808
        %v6734 = vunpack.c.0.s8 %v6733
        %v6735 = vlaneseq
        %v6736 = vshrl.u32 %v6735, 7
        %v6737 = vsub.s32 %v6734, %v6736
        %v6738 = vrot.slane %v5959, %v6737
        %v6740 = vunpack.c.l.s4 1983009808
        %v6741 = vunpack.c.0.s8 %v6740
        %v6742 = vlaneseq
        %v6743 = vshrl.u32 %v6742, 7
        %v6744 = vsub.s32 %v6741, %v6743
        %v6745 = vrot.slane %v6731, %v6744
        %v6746 = vcombine.high %v6738, %v6738
        %v6747 = vcombine.high %v6745, %v6745
        %v6748 = vcombine.high %v5960, %v5960
        %v6750 = vunpack.c.l.s4 1983009808
        %v6751 = vunpack.c.0.s8 %v6750
        %v6752 = vlaneseq
        %v6753 = vshrl.u32 %v6752, 7
        %v6754 = vsub.s32 %v6751, %v6753
        %v6755 = vrot.slane %v5960, %v6754
        %v6757 = vunpack.c.l.s4 1983009808
        %v6758 = vunpack.c.0.s8 %v6757
        %v6759 = vlaneseq
        %v6760 = vshrl.u32 %v6759, 7
        %v6761 = vsub.s32 %v6758, %v6760
        %v6762 = vrot.slane %v6748, %v6761
        %v6763 = vcombine.high %v6755, %v6755
        %v6764 = vcombine.high %v6762, %v6762
        %v6765 = vcombine.high %v5961, %v5961
        %v6767 = vunpack.c.l.s4 1983009808
        %v6768 = vunpack.c.0.s8 %v6767
        %v6769 = vlaneseq
        %v6770 = vshrl.u32 %v6769, 7
        %v6771 = vsub.s32 %v6768, %v6770
        %v6772 = vrot.slane %v5961, %v6771
        %v6774 = vunpack.c.l.s4 1983009808
        %v6775 = vunpack.c.0.s8 %v6774
        %v6776 = vlaneseq
        %v6777 = vshrl.u32 %v6776, 7
        %v6778 = vsub.s32 %v6775, %v6777
        %v6779 = vrot.slane %v6765, %v6778
        %v6780 = vcombine.high %v6772, %v6772
        %v6781 = vcombine.high %v6779, %v6779
        %v6783 = vunpack.c.l.s4 1983009808
        %v6784 = vunpack.c.0.s8 %v6783
        %v6785 = vlaneseq
        %v6786 = vshrl.u32 %v6785, 7
        %v6787 = vsub.s32 %v6784, %v6786
        %v6788 = vrot.slane %v5962, %v6787
        %v6789 = vcombine.high %v6788, %v6788
        %v6790 = vcombine.high %v5963, %v5963
        %v6792 = vunpack.c.l.s4 1983009808
        %v6793 = vunpack.c.0.s8 %v6792
        %v6794 = vlaneseq
        %v6795 = vshrl.u32 %v6794, 7
        %v6796 = vsub.s32 %v6793, %v6795
        %v6797 = vrot.slane %v5963, %v6796
        %v6799 = vunpack.c.l.s4 1983009808
        %v6800 = vunpack.c.0.s8 %v6799
        %v6801 = vlaneseq
        %v6802 = vshrl.u32 %v6801, 7
        %v6803 = vsub.s32 %v6800, %v6802
        %v6804 = vrot.slane %v6790, %v6803
        %v6805 = vcombine.high %v6797, %v6797
        %v6806 = vcombine.high %v6804, %v6804
        %v6807 = vcombine.high %v5964, %v5964
        %v6809 = vunpack.c.l.s4 1983009808
        %v6810 = vunpack.c.0.s8 %v6809
        %v6811 = vlaneseq
        %v6812 = vshrl.u32 %v6811, 7
        %v6813 = vsub.s32 %v6810, %v6812
        %v6814 = vrot.slane %v5964, %v6813
        %v6816 = vunpack.c.l.s4 1983009808
        %v6817 = vunpack.c.0.s8 %v6816
        %v6818 = vlaneseq
        %v6819 = vshrl.u32 %v6818, 7
        %v6820 = vsub.s32 %v6817, %v6819
        %v6821 = vrot.slane %v6807, %v6820
        %v6822 = vcombine.high %v6814, %v6814
        %v6823 = vcombine.high %v6821, %v6821
        %v6824 = vcombine.high %v5965, %v5965
        %v6826 = vunpack.c.l.s4 1983009808
        %v6827 = vunpack.c.0.s8 %v6826
        %v6828 = vlaneseq
        %v6829 = vshrl.u32 %v6828, 7
        %v6830 = vsub.s32 %v6827, %v6829
        %v6831 = vrot.slane %v5965, %v6830
        %v6833 = vunpack.c.l.s4 1983009808
        %v6834 = vunpack.c.0.s8 %v6833
        %v6835 = vlaneseq
        %v6836 = vshrl.u32 %v6835, 7
        %v6837 = vsub.s32 %v6834, %v6836
        %v6838 = vrot.slane %v6824, %v6837
        %v6839 = vcombine.high %v6831, %v6831
        %v6840 = vcombine.high %v6838, %v6838
        %v6842 = vunpack.c.l.s4 1983009808
        %v6843 = vunpack.c.0.s8 %v6842
        %v6844 = vlaneseq
        %v6845 = vshrl.u32 %v6844, 7
        %v6846 = vsub.s32 %v6843, %v6845
        %v6847 = vrot.slane %v5966, %v6846
        %v6848 = vcombine.high %v6847, %v6847
        %v7045 = vrot.slane %v6030, 7
        %v7046 = vrot.slane %v7045, 2
        %v7047 = vrot.slane %v6038, 7
        %v7048 = vrot.slane %v7047, 2
        %v7049 = vrot.slane %v6037, 7
        %v7050 = vrot.slane %v7049, 2
        %v7051 = vrot.slane %v6039, 7
        %v7052 = vrot.slane %v7051, 2
        %v7053 = vrot.slane %v6047, 7
        %v7054 = vrot.slane %v7053, 2
        %v7055 = vrot.slane %v6055, 7
        %v7056 = vrot.slane %v7055, 2
        %v7057 = vrot.slane %v6054, 7
        %v7058 = vrot.slane %v7057, 2
        %v7059 = vrot.slane %v6056, 7
        %v7060 = vrot.slane %v7059, 2
        %v7061 = vrot.slane %v6064, 7
        %v7062 = vrot.slane %v7061, 2
        %v7063 = vrot.slane %v6072, 7
        %v7064 = vrot.slane %v7063, 2
        %v7065 = vrot.slane %v6071, 7
        %v7066 = vrot.slane %v7065, 2
        %v7067 = vrot.slane %v6073, 7
        %v7068 = vrot.slane %v7067, 2
        %v7069 = vrot.slane %v6080, 7
        %v7070 = vrot.slane %v7069, 2
        %v7071 = vrot.slane %v6081, 7
        %v7072 = vrot.slane %v7071, 2
        %v7073 = vrot.slane %v6089, 7
        %v7074 = vrot.slane %v7073, 2
        %v7075 = vrot.slane %v6097, 7
        %v7076 = vrot.slane %v7075, 2
        %v7077 = vrot.slane %v6096, 7
        %v7078 = vrot.slane %v7077, 2
        %v7079 = vrot.slane %v6098, 7
        %v7080 = vrot.slane %v7079, 2
        %v7081 = vrot.slane %v6106, 7
        %v7082 = vrot.slane %v7081, 2
        %v7083 = vrot.slane %v6114, 7
        %v7084 = vrot.slane %v7083, 2
        %v7085 = vrot.slane %v6113, 7
        %v7086 = vrot.slane %v7085, 2
        %v7087 = vrot.slane %v6115, 7
        %v7088 = vrot.slane %v7087, 2
        %v7089 = vrot.slane %v6123, 7
        %v7090 = vrot.slane %v7089, 2
        %v7091 = vrot.slane %v6131, 7
        %v7092 = vrot.slane %v7091, 2
        %v7093 = vrot.slane %v6130, 7
        %v7094 = vrot.slane %v7093, 2
        %v7095 = vrot.slane %v6132, 7
        %v7096 = vrot.slane %v7095, 2
        %v7097 = vrot.slane %v6139, 7
        %v7098 = vrot.slane %v7097, 2
        %v7099 = vrot.slane %v6140, 7
        %v7100 = vrot.slane %v7099, 2
        %v7101 = vrot.slane %v6148, 7
        %v7102 = vrot.slane %v7101, 2
        %v7103 = vrot.slane %v6156, 7
        %v7104 = vrot.slane %v7103, 2
        %v7105 = vrot.slane %v6155, 7
        %v7106 = vrot.slane %v7105, 2
        %v7107 = vrot.slane %v6157, 7
        %v7108 = vrot.slane %v7107, 2
        %v7109 = vrot.slane %v6165, 7
        %v7110 = vrot.slane %v7109, 2
        %v7111 = vrot.slane %v6173, 7
        %v7112 = vrot.slane %v7111, 2
        %v7113 = vrot.slane %v6172, 7
        %v7114 = vrot.slane %v7113, 2
        %v7115 = vrot.slane %v6174, 7
        %v7116 = vrot.slane %v7115, 2
        %v7117 = vrot.slane %v6182, 7
        %v7118 = vrot.slane %v7117, 2
        %v7119 = vrot.slane %v6190, 7
        %v7120 = vrot.slane %v7119, 2
        %v7121 = vrot.slane %v6189, 7
        %v7122 = vrot.slane %v7121, 2
        %v7123 = vrot.slane %v6191, 7
        %v7124 = vrot.slane %v7123, 2
        %v7125 = vrot.slane %v6198, 7
        %v7126 = vrot.slane %v7125, 2
        %v7127 = vrot.slane %v6199, 7
        %v7128 = vrot.slane %v7127, 2
        %v7129 = vrot.slane %v6207, 7
        %v7130 = vrot.slane %v7129, 2
        %v7131 = vrot.slane %v6215, 7
        %v7132 = vrot.slane %v7131, 2
        %v7133 = vrot.slane %v6214, 7
        %v7134 = vrot.slane %v7133, 2
        %v7135 = vrot.slane %v6216, 7
        %v7136 = vrot.slane %v7135, 2
        %v7137 = vrot.slane %v6224, 7
        %v7138 = vrot.slane %v7137, 2
        %v7139 = vrot.slane %v6232, 7
        %v7140 = vrot.slane %v7139, 2
        %v7141 = vrot.slane %v6231, 7
        %v7142 = vrot.slane %v7141, 2
        %v7143 = vrot.slane %v6233, 7
        %v7144 = vrot.slane %v7143, 2
        %v7145 = vrot.slane %v6241, 7
        %v7146 = vrot.slane %v7145, 2
        %v7147 = vrot.slane %v6249, 7
        %v7148 = vrot.slane %v7147, 2
        %v7149 = vrot.slane %v6248, 7
        %v7150 = vrot.slane %v7149, 2
        %v7151 = vrot.slane %v6250, 7
        %v7152 = vrot.slane %v7151, 2
        %v7153 = vrot.slane %v6257, 7
        %v7154 = vrot.slane %v7153, 2
        %v7155 = vrot.slane %v6258, 7
        %v7156 = vrot.slane %v7155, 2
        %v7157 = vrot.slane %v6266, 7
        %v7158 = vrot.slane %v7157, 2
        %v7159 = vrot.slane %v6274, 7
        %v7160 = vrot.slane %v7159, 2
        %v7161 = vrot.slane %v6273, 7
        %v7162 = vrot.slane %v7161, 2
        %v7163 = vrot.slane %v6275, 7
        %v7164 = vrot.slane %v7163, 2
        %v7165 = vrot.slane %v6283, 7
        %v7166 = vrot.slane %v7165, 2
        %v7167 = vrot.slane %v6291, 7
        %v7168 = vrot.slane %v7167, 2
        %v7169 = vrot.slane %v6290, 7
        %v7170 = vrot.slane %v7169, 2
        %v7171 = vrot.slane %v6292, 7
        %v7172 = vrot.slane %v7171, 2
        %v7173 = vrot.slane %v6300, 7
        %v7174 = vrot.slane %v7173, 2
        %v7175 = vrot.slane %v6308, 7
        %v7176 = vrot.slane %v7175, 2
        %v7177 = vrot.slane %v6307, 7
        %v7178 = vrot.slane %v7177, 2
        %v7179 = vrot.slane %v6309, 7
        %v7180 = vrot.slane %v7179, 2
        %v7181 = vrot.slane %v6316, 7
        %v7182 = vrot.slane %v7181, 2
        %v7183 = vrot.slane %v6317, 7
        %v7184 = vrot.slane %v7183, 2
        %v7185 = vrot.slane %v6325, 7
        %v7186 = vrot.slane %v7185, 2
        %v7187 = vrot.slane %v6333, 7
        %v7188 = vrot.slane %v7187, 2
        %v7189 = vrot.slane %v6332, 7
        %v7190 = vrot.slane %v7189, 2
        %v7191 = vrot.slane %v6334, 7
        %v7192 = vrot.slane %v7191, 2
        %v7193 = vrot.slane %v6342, 7
        %v7194 = vrot.slane %v7193, 2
        %v7195 = vrot.slane %v6350, 7
        %v7196 = vrot.slane %v7195, 2
        %v7197 = vrot.slane %v6349, 7
        %v7198 = vrot.slane %v7197, 2
        %v7199 = vrot.slane %v6351, 7
        %v7200 = vrot.slane %v7199, 2
        %v7201 = vrot.slane %v6359, 7
        %v7202 = vrot.slane %v7201, 2
        %v7203 = vrot.slane %v6367, 7
        %v7204 = vrot.slane %v7203, 2
        %v7205 = vrot.slane %v6366, 7
        %v7206 = vrot.slane %v7205, 2
        %v7207 = vrot.slane %v6368, 7
        %v7208 = vrot.slane %v7207, 2
        %v7209 = vrot.slane %v6375, 7
        %v7210 = vrot.slane %v7209, 2
        %v7211 = vrot.slane %v6376, 7
        %v7212 = vrot.slane %v7211, 2
        %v7213 = vrot.slane %v6384, 7
        %v7214 = vrot.slane %v7213, 2
        %v7215 = vrot.slane %v6392, 7
        %v7216 = vrot.slane %v7215, 2
        %v7217 = vrot.slane %v6391, 7
        %v7218 = vrot.slane %v7217, 2
        %v7219 = vrot.slane %v6393, 7
        %v7220 = vrot.slane %v7219, 2
        %v7221 = vrot.slane %v6401, 7
        %v7222 = vrot.slane %v7221, 2
        %v7223 = vrot.slane %v6409, 7
        %v7224 = vrot.slane %v7223, 2
        %v7225 = vrot.slane %v6408, 7
        %v7226 = vrot.slane %v7225, 2
        %v7227 = vrot.slane %v6410, 7
        %v7228 = vrot.slane %v7227, 2
        %v7229 = vrot.slane %v6418, 7
        %v7230 = vrot.slane %v7229, 2
        %v7231 = vrot.slane %v6426, 7
        %v7232 = vrot.slane %v7231, 2
        %v7233 = vrot.slane %v6425, 7
        %v7234 = vrot.slane %v7233, 2
        %v7235 = vrot.slane %v6427, 7
        %v7236 = vrot.slane %v7235, 2
        %v7237 = vrot.slane %v6434, 7
        %v7238 = vrot.slane %v7237, 2
        %v7239 = vrot.slane %v6435, 7
        %v7240 = vrot.slane %v7239, 2
        %v7241 = vrot.slane %v6443, 7
        %v7242 = vrot.slane %v7241, 2
        %v7243 = vrot.slane %v6451, 7
        %v7244 = vrot.slane %v7243, 2
        %v7245 = vrot.slane %v6450, 7
        %v7246 = vrot.slane %v7245, 2
        %v7247 = vrot.slane %v6452, 7
        %v7248 = vrot.slane %v7247, 2
        %v7249 = vrot.slane %v6460, 7
        %v7250 = vrot.slane %v7249, 2
        %v7251 = vrot.slane %v6468, 7
        %v7252 = vrot.slane %v7251, 2
        %v7253 = vrot.slane %v6467, 7
        %v7254 = vrot.slane %v7253, 2
        %v7255 = vrot.slane %v6469, 7
        %v7256 = vrot.slane %v7255, 2
        %v7257 = vrot.slane %v6477, 7
        %v7258 = vrot.slane %v7257, 2
        %v7259 = vrot.slane %v6485, 7
        %v7260 = vrot.slane %v7259, 2
        %v7261 = vrot.slane %v6484, 7
        %v7262 = vrot.slane %v7261, 2
        %v7263 = vrot.slane %v6486, 7
        %v7264 = vrot.slane %v7263, 2
        %v7265 = vrot.slane %v6493, 7
        %v7266 = vrot.slane %v7265, 2
        %v7267 = vrot.slane %v6494, 7
        %v7268 = vrot.slane %v7267, 2
        %v7269 = vrot.slane %v6502, 7
        %v7270 = vrot.slane %v7269, 2
        %v7271 = vrot.slane %v6510, 7
        %v7272 = vrot.slane %v7271, 2
        %v7273 = vrot.slane %v6509, 7
        %v7274 = vrot.slane %v7273, 2
        %v7275 = vrot.slane %v6511, 7
        %v7276 = vrot.slane %v7275, 2
        %v7277 = vrot.slane %v6519, 7
        %v7278 = vrot.slane %v7277, 2
        %v7279 = vrot.slane %v6527, 7
        %v7280 = vrot.slane %v7279, 2
        %v7281 = vrot.slane %v6526, 7
        %v7282 = vrot.slane %v7281, 2
        %v7283 = vrot.slane %v6528, 7
        %v7284 = vrot.slane %v7283, 2
        %v7285 = vrot.slane %v6536, 7
        %v7286 = vrot.slane %v7285, 2
        %v7287 = vrot.slane %v6544, 7
        %v7288 = vrot.slane %v7287, 2
        %v7289 = vrot.slane %v6543, 7
        %v7290 = vrot.slane %v7289, 2
        %v7291 = vrot.slane %v6545, 7
        %v7292 = vrot.slane %v7291, 2
        %v7293 = vrot.slane %v6552, 7
        %v7294 = vrot.slane %v7293, 2
        %v7295 = vrot.slane %v6553, 7
        %v7296 = vrot.slane %v7295, 2
        %v7297 = vrot.slane %v6561, 7
        %v7298 = vrot.slane %v7297, 2
        %v7299 = vrot.slane %v6569, 7
        %v7300 = vrot.slane %v7299, 2
        %v7301 = vrot.slane %v6568, 7
        %v7302 = vrot.slane %v7301, 2
        %v7303 = vrot.slane %v6570, 7
        %v7304 = vrot.slane %v7303, 2
        %v7305 = vrot.slane %v6578, 7
        %v7306 = vrot.slane %v7305, 2
        %v7307 = vrot.slane %v6586, 7
        %v7308 = vrot.slane %v7307, 2
        %v7309 = vrot.slane %v6585, 7
        %v7310 = vrot.slane %v7309, 2
        %v7311 = vrot.slane %v6587, 7
        %v7312 = vrot.slane %v7311, 2
        %v7313 = vrot.slane %v6595, 7
        %v7314 = vrot.slane %v7313, 2
        %v7315 = vrot.slane %v6603, 7
        %v7316 = vrot.slane %v7315, 2
        %v7317 = vrot.slane %v6602, 7
        %v7318 = vrot.slane %v7317, 2
        %v7319 = vrot.slane %v6604, 7
        %v7320 = vrot.slane %v7319, 2
        %v7321 = vrot.slane %v6611, 7
        %v7322 = vrot.slane %v7321, 2
        %v7323 = vrot.slane %v6612, 7
        %v7324 = vrot.slane %v7323, 2
        %v7325 = vrot.slane %v6620, 7
        %v7326 = vrot.slane %v7325, 2
        %v7327 = vrot.slane %v6628, 7
        %v7328 = vrot.slane %v7327, 2
        %v7329 = vrot.slane %v6627, 7
        %v7330 = vrot.slane %v7329, 2
        %v7331 = vrot.slane %v6629, 7
        %v7332 = vrot.slane %v7331, 2
        %v7333 = vrot.slane %v6637, 7
        %v7334 = vrot.slane %v7333, 2
        %v7335 = vrot.slane %v6645, 7
        %v7336 = vrot.slane %v7335, 2
        %v7337 = vrot.slane %v6644, 7
        %v7338 = vrot.slane %v7337, 2
        %v7339 = vrot.slane %v6646, 7
        %v7340 = vrot.slane %v7339, 2
        %v7341 = vrot.slane %v6654, 7
        %v7342 = vrot.slane %v7341, 2
        %v7343 = vrot.slane %v6662, 7
        %v7344 = vrot.slane %v7343, 2
        %v7345 = vrot.slane %v6661, 7
        %v7346 = vrot.slane %v7345, 2
        %v7347 = vrot.slane %v6663, 7
        %v7348 = vrot.slane %v7347, 2
        %v7349 = vrot.slane %v6670, 7
        %v7350 = vrot.slane %v7349, 2
        %v7351 = vrot.slane %v6671, 7
        %v7352 = vrot.slane %v7351, 2
        %v7353 = vrot.slane %v6679, 7
        %v7354 = vrot.slane %v7353, 2
        %v7355 = vrot.slane %v6687, 7
        %v7356 = vrot.slane %v7355, 2
        %v7357 = vrot.slane %v6686, 7
        %v7358 = vrot.slane %v7357, 2
        %v7359 = vrot.slane %v6688, 7
        %v7360 = vrot.slane %v7359, 2
        %v7361 = vrot.slane %v6696, 7
        %v7362 = vrot.slane %v7361, 2
        %v7363 = vrot.slane %v6704, 7
        %v7364 = vrot.slane %v7363, 2
        %v7365 = vrot.slane %v6703, 7
        %v7366 = vrot.slane %v7365, 2
        %v7367 = vrot.slane %v6705, 7
        %v7368 = vrot.slane %v7367, 2
        %v7369 = vrot.slane %v6713, 7
        %v7370 = vrot.slane %v7369, 2
        %v7371 = vrot.slane %v6721, 7
        %v7372 = vrot.slane %v7371, 2
        %v7373 = vrot.slane %v6720, 7
        %v7374 = vrot.slane %v7373, 2
        %v7375 = vrot.slane %v6722, 7
        %v7376 = vrot.slane %v7375, 2
        %v7377 = vrot.slane %v6729, 7
        %v7378 = vrot.slane %v7377, 2
        %v7379 = vrot.slane %v6730, 7
        %v7380 = vrot.slane %v7379, 2
        %v7381 = vrot.slane %v6738, 7
        %v7382 = vrot.slane %v7381, 2
        %v7383 = vrot.slane %v6746, 7
        %v7384 = vrot.slane %v7383, 2
        %v7385 = vrot.slane %v6745, 7
        %v7386 = vrot.slane %v7385, 2
        %v7387 = vrot.slane %v6747, 7
        %v7388 = vrot.slane %v7387, 2
        %v7389 = vrot.slane %v6755, 7
        %v7390 = vrot.slane %v7389, 2
        %v7391 = vrot.slane %v6763, 7
        %v7392 = vrot.slane %v7391, 2
        %v7393 = vrot.slane %v6762, 7
        %v7394 = vrot.slane %v7393, 2
        %v7395 = vrot.slane %v6764, 7
        %v7396 = vrot.slane %v7395, 2
        %v7397 = vrot.slane %v6772, 7
        %v7398 = vrot.slane %v7397, 2
        %v7399 = vrot.slane %v6780, 7
        %v7400 = vrot.slane %v7399, 2
        %v7401 = vrot.slane %v6779, 7
        %v7402 = vrot.slane %v7401, 2
        %v7403 = vrot.slane %v6781, 7
        %v7404 = vrot.slane %v7403, 2
        %v7405 = vrot.slane %v6788, 7
        %v7406 = vrot.slane %v7405, 2
        %v7407 = vrot.slane %v6789, 7
        %v7408 = vrot.slane %v7407, 2
        %v7409 = vrot.slane %v6797, 7
        %v7410 = vrot.slane %v7409, 2
        %v7411 = vrot.slane %v6805, 7
        %v7412 = vrot.slane %v7411, 2
        %v7413 = vrot.slane %v6804, 7
        %v7414 = vrot.slane %v7413, 2
        %v7415 = vrot.slane %v6806, 7
        %v7416 = vrot.slane %v7415, 2
        %v7417 = vrot.slane %v6814, 7
        %v7418 = vrot.slane %v7417, 2
        %v7419 = vrot.slane %v6822, 7
        %v7420 = vrot.slane %v7419, 2
        %v7421 = vrot.slane %v6821, 7
        %v7422 = vrot.slane %v7421, 2
        %v7423 = vrot.slane %v6823, 7
        %v7424 = vrot.slane %v7423, 2
        %v7425 = vrot.slane %v6831, 7
        %v7426 = vrot.slane %v7425, 2
        %v7427 = vrot.slane %v6839, 7
        %v7428 = vrot.slane %v7427, 2
        %v7429 = vrot.slane %v6838, 7
        %v7430 = vrot.slane %v7429, 2
        %v7431 = vrot.slane %v6840, 7
        %v7432 = vrot.slane %v7431, 2
        %v7433 = vrot.slane %v6847, 7
        %v7434 = vrot.slane %v7433, 2
        %v7435 = vrot.slane %v6848, 7
        %v7436 = vrot.slane %v7435, 2
        %v7633 = vmax.f32 %v6030, %v7046
        %v7634 = vmax.f32 %v6038, %v7048
        %v7635 = vmax.f32 %v6037, %v7050
        %v7636 = vmax.f32 %v6039, %v7052
        %v7637 = vmax.f32 %v6047, %v7054
        %v7638 = vmax.f32 %v6055, %v7056
        %v7639 = vmax.f32 %v6054, %v7058
        %v7640 = vmax.f32 %v6056, %v7060
        %v7641 = vmax.f32 %v6064, %v7062
        %v7642 = vmax.f32 %v6072, %v7064
        %v7643 = vmax.f32 %v6071, %v7066
        %v7644 = vmax.f32 %v6073, %v7068
        %v7645 = vmax.f32 %v6080, %v7070
        %v7646 = vmax.f32 %v6081, %v7072
        %v7647 = vmax.f32 %v6089, %v7074
        %v7648 = vmax.f32 %v6097, %v7076
        %v7649 = vmax.f32 %v6096, %v7078
        %v7650 = vmax.f32 %v6098, %v7080
        %v7651 = vmax.f32 %v6106, %v7082
        %v7652 = vmax.f32 %v6114, %v7084
        %v7653 = vmax.f32 %v6113, %v7086
        %v7654 = vmax.f32 %v6115, %v7088
        %v7655 = vmax.f32 %v6123, %v7090
        %v7656 = vmax.f32 %v6131, %v7092
        %v7657 = vmax.f32 %v6130, %v7094
        %v7658 = vmax.f32 %v6132, %v7096
        %v7659 = vmax.f32 %v6139, %v7098
        %v7660 = vmax.f32 %v6140, %v7100
        %v7661 = vmax.f32 %v6148, %v7102
        %v7662 = vmax.f32 %v6156, %v7104
        %v7663 = vmax.f32 %v6155, %v7106
        %v7664 = vmax.f32 %v6157, %v7108
        %v7665 = vmax.f32 %v6165, %v7110
        %v7666 = vmax.f32 %v6173, %v7112
        %v7667 = vmax.f32 %v6172, %v7114
        %v7668 = vmax.f32 %v6174, %v7116
        %v7669 = vmax.f32 %v6182, %v7118
        %v7670 = vmax.f32 %v6190, %v7120
        %v7671 = vmax.f32 %v6189, %v7122
        %v7672 = vmax.f32 %v6191, %v7124
        %v7673 = vmax.f32 %v6198, %v7126
        %v7674 = vmax.f32 %v6199, %v7128
        %v7675 = vmax.f32 %v6207, %v7130
        %v7676 = vmax.f32 %v6215, %v7132
        %v7677 = vmax.f32 %v6214, %v7134
        %v7678 = vmax.f32 %v6216, %v7136
        %v7679 = vmax.f32 %v6224, %v7138
        %v7680 = vmax.f32 %v6232, %v7140
        %v7681 = vmax.f32 %v6231, %v7142
        %v7682 = vmax.f32 %v6233, %v7144
        %v7683 = vmax.f32 %v6241, %v7146
        %v7684 = vmax.f32 %v6249, %v7148
        %v7685 = vmax.f32 %v6248, %v7150
        %v7686 = vmax.f32 %v6250, %v7152
        %v7687 = vmax.f32 %v6257, %v7154
        %v7688 = vmax.f32 %v6258, %v7156
        %v7689 = vmax.f32 %v6266, %v7158
        %v7690 = vmax.f32 %v6274, %v7160
        %v7691 = vmax.f32 %v6273, %v7162
        %v7692 = vmax.f32 %v6275, %v7164
        %v7693 = vmax.f32 %v6283, %v7166
        %v7694 = vmax.f32 %v6291, %v7168
        %v7695 = vmax.f32 %v6290, %v7170
        %v7696 = vmax.f32 %v6292, %v7172
        %v7697 = vmax.f32 %v6300, %v7174
        %v7698 = vmax.f32 %v6308, %v7176
        %v7699 = vmax.f32 %v6307, %v7178
        %v7700 = vmax.f32 %v6309, %v7180
        %v7701 = vmax.f32 %v6316, %v7182
        %v7702 = vmax.f32 %v6317, %v7184
        %v7703 = vmax.f32 %v6325, %v7186
        %v7704 = vmax.f32 %v6333, %v7188
        %v7705 = vmax.f32 %v6332, %v7190
        %v7706 = vmax.f32 %v6334, %v7192
        %v7707 = vmax.f32 %v6342, %v7194
        %v7708 = vmax.f32 %v6350, %v7196
        %v7709 = vmax.f32 %v6349, %v7198
        %v7710 = vmax.f32 %v6351, %v7200
        %v7711 = vmax.f32 %v6359, %v7202
        %v7712 = vmax.f32 %v6367, %v7204
        %v7713 = vmax.f32 %v6366, %v7206
        %v7714 = vmax.f32 %v6368, %v7208
        %v7715 = vmax.f32 %v6375, %v7210
        %v7716 = vmax.f32 %v6376, %v7212
        %v7717 = vmax.f32 %v6384, %v7214
        %v7718 = vmax.f32 %v6392, %v7216
        %v7719 = vmax.f32 %v6391, %v7218
        %v7720 = vmax.f32 %v6393, %v7220
        %v7721 = vmax.f32 %v6401, %v7222
        %v7722 = vmax.f32 %v6409, %v7224
        %v7723 = vmax.f32 %v6408, %v7226
        %v7724 = vmax.f32 %v6410, %v7228
        %v7725 = vmax.f32 %v6418, %v7230
        %v7726 = vmax.f32 %v6426, %v7232
        %v7727 = vmax.f32 %v6425, %v7234
        %v7728 = vmax.f32 %v6427, %v7236
        %v7729 = vmax.f32 %v6434, %v7238
        %v7730 = vmax.f32 %v6435, %v7240
        %v7731 = vmax.f32 %v6443, %v7242
        %v7732 = vmax.f32 %v6451, %v7244
        %v7733 = vmax.f32 %v6450, %v7246
        %v7734 = vmax.f32 %v6452, %v7248
        %v7735 = vmax.f32 %v6460, %v7250
        %v7736 = vmax.f32 %v6468, %v7252
        %v7737 = vmax.f32 %v6467, %v7254
        %v7738 = vmax.f32 %v6469, %v7256
        %v7739 = vmax.f32 %v6477, %v7258
        %v7740 = vmax.f32 %v6485, %v7260
        %v7741 = vmax.f32 %v6484, %v7262
        %v7742 = vmax.f32 %v6486, %v7264
        %v7743 = vmax.f32 %v6493, %v7266
        %v7744 = vmax.f32 %v6494, %v7268
        %v7745 = vmax.f32 %v6502, %v7270
        %v7746 = vmax.f32 %v6510, %v7272
        %v7747 = vmax.f32 %v6509, %v7274
        %v7748 = vmax.f32 %v6511, %v7276
        %v7749 = vmax.f32 %v6519, %v7278
        %v7750 = vmax.f32 %v6527, %v7280
        %v7751 = vmax.f32 %v6526, %v7282
        %v7752 = vmax.f32 %v6528, %v7284
        %v7753 = vmax.f32 %v6536, %v7286
        %v7754 = vmax.f32 %v6544, %v7288
        %v7755 = vmax.f32 %v6543, %v7290
        %v7756 = vmax.f32 %v6545, %v7292
        %v7757 = vmax.f32 %v6552, %v7294
        %v7758 = vmax.f32 %v6553, %v7296
        %v7759 = vmax.f32 %v6561, %v7298
        %v7760 = vmax.f32 %v6569, %v7300
        %v7761 = vmax.f32 %v6568, %v7302
        %v7762 = vmax.f32 %v6570, %v7304
        %v7763 = vmax.f32 %v6578, %v7306
        %v7764 = vmax.f32 %v6586, %v7308
        %v7765 = vmax.f32 %v6585, %v7310
        %v7766 = vmax.f32 %v6587, %v7312
        %v7767 = vmax.f32 %v6595, %v7314
        %v7768 = vmax.f32 %v6603, %v7316
        %v7769 = vmax.f32 %v6602, %v7318
        %v7770 = vmax.f32 %v6604, %v7320
        %v7771 = vmax.f32 %v6611, %v7322
        %v7772 = vmax.f32 %v6612, %v7324
        %v7773 = vmax.f32 %v6620, %v7326
        %v7774 = vmax.f32 %v6628, %v7328
        %v7775 = vmax.f32 %v6627, %v7330
        %v7776 = vmax.f32 %v6629, %v7332
        %v7777 = vmax.f32 %v6637, %v7334
        %v7778 = vmax.f32 %v6645, %v7336
        %v7779 = vmax.f32 %v6644, %v7338
        %v7780 = vmax.f32 %v6646, %v7340
        %v7781 = vmax.f32 %v6654, %v7342
        %v7782 = vmax.f32 %v6662, %v7344
        %v7783 = vmax.f32 %v6661, %v7346
        %v7784 = vmax.f32 %v6663, %v7348
        %v7785 = vmax.f32 %v6670, %v7350
        %v7786 = vmax.f32 %v6671, %v7352
        %v7787 = vmax.f32 %v6679, %v7354
        %v7788 = vmax.f32 %v6687, %v7356
        %v7789 = vmax.f32 %v6686, %v7358
        %v7790 = vmax.f32 %v6688, %v7360
        %v7791 = vmax.f32 %v6696, %v7362
        %v7792 = vmax.f32 %v6704, %v7364
        %v7793 = vmax.f32 %v6703, %v7366
        %v7794 = vmax.f32 %v6705, %v7368
        %v7795 = vmax.f32 %v6713, %v7370
        %v7796 = vmax.f32 %v6721, %v7372
        %v7797 = vmax.f32 %v6720, %v7374
        %v7798 = vmax.f32 %v6722, %v7376
        %v7799 = vmax.f32 %v6729, %v7378
        %v7800 = vmax.f32 %v6730, %v7380
        %v7801 = vmax.f32 %v6738, %v7382
        %v7802 = vmax.f32 %v6746, %v7384
        %v7803 = vmax.f32 %v6745, %v7386
        %v7804 = vmax.f32 %v6747, %v7388
        %v7805 = vmax.f32 %v6755, %v7390
        %v7806 = vmax.f32 %v6763, %v7392
        %v7807 = vmax.f32 %v6762, %v7394
        %v7808 = vmax.f32 %v6764, %v7396
        %v7809 = vmax.f32 %v6772, %v7398
        %v7810 = vmax.f32 %v6780, %v7400
        %v7811 = vmax.f32 %v6779, %v7402
        %v7812 = vmax.f32 %v6781, %v7404
        %v7813 = vmax.f32 %v6788, %v7406
        %v7814 = vmax.f32 %v6789, %v7408
        %v7815 = vmax.f32 %v6797, %v7410
        %v7816 = vmax.f32 %v6805, %v7412
        %v7817 = vmax.f32 %v6804, %v7414
        %v7818 = vmax.f32 %v6806, %v7416
        %v7819 = vmax.f32 %v6814, %v7418
        %v7820 = vmax.f32 %v6822, %v7420
        %v7821 = vmax.f32 %v6821, %v7422
        %v7822 = vmax.f32 %v6823, %v7424
        %v7823 = vmax.f32 %v6831, %v7426
        %v7824 = vmax.f32 %v6839, %v7428
        %v7825 = vmax.f32 %v6838, %v7430
        %v7826 = vmax.f32 %v6840, %v7432
        %v7827 = vmax.f32 %v6847, %v7434
        %v7828 = vmax.f32 %v6848, %v7436
        %v7929 = vlaneseq
        %v7930 = vshrl.u32 %v7929, 7
        %v7931 = vsub.s32 0, %v7930
        %v7932 = vrot.slane %v7633, %v7931
        %v7933 = vlaneseq
        %v7934 = vshrl.u32 %v7933, 7
        %v7935 = vsub.s32 0, %v7934
        %v7936 = vrot.slane %v7634, %v7935
        %v7937 = vlaneseq
        %v7938 = vshrl.u32 %v7937, 7
        %v7939 = vsub.s32 0, %v7938
        %v7940 = vrot.slane %v7635, %v7939
        %v7941 = vlaneseq
        %v7942 = vshrl.u32 %v7941, 7
        %v7943 = vsub.s32 0, %v7942
        %v7944 = vrot.slane %v7636, %v7943
        %v7945 = vlaneseq
        %v7946 = vshrl.u32 %v7945, 7
        %v7947 = vsub.s32 0, %v7946
        %v7948 = vrot.slane %v7637, %v7947
        %v7949 = vlaneseq
        %v7950 = vshrl.u32 %v7949, 7
        %v7951 = vsub.s32 0, %v7950
        %v7952 = vrot.slane %v7638, %v7951
        %v7953 = vlaneseq
        %v7954 = vshrl.u32 %v7953, 7
        %v7955 = vsub.s32 0, %v7954
        %v7956 = vrot.slane %v7639, %v7955
        %v7957 = vlaneseq
        %v7958 = vshrl.u32 %v7957, 7
        %v7959 = vsub.s32 0, %v7958
        %v7960 = vrot.slane %v7640, %v7959
        %v7961 = vlaneseq
        %v7962 = vshrl.u32 %v7961, 7
        %v7963 = vsub.s32 0, %v7962
        %v7964 = vrot.slane %v7641, %v7963
        %v7965 = vlaneseq
        %v7966 = vshrl.u32 %v7965, 7
        %v7967 = vsub.s32 0, %v7966
        %v7968 = vrot.slane %v7642, %v7967
        %v7969 = vlaneseq
        %v7970 = vshrl.u32 %v7969, 7
        %v7971 = vsub.s32 0, %v7970
        %v7972 = vrot.slane %v7647, %v7971
        %v7973 = vlaneseq
        %v7974 = vshrl.u32 %v7973, 7
        %v7975 = vsub.s32 0, %v7974
        %v7976 = vrot.slane %v7648, %v7975
        %v7977 = vlaneseq
        %v7978 = vshrl.u32 %v7977, 7
        %v7979 = vsub.s32 0, %v7978
        %v7980 = vrot.slane %v7649, %v7979
        %v7981 = vlaneseq
        %v7982 = vshrl.u32 %v7981, 7
        %v7983 = vsub.s32 0, %v7982
        %v7984 = vrot.slane %v7650, %v7983
        %v7985 = vlaneseq
        %v7986 = vshrl.u32 %v7985, 7
        %v7987 = vsub.s32 0, %v7986
        %v7988 = vrot.slane %v7651, %v7987
        %v7989 = vlaneseq
        %v7990 = vshrl.u32 %v7989, 7
        %v7991 = vsub.s32 0, %v7990
        %v7992 = vrot.slane %v7652, %v7991
        %v7993 = vlaneseq
        %v7994 = vshrl.u32 %v7993, 7
        %v7995 = vsub.s32 0, %v7994
        %v7996 = vrot.slane %v7653, %v7995
        %v7997 = vlaneseq
        %v7998 = vshrl.u32 %v7997, 7
        %v7999 = vsub.s32 0, %v7998
        %v8000 = vrot.slane %v7654, %v7999
        %v8001 = vlaneseq
        %v8002 = vshrl.u32 %v8001, 7
        %v8003 = vsub.s32 0, %v8002
        %v8004 = vrot.slane %v7655, %v8003
        %v8005 = vlaneseq
        %v8006 = vshrl.u32 %v8005, 7
        %v8007 = vsub.s32 0, %v8006
        %v8008 = vrot.slane %v7656, %v8007
        %v8009 = vlaneseq
        %v8010 = vshrl.u32 %v8009, 7
        %v8011 = vsub.s32 0, %v8010
        %v8012 = vrot.slane %v7661, %v8011
        %v8013 = vlaneseq
        %v8014 = vshrl.u32 %v8013, 7
        %v8015 = vsub.s32 0, %v8014
        %v8016 = vrot.slane %v7662, %v8015
        %v8017 = vlaneseq
        %v8018 = vshrl.u32 %v8017, 7
        %v8019 = vsub.s32 0, %v8018
        %v8020 = vrot.slane %v7663, %v8019
        %v8021 = vlaneseq
        %v8022 = vshrl.u32 %v8021, 7
        %v8023 = vsub.s32 0, %v8022
        %v8024 = vrot.slane %v7664, %v8023
        %v8025 = vlaneseq
        %v8026 = vshrl.u32 %v8025, 7
        %v8027 = vsub.s32 0, %v8026
        %v8028 = vrot.slane %v7665, %v8027
        %v8029 = vlaneseq
        %v8030 = vshrl.u32 %v8029, 7
        %v8031 = vsub.s32 0, %v8030
        %v8032 = vrot.slane %v7666, %v8031
        %v8033 = vlaneseq
        %v8034 = vshrl.u32 %v8033, 7
        %v8035 = vsub.s32 0, %v8034
        %v8036 = vrot.slane %v7667, %v8035
        %v8037 = vlaneseq
        %v8038 = vshrl.u32 %v8037, 7
        %v8039 = vsub.s32 0, %v8038
        %v8040 = vrot.slane %v7668, %v8039
        %v8041 = vlaneseq
        %v8042 = vshrl.u32 %v8041, 7
        %v8043 = vsub.s32 0, %v8042
        %v8044 = vrot.slane %v7669, %v8043
        %v8045 = vlaneseq
        %v8046 = vshrl.u32 %v8045, 7
        %v8047 = vsub.s32 0, %v8046
        %v8048 = vrot.slane %v7670, %v8047
        %v8049 = vlaneseq
        %v8050 = vshrl.u32 %v8049, 7
        %v8051 = vsub.s32 0, %v8050
        %v8052 = vrot.slane %v7675, %v8051
        %v8053 = vlaneseq
        %v8054 = vshrl.u32 %v8053, 7
        %v8055 = vsub.s32 0, %v8054
        %v8056 = vrot.slane %v7676, %v8055
        %v8057 = vlaneseq
        %v8058 = vshrl.u32 %v8057, 7
        %v8059 = vsub.s32 0, %v8058
        %v8060 = vrot.slane %v7677, %v8059
        %v8061 = vlaneseq
        %v8062 = vshrl.u32 %v8061, 7
        %v8063 = vsub.s32 0, %v8062
        %v8064 = vrot.slane %v7678, %v8063
        %v8065 = vlaneseq
        %v8066 = vshrl.u32 %v8065, 7
        %v8067 = vsub.s32 0, %v8066
        %v8068 = vrot.slane %v7679, %v8067
        %v8069 = vlaneseq
        %v8070 = vshrl.u32 %v8069, 7
        %v8071 = vsub.s32 0, %v8070
        %v8072 = vrot.slane %v7680, %v8071
        %v8073 = vlaneseq
        %v8074 = vshrl.u32 %v8073, 7
        %v8075 = vsub.s32 0, %v8074
        %v8076 = vrot.slane %v7681, %v8075
        %v8077 = vlaneseq
        %v8078 = vshrl.u32 %v8077, 7
        %v8079 = vsub.s32 0, %v8078
        %v8080 = vrot.slane %v7682, %v8079
        %v8081 = vlaneseq
        %v8082 = vshrl.u32 %v8081, 7
        %v8083 = vsub.s32 0, %v8082
        %v8084 = vrot.slane %v7683, %v8083
        %v8085 = vlaneseq
        %v8086 = vshrl.u32 %v8085, 7
        %v8087 = vsub.s32 0, %v8086
        %v8088 = vrot.slane %v7684, %v8087
        %v8089 = vlaneseq
        %v8090 = vshrl.u32 %v8089, 7
        %v8091 = vsub.s32 0, %v8090
        %v8092 = vrot.slane %v7689, %v8091
        %v8093 = vlaneseq
        %v8094 = vshrl.u32 %v8093, 7
        %v8095 = vsub.s32 0, %v8094
        %v8096 = vrot.slane %v7690, %v8095
        %v8097 = vlaneseq
        %v8098 = vshrl.u32 %v8097, 7
        %v8099 = vsub.s32 0, %v8098
        %v8100 = vrot.slane %v7691, %v8099
        %v8101 = vlaneseq
        %v8102 = vshrl.u32 %v8101, 7
        %v8103 = vsub.s32 0, %v8102
        %v8104 = vrot.slane %v7692, %v8103
        %v8105 = vlaneseq
        %v8106 = vshrl.u32 %v8105, 7
        %v8107 = vsub.s32 0, %v8106
        %v8108 = vrot.slane %v7693, %v8107
        %v8109 = vlaneseq
        %v8110 = vshrl.u32 %v8109, 7
        %v8111 = vsub.s32 0, %v8110
        %v8112 = vrot.slane %v7694, %v8111
        %v8113 = vlaneseq
        %v8114 = vshrl.u32 %v8113, 7
        %v8115 = vsub.s32 0, %v8114
        %v8116 = vrot.slane %v7695, %v8115
        %v8117 = vlaneseq
        %v8118 = vshrl.u32 %v8117, 7
        %v8119 = vsub.s32 0, %v8118
        %v8120 = vrot.slane %v7696, %v8119
        %v8121 = vlaneseq
        %v8122 = vshrl.u32 %v8121, 7
        %v8123 = vsub.s32 0, %v8122
        %v8124 = vrot.slane %v7697, %v8123
        %v8125 = vlaneseq
        %v8126 = vshrl.u32 %v8125, 7
        %v8127 = vsub.s32 0, %v8126
        %v8128 = vrot.slane %v7698, %v8127
        %v8129 = vlaneseq
        %v8130 = vshrl.u32 %v8129, 7
        %v8131 = vsub.s32 0, %v8130
        %v8132 = vrot.slane %v7703, %v8131
        %v8133 = vlaneseq
        %v8134 = vshrl.u32 %v8133, 7
        %v8135 = vsub.s32 0, %v8134
        %v8136 = vrot.slane %v7704, %v8135
        %v8137 = vlaneseq
        %v8138 = vshrl.u32 %v8137, 7
        %v8139 = vsub.s32 0, %v8138
        %v8140 = vrot.slane %v7705, %v8139
        %v8141 = vlaneseq
        %v8142 = vshrl.u32 %v8141, 7
        %v8143 = vsub.s32 0, %v8142
        %v8144 = vrot.slane %v7706, %v8143
        %v8145 = vlaneseq
        %v8146 = vshrl.u32 %v8145, 7
        %v8147 = vsub.s32 0, %v8146
        %v8148 = vrot.slane %v7707, %v8147
        %v8149 = vlaneseq
        %v8150 = vshrl.u32 %v8149, 7
        %v8151 = vsub.s32 0, %v8150
        %v8152 = vrot.slane %v7708, %v8151
        %v8153 = vlaneseq
        %v8154 = vshrl.u32 %v8153, 7
        %v8155 = vsub.s32 0, %v8154
        %v8156 = vrot.slane %v7709, %v8155
        %v8157 = vlaneseq
        %v8158 = vshrl.u32 %v8157, 7
        %v8159 = vsub.s32 0, %v8158
        %v8160 = vrot.slane %v7710, %v8159
        %v8161 = vlaneseq
        %v8162 = vshrl.u32 %v8161, 7
        %v8163 = vsub.s32 0, %v8162
        %v8164 = vrot.slane %v7711, %v8163
        %v8165 = vlaneseq
        %v8166 = vshrl.u32 %v8165, 7
        %v8167 = vsub.s32 0, %v8166
        %v8168 = vrot.slane %v7712, %v8167
        %v8169 = vlaneseq
        %v8170 = vshrl.u32 %v8169, 7
        %v8171 = vsub.s32 0, %v8170
        %v8172 = vrot.slane %v7717, %v8171
        %v8173 = vlaneseq
        %v8174 = vshrl.u32 %v8173, 7
        %v8175 = vsub.s32 0, %v8174
        %v8176 = vrot.slane %v7718, %v8175
        %v8177 = vlaneseq
        %v8178 = vshrl.u32 %v8177, 7
        %v8179 = vsub.s32 0, %v8178
        %v8180 = vrot.slane %v7719, %v8179
        %v8181 = vlaneseq
        %v8182 = vshrl.u32 %v8181, 7
        %v8183 = vsub.s32 0, %v8182
        %v8184 = vrot.slane %v7720, %v8183
        %v8185 = vlaneseq
        %v8186 = vshrl.u32 %v8185, 7
        %v8187 = vsub.s32 0, %v8186
        %v8188 = vrot.slane %v7721, %v8187
        %v8189 = vlaneseq
        %v8190 = vshrl.u32 %v8189, 7
        %v8191 = vsub.s32 0, %v8190
        %v8192 = vrot.slane %v7722, %v8191
        %v8193 = vlaneseq
        %v8194 = vshrl.u32 %v8193, 7
        %v8195 = vsub.s32 0, %v8194
        %v8196 = vrot.slane %v7723, %v8195
        %v8197 = vlaneseq
        %v8198 = vshrl.u32 %v8197, 7
        %v8199 = vsub.s32 0, %v8198
        %v8200 = vrot.slane %v7724, %v8199
        %v8201 = vlaneseq
        %v8202 = vshrl.u32 %v8201, 7
        %v8203 = vsub.s32 0, %v8202
        %v8204 = vrot.slane %v7725, %v8203
        %v8205 = vlaneseq
        %v8206 = vshrl.u32 %v8205, 7
        %v8207 = vsub.s32 0, %v8206
        %v8208 = vrot.slane %v7726, %v8207
        %v8209 = vlaneseq
        %v8210 = vshrl.u32 %v8209, 7
        %v8211 = vsub.s32 0, %v8210
        %v8212 = vrot.slane %v7731, %v8211
        %v8213 = vlaneseq
        %v8214 = vshrl.u32 %v8213, 7
        %v8215 = vsub.s32 0, %v8214
        %v8216 = vrot.slane %v7732, %v8215
        %v8217 = vlaneseq
        %v8218 = vshrl.u32 %v8217, 7
        %v8219 = vsub.s32 0, %v8218
        %v8220 = vrot.slane %v7733, %v8219
        %v8221 = vlaneseq
        %v8222 = vshrl.u32 %v8221, 7
        %v8223 = vsub.s32 0, %v8222
        %v8224 = vrot.slane %v7734, %v8223
        %v8225 = vlaneseq
        %v8226 = vshrl.u32 %v8225, 7
        %v8227 = vsub.s32 0, %v8226
        %v8228 = vrot.slane %v7735, %v8227
        %v8229 = vlaneseq
        %v8230 = vshrl.u32 %v8229, 7
        %v8231 = vsub.s32 0, %v8230
        %v8232 = vrot.slane %v7736, %v8231
        %v8233 = vlaneseq
        %v8234 = vshrl.u32 %v8233, 7
        %v8235 = vsub.s32 0, %v8234
        %v8236 = vrot.slane %v7737, %v8235
        %v8237 = vlaneseq
        %v8238 = vshrl.u32 %v8237, 7
        %v8239 = vsub.s32 0, %v8238
        %v8240 = vrot.slane %v7738, %v8239
        %v8241 = vlaneseq
        %v8242 = vshrl.u32 %v8241, 7
        %v8243 = vsub.s32 0, %v8242
        %v8244 = vrot.slane %v7739, %v8243
        %v8245 = vlaneseq
        %v8246 = vshrl.u32 %v8245, 7
        %v8247 = vsub.s32 0, %v8246
        %v8248 = vrot.slane %v7740, %v8247
        %v8249 = vlaneseq
        %v8250 = vshrl.u32 %v8249, 7
        %v8251 = vsub.s32 0, %v8250
        %v8252 = vrot.slane %v7745, %v8251
        %v8253 = vlaneseq
        %v8254 = vshrl.u32 %v8253, 7
        %v8255 = vsub.s32 0, %v8254
        %v8256 = vrot.slane %v7746, %v8255
        %v8257 = vlaneseq
        %v8258 = vshrl.u32 %v8257, 7
        %v8259 = vsub.s32 0, %v8258
        %v8260 = vrot.slane %v7747, %v8259
        %v8261 = vlaneseq
        %v8262 = vshrl.u32 %v8261, 7
        %v8263 = vsub.s32 0, %v8262
        %v8264 = vrot.slane %v7748, %v8263
        %v8265 = vlaneseq
        %v8266 = vshrl.u32 %v8265, 7
        %v8267 = vsub.s32 0, %v8266
        %v8268 = vrot.slane %v7749, %v8267
        %v8269 = vlaneseq
        %v8270 = vshrl.u32 %v8269, 7
        %v8271 = vsub.s32 0, %v8270
        %v8272 = vrot.slane %v7750, %v8271
        %v8273 = vlaneseq
        %v8274 = vshrl.u32 %v8273, 7
        %v8275 = vsub.s32 0, %v8274
        %v8276 = vrot.slane %v7751, %v8275
        %v8277 = vlaneseq
        %v8278 = vshrl.u32 %v8277, 7
        %v8279 = vsub.s32 0, %v8278
        %v8280 = vrot.slane %v7752, %v8279
        %v8281 = vlaneseq
        %v8282 = vshrl.u32 %v8281, 7
        %v8283 = vsub.s32 0, %v8282
        %v8284 = vrot.slane %v7753, %v8283
        %v8285 = vlaneseq
        %v8286 = vshrl.u32 %v8285, 7
        %v8287 = vsub.s32 0, %v8286
        %v8288 = vrot.slane %v7754, %v8287
        %v8289 = vlaneseq
        %v8290 = vshrl.u32 %v8289, 7
        %v8291 = vsub.s32 0, %v8290
        %v8292 = vrot.slane %v7759, %v8291
        %v8293 = vlaneseq
        %v8294 = vshrl.u32 %v8293, 7
        %v8295 = vsub.s32 0, %v8294
        %v8296 = vrot.slane %v7760, %v8295
        %v8297 = vlaneseq
        %v8298 = vshrl.u32 %v8297, 7
        %v8299 = vsub.s32 0, %v8298
        %v8300 = vrot.slane %v7761, %v8299
        %v8301 = vlaneseq
        %v8302 = vshrl.u32 %v8301, 7
        %v8303 = vsub.s32 0, %v8302
        %v8304 = vrot.slane %v7762, %v8303
        %v8305 = vlaneseq
        %v8306 = vshrl.u32 %v8305, 7
        %v8307 = vsub.s32 0, %v8306
        %v8308 = vrot.slane %v7763, %v8307
        %v8309 = vlaneseq
        %v8310 = vshrl.u32 %v8309, 7
        %v8311 = vsub.s32 0, %v8310
        %v8312 = vrot.slane %v7764, %v8311
        %v8313 = vlaneseq
        %v8314 = vshrl.u32 %v8313, 7
        %v8315 = vsub.s32 0, %v8314
        %v8316 = vrot.slane %v7765, %v8315
        %v8317 = vlaneseq
        %v8318 = vshrl.u32 %v8317, 7
        %v8319 = vsub.s32 0, %v8318
        %v8320 = vrot.slane %v7766, %v8319
        %v8321 = vlaneseq
        %v8322 = vshrl.u32 %v8321, 7
        %v8323 = vsub.s32 0, %v8322
        %v8324 = vrot.slane %v7767, %v8323
        %v8325 = vlaneseq
        %v8326 = vshrl.u32 %v8325, 7
        %v8327 = vsub.s32 0, %v8326
        %v8328 = vrot.slane %v7768, %v8327
        %vm8329 = vcmask 1041409
        %v8330 = vsel %vm8329, %v7936, %v7932
        %vm8331 = vcmask 1042434
        %v8332 = vsel %vm8331, %v7940, %v8330
        %vm8333 = vcmask 1043459
        %v8334 = vsel %vm8333, %v7944, %v8332
        %vm8335 = vcmask 1044484
        %v8336 = vsel %vm8335, %v7948, %v8334
        %vm8337 = vcmask 1045509
        %v8338 = vsel %vm8337, %v7952, %v8336
        %vm8339 = vcmask 1046534
        %v8340 = vsel %vm8339, %v7956, %v8338
        %vm8341 = vcmask 1047559
        %v8342 = vsel %vm8341, %v7960, %v8340
        %v8343 = vsel %vm8329, %v7968, %v7964
        %v8344 = vsel %vm8329, %v7976, %v7972
        %v8345 = vsel %vm8331, %v7980, %v8344
        %v8346 = vsel %vm8333, %v7984, %v8345
        %v8347 = vsel %vm8335, %v7988, %v8346
        %v8348 = vsel %vm8337, %v7992, %v8347
        %v8349 = vsel %vm8339, %v7996, %v8348
        %v8350 = vsel %vm8341, %v8000, %v8349
        %v8351 = vsel %vm8329, %v8008, %v8004
        %v8352 = vsel %vm8329, %v8016, %v8012
        %v8353 = vsel %vm8331, %v8020, %v8352
        %v8354 = vsel %vm8333, %v8024, %v8353
        %v8355 = vsel %vm8335, %v8028, %v8354
        %v8356 = vsel %vm8337, %v8032, %v8355
        %v8357 = vsel %vm8339, %v8036, %v8356
        %v8358 = vsel %vm8341, %v8040, %v8357
        %v8359 = vsel %vm8329, %v8048, %v8044
        %v8360 = vsel %vm8329, %v8056, %v8052
        %v8361 = vsel %vm8331, %v8060, %v8360
        %v8362 = vsel %vm8333, %v8064, %v8361
        %v8363 = vsel %vm8335, %v8068, %v8362
        %v8364 = vsel %vm8337, %v8072, %v8363
        %v8365 = vsel %vm8339, %v8076, %v8364
        %v8366 = vsel %vm8341, %v8080, %v8365
        %v8367 = vsel %vm8329, %v8088, %v8084
        %v8368 = vsel %vm8329, %v8096, %v8092
        %v8369 = vsel %vm8331, %v8100, %v8368
        %v8370 = vsel %vm8333, %v8104, %v8369
        %v8371 = vsel %vm8335, %v8108, %v8370
        %v8372 = vsel %vm8337, %v8112, %v8371
        %v8373 = vsel %vm8339, %v8116, %v8372
        %v8374 = vsel %vm8341, %v8120, %v8373
        %v8375 = vsel %vm8329, %v8128, %v8124
        %v8376 = vsel %vm8329, %v8136, %v8132
        %v8377 = vsel %vm8331, %v8140, %v8376
        %v8378 = vsel %vm8333, %v8144, %v8377
        %v8379 = vsel %vm8335, %v8148, %v8378
        %v8380 = vsel %vm8337, %v8152, %v8379
        %v8381 = vsel %vm8339, %v8156, %v8380
        %v8382 = vsel %vm8341, %v8160, %v8381
        %v8383 = vsel %vm8329, %v8168, %v8164
        %v8384 = vsel %vm8329, %v8176, %v8172
        %v8385 = vsel %vm8331, %v8180, %v8384
        %v8386 = vsel %vm8333, %v8184, %v8385
        %v8387 = vsel %vm8335, %v8188, %v8386
        %v8388 = vsel %vm8337, %v8192, %v8387
        %v8389 = vsel %vm8339, %v8196, %v8388
        %v8390 = vsel %vm8341, %v8200, %v8389
        %v8391 = vsel %vm8329, %v8208, %v8204
        %v8392 = vsel %vm8329, %v8216, %v8212
        %v8393 = vsel %vm8331, %v8220, %v8392
        %v8394 = vsel %vm8333, %v8224, %v8393
        %v8395 = vsel %vm8335, %v8228, %v8394
        %v8396 = vsel %vm8337, %v8232, %v8395
        %v8397 = vsel %vm8339, %v8236, %v8396
        %v8398 = vsel %vm8341, %v8240, %v8397
        %v8399 = vsel %vm8329, %v8248, %v8244
        %v8400 = vsel %vm8329, %v8256, %v8252
        %v8401 = vsel %vm8331, %v8260, %v8400
        %v8402 = vsel %vm8333, %v8264, %v8401
        %v8403 = vsel %vm8335, %v8268, %v8402
        %v8404 = vsel %vm8337, %v8272, %v8403
        %v8405 = vsel %vm8339, %v8276, %v8404
        %v8406 = vsel %vm8341, %v8280, %v8405
        %v8407 = vsel %vm8329, %v8288, %v8284
        %v8408 = vsel %vm8329, %v8296, %v8292
        %v8409 = vsel %vm8331, %v8300, %v8408
        %v8410 = vsel %vm8333, %v8304, %v8409
        %v8411 = vsel %vm8335, %v8308, %v8410
        %v8412 = vsel %vm8337, %v8312, %v8411
        %v8413 = vsel %vm8339, %v8316, %v8412
        %v8414 = vsel %vm8341, %v8320, %v8413
        %v8415 = vsel %vm8329, %v8328, %v8324
        %v8446 = vlaneseq
        %v8447 = vshrl.u32 %v8446, 7
        %v8448 = vsub.s32 0, %v8447
        %v8449 = vrot.slane %v7643, %v8448
        %v8450 = vlaneseq
        %v8451 = vshrl.u32 %v8450, 7
        %v8452 = vsub.s32 0, %v8451
        %v8453 = vrot.slane %v7657, %v8452
        %v8454 = vlaneseq
        %v8455 = vshrl.u32 %v8454, 7
        %v8456 = vsub.s32 0, %v8455
        %v8457 = vrot.slane %v7671, %v8456
        %v8458 = vlaneseq
        %v8459 = vshrl.u32 %v8458, 7
        %v8460 = vsub.s32 0, %v8459
        %v8461 = vrot.slane %v7685, %v8460
        %v8462 = vlaneseq
        %v8463 = vshrl.u32 %v8462, 7
        %v8464 = vsub.s32 0, %v8463
        %v8465 = vrot.slane %v7699, %v8464
        %v8466 = vlaneseq
        %v8467 = vshrl.u32 %v8466, 7
        %v8468 = vsub.s32 0, %v8467
        %v8469 = vrot.slane %v7713, %v8468
        %v8470 = vlaneseq
        %v8471 = vshrl.u32 %v8470, 7
        %v8472 = vsub.s32 0, %v8471
        %v8473 = vrot.slane %v7727, %v8472
        %v8474 = vlaneseq
        %v8475 = vshrl.u32 %v8474, 7
        %v8476 = vsub.s32 0, %v8475
        %v8477 = vrot.slane %v7741, %v8476
        %v8478 = vlaneseq
        %v8479 = vshrl.u32 %v8478, 7
        %v8480 = vsub.s32 0, %v8479
        %v8481 = vrot.slane %v7755, %v8480
        %v8482 = vlaneseq
        %v8483 = vshrl.u32 %v8482, 7
        %v8484 = vsub.s32 0, %v8483
        %v8485 = vrot.slane %v7769, %v8484
        %v8486 = vsel %vm8329, %v7940, %v7936
        %v8487 = vsel %vm8331, %v7944, %v8486
        %v8488 = vsel %vm8333, %v7948, %v8487
        %v8489 = vsel %vm8335, %v7952, %v8488
        %v8490 = vsel %vm8337, %v7956, %v8489
        %v8491 = vsel %vm8339, %v7960, %v8490
        %v8492 = vsel %vm8341, %v7964, %v8491
        %v8493 = vsel %vm8329, %v8449, %v7968
        %v8494 = vsel %vm8329, %v7980, %v7976
        %v8495 = vsel %vm8331, %v7984, %v8494
        %v8496 = vsel %vm8333, %v7988, %v8495
        %v8497 = vsel %vm8335, %v7992, %v8496
        %v8498 = vsel %vm8337, %v7996, %v8497
        %v8499 = vsel %vm8339, %v8000, %v8498
        %v8500 = vsel %vm8341, %v8004, %v8499
        %v8501 = vsel %vm8329, %v8453, %v8008
        %v8502 = vsel %vm8329, %v8020, %v8016
        %v8503 = vsel %vm8331, %v8024, %v8502
        %v8504 = vsel %vm8333, %v8028, %v8503
        %v8505 = vsel %vm8335, %v8032, %v8504
        %v8506 = vsel %vm8337, %v8036, %v8505
        %v8507 = vsel %vm8339, %v8040, %v8506
        %v8508 = vsel %vm8341, %v8044, %v8507
        %v8509 = vsel %vm8329, %v8457, %v8048
        %v8510 = vsel %vm8329, %v8060, %v8056
        %v8511 = vsel %vm8331, %v8064, %v8510
        %v8512 = vsel %vm8333, %v8068, %v8511
        %v8513 = vsel %vm8335, %v8072, %v8512
        %v8514 = vsel %vm8337, %v8076, %v8513
        %v8515 = vsel %vm8339, %v8080, %v8514
        %v8516 = vsel %vm8341, %v8084, %v8515
        %v8517 = vsel %vm8329, %v8461, %v8088
        %v8518 = vsel %vm8329, %v8100, %v8096
        %v8519 = vsel %vm8331, %v8104, %v8518
        %v8520 = vsel %vm8333, %v8108, %v8519
        %v8521 = vsel %vm8335, %v8112, %v8520
        %v8522 = vsel %vm8337, %v8116, %v8521
        %v8523 = vsel %vm8339, %v8120, %v8522
        %v8524 = vsel %vm8341, %v8124, %v8523
        %v8525 = vsel %vm8329, %v8465, %v8128
        %v8526 = vsel %vm8329, %v8140, %v8136
        %v8527 = vsel %vm8331, %v8144, %v8526
        %v8528 = vsel %vm8333, %v8148, %v8527
        %v8529 = vsel %vm8335, %v8152, %v8528
        %v8530 = vsel %vm8337, %v8156, %v8529
        %v8531 = vsel %vm8339, %v8160, %v8530
        %v8532 = vsel %vm8341, %v8164, %v8531
        %v8533 = vsel %vm8329, %v8469, %v8168
        %v8534 = vsel %vm8329, %v8180, %v8176
        %v8535 = vsel %vm8331, %v8184, %v8534
        %v8536 = vsel %vm8333, %v8188, %v8535
        %v8537 = vsel %vm8335, %v8192, %v8536
        %v8538 = vsel %vm8337, %v8196, %v8537
        %v8539 = vsel %vm8339, %v8200, %v8538
        %v8540 = vsel %vm8341, %v8204, %v8539
        %v8541 = vsel %vm8329, %v8473, %v8208
        %v8542 = vsel %vm8329, %v8220, %v8216
        %v8543 = vsel %vm8331, %v8224, %v8542
        %v8544 = vsel %vm8333, %v8228, %v8543
        %v8545 = vsel %vm8335, %v8232, %v8544
        %v8546 = vsel %vm8337, %v8236, %v8545
        %v8547 = vsel %vm8339, %v8240, %v8546
        %v8548 = vsel %vm8341, %v8244, %v8547
        %v8549 = vsel %vm8329, %v8477, %v8248
        %v8550 = vsel %vm8329, %v8260, %v8256
        %v8551 = vsel %vm8331, %v8264, %v8550
        %v8552 = vsel %vm8333, %v8268, %v8551
        %v8553 = vsel %vm8335, %v8272, %v8552
        %v8554 = vsel %vm8337, %v8276, %v8553
        %v8555 = vsel %vm8339, %v8280, %v8554
        %v8556 = vsel %vm8341, %v8284, %v8555
        %v8557 = vsel %vm8329, %v8481, %v8288
        %v8558 = vsel %vm8329, %v8300, %v8296
        %v8559 = vsel %vm8331, %v8304, %v8558
        %v8560 = vsel %vm8333, %v8308, %v8559
        %v8561 = vsel %vm8335, %v8312, %v8560
        %v8562 = vsel %vm8337, %v8316, %v8561
        %v8563 = vsel %vm8339, %v8320, %v8562
        %v8564 = vsel %vm8341, %v8324, %v8563
        %v8565 = vsel %vm8329, %v8485, %v8328
        %8566 = vrot.lane.b32.xlu0 %v8492, 6
        %v8567 = vpop.permute.xlu0 %8566
        %8568 = vrot.lane.b32.xlu0 %v8493, 6
        %v8569 = vpop.permute.xlu0 %8568
        %8570 = vrot.lane.b32.xlu0 %v8500, 6
        %v8571 = vpop.permute.xlu0 %8570
        %8572 = vrot.lane.b32.xlu0 %v8501, 6
        %v8573 = vpop.permute.xlu0 %8572
        %8574 = vrot.lane.b32.xlu0 %v8508, 6
        %v8575 = vpop.permute.xlu0 %8574
        %8576 = vrot.lane.b32.xlu0 %v8509, 6
        %v8577 = vpop.permute.xlu0 %8576
        %8578 = vrot.lane.b32.xlu0 %v8516, 6
        %v8579 = vpop.permute.xlu0 %8578
        %8580 = vrot.lane.b32.xlu0 %v8517, 6
        %v8581 = vpop.permute.xlu0 %8580
        %8582 = vrot.lane.b32.xlu0 %v8524, 6
        %v8583 = vpop.permute.xlu0 %8582
        %8584 = vrot.lane.b32.xlu0 %v8525, 6
        %v8585 = vpop.permute.xlu0 %8584
        %8586 = vrot.lane.b32.xlu0 %v8532, 6
        %v8587 = vpop.permute.xlu0 %8586
        %8588 = vrot.lane.b32.xlu0 %v8533, 6
        %v8589 = vpop.permute.xlu0 %8588
        %8590 = vrot.lane.b32.xlu0 %v8540, 6
        %v8591 = vpop.permute.xlu0 %8590
        %8592 = vrot.lane.b32.xlu0 %v8541, 6
        %v8593 = vpop.permute.xlu0 %8592
        %8594 = vrot.lane.b32.xlu0 %v8548, 6
        %v8595 = vpop.permute.xlu0 %8594
        %8596 = vrot.lane.b32.xlu0 %v8549, 6
        %v8597 = vpop.permute.xlu0 %8596
        %8598 = vrot.lane.b32.xlu0 %v8556, 6
        %v8599 = vpop.permute.xlu0 %8598
        %8600 = vrot.lane.b32.xlu0 %v8557, 6
        %v8601 = vpop.permute.xlu0 %8600
        %8602 = vrot.lane.b32.xlu0 %v8564, 6
        %v8603 = vpop.permute.xlu0 %8602
        %8604 = vrot.lane.b32.xlu0 %v8565, 6
        %v8605 = vpop.permute.xlu0 %8604
        %v8636 = vlaneseq
        %v8637 = vshrl.u32 %v8636, 7
        %v8638 = vsub.s32 0, %v8637
        %v8639 = vrot.slane %v7644, %v8638
        %v8640 = vlaneseq
        %v8641 = vshrl.u32 %v8640, 7
        %v8642 = vsub.s32 0, %v8641
        %v8643 = vrot.slane %v7658, %v8642
        %v8644 = vlaneseq
        %v8645 = vshrl.u32 %v8644, 7
        %v8646 = vsub.s32 0, %v8645
        %v8647 = vrot.slane %v7672, %v8646
        %v8648 = vlaneseq
        %v8649 = vshrl.u32 %v8648, 7
        %v8650 = vsub.s32 0, %v8649
        %v8651 = vrot.slane %v7686, %v8650
        %v8652 = vlaneseq
        %v8653 = vshrl.u32 %v8652, 7
        %v8654 = vsub.s32 0, %v8653
        %v8655 = vrot.slane %v7700, %v8654
        %v8656 = vlaneseq
        %v8657 = vshrl.u32 %v8656, 7
        %v8658 = vsub.s32 0, %v8657
        %v8659 = vrot.slane %v7714, %v8658
        %v8660 = vlaneseq
        %v8661 = vshrl.u32 %v8660, 7
        %v8662 = vsub.s32 0, %v8661
        %v8663 = vrot.slane %v7728, %v8662
        %v8664 = vlaneseq
        %v8665 = vshrl.u32 %v8664, 7
        %v8666 = vsub.s32 0, %v8665
        %v8667 = vrot.slane %v7742, %v8666
        %v8668 = vlaneseq
        %v8669 = vshrl.u32 %v8668, 7
        %v8670 = vsub.s32 0, %v8669
        %v8671 = vrot.slane %v7756, %v8670
        %v8672 = vlaneseq
        %v8673 = vshrl.u32 %v8672, 7
        %v8674 = vsub.s32 0, %v8673
        %v8675 = vrot.slane %v7770, %v8674
        %v8676 = vsel %vm8329, %v7944, %v7940
        %v8677 = vsel %vm8331, %v7948, %v8676
        %v8678 = vsel %vm8333, %v7952, %v8677
        %v8679 = vsel %vm8335, %v7956, %v8678
        %v8680 = vsel %vm8337, %v7960, %v8679
        %v8681 = vsel %vm8339, %v7964, %v8680
        %v8682 = vsel %vm8341, %v7968, %v8681
        %v8683 = vsel %vm8329, %v8639, %v8449
        %v8684 = vsel %vm8329, %v7984, %v7980
        %v8685 = vsel %vm8331, %v7988, %v8684
        %v8686 = vsel %vm8333, %v7992, %v8685
        %v8687 = vsel %vm8335, %v7996, %v8686
        %v8688 = vsel %vm8337, %v8000, %v8687
        %v8689 = vsel %vm8339, %v8004, %v8688
        %v8690 = vsel %vm8341, %v8008, %v8689
        %v8691 = vsel %vm8329, %v8643, %v8453
        %v8692 = vsel %vm8329, %v8024, %v8020
        %v8693 = vsel %vm8331, %v8028, %v8692
        %v8694 = vsel %vm8333, %v8032, %v8693
        %v8695 = vsel %vm8335, %v8036, %v8694
        %v8696 = vsel %vm8337, %v8040, %v8695
        %v8697 = vsel %vm8339, %v8044, %v8696
        %v8698 = vsel %vm8341, %v8048, %v8697
        %v8699 = vsel %vm8329, %v8647, %v8457
        %v8700 = vsel %vm8329, %v8064, %v8060
        %v8701 = vsel %vm8331, %v8068, %v8700
        %v8702 = vsel %vm8333, %v8072, %v8701
        %v8703 = vsel %vm8335, %v8076, %v8702
        %v8704 = vsel %vm8337, %v8080, %v8703
        %v8705 = vsel %vm8339, %v8084, %v8704
        %v8706 = vsel %vm8341, %v8088, %v8705
        %v8707 = vsel %vm8329, %v8651, %v8461
        %v8708 = vsel %vm8329, %v8104, %v8100
        %v8709 = vsel %vm8331, %v8108, %v8708
        %v8710 = vsel %vm8333, %v8112, %v8709
        %v8711 = vsel %vm8335, %v8116, %v8710
        %v8712 = vsel %vm8337, %v8120, %v8711
        %v8713 = vsel %vm8339, %v8124, %v8712
        %v8714 = vsel %vm8341, %v8128, %v8713
        %v8715 = vsel %vm8329, %v8655, %v8465
        %v8716 = vsel %vm8329, %v8144, %v8140
        %v8717 = vsel %vm8331, %v8148, %v8716
        %v8718 = vsel %vm8333, %v8152, %v8717
        %v8719 = vsel %vm8335, %v8156, %v8718
        %v8720 = vsel %vm8337, %v8160, %v8719
        %v8721 = vsel %vm8339, %v8164, %v8720
        %v8722 = vsel %vm8341, %v8168, %v8721
        %v8723 = vsel %vm8329, %v8659, %v8469
        %v8724 = vsel %vm8329, %v8184, %v8180
        %v8725 = vsel %vm8331, %v8188, %v8724
        %v8726 = vsel %vm8333, %v8192, %v8725
        %v8727 = vsel %vm8335, %v8196, %v8726
        %v8728 = vsel %vm8337, %v8200, %v8727
        %v8729 = vsel %vm8339, %v8204, %v8728
        %v8730 = vsel %vm8341, %v8208, %v8729
        %v8731 = vsel %vm8329, %v8663, %v8473
        %v8732 = vsel %vm8329, %v8224, %v8220
        %v8733 = vsel %vm8331, %v8228, %v8732
        %v8734 = vsel %vm8333, %v8232, %v8733
        %v8735 = vsel %vm8335, %v8236, %v8734
        %v8736 = vsel %vm8337, %v8240, %v8735
        %v8737 = vsel %vm8339, %v8244, %v8736
        %v8738 = vsel %vm8341, %v8248, %v8737
        %v8739 = vsel %vm8329, %v8667, %v8477
        %v8740 = vsel %vm8329, %v8264, %v8260
        %v8741 = vsel %vm8331, %v8268, %v8740
        %v8742 = vsel %vm8333, %v8272, %v8741
        %v8743 = vsel %vm8335, %v8276, %v8742
        %v8744 = vsel %vm8337, %v8280, %v8743
        %v8745 = vsel %vm8339, %v8284, %v8744
        %v8746 = vsel %vm8341, %v8288, %v8745
        %v8747 = vsel %vm8329, %v8671, %v8481
        %v8748 = vsel %vm8329, %v8304, %v8300
        %v8749 = vsel %vm8331, %v8308, %v8748
        %v8750 = vsel %vm8333, %v8312, %v8749
        %v8751 = vsel %vm8335, %v8316, %v8750
        %v8752 = vsel %vm8337, %v8320, %v8751
        %v8753 = vsel %vm8339, %v8324, %v8752
        %v8754 = vsel %vm8341, %v8328, %v8753
        %v8755 = vsel %vm8329, %v8675, %v8485
        %8756 = vrot.lane.b32.xlu0 %v8682, 12
        %v8757 = vpop.permute.xlu0 %8756
        %8758 = vrot.lane.b32.xlu0 %v8683, 12
        %v8759 = vpop.permute.xlu0 %8758
        %8760 = vrot.lane.b32.xlu0 %v8690, 12
        %v8761 = vpop.permute.xlu0 %8760
        %8762 = vrot.lane.b32.xlu0 %v8691, 12
        %v8763 = vpop.permute.xlu0 %8762
        %8764 = vrot.lane.b32.xlu0 %v8698, 12
        %v8765 = vpop.permute.xlu0 %8764
        %8766 = vrot.lane.b32.xlu0 %v8699, 12
        %v8767 = vpop.permute.xlu0 %8766
        %8768 = vrot.lane.b32.xlu0 %v8706, 12
        %v8769 = vpop.permute.xlu0 %8768
        %8770 = vrot.lane.b32.xlu0 %v8707, 12
        %v8771 = vpop.permute.xlu0 %8770
        %8772 = vrot.lane.b32.xlu0 %v8714, 12
        %v8773 = vpop.permute.xlu0 %8772
        %8774 = vrot.lane.b32.xlu0 %v8715, 12
        %v8775 = vpop.permute.xlu0 %8774
        %8776 = vrot.lane.b32.xlu0 %v8722, 12
        %v8777 = vpop.permute.xlu0 %8776
        %8778 = vrot.lane.b32.xlu0 %v8723, 12
        %v8779 = vpop.permute.xlu0 %8778
        %8780 = vrot.lane.b32.xlu0 %v8730, 12
        %v8781 = vpop.permute.xlu0 %8780
        %8782 = vrot.lane.b32.xlu0 %v8731, 12
        %v8783 = vpop.permute.xlu0 %8782
        %8784 = vrot.lane.b32.xlu0 %v8738, 12
        %v8785 = vpop.permute.xlu0 %8784
        %8786 = vrot.lane.b32.xlu0 %v8739, 12
        %v8787 = vpop.permute.xlu0 %8786
        %8788 = vrot.lane.b32.xlu0 %v8746, 12
        %v8789 = vpop.permute.xlu0 %8788
        %8790 = vrot.lane.b32.xlu0 %v8747, 12
        %v8791 = vpop.permute.xlu0 %8790
        %8792 = vrot.lane.b32.xlu0 %v8754, 12
        %v8793 = vpop.permute.xlu0 %8792
        %8794 = vrot.lane.b32.xlu0 %v8755, 12
        %v8795 = vpop.permute.xlu0 %8794
        %v8826 = vlaneseq
        %v8827 = vshrl.u32 %v8826, 7
        %v8828 = vsub.s32 0, %v8827
        %v8829 = vrot.slane %v7645, %v8828
        %v8830 = vlaneseq
        %v8831 = vshrl.u32 %v8830, 7
        %v8832 = vsub.s32 0, %v8831
        %v8833 = vrot.slane %v7659, %v8832
        %v8834 = vlaneseq
        %v8835 = vshrl.u32 %v8834, 7
        %v8836 = vsub.s32 0, %v8835
        %v8837 = vrot.slane %v7673, %v8836
        %v8838 = vlaneseq
        %v8839 = vshrl.u32 %v8838, 7
        %v8840 = vsub.s32 0, %v8839
        %v8841 = vrot.slane %v7687, %v8840
        %v8842 = vlaneseq
        %v8843 = vshrl.u32 %v8842, 7
        %v8844 = vsub.s32 0, %v8843
        %v8845 = vrot.slane %v7701, %v8844
        %v8846 = vlaneseq
        %v8847 = vshrl.u32 %v8846, 7
        %v8848 = vsub.s32 0, %v8847
        %v8849 = vrot.slane %v7715, %v8848
        %v8850 = vlaneseq
        %v8851 = vshrl.u32 %v8850, 7
        %v8852 = vsub.s32 0, %v8851
        %v8853 = vrot.slane %v7729, %v8852
        %v8854 = vlaneseq
        %v8855 = vshrl.u32 %v8854, 7
        %v8856 = vsub.s32 0, %v8855
        %v8857 = vrot.slane %v7743, %v8856
        %v8858 = vlaneseq
        %v8859 = vshrl.u32 %v8858, 7
        %v8860 = vsub.s32 0, %v8859
        %v8861 = vrot.slane %v7757, %v8860
        %v8862 = vlaneseq
        %v8863 = vshrl.u32 %v8862, 7
        %v8864 = vsub.s32 0, %v8863
        %v8865 = vrot.slane %v7771, %v8864
        %v8866 = vsel %vm8329, %v7948, %v7944
        %v8867 = vsel %vm8331, %v7952, %v8866
        %v8868 = vsel %vm8333, %v7956, %v8867
        %v8869 = vsel %vm8335, %v7960, %v8868
        %v8870 = vsel %vm8337, %v7964, %v8869
        %v8871 = vsel %vm8339, %v7968, %v8870
        %v8872 = vsel %vm8341, %v8449, %v8871
        %v8873 = vsel %vm8329, %v8829, %v8639
        %v8874 = vsel %vm8329, %v7988, %v7984
        %v8875 = vsel %vm8331, %v7992, %v8874
        %v8876 = vsel %vm8333, %v7996, %v8875
        %v8877 = vsel %vm8335, %v8000, %v8876
        %v8878 = vsel %vm8337, %v8004, %v8877
        %v8879 = vsel %vm8339, %v8008, %v8878
        %v8880 = vsel %vm8341, %v8453, %v8879
        %v8881 = vsel %vm8329, %v8833, %v8643
        %v8882 = vsel %vm8329, %v8028, %v8024
        %v8883 = vsel %vm8331, %v8032, %v8882
        %v8884 = vsel %vm8333, %v8036, %v8883
        %v8885 = vsel %vm8335, %v8040, %v8884
        %v8886 = vsel %vm8337, %v8044, %v8885
        %v8887 = vsel %vm8339, %v8048, %v8886
        %v8888 = vsel %vm8341, %v8457, %v8887
        %v8889 = vsel %vm8329, %v8837, %v8647
        %v8890 = vsel %vm8329, %v8068, %v8064
        %v8891 = vsel %vm8331, %v8072, %v8890
        %v8892 = vsel %vm8333, %v8076, %v8891
        %v8893 = vsel %vm8335, %v8080, %v8892
        %v8894 = vsel %vm8337, %v8084, %v8893
        %v8895 = vsel %vm8339, %v8088, %v8894
        %v8896 = vsel %vm8341, %v8461, %v8895
        %v8897 = vsel %vm8329, %v8841, %v8651
        %v8898 = vsel %vm8329, %v8108, %v8104
        %v8899 = vsel %vm8331, %v8112, %v8898
        %v8900 = vsel %vm8333, %v8116, %v8899
        %v8901 = vsel %vm8335, %v8120, %v8900
        %v8902 = vsel %vm8337, %v8124, %v8901
        %v8903 = vsel %vm8339, %v8128, %v8902
        %v8904 = vsel %vm8341, %v8465, %v8903
        %v8905 = vsel %vm8329, %v8845, %v8655
        %v8906 = vsel %vm8329, %v8148, %v8144
        %v8907 = vsel %vm8331, %v8152, %v8906
        %v8908 = vsel %vm8333, %v8156, %v8907
        %v8909 = vsel %vm8335, %v8160, %v8908
        %v8910 = vsel %vm8337, %v8164, %v8909
        %v8911 = vsel %vm8339, %v8168, %v8910
        %v8912 = vsel %vm8341, %v8469, %v8911
        %v8913 = vsel %vm8329, %v8849, %v8659
        %v8914 = vsel %vm8329, %v8188, %v8184
        %v8915 = vsel %vm8331, %v8192, %v8914
        %v8916 = vsel %vm8333, %v8196, %v8915
        %v8917 = vsel %vm8335, %v8200, %v8916
        %v8918 = vsel %vm8337, %v8204, %v8917
        %v8919 = vsel %vm8339, %v8208, %v8918
        %v8920 = vsel %vm8341, %v8473, %v8919
        %v8921 = vsel %vm8329, %v8853, %v8663
        %v8922 = vsel %vm8329, %v8228, %v8224
        %v8923 = vsel %vm8331, %v8232, %v8922
        %v8924 = vsel %vm8333, %v8236, %v8923
        %v8925 = vsel %vm8335, %v8240, %v8924
        %v8926 = vsel %vm8337, %v8244, %v8925
        %v8927 = vsel %vm8339, %v8248, %v8926
        %v8928 = vsel %vm8341, %v8477, %v8927
        %v8929 = vsel %vm8329, %v8857, %v8667
        %v8930 = vsel %vm8329, %v8268, %v8264
        %v8931 = vsel %vm8331, %v8272, %v8930
        %v8932 = vsel %vm8333, %v8276, %v8931
        %v8933 = vsel %vm8335, %v8280, %v8932
        %v8934 = vsel %vm8337, %v8284, %v8933
        %v8935 = vsel %vm8339, %v8288, %v8934
        %v8936 = vsel %vm8341, %v8481, %v8935
        %v8937 = vsel %vm8329, %v8861, %v8671
        %v8938 = vsel %vm8329, %v8308, %v8304
        %v8939 = vsel %vm8331, %v8312, %v8938
        %v8940 = vsel %vm8333, %v8316, %v8939
        %v8941 = vsel %vm8335, %v8320, %v8940
        %v8942 = vsel %vm8337, %v8324, %v8941
        %v8943 = vsel %vm8339, %v8328, %v8942
        %v8944 = vsel %vm8341, %v8485, %v8943
        %v8945 = vsel %vm8329, %v8865, %v8675
        %8946 = vrot.lane.b32.xlu0 %v8872, 18
        %v8947 = vpop.permute.xlu0 %8946
        %8948 = vrot.lane.b32.xlu0 %v8873, 18
        %v8949 = vpop.permute.xlu0 %8948
        %8950 = vrot.lane.b32.xlu0 %v8880, 18
        %v8951 = vpop.permute.xlu0 %8950
        %8952 = vrot.lane.b32.xlu0 %v8881, 18
        %v8953 = vpop.permute.xlu0 %8952
        %8954 = vrot.lane.b32.xlu0 %v8888, 18
        %v8955 = vpop.permute.xlu0 %8954
        %8956 = vrot.lane.b32.xlu0 %v8889, 18
        %v8957 = vpop.permute.xlu0 %8956
        %8958 = vrot.lane.b32.xlu0 %v8896, 18
        %v8959 = vpop.permute.xlu0 %8958
        %8960 = vrot.lane.b32.xlu0 %v8897, 18
        %v8961 = vpop.permute.xlu0 %8960
        %8962 = vrot.lane.b32.xlu0 %v8904, 18
        %v8963 = vpop.permute.xlu0 %8962
        %8964 = vrot.lane.b32.xlu0 %v8905, 18
        %v8965 = vpop.permute.xlu0 %8964
        %8966 = vrot.lane.b32.xlu0 %v8912, 18
        %v8967 = vpop.permute.xlu0 %8966
        %8968 = vrot.lane.b32.xlu0 %v8913, 18
        %v8969 = vpop.permute.xlu0 %8968
        %8970 = vrot.lane.b32.xlu0 %v8920, 18
        %v8971 = vpop.permute.xlu0 %8970
        %8972 = vrot.lane.b32.xlu0 %v8921, 18
        %v8973 = vpop.permute.xlu0 %8972
        %8974 = vrot.lane.b32.xlu0 %v8928, 18
        %v8975 = vpop.permute.xlu0 %8974
        %8976 = vrot.lane.b32.xlu0 %v8929, 18
        %v8977 = vpop.permute.xlu0 %8976
        %8978 = vrot.lane.b32.xlu0 %v8936, 18
        %v8979 = vpop.permute.xlu0 %8978
        %8980 = vrot.lane.b32.xlu0 %v8937, 18
        %v8981 = vpop.permute.xlu0 %8980
        %8982 = vrot.lane.b32.xlu0 %v8944, 18
        %v8983 = vpop.permute.xlu0 %8982
        %8984 = vrot.lane.b32.xlu0 %v8945, 18
        %v8985 = vpop.permute.xlu0 %8984
        %v9016 = vlaneseq
        %v9017 = vshrl.u32 %v9016, 7
        %v9018 = vsub.s32 0, %v9017
        %v9019 = vrot.slane %v7646, %v9018
        %v9020 = vlaneseq
        %v9021 = vshrl.u32 %v9020, 7
        %v9022 = vsub.s32 0, %v9021
        %v9023 = vrot.slane %v7660, %v9022
        %v9024 = vlaneseq
        %v9025 = vshrl.u32 %v9024, 7
        %v9026 = vsub.s32 0, %v9025
        %v9027 = vrot.slane %v7674, %v9026
        %v9028 = vlaneseq
        %v9029 = vshrl.u32 %v9028, 7
        %v9030 = vsub.s32 0, %v9029
        %v9031 = vrot.slane %v7688, %v9030
        %v9032 = vlaneseq
        %v9033 = vshrl.u32 %v9032, 7
        %v9034 = vsub.s32 0, %v9033
        %v9035 = vrot.slane %v7702, %v9034
        %v9036 = vlaneseq
        %v9037 = vshrl.u32 %v9036, 7
        %v9038 = vsub.s32 0, %v9037
        %v9039 = vrot.slane %v7716, %v9038
        %v9040 = vlaneseq
        %v9041 = vshrl.u32 %v9040, 7
        %v9042 = vsub.s32 0, %v9041
        %v9043 = vrot.slane %v7730, %v9042
        %v9044 = vlaneseq
        %v9045 = vshrl.u32 %v9044, 7
        %v9046 = vsub.s32 0, %v9045
        %v9047 = vrot.slane %v7744, %v9046
        %v9048 = vlaneseq
        %v9049 = vshrl.u32 %v9048, 7
        %v9050 = vsub.s32 0, %v9049
        %v9051 = vrot.slane %v7758, %v9050
        %v9052 = vlaneseq
        %v9053 = vshrl.u32 %v9052, 7
        %v9054 = vsub.s32 0, %v9053
        %v9055 = vrot.slane %v7772, %v9054
        %v9056 = vsel %vm8329, %v7952, %v7948
        %v9057 = vsel %vm8331, %v7956, %v9056
        %v9058 = vsel %vm8333, %v7960, %v9057
        %v9059 = vsel %vm8335, %v7964, %v9058
        %v9060 = vsel %vm8337, %v7968, %v9059
        %v9061 = vsel %vm8339, %v8449, %v9060
        %v9062 = vsel %vm8341, %v8639, %v9061
        %v9063 = vsel %vm8329, %v9019, %v8829
        %v9064 = vsel %vm8329, %v7992, %v7988
        %v9065 = vsel %vm8331, %v7996, %v9064
        %v9066 = vsel %vm8333, %v8000, %v9065
        %v9067 = vsel %vm8335, %v8004, %v9066
        %v9068 = vsel %vm8337, %v8008, %v9067
        %v9069 = vsel %vm8339, %v8453, %v9068
        %v9070 = vsel %vm8341, %v8643, %v9069
        %v9071 = vsel %vm8329, %v9023, %v8833
        %v9072 = vsel %vm8329, %v8032, %v8028
        %v9073 = vsel %vm8331, %v8036, %v9072
        %v9074 = vsel %vm8333, %v8040, %v9073
        %v9075 = vsel %vm8335, %v8044, %v9074
        %v9076 = vsel %vm8337, %v8048, %v9075
        %v9077 = vsel %vm8339, %v8457, %v9076
        %v9078 = vsel %vm8341, %v8647, %v9077
        %v9079 = vsel %vm8329, %v9027, %v8837
        %v9080 = vsel %vm8329, %v8072, %v8068
        %v9081 = vsel %vm8331, %v8076, %v9080
        %v9082 = vsel %vm8333, %v8080, %v9081
        %v9083 = vsel %vm8335, %v8084, %v9082
        %v9084 = vsel %vm8337, %v8088, %v9083
        %v9085 = vsel %vm8339, %v8461, %v9084
        %v9086 = vsel %vm8341, %v8651, %v9085
        %v9087 = vsel %vm8329, %v9031, %v8841
        %v9088 = vsel %vm8329, %v8112, %v8108
        %v9089 = vsel %vm8331, %v8116, %v9088
        %v9090 = vsel %vm8333, %v8120, %v9089
        %v9091 = vsel %vm8335, %v8124, %v9090
        %v9092 = vsel %vm8337, %v8128, %v9091
        %v9093 = vsel %vm8339, %v8465, %v9092
        %v9094 = vsel %vm8341, %v8655, %v9093
        %v9095 = vsel %vm8329, %v9035, %v8845
        %v9096 = vsel %vm8329, %v8152, %v8148
        %v9097 = vsel %vm8331, %v8156, %v9096
        %v9098 = vsel %vm8333, %v8160, %v9097
        %v9099 = vsel %vm8335, %v8164, %v9098
        %v9100 = vsel %vm8337, %v8168, %v9099
        %v9101 = vsel %vm8339, %v8469, %v9100
        %v9102 = vsel %vm8341, %v8659, %v9101
        %v9103 = vsel %vm8329, %v9039, %v8849
        %v9104 = vsel %vm8329, %v8192, %v8188
        %v9105 = vsel %vm8331, %v8196, %v9104
        %v9106 = vsel %vm8333, %v8200, %v9105
        %v9107 = vsel %vm8335, %v8204, %v9106
        %v9108 = vsel %vm8337, %v8208, %v9107
        %v9109 = vsel %vm8339, %v8473, %v9108
        %v9110 = vsel %vm8341, %v8663, %v9109
        %v9111 = vsel %vm8329, %v9043, %v8853
        %v9112 = vsel %vm8329, %v8232, %v8228
        %v9113 = vsel %vm8331, %v8236, %v9112
        %v9114 = vsel %vm8333, %v8240, %v9113
        %v9115 = vsel %vm8335, %v8244, %v9114
        %v9116 = vsel %vm8337, %v8248, %v9115
        %v9117 = vsel %vm8339, %v8477, %v9116
        %v9118 = vsel %vm8341, %v8667, %v9117
        %v9119 = vsel %vm8329, %v9047, %v8857
        %v9120 = vsel %vm8329, %v8272, %v8268
        %v9121 = vsel %vm8331, %v8276, %v9120
        %v9122 = vsel %vm8333, %v8280, %v9121
        %v9123 = vsel %vm8335, %v8284, %v9122
        %v9124 = vsel %vm8337, %v8288, %v9123
        %v9125 = vsel %vm8339, %v8481, %v9124
        %v9126 = vsel %vm8341, %v8671, %v9125
        %v9127 = vsel %vm8329, %v9051, %v8861
        %v9128 = vsel %vm8329, %v8312, %v8308
        %v9129 = vsel %vm8331, %v8316, %v9128
        %v9130 = vsel %vm8333, %v8320, %v9129
        %v9131 = vsel %vm8335, %v8324, %v9130
        %v9132 = vsel %vm8337, %v8328, %v9131
        %v9133 = vsel %vm8339, %v8485, %v9132
        %v9134 = vsel %vm8341, %v8675, %v9133
        %v9135 = vsel %vm8329, %v9055, %v8865
        %9136 = vrot.lane.b32.xlu0 %v9062, 24
        %v9137 = vpop.permute.xlu0 %9136
        %9138 = vrot.lane.b32.xlu0 %v9063, 24
        %v9139 = vpop.permute.xlu0 %9138
        %9140 = vrot.lane.b32.xlu0 %v9070, 24
        %v9141 = vpop.permute.xlu0 %9140
        %9142 = vrot.lane.b32.xlu0 %v9071, 24
        %v9143 = vpop.permute.xlu0 %9142
        %9144 = vrot.lane.b32.xlu0 %v9078, 24
        %v9145 = vpop.permute.xlu0 %9144
        %9146 = vrot.lane.b32.xlu0 %v9079, 24
        %v9147 = vpop.permute.xlu0 %9146
        %9148 = vrot.lane.b32.xlu0 %v9086, 24
        %v9149 = vpop.permute.xlu0 %9148
        %9150 = vrot.lane.b32.xlu0 %v9087, 24
        %v9151 = vpop.permute.xlu0 %9150
        %9152 = vrot.lane.b32.xlu0 %v9094, 24
        %v9153 = vpop.permute.xlu0 %9152
        %9154 = vrot.lane.b32.xlu0 %v9095, 24
        %v9155 = vpop.permute.xlu0 %9154
        %9156 = vrot.lane.b32.xlu0 %v9102, 24
        %v9157 = vpop.permute.xlu0 %9156
        %9158 = vrot.lane.b32.xlu0 %v9103, 24
        %v9159 = vpop.permute.xlu0 %9158
        %9160 = vrot.lane.b32.xlu0 %v9110, 24
        %v9161 = vpop.permute.xlu0 %9160
        %9162 = vrot.lane.b32.xlu0 %v9111, 24
        %v9163 = vpop.permute.xlu0 %9162
        %9164 = vrot.lane.b32.xlu0 %v9118, 24
        %v9165 = vpop.permute.xlu0 %9164
        %9166 = vrot.lane.b32.xlu0 %v9119, 24
        %v9167 = vpop.permute.xlu0 %9166
        %9168 = vrot.lane.b32.xlu0 %v9126, 24
        %v9169 = vpop.permute.xlu0 %9168
        %9170 = vrot.lane.b32.xlu0 %v9127, 24
        %v9171 = vpop.permute.xlu0 %9170
        %9172 = vrot.lane.b32.xlu0 %v9134, 24
        %v9173 = vpop.permute.xlu0 %9172
        %9174 = vrot.lane.b32.xlu0 %v9135, 24
        %v9175 = vpop.permute.xlu0 %9174
        %v9206 = vlaneseq
        %v9207 = vshrl.u32 %v9206, 7
        %v9208 = vsub.s32 0, %v9207
        %v9209 = vrot.slane %v7773, %v9208
        %v9210 = vlaneseq
        %v9211 = vshrl.u32 %v9210, 7
        %v9212 = vsub.s32 0, %v9211
        %v9213 = vrot.slane %v7774, %v9212
        %v9214 = vlaneseq
        %v9215 = vshrl.u32 %v9214, 7
        %v9216 = vsub.s32 0, %v9215
        %v9217 = vrot.slane %v7775, %v9216
        %v9218 = vlaneseq
        %v9219 = vshrl.u32 %v9218, 7
        %v9220 = vsub.s32 0, %v9219
        %v9221 = vrot.slane %v7776, %v9220
        %v9222 = vlaneseq
        %v9223 = vshrl.u32 %v9222, 7
        %v9224 = vsub.s32 0, %v9223
        %v9225 = vrot.slane %v7777, %v9224
        %v9226 = vlaneseq
        %v9227 = vshrl.u32 %v9226, 7
        %v9228 = vsub.s32 0, %v9227
        %v9229 = vrot.slane %v7778, %v9228
        %v9230 = vlaneseq
        %v9231 = vshrl.u32 %v9230, 7
        %v9232 = vsub.s32 0, %v9231
        %v9233 = vrot.slane %v7779, %v9232
        %v9234 = vlaneseq
        %v9235 = vshrl.u32 %v9234, 7
        %v9236 = vsub.s32 0, %v9235
        %v9237 = vrot.slane %v7780, %v9236
        %v9238 = vlaneseq
        %v9239 = vshrl.u32 %v9238, 7
        %v9240 = vsub.s32 0, %v9239
        %v9241 = vrot.slane %v7781, %v9240
        %v9242 = vlaneseq
        %v9243 = vshrl.u32 %v9242, 7
        %v9244 = vsub.s32 0, %v9243
        %v9245 = vrot.slane %v7782, %v9244
        %v9246 = vsel %vm8329, %v9213, %v9209
        %v9247 = vsel %vm8331, %v9217, %v9246
        %v9248 = vsel %vm8333, %v9221, %v9247
        %v9249 = vsel %vm8335, %v9225, %v9248
        %v9250 = vsel %vm8337, %v9229, %v9249
        %v9251 = vsel %vm8339, %v9233, %v9250
        %v9252 = vsel %vm8341, %v9237, %v9251
        %v9253 = vsel %vm8329, %v9245, %v9241
        %9254 = vrot.lane.b32.xlu0 %v8350, 30
        %v9255 = vpop.permute.xlu0 %9254
        %9256 = vrot.lane.b32.xlu0 %v8351, 30
        %v9257 = vpop.permute.xlu0 %9256
        %9258 = vrot.lane.b32.xlu0 %v8358, 30
        %v9259 = vpop.permute.xlu0 %9258
        %9260 = vrot.lane.b32.xlu0 %v8359, 30
        %v9261 = vpop.permute.xlu0 %9260
        %9262 = vrot.lane.b32.xlu0 %v8366, 30
        %v9263 = vpop.permute.xlu0 %9262
        %9264 = vrot.lane.b32.xlu0 %v8367, 30
        %v9265 = vpop.permute.xlu0 %9264
        %9266 = vrot.lane.b32.xlu0 %v8374, 30
        %v9267 = vpop.permute.xlu0 %9266
        %9268 = vrot.lane.b32.xlu0 %v8375, 30
        %v9269 = vpop.permute.xlu0 %9268
        %9270 = vrot.lane.b32.xlu0 %v8382, 30
        %v9271 = vpop.permute.xlu0 %9270
        %9272 = vrot.lane.b32.xlu0 %v8383, 30
        %v9273 = vpop.permute.xlu0 %9272
        %9274 = vrot.lane.b32.xlu0 %v8390, 30
        %v9275 = vpop.permute.xlu0 %9274
        %9276 = vrot.lane.b32.xlu0 %v8391, 30
        %v9277 = vpop.permute.xlu0 %9276
        %9278 = vrot.lane.b32.xlu0 %v8398, 30
        %v9279 = vpop.permute.xlu0 %9278
        %9280 = vrot.lane.b32.xlu0 %v8399, 30
        %v9281 = vpop.permute.xlu0 %9280
        %9282 = vrot.lane.b32.xlu0 %v8406, 30
        %v9283 = vpop.permute.xlu0 %9282
        %9284 = vrot.lane.b32.xlu0 %v8407, 30
        %v9285 = vpop.permute.xlu0 %9284
        %9286 = vrot.lane.b32.xlu0 %v8414, 30
        %v9287 = vpop.permute.xlu0 %9286
        %9288 = vrot.lane.b32.xlu0 %v8415, 30
        %v9289 = vpop.permute.xlu0 %9288
        %9290 = vrot.lane.b32.xlu0 %v9252, 30
        %v9291 = vpop.permute.xlu0 %9290
        %9292 = vrot.lane.b32.xlu0 %v9253, 30
        %v9293 = vpop.permute.xlu0 %9292
        %v9315 = vlaneseq
        %v9316 = vshrl.u32 %v9315, 7
        %v9317 = vsub.s32 0, %v9316
        %v9318 = vrot.slane %v7783, %v9317
        %v9319 = vsel %vm8329, %v9217, %v9213
        %v9320 = vsel %vm8331, %v9221, %v9319
        %v9321 = vsel %vm8333, %v9225, %v9320
        %v9322 = vsel %vm8335, %v9229, %v9321
        %v9323 = vsel %vm8337, %v9233, %v9322
        %v9324 = vsel %vm8339, %v9237, %v9323
        %v9325 = vsel %vm8341, %v9241, %v9324
        %v9326 = vsel %vm8329, %v9318, %v9245
        %9327 = vrot.lane.b32.xlu0 %v8500, 36
        %v9328 = vpop.permute.xlu0 %9327
        %9329 = vrot.lane.b32.xlu0 %v8501, 36
        %v9330 = vpop.permute.xlu0 %9329
        %9331 = vrot.lane.b32.xlu0 %v8508, 36
        %v9332 = vpop.permute.xlu0 %9331
        %9333 = vrot.lane.b32.xlu0 %v8509, 36
        %v9334 = vpop.permute.xlu0 %9333
        %9335 = vrot.lane.b32.xlu0 %v8516, 36
        %v9336 = vpop.permute.xlu0 %9335
        %9337 = vrot.lane.b32.xlu0 %v8517, 36
        %v9338 = vpop.permute.xlu0 %9337
        %9339 = vrot.lane.b32.xlu0 %v8524, 36
        %v9340 = vpop.permute.xlu0 %9339
        %9341 = vrot.lane.b32.xlu0 %v8525, 36
        %v9342 = vpop.permute.xlu0 %9341
        %9343 = vrot.lane.b32.xlu0 %v8532, 36
        %v9344 = vpop.permute.xlu0 %9343
        %9345 = vrot.lane.b32.xlu0 %v8533, 36
        %v9346 = vpop.permute.xlu0 %9345
        %9347 = vrot.lane.b32.xlu0 %v8540, 36
        %v9348 = vpop.permute.xlu0 %9347
        %9349 = vrot.lane.b32.xlu0 %v8541, 36
        %v9350 = vpop.permute.xlu0 %9349
        %9351 = vrot.lane.b32.xlu0 %v8548, 36
        %v9352 = vpop.permute.xlu0 %9351
        %9353 = vrot.lane.b32.xlu0 %v8549, 36
        %v9354 = vpop.permute.xlu0 %9353
        %9355 = vrot.lane.b32.xlu0 %v8556, 36
        %v9356 = vpop.permute.xlu0 %9355
        %9357 = vrot.lane.b32.xlu0 %v8557, 36
        %v9358 = vpop.permute.xlu0 %9357
        %9359 = vrot.lane.b32.xlu0 %v8564, 36
        %v9360 = vpop.permute.xlu0 %9359
        %9361 = vrot.lane.b32.xlu0 %v8565, 36
        %v9362 = vpop.permute.xlu0 %9361
        %9363 = vrot.lane.b32.xlu0 %v9325, 36
        %v9364 = vpop.permute.xlu0 %9363
        %9365 = vrot.lane.b32.xlu0 %v9326, 36
        %v9366 = vpop.permute.xlu0 %9365
        %v9388 = vlaneseq
        %v9389 = vshrl.u32 %v9388, 7
        %v9390 = vsub.s32 0, %v9389
        %v9391 = vrot.slane %v7784, %v9390
        %v9392 = vsel %vm8329, %v9221, %v9217
        %v9393 = vsel %vm8331, %v9225, %v9392
        %v9394 = vsel %vm8333, %v9229, %v9393
        %v9395 = vsel %vm8335, %v9233, %v9394
        %v9396 = vsel %vm8337, %v9237, %v9395
        %v9397 = vsel %vm8339, %v9241, %v9396
        %v9398 = vsel %vm8341, %v9245, %v9397
        %v9399 = vsel %vm8329, %v9391, %v9318
        %9400 = vrot.lane.b32.xlu0 %v8690, 42
        %v9401 = vpop.permute.xlu0 %9400
        %9402 = vrot.lane.b32.xlu0 %v8691, 42
        %v9403 = vpop.permute.xlu0 %9402
        %9404 = vrot.lane.b32.xlu0 %v8698, 42
        %v9405 = vpop.permute.xlu0 %9404
        %9406 = vrot.lane.b32.xlu0 %v8699, 42
        %v9407 = vpop.permute.xlu0 %9406
        %9408 = vrot.lane.b32.xlu0 %v8706, 42
        %v9409 = vpop.permute.xlu0 %9408
        %9410 = vrot.lane.b32.xlu0 %v8707, 42
        %v9411 = vpop.permute.xlu0 %9410
        %9412 = vrot.lane.b32.xlu0 %v8714, 42
        %v9413 = vpop.permute.xlu0 %9412
        %9414 = vrot.lane.b32.xlu0 %v8715, 42
        %v9415 = vpop.permute.xlu0 %9414
        %9416 = vrot.lane.b32.xlu0 %v8722, 42
        %v9417 = vpop.permute.xlu0 %9416
        %9418 = vrot.lane.b32.xlu0 %v8723, 42
        %v9419 = vpop.permute.xlu0 %9418
        %9420 = vrot.lane.b32.xlu0 %v8730, 42
        %v9421 = vpop.permute.xlu0 %9420
        %9422 = vrot.lane.b32.xlu0 %v8731, 42
        %v9423 = vpop.permute.xlu0 %9422
        %9424 = vrot.lane.b32.xlu0 %v8738, 42
        %v9425 = vpop.permute.xlu0 %9424
        %9426 = vrot.lane.b32.xlu0 %v8739, 42
        %v9427 = vpop.permute.xlu0 %9426
        %9428 = vrot.lane.b32.xlu0 %v8746, 42
        %v9429 = vpop.permute.xlu0 %9428
        %9430 = vrot.lane.b32.xlu0 %v8747, 42
        %v9431 = vpop.permute.xlu0 %9430
        %9432 = vrot.lane.b32.xlu0 %v8754, 42
        %v9433 = vpop.permute.xlu0 %9432
        %9434 = vrot.lane.b32.xlu0 %v8755, 42
        %v9435 = vpop.permute.xlu0 %9434
        %9436 = vrot.lane.b32.xlu0 %v9398, 42
        %v9437 = vpop.permute.xlu0 %9436
        %9438 = vrot.lane.b32.xlu0 %v9399, 42
        %v9439 = vpop.permute.xlu0 %9438
        %v9461 = vlaneseq
        %v9462 = vshrl.u32 %v9461, 7
        %v9463 = vsub.s32 0, %v9462
        %v9464 = vrot.slane %v7785, %v9463
        %v9465 = vsel %vm8329, %v9225, %v9221
        %v9466 = vsel %vm8331, %v9229, %v9465
        %v9467 = vsel %vm8333, %v9233, %v9466
        %v9468 = vsel %vm8335, %v9237, %v9467
        %v9469 = vsel %vm8337, %v9241, %v9468
        %v9470 = vsel %vm8339, %v9245, %v9469
        %v9471 = vsel %vm8341, %v9318, %v9470
        %v9472 = vsel %vm8329, %v9464, %v9391
        %9473 = vrot.lane.b32.xlu0 %v8880, 48
        %v9474 = vpop.permute.xlu0 %9473
        %9475 = vrot.lane.b32.xlu0 %v8881, 48
        %v9476 = vpop.permute.xlu0 %9475
        %9477 = vrot.lane.b32.xlu0 %v8888, 48
        %v9478 = vpop.permute.xlu0 %9477
        %9479 = vrot.lane.b32.xlu0 %v8889, 48
        %v9480 = vpop.permute.xlu0 %9479
        %9481 = vrot.lane.b32.xlu0 %v8896, 48
        %v9482 = vpop.permute.xlu0 %9481
        %9483 = vrot.lane.b32.xlu0 %v8897, 48
        %v9484 = vpop.permute.xlu0 %9483
        %9485 = vrot.lane.b32.xlu0 %v8904, 48
        %v9486 = vpop.permute.xlu0 %9485
        %9487 = vrot.lane.b32.xlu0 %v8905, 48
        %v9488 = vpop.permute.xlu0 %9487
        %9489 = vrot.lane.b32.xlu0 %v8912, 48
        %v9490 = vpop.permute.xlu0 %9489
        %9491 = vrot.lane.b32.xlu0 %v8913, 48
        %v9492 = vpop.permute.xlu0 %9491
        %9493 = vrot.lane.b32.xlu0 %v8920, 48
        %v9494 = vpop.permute.xlu0 %9493
        %9495 = vrot.lane.b32.xlu0 %v8921, 48
        %v9496 = vpop.permute.xlu0 %9495
        %9497 = vrot.lane.b32.xlu0 %v8928, 48
        %v9498 = vpop.permute.xlu0 %9497
        %9499 = vrot.lane.b32.xlu0 %v8929, 48
        %v9500 = vpop.permute.xlu0 %9499
        %9501 = vrot.lane.b32.xlu0 %v8936, 48
        %v9502 = vpop.permute.xlu0 %9501
        %9503 = vrot.lane.b32.xlu0 %v8937, 48
        %v9504 = vpop.permute.xlu0 %9503
        %9505 = vrot.lane.b32.xlu0 %v8944, 48
        %v9506 = vpop.permute.xlu0 %9505
        %9507 = vrot.lane.b32.xlu0 %v8945, 48
        %v9508 = vpop.permute.xlu0 %9507
        %9509 = vrot.lane.b32.xlu0 %v9471, 48
        %v9510 = vpop.permute.xlu0 %9509
        %9511 = vrot.lane.b32.xlu0 %v9472, 48
        %v9512 = vpop.permute.xlu0 %9511
        %v9534 = vlaneseq
        %v9535 = vshrl.u32 %v9534, 7
        %v9536 = vsub.s32 0, %v9535
        %v9537 = vrot.slane %v7786, %v9536
        %v9538 = vsel %vm8329, %v9229, %v9225
        %v9539 = vsel %vm8331, %v9233, %v9538
        %v9540 = vsel %vm8333, %v9237, %v9539
        %v9541 = vsel %vm8335, %v9241, %v9540
        %v9542 = vsel %vm8337, %v9245, %v9541
        %v9543 = vsel %vm8339, %v9318, %v9542
        %v9544 = vsel %vm8341, %v9391, %v9543
        %v9545 = vsel %vm8329, %v9537, %v9464
        %9546 = vrot.lane.b32.xlu0 %v9070, 54
        %v9547 = vpop.permute.xlu0 %9546
        %9548 = vrot.lane.b32.xlu0 %v9071, 54
        %v9549 = vpop.permute.xlu0 %9548
        %9550 = vrot.lane.b32.xlu0 %v9078, 54
        %v9551 = vpop.permute.xlu0 %9550
        %9552 = vrot.lane.b32.xlu0 %v9079, 54
        %v9553 = vpop.permute.xlu0 %9552
        %9554 = vrot.lane.b32.xlu0 %v9086, 54
        %v9555 = vpop.permute.xlu0 %9554
        %9556 = vrot.lane.b32.xlu0 %v9087, 54
        %v9557 = vpop.permute.xlu0 %9556
        %9558 = vrot.lane.b32.xlu0 %v9094, 54
        %v9559 = vpop.permute.xlu0 %9558
        %9560 = vrot.lane.b32.xlu0 %v9095, 54
        %v9561 = vpop.permute.xlu0 %9560
        %9562 = vrot.lane.b32.xlu0 %v9102, 54
        %v9563 = vpop.permute.xlu0 %9562
        %9564 = vrot.lane.b32.xlu0 %v9103, 54
        %v9565 = vpop.permute.xlu0 %9564
        %9566 = vrot.lane.b32.xlu0 %v9110, 54
        %v9567 = vpop.permute.xlu0 %9566
        %9568 = vrot.lane.b32.xlu0 %v9111, 54
        %v9569 = vpop.permute.xlu0 %9568
        %9570 = vrot.lane.b32.xlu0 %v9118, 54
        %v9571 = vpop.permute.xlu0 %9570
        %9572 = vrot.lane.b32.xlu0 %v9119, 54
        %v9573 = vpop.permute.xlu0 %9572
        %9574 = vrot.lane.b32.xlu0 %v9126, 54
        %v9575 = vpop.permute.xlu0 %9574
        %9576 = vrot.lane.b32.xlu0 %v9127, 54
        %v9577 = vpop.permute.xlu0 %9576
        %9578 = vrot.lane.b32.xlu0 %v9134, 54
        %v9579 = vpop.permute.xlu0 %9578
        %9580 = vrot.lane.b32.xlu0 %v9135, 54
        %v9581 = vpop.permute.xlu0 %9580
        %9582 = vrot.lane.b32.xlu0 %v9544, 54
        %v9583 = vpop.permute.xlu0 %9582
        %9584 = vrot.lane.b32.xlu0 %v9545, 54
        %v9585 = vpop.permute.xlu0 %9584
        %v9616 = vlaneseq
        %v9617 = vshrl.u32 %v9616, 7
        %v9618 = vsub.s32 0, %v9617
        %v9619 = vrot.slane %v7787, %v9618
        %v9620 = vlaneseq
        %v9621 = vshrl.u32 %v9620, 7
        %v9622 = vsub.s32 0, %v9621
        %v9623 = vrot.slane %v7788, %v9622
        %v9624 = vlaneseq
        %v9625 = vshrl.u32 %v9624, 7
        %v9626 = vsub.s32 0, %v9625
        %v9627 = vrot.slane %v7789, %v9626
        %v9628 = vlaneseq
        %v9629 = vshrl.u32 %v9628, 7
        %v9630 = vsub.s32 0, %v9629
        %v9631 = vrot.slane %v7790, %v9630
        %v9632 = vlaneseq
        %v9633 = vshrl.u32 %v9632, 7
        %v9634 = vsub.s32 0, %v9633
        %v9635 = vrot.slane %v7791, %v9634
        %v9636 = vlaneseq
        %v9637 = vshrl.u32 %v9636, 7
        %v9638 = vsub.s32 0, %v9637
        %v9639 = vrot.slane %v7792, %v9638
        %v9640 = vlaneseq
        %v9641 = vshrl.u32 %v9640, 7
        %v9642 = vsub.s32 0, %v9641
        %v9643 = vrot.slane %v7793, %v9642
        %v9644 = vlaneseq
        %v9645 = vshrl.u32 %v9644, 7
        %v9646 = vsub.s32 0, %v9645
        %v9647 = vrot.slane %v7794, %v9646
        %v9648 = vlaneseq
        %v9649 = vshrl.u32 %v9648, 7
        %v9650 = vsub.s32 0, %v9649
        %v9651 = vrot.slane %v7795, %v9650
        %v9652 = vlaneseq
        %v9653 = vshrl.u32 %v9652, 7
        %v9654 = vsub.s32 0, %v9653
        %v9655 = vrot.slane %v7796, %v9654
        %v9656 = vsel %vm8329, %v9623, %v9619
        %v9657 = vsel %vm8331, %v9627, %v9656
        %v9658 = vsel %vm8333, %v9631, %v9657
        %v9659 = vsel %vm8335, %v9635, %v9658
        %v9660 = vsel %vm8337, %v9639, %v9659
        %v9661 = vsel %vm8339, %v9643, %v9660
        %v9662 = vsel %vm8341, %v9647, %v9661
        %v9663 = vsel %vm8329, %v9655, %v9651
        %9664 = vrot.lane.b32.xlu0 %v8358, 60
        %v9665 = vpop.permute.xlu0 %9664
        %9666 = vrot.lane.b32.xlu0 %v8359, 60
        %v9667 = vpop.permute.xlu0 %9666
        %9668 = vrot.lane.b32.xlu0 %v8366, 60
        %v9669 = vpop.permute.xlu0 %9668
        %9670 = vrot.lane.b32.xlu0 %v8367, 60
        %v9671 = vpop.permute.xlu0 %9670
        %9672 = vrot.lane.b32.xlu0 %v8374, 60
        %v9673 = vpop.permute.xlu0 %9672
        %9674 = vrot.lane.b32.xlu0 %v8375, 60
        %v9675 = vpop.permute.xlu0 %9674
        %9676 = vrot.lane.b32.xlu0 %v8382, 60
        %v9677 = vpop.permute.xlu0 %9676
        %9678 = vrot.lane.b32.xlu0 %v8383, 60
        %v9679 = vpop.permute.xlu0 %9678
        %9680 = vrot.lane.b32.xlu0 %v8390, 60
        %v9681 = vpop.permute.xlu0 %9680
        %9682 = vrot.lane.b32.xlu0 %v8391, 60
        %v9683 = vpop.permute.xlu0 %9682
        %9684 = vrot.lane.b32.xlu0 %v8398, 60
        %v9685 = vpop.permute.xlu0 %9684
        %9686 = vrot.lane.b32.xlu0 %v8399, 60
        %v9687 = vpop.permute.xlu0 %9686
        %9688 = vrot.lane.b32.xlu0 %v8406, 60
        %v9689 = vpop.permute.xlu0 %9688
        %9690 = vrot.lane.b32.xlu0 %v8407, 60
        %v9691 = vpop.permute.xlu0 %9690
        %9692 = vrot.lane.b32.xlu0 %v8414, 60
        %v9693 = vpop.permute.xlu0 %9692
        %9694 = vrot.lane.b32.xlu0 %v8415, 60
        %v9695 = vpop.permute.xlu0 %9694
        %9696 = vrot.lane.b32.xlu0 %v9252, 60
        %v9697 = vpop.permute.xlu0 %9696
        %9698 = vrot.lane.b32.xlu0 %v9253, 60
        %v9699 = vpop.permute.xlu0 %9698
        %9700 = vrot.lane.b32.xlu0 %v9662, 60
        %v9701 = vpop.permute.xlu0 %9700
        %9702 = vrot.lane.b32.xlu0 %v9663, 60
        %v9703 = vpop.permute.xlu0 %9702
        %v9725 = vlaneseq
        %v9726 = vshrl.u32 %v9725, 7
        %v9727 = vsub.s32 0, %v9726
        %v9728 = vrot.slane %v7797, %v9727
        %v9729 = vsel %vm8329, %v9627, %v9623
        %v9730 = vsel %vm8331, %v9631, %v9729
        %v9731 = vsel %vm8333, %v9635, %v9730
        %v9732 = vsel %vm8335, %v9639, %v9731
        %v9733 = vsel %vm8337, %v9643, %v9732
        %v9734 = vsel %vm8339, %v9647, %v9733
        %v9735 = vsel %vm8341, %v9651, %v9734
        %v9736 = vsel %vm8329, %v9728, %v9655
        %9737 = vrot.lane.b32.xlu0 %v8508, 66
        %v9738 = vpop.permute.xlu0 %9737
        %9739 = vrot.lane.b32.xlu0 %v8509, 66
        %v9740 = vpop.permute.xlu0 %9739
        %9741 = vrot.lane.b32.xlu0 %v8516, 66
        %v9742 = vpop.permute.xlu0 %9741
        %9743 = vrot.lane.b32.xlu0 %v8517, 66
        %v9744 = vpop.permute.xlu0 %9743
        %9745 = vrot.lane.b32.xlu0 %v8524, 66
        %v9746 = vpop.permute.xlu0 %9745
        %9747 = vrot.lane.b32.xlu0 %v8525, 66
        %v9748 = vpop.permute.xlu0 %9747
        %9749 = vrot.lane.b32.xlu0 %v8532, 66
        %v9750 = vpop.permute.xlu0 %9749
        %9751 = vrot.lane.b32.xlu0 %v8533, 66
        %v9752 = vpop.permute.xlu0 %9751
        %9753 = vrot.lane.b32.xlu0 %v8540, 66
        %v9754 = vpop.permute.xlu0 %9753
        %9755 = vrot.lane.b32.xlu0 %v8541, 66
        %v9756 = vpop.permute.xlu0 %9755
        %9757 = vrot.lane.b32.xlu0 %v8548, 66
        %v9758 = vpop.permute.xlu0 %9757
        %9759 = vrot.lane.b32.xlu0 %v8549, 66
        %v9760 = vpop.permute.xlu0 %9759
        %9761 = vrot.lane.b32.xlu0 %v8556, 66
        %v9762 = vpop.permute.xlu0 %9761
        %9763 = vrot.lane.b32.xlu0 %v8557, 66
        %v9764 = vpop.permute.xlu0 %9763
        %9765 = vrot.lane.b32.xlu0 %v8564, 66
        %v9766 = vpop.permute.xlu0 %9765
        %9767 = vrot.lane.b32.xlu0 %v8565, 66
        %v9768 = vpop.permute.xlu0 %9767
        %9769 = vrot.lane.b32.xlu0 %v9325, 66
        %v9770 = vpop.permute.xlu0 %9769
        %9771 = vrot.lane.b32.xlu0 %v9326, 66
        %v9772 = vpop.permute.xlu0 %9771
        %9773 = vrot.lane.b32.xlu0 %v9735, 66
        %v9774 = vpop.permute.xlu0 %9773
        %9775 = vrot.lane.b32.xlu0 %v9736, 66
        %v9776 = vpop.permute.xlu0 %9775
        %v9798 = vlaneseq
        %v9799 = vshrl.u32 %v9798, 7
        %v9800 = vsub.s32 0, %v9799
        %v9801 = vrot.slane %v7798, %v9800
        %v9802 = vsel %vm8329, %v9631, %v9627
        %v9803 = vsel %vm8331, %v9635, %v9802
        %v9804 = vsel %vm8333, %v9639, %v9803
        %v9805 = vsel %vm8335, %v9643, %v9804
        %v9806 = vsel %vm8337, %v9647, %v9805
        %v9807 = vsel %vm8339, %v9651, %v9806
        %v9808 = vsel %vm8341, %v9655, %v9807
        %v9809 = vsel %vm8329, %v9801, %v9728
        %9810 = vrot.lane.b32.xlu0 %v8698, 72
        %v9811 = vpop.permute.xlu0 %9810
        %9812 = vrot.lane.b32.xlu0 %v8699, 72
        %v9813 = vpop.permute.xlu0 %9812
        %9814 = vrot.lane.b32.xlu0 %v8706, 72
        %v9815 = vpop.permute.xlu0 %9814
        %9816 = vrot.lane.b32.xlu0 %v8707, 72
        %v9817 = vpop.permute.xlu0 %9816
        %9818 = vrot.lane.b32.xlu0 %v8714, 72
        %v9819 = vpop.permute.xlu0 %9818
        %9820 = vrot.lane.b32.xlu0 %v8715, 72
        %v9821 = vpop.permute.xlu0 %9820
        %9822 = vrot.lane.b32.xlu0 %v8722, 72
        %v9823 = vpop.permute.xlu0 %9822
        %9824 = vrot.lane.b32.xlu0 %v8723, 72
        %v9825 = vpop.permute.xlu0 %9824
        %9826 = vrot.lane.b32.xlu0 %v8730, 72
        %v9827 = vpop.permute.xlu0 %9826
        %9828 = vrot.lane.b32.xlu0 %v8731, 72
        %v9829 = vpop.permute.xlu0 %9828
        %9830 = vrot.lane.b32.xlu0 %v8738, 72
        %v9831 = vpop.permute.xlu0 %9830
        %9832 = vrot.lane.b32.xlu0 %v8739, 72
        %v9833 = vpop.permute.xlu0 %9832
        %9834 = vrot.lane.b32.xlu0 %v8746, 72
        %v9835 = vpop.permute.xlu0 %9834
        %9836 = vrot.lane.b32.xlu0 %v8747, 72
        %v9837 = vpop.permute.xlu0 %9836
        %9838 = vrot.lane.b32.xlu0 %v8754, 72
        %v9839 = vpop.permute.xlu0 %9838
        %9840 = vrot.lane.b32.xlu0 %v8755, 72
        %v9841 = vpop.permute.xlu0 %9840
        %9842 = vrot.lane.b32.xlu0 %v9398, 72
        %v9843 = vpop.permute.xlu0 %9842
        %9844 = vrot.lane.b32.xlu0 %v9399, 72
        %v9845 = vpop.permute.xlu0 %9844
        %9846 = vrot.lane.b32.xlu0 %v9808, 72
        %v9847 = vpop.permute.xlu0 %9846
        %9848 = vrot.lane.b32.xlu0 %v9809, 72
        %v9849 = vpop.permute.xlu0 %9848
        %v9871 = vlaneseq
        %v9872 = vshrl.u32 %v9871, 7
        %v9873 = vsub.s32 0, %v9872
        %v9874 = vrot.slane %v7799, %v9873
        %v9875 = vsel %vm8329, %v9635, %v9631
        %v9876 = vsel %vm8331, %v9639, %v9875
        %v9877 = vsel %vm8333, %v9643, %v9876
        %v9878 = vsel %vm8335, %v9647, %v9877
        %v9879 = vsel %vm8337, %v9651, %v9878
        %v9880 = vsel %vm8339, %v9655, %v9879
        %v9881 = vsel %vm8341, %v9728, %v9880
        %v9882 = vsel %vm8329, %v9874, %v9801
        %9883 = vrot.lane.b32.xlu0 %v8888, 78
        %v9884 = vpop.permute.xlu0 %9883
        %9885 = vrot.lane.b32.xlu0 %v8889, 78
        %v9886 = vpop.permute.xlu0 %9885
        %9887 = vrot.lane.b32.xlu0 %v8896, 78
        %v9888 = vpop.permute.xlu0 %9887
        %9889 = vrot.lane.b32.xlu0 %v8897, 78
        %v9890 = vpop.permute.xlu0 %9889
        %9891 = vrot.lane.b32.xlu0 %v8904, 78
        %v9892 = vpop.permute.xlu0 %9891
        %9893 = vrot.lane.b32.xlu0 %v8905, 78
        %v9894 = vpop.permute.xlu0 %9893
        %9895 = vrot.lane.b32.xlu0 %v8912, 78
        %v9896 = vpop.permute.xlu0 %9895
        %9897 = vrot.lane.b32.xlu0 %v8913, 78
        %v9898 = vpop.permute.xlu0 %9897
        %9899 = vrot.lane.b32.xlu0 %v8920, 78
        %v9900 = vpop.permute.xlu0 %9899
        %9901 = vrot.lane.b32.xlu0 %v8921, 78
        %v9902 = vpop.permute.xlu0 %9901
        %9903 = vrot.lane.b32.xlu0 %v8928, 78
        %v9904 = vpop.permute.xlu0 %9903
        %9905 = vrot.lane.b32.xlu0 %v8929, 78
        %v9906 = vpop.permute.xlu0 %9905
        %9907 = vrot.lane.b32.xlu0 %v8936, 78
        %v9908 = vpop.permute.xlu0 %9907
        %9909 = vrot.lane.b32.xlu0 %v8937, 78
        %v9910 = vpop.permute.xlu0 %9909
        %9911 = vrot.lane.b32.xlu0 %v8944, 78
        %v9912 = vpop.permute.xlu0 %9911
        %9913 = vrot.lane.b32.xlu0 %v8945, 78
        %v9914 = vpop.permute.xlu0 %9913
        %9915 = vrot.lane.b32.xlu0 %v9471, 78
        %v9916 = vpop.permute.xlu0 %9915
        %9917 = vrot.lane.b32.xlu0 %v9472, 78
        %v9918 = vpop.permute.xlu0 %9917
        %9919 = vrot.lane.b32.xlu0 %v9881, 78
        %v9920 = vpop.permute.xlu0 %9919
        %9921 = vrot.lane.b32.xlu0 %v9882, 78
        %v9922 = vpop.permute.xlu0 %9921
        %v9944 = vlaneseq
        %v9945 = vshrl.u32 %v9944, 7
        %v9946 = vsub.s32 0, %v9945
        %v9947 = vrot.slane %v7800, %v9946
        %v9948 = vsel %vm8329, %v9639, %v9635
        %v9949 = vsel %vm8331, %v9643, %v9948
        %v9950 = vsel %vm8333, %v9647, %v9949
        %v9951 = vsel %vm8335, %v9651, %v9950
        %v9952 = vsel %vm8337, %v9655, %v9951
        %v9953 = vsel %vm8339, %v9728, %v9952
        %v9954 = vsel %vm8341, %v9801, %v9953
        %v9955 = vsel %vm8329, %v9947, %v9874
        %9956 = vrot.lane.b32.xlu0 %v9078, 84
        %v9957 = vpop.permute.xlu0 %9956
        %9958 = vrot.lane.b32.xlu0 %v9079, 84
        %v9959 = vpop.permute.xlu0 %9958
        %9960 = vrot.lane.b32.xlu0 %v9086, 84
        %v9961 = vpop.permute.xlu0 %9960
        %9962 = vrot.lane.b32.xlu0 %v9087, 84
        %v9963 = vpop.permute.xlu0 %9962
        %9964 = vrot.lane.b32.xlu0 %v9094, 84
        %v9965 = vpop.permute.xlu0 %9964
        %9966 = vrot.lane.b32.xlu0 %v9095, 84
        %v9967 = vpop.permute.xlu0 %9966
        %9968 = vrot.lane.b32.xlu0 %v9102, 84
        %v9969 = vpop.permute.xlu0 %9968
        %9970 = vrot.lane.b32.xlu0 %v9103, 84
        %v9971 = vpop.permute.xlu0 %9970
        %9972 = vrot.lane.b32.xlu0 %v9110, 84
        %v9973 = vpop.permute.xlu0 %9972
        %9974 = vrot.lane.b32.xlu0 %v9111, 84
        %v9975 = vpop.permute.xlu0 %9974
        %9976 = vrot.lane.b32.xlu0 %v9118, 84
        %v9977 = vpop.permute.xlu0 %9976
        %9978 = vrot.lane.b32.xlu0 %v9119, 84
        %v9979 = vpop.permute.xlu0 %9978
        %9980 = vrot.lane.b32.xlu0 %v9126, 84
        %v9981 = vpop.permute.xlu0 %9980
        %9982 = vrot.lane.b32.xlu0 %v9127, 84
        %v9983 = vpop.permute.xlu0 %9982
        %9984 = vrot.lane.b32.xlu0 %v9134, 84
        %v9985 = vpop.permute.xlu0 %9984
        %9986 = vrot.lane.b32.xlu0 %v9135, 84
        %v9987 = vpop.permute.xlu0 %9986
        %9988 = vrot.lane.b32.xlu0 %v9544, 84
        %v9989 = vpop.permute.xlu0 %9988
        %9990 = vrot.lane.b32.xlu0 %v9545, 84
        %v9991 = vpop.permute.xlu0 %9990
        %9992 = vrot.lane.b32.xlu0 %v9954, 84
        %v9993 = vpop.permute.xlu0 %9992
        %9994 = vrot.lane.b32.xlu0 %v9955, 84
        %v9995 = vpop.permute.xlu0 %9994
        %v10026 = vlaneseq
        %v10027 = vshrl.u32 %v10026, 7
        %v10028 = vsub.s32 0, %v10027
        %v10029 = vrot.slane %v7801, %v10028
        %v10030 = vlaneseq
        %v10031 = vshrl.u32 %v10030, 7
        %v10032 = vsub.s32 0, %v10031
        %v10033 = vrot.slane %v7802, %v10032
        %v10034 = vlaneseq
        %v10035 = vshrl.u32 %v10034, 7
        %v10036 = vsub.s32 0, %v10035
        %v10037 = vrot.slane %v7803, %v10036
        %v10038 = vlaneseq
        %v10039 = vshrl.u32 %v10038, 7
        %v10040 = vsub.s32 0, %v10039
        %v10041 = vrot.slane %v7804, %v10040
        %v10042 = vlaneseq
        %v10043 = vshrl.u32 %v10042, 7
        %v10044 = vsub.s32 0, %v10043
        %v10045 = vrot.slane %v7805, %v10044
        %v10046 = vlaneseq
        %v10047 = vshrl.u32 %v10046, 7
        %v10048 = vsub.s32 0, %v10047
        %v10049 = vrot.slane %v7806, %v10048
        %v10050 = vlaneseq
        %v10051 = vshrl.u32 %v10050, 7
        %v10052 = vsub.s32 0, %v10051
        %v10053 = vrot.slane %v7807, %v10052
        %v10054 = vlaneseq
        %v10055 = vshrl.u32 %v10054, 7
        %v10056 = vsub.s32 0, %v10055
        %v10057 = vrot.slane %v7808, %v10056
        %v10058 = vlaneseq
        %v10059 = vshrl.u32 %v10058, 7
        %v10060 = vsub.s32 0, %v10059
        %v10061 = vrot.slane %v7809, %v10060
        %v10062 = vlaneseq
        %v10063 = vshrl.u32 %v10062, 7
        %v10064 = vsub.s32 0, %v10063
        %v10065 = vrot.slane %v7810, %v10064
        %v10066 = vsel %vm8329, %v10033, %v10029
        %v10067 = vsel %vm8331, %v10037, %v10066
        %v10068 = vsel %vm8333, %v10041, %v10067
        %v10069 = vsel %vm8335, %v10045, %v10068
        %v10070 = vsel %vm8337, %v10049, %v10069
        %v10071 = vsel %vm8339, %v10053, %v10070
        %v10072 = vsel %vm8341, %v10057, %v10071
        %v10073 = vsel %vm8329, %v10065, %v10061
        %10074 = vrot.lane.b32.xlu0 %v8366, 90
        %v10075 = vpop.permute.xlu0 %10074
        %10076 = vrot.lane.b32.xlu0 %v8367, 90
        %v10077 = vpop.permute.xlu0 %10076
        %10078 = vrot.lane.b32.xlu0 %v8374, 90
        %v10079 = vpop.permute.xlu0 %10078
        %10080 = vrot.lane.b32.xlu0 %v8375, 90
        %v10081 = vpop.permute.xlu0 %10080
        %10082 = vrot.lane.b32.xlu0 %v8382, 90
        %v10083 = vpop.permute.xlu0 %10082
        %10084 = vrot.lane.b32.xlu0 %v8383, 90
        %v10085 = vpop.permute.xlu0 %10084
        %10086 = vrot.lane.b32.xlu0 %v8390, 90
        %v10087 = vpop.permute.xlu0 %10086
        %10088 = vrot.lane.b32.xlu0 %v8391, 90
        %v10089 = vpop.permute.xlu0 %10088
        %10090 = vrot.lane.b32.xlu0 %v8398, 90
        %v10091 = vpop.permute.xlu0 %10090
        %10092 = vrot.lane.b32.xlu0 %v8399, 90
        %v10093 = vpop.permute.xlu0 %10092
        %10094 = vrot.lane.b32.xlu0 %v8406, 90
        %v10095 = vpop.permute.xlu0 %10094
        %10096 = vrot.lane.b32.xlu0 %v8407, 90
        %v10097 = vpop.permute.xlu0 %10096
        %10098 = vrot.lane.b32.xlu0 %v8414, 90
        %v10099 = vpop.permute.xlu0 %10098
        %10100 = vrot.lane.b32.xlu0 %v8415, 90
        %v10101 = vpop.permute.xlu0 %10100
        %10102 = vrot.lane.b32.xlu0 %v9252, 90
        %v10103 = vpop.permute.xlu0 %10102
        %10104 = vrot.lane.b32.xlu0 %v9253, 90
        %v10105 = vpop.permute.xlu0 %10104
        %10106 = vrot.lane.b32.xlu0 %v9662, 90
        %v10107 = vpop.permute.xlu0 %10106
        %10108 = vrot.lane.b32.xlu0 %v9663, 90
        %v10109 = vpop.permute.xlu0 %10108
        %10110 = vrot.lane.b32.xlu0 %v10072, 90
        %v10111 = vpop.permute.xlu0 %10110
        %10112 = vrot.lane.b32.xlu0 %v10073, 90
        %v10113 = vpop.permute.xlu0 %10112
        %vm10134 = vcmask 48128
        %v10135 = vsel %vm10134, %v8342, %v8567
        %v10136 = vsel %vm10134, %v8343, %v8569
        %v10137 = vsel %vm10134, %v8350, %v8571
        %v10138 = vsel %vm10134, %v8351, %v8573
        %v10139 = vsel %vm10134, %v8358, %v8575
        %v10140 = vsel %vm10134, %v8359, %v8577
        %v10141 = vsel %vm10134, %v8366, %v8579
        %v10142 = vsel %vm10134, %v8367, %v8581
        %v10143 = vsel %vm10134, %v8374, %v8583
        %v10144 = vsel %vm10134, %v8375, %v8585
        %v10145 = vsel %vm10134, %v8382, %v8587
        %v10146 = vsel %vm10134, %v8383, %v8589
        %v10147 = vsel %vm10134, %v8390, %v8591
        %v10148 = vsel %vm10134, %v8391, %v8593
        %v10149 = vsel %vm10134, %v8398, %v8595
        %v10150 = vsel %vm10134, %v8399, %v8597
        %v10151 = vsel %vm10134, %v8406, %v8599
        %v10152 = vsel %vm10134, %v8407, %v8601
        %v10153 = vsel %vm10134, %v8414, %v8603
        %v10154 = vsel %vm10134, %v8415, %v8605
        %vm10155 = vcmask 97280
        %v10156 = vsel %vm10155, %v10135, %v8757
        %v10157 = vsel %vm10155, %v10136, %v8759
        %v10158 = vsel %vm10155, %v10137, %v8761
        %v10159 = vsel %vm10155, %v10138, %v8763
        %v10160 = vsel %vm10155, %v10139, %v8765
        %v10161 = vsel %vm10155, %v10140, %v8767
        %v10162 = vsel %vm10155, %v10141, %v8769
        %v10163 = vsel %vm10155, %v10142, %v8771
        %v10164 = vsel %vm10155, %v10143, %v8773
        %v10165 = vsel %vm10155, %v10144, %v8775
        %v10166 = vsel %vm10155, %v10145, %v8777
        %v10167 = vsel %vm10155, %v10146, %v8779
        %v10168 = vsel %vm10155, %v10147, %v8781
        %v10169 = vsel %vm10155, %v10148, %v8783
        %v10170 = vsel %vm10155, %v10149, %v8785
        %v10171 = vsel %vm10155, %v10150, %v8787
        %v10172 = vsel %vm10155, %v10151, %v8789
        %v10173 = vsel %vm10155, %v10152, %v8791
        %v10174 = vsel %vm10155, %v10153, %v8793
        %v10175 = vsel %vm10155, %v10154, %v8795
        %vm10176 = vcmask 146432
        %v10177 = vsel %vm10176, %v10156, %v8947
        %v10178 = vsel %vm10176, %v10157, %v8949
        %v10179 = vsel %vm10176, %v10158, %v8951
        %v10180 = vsel %vm10176, %v10159, %v8953
        %v10181 = vsel %vm10176, %v10160, %v8955
        %v10182 = vsel %vm10176, %v10161, %v8957
        %v10183 = vsel %vm10176, %v10162, %v8959
        %v10184 = vsel %vm10176, %v10163, %v8961
        %v10185 = vsel %vm10176, %v10164, %v8963
        %v10186 = vsel %vm10176, %v10165, %v8965
        %v10187 = vsel %vm10176, %v10166, %v8967
        %v10188 = vsel %vm10176, %v10167, %v8969
        %v10189 = vsel %vm10176, %v10168, %v8971
        %v10190 = vsel %vm10176, %v10169, %v8973
        %v10191 = vsel %vm10176, %v10170, %v8975
        %v10192 = vsel %vm10176, %v10171, %v8977
        %v10193 = vsel %vm10176, %v10172, %v8979
        %v10194 = vsel %vm10176, %v10173, %v8981
        %v10195 = vsel %vm10176, %v10174, %v8983
        %v10196 = vsel %vm10176, %v10175, %v8985
        %vm10197 = vcmask 195584
        %v10198 = vsel %vm10197, %v10177, %v9137
        %v10199 = vsel %vm10197, %v10178, %v9139
        %v10200 = vsel %vm10197, %v10179, %v9141
        %v10201 = vsel %vm10197, %v10180, %v9143
        %v10202 = vsel %vm10197, %v10181, %v9145
        %v10203 = vsel %vm10197, %v10182, %v9147
        %v10204 = vsel %vm10197, %v10183, %v9149
        %v10205 = vsel %vm10197, %v10184, %v9151
        %v10206 = vsel %vm10197, %v10185, %v9153
        %v10207 = vsel %vm10197, %v10186, %v9155
        %v10208 = vsel %vm10197, %v10187, %v9157
        %v10209 = vsel %vm10197, %v10188, %v9159
        %v10210 = vsel %vm10197, %v10189, %v9161
        %v10211 = vsel %vm10197, %v10190, %v9163
        %v10212 = vsel %vm10197, %v10191, %v9165
        %v10213 = vsel %vm10197, %v10192, %v9167
        %v10214 = vsel %vm10197, %v10193, %v9169
        %v10215 = vsel %vm10197, %v10194, %v9171
        %v10216 = vsel %vm10197, %v10195, %v9173
        %v10217 = vsel %vm10197, %v10196, %v9175
        %vm10218 = vcmask 244736
        %v10219 = vsel %vm10218, %v10198, %v9255
        %v10220 = vsel %vm10218, %v10199, %v9257
        %v10221 = vsel %vm10218, %v10200, %v9259
        %v10222 = vsel %vm10218, %v10201, %v9261
        %v10223 = vsel %vm10218, %v10202, %v9263
        %v10224 = vsel %vm10218, %v10203, %v9265
        %v10225 = vsel %vm10218, %v10204, %v9267
        %v10226 = vsel %vm10218, %v10205, %v9269
        %v10227 = vsel %vm10218, %v10206, %v9271
        %v10228 = vsel %vm10218, %v10207, %v9273
        %v10229 = vsel %vm10218, %v10208, %v9275
        %v10230 = vsel %vm10218, %v10209, %v9277
        %v10231 = vsel %vm10218, %v10210, %v9279
        %v10232 = vsel %vm10218, %v10211, %v9281
        %v10233 = vsel %vm10218, %v10212, %v9283
        %v10234 = vsel %vm10218, %v10213, %v9285
        %v10235 = vsel %vm10218, %v10214, %v9287
        %v10236 = vsel %vm10218, %v10215, %v9289
        %v10237 = vsel %vm10218, %v10216, %v9291
        %v10238 = vsel %vm10218, %v10217, %v9293
        %vm10239 = vcmask 293888
        %v10240 = vsel %vm10239, %v10219, %v9328
        %v10241 = vsel %vm10239, %v10220, %v9330
        %v10242 = vsel %vm10239, %v10221, %v9332
        %v10243 = vsel %vm10239, %v10222, %v9334
        %v10244 = vsel %vm10239, %v10223, %v9336
        %v10245 = vsel %vm10239, %v10224, %v9338
        %v10246 = vsel %vm10239, %v10225, %v9340
        %v10247 = vsel %vm10239, %v10226, %v9342
        %v10248 = vsel %vm10239, %v10227, %v9344
        %v10249 = vsel %vm10239, %v10228, %v9346
        %v10250 = vsel %vm10239, %v10229, %v9348
        %v10251 = vsel %vm10239, %v10230, %v9350
        %v10252 = vsel %vm10239, %v10231, %v9352
        %v10253 = vsel %vm10239, %v10232, %v9354
        %v10254 = vsel %vm10239, %v10233, %v9356
        %v10255 = vsel %vm10239, %v10234, %v9358
        %v10256 = vsel %vm10239, %v10235, %v9360
        %v10257 = vsel %vm10239, %v10236, %v9362
        %v10258 = vsel %vm10239, %v10237, %v9364
        %v10259 = vsel %vm10239, %v10238, %v9366
        %vm10260 = vcmask 343040
        %v10261 = vsel %vm10260, %v10240, %v9401
        %v10262 = vsel %vm10260, %v10241, %v9403
        %v10263 = vsel %vm10260, %v10242, %v9405
        %v10264 = vsel %vm10260, %v10243, %v9407
        %v10265 = vsel %vm10260, %v10244, %v9409
        %v10266 = vsel %vm10260, %v10245, %v9411
        %v10267 = vsel %vm10260, %v10246, %v9413
        %v10268 = vsel %vm10260, %v10247, %v9415
        %v10269 = vsel %vm10260, %v10248, %v9417
        %v10270 = vsel %vm10260, %v10249, %v9419
        %v10271 = vsel %vm10260, %v10250, %v9421
        %v10272 = vsel %vm10260, %v10251, %v9423
        %v10273 = vsel %vm10260, %v10252, %v9425
        %v10274 = vsel %vm10260, %v10253, %v9427
        %v10275 = vsel %vm10260, %v10254, %v9429
        %v10276 = vsel %vm10260, %v10255, %v9431
        %v10277 = vsel %vm10260, %v10256, %v9433
        %v10278 = vsel %vm10260, %v10257, %v9435
        %v10279 = vsel %vm10260, %v10258, %v9437
        %v10280 = vsel %vm10260, %v10259, %v9439
        %vm10281 = vcmask 392192
        %v10282 = vsel %vm10281, %v10261, %v9474
        %v10283 = vsel %vm10281, %v10262, %v9476
        %v10284 = vsel %vm10281, %v10263, %v9478
        %v10285 = vsel %vm10281, %v10264, %v9480
        %v10286 = vsel %vm10281, %v10265, %v9482
        %v10287 = vsel %vm10281, %v10266, %v9484
        %v10288 = vsel %vm10281, %v10267, %v9486
        %v10289 = vsel %vm10281, %v10268, %v9488
        %v10290 = vsel %vm10281, %v10269, %v9490
        %v10291 = vsel %vm10281, %v10270, %v9492
        %v10292 = vsel %vm10281, %v10271, %v9494
        %v10293 = vsel %vm10281, %v10272, %v9496
        %v10294 = vsel %vm10281, %v10273, %v9498
        %v10295 = vsel %vm10281, %v10274, %v9500
        %v10296 = vsel %vm10281, %v10275, %v9502
        %v10297 = vsel %vm10281, %v10276, %v9504
        %v10298 = vsel %vm10281, %v10277, %v9506
        %v10299 = vsel %vm10281, %v10278, %v9508
        %v10300 = vsel %vm10281, %v10279, %v9510
        %v10301 = vsel %vm10281, %v10280, %v9512
        %vm10302 = vcmask 441344
        %v10303 = vsel %vm10302, %v10282, %v9547
        %v10304 = vsel %vm10302, %v10283, %v9549
        %v10305 = vsel %vm10302, %v10284, %v9551
        %v10306 = vsel %vm10302, %v10285, %v9553
        %v10307 = vsel %vm10302, %v10286, %v9555
        %v10308 = vsel %vm10302, %v10287, %v9557
        %v10309 = vsel %vm10302, %v10288, %v9559
        %v10310 = vsel %vm10302, %v10289, %v9561
        %v10311 = vsel %vm10302, %v10290, %v9563
        %v10312 = vsel %vm10302, %v10291, %v9565
        %v10313 = vsel %vm10302, %v10292, %v9567
        %v10314 = vsel %vm10302, %v10293, %v9569
        %v10315 = vsel %vm10302, %v10294, %v9571
        %v10316 = vsel %vm10302, %v10295, %v9573
        %v10317 = vsel %vm10302, %v10296, %v9575
        %v10318 = vsel %vm10302, %v10297, %v9577
        %v10319 = vsel %vm10302, %v10298, %v9579
        %v10320 = vsel %vm10302, %v10299, %v9581
        %v10321 = vsel %vm10302, %v10300, %v9583
        %v10322 = vsel %vm10302, %v10301, %v9585
        %vm10323 = vcmask 490496
        %v10324 = vsel %vm10323, %v10303, %v9665
        %v10325 = vsel %vm10323, %v10304, %v9667
        %v10326 = vsel %vm10323, %v10305, %v9669
        %v10327 = vsel %vm10323, %v10306, %v9671
        %v10328 = vsel %vm10323, %v10307, %v9673
        %v10329 = vsel %vm10323, %v10308, %v9675
        %v10330 = vsel %vm10323, %v10309, %v9677
        %v10331 = vsel %vm10323, %v10310, %v9679
        %v10332 = vsel %vm10323, %v10311, %v9681
        %v10333 = vsel %vm10323, %v10312, %v9683
        %v10334 = vsel %vm10323, %v10313, %v9685
        %v10335 = vsel %vm10323, %v10314, %v9687
        %v10336 = vsel %vm10323, %v10315, %v9689
        %v10337 = vsel %vm10323, %v10316, %v9691
        %v10338 = vsel %vm10323, %v10317, %v9693
        %v10339 = vsel %vm10323, %v10318, %v9695
        %v10340 = vsel %vm10323, %v10319, %v9697
        %v10341 = vsel %vm10323, %v10320, %v9699
        %v10342 = vsel %vm10323, %v10321, %v9701
        %v10343 = vsel %vm10323, %v10322, %v9703
        %vm10344 = vcmask 539648
        %v10345 = vsel %vm10344, %v10324, %v9738
        %v10346 = vsel %vm10344, %v10325, %v9740
        %v10347 = vsel %vm10344, %v10326, %v9742
        %v10348 = vsel %vm10344, %v10327, %v9744
        %v10349 = vsel %vm10344, %v10328, %v9746
        %v10350 = vsel %vm10344, %v10329, %v9748
        %v10351 = vsel %vm10344, %v10330, %v9750
        %v10352 = vsel %vm10344, %v10331, %v9752
        %v10353 = vsel %vm10344, %v10332, %v9754
        %v10354 = vsel %vm10344, %v10333, %v9756
        %v10355 = vsel %vm10344, %v10334, %v9758
        %v10356 = vsel %vm10344, %v10335, %v9760
        %v10357 = vsel %vm10344, %v10336, %v9762
        %v10358 = vsel %vm10344, %v10337, %v9764
        %v10359 = vsel %vm10344, %v10338, %v9766
        %v10360 = vsel %vm10344, %v10339, %v9768
        %v10361 = vsel %vm10344, %v10340, %v9770
        %v10362 = vsel %vm10344, %v10341, %v9772
        %v10363 = vsel %vm10344, %v10342, %v9774
        %v10364 = vsel %vm10344, %v10343, %v9776
        %vm10365 = vcmask 588800
        %v10366 = vsel %vm10365, %v10345, %v9811
        %v10367 = vsel %vm10365, %v10346, %v9813
        %v10368 = vsel %vm10365, %v10347, %v9815
        %v10369 = vsel %vm10365, %v10348, %v9817
        %v10370 = vsel %vm10365, %v10349, %v9819
        %v10371 = vsel %vm10365, %v10350, %v9821
        %v10372 = vsel %vm10365, %v10351, %v9823
        %v10373 = vsel %vm10365, %v10352, %v9825
        %v10374 = vsel %vm10365, %v10353, %v9827
        %v10375 = vsel %vm10365, %v10354, %v9829
        %v10376 = vsel %vm10365, %v10355, %v9831
        %v10377 = vsel %vm10365, %v10356, %v9833
        %v10378 = vsel %vm10365, %v10357, %v9835
        %v10379 = vsel %vm10365, %v10358, %v9837
        %v10380 = vsel %vm10365, %v10359, %v9839
        %v10381 = vsel %vm10365, %v10360, %v9841
        %v10382 = vsel %vm10365, %v10361, %v9843
        %v10383 = vsel %vm10365, %v10362, %v9845
        %v10384 = vsel %vm10365, %v10363, %v9847
        %v10385 = vsel %vm10365, %v10364, %v9849
        %vm10386 = vcmask 637952
        %v10387 = vsel %vm10386, %v10366, %v9884
        %v10388 = vsel %vm10386, %v10367, %v9886
        %v10389 = vsel %vm10386, %v10368, %v9888
        %v10390 = vsel %vm10386, %v10369, %v9890
        %v10391 = vsel %vm10386, %v10370, %v9892
        %v10392 = vsel %vm10386, %v10371, %v9894
        %v10393 = vsel %vm10386, %v10372, %v9896
        %v10394 = vsel %vm10386, %v10373, %v9898
        %v10395 = vsel %vm10386, %v10374, %v9900
        %v10396 = vsel %vm10386, %v10375, %v9902
        %v10397 = vsel %vm10386, %v10376, %v9904
        %v10398 = vsel %vm10386, %v10377, %v9906
        %v10399 = vsel %vm10386, %v10378, %v9908
        %v10400 = vsel %vm10386, %v10379, %v9910
        %v10401 = vsel %vm10386, %v10380, %v9912
        %v10402 = vsel %vm10386, %v10381, %v9914
        %v10403 = vsel %vm10386, %v10382, %v9916
        %v10404 = vsel %vm10386, %v10383, %v9918
        %v10405 = vsel %vm10386, %v10384, %v9920
        %v10406 = vsel %vm10386, %v10385, %v9922
        %vm10407 = vcmask 687104
        %v10408 = vsel %vm10407, %v10387, %v9957
        %v10409 = vsel %vm10407, %v10388, %v9959
        %v10410 = vsel %vm10407, %v10389, %v9961
        %v10411 = vsel %vm10407, %v10390, %v9963
        %v10412 = vsel %vm10407, %v10391, %v9965
        %v10413 = vsel %vm10407, %v10392, %v9967
        %v10414 = vsel %vm10407, %v10393, %v9969
        %v10415 = vsel %vm10407, %v10394, %v9971
        %v10416 = vsel %vm10407, %v10395, %v9973
        %v10417 = vsel %vm10407, %v10396, %v9975
        %v10418 = vsel %vm10407, %v10397, %v9977
        %v10419 = vsel %vm10407, %v10398, %v9979
        %v10420 = vsel %vm10407, %v10399, %v9981
        %v10421 = vsel %vm10407, %v10400, %v9983
        %v10422 = vsel %vm10407, %v10401, %v9985
        %v10423 = vsel %vm10407, %v10402, %v9987
        %v10424 = vsel %vm10407, %v10403, %v9989
        %v10425 = vsel %vm10407, %v10404, %v9991
        %v10426 = vsel %vm10407, %v10405, %v9993
        %v10427 = vsel %vm10407, %v10406, %v9995
        %vm10428 = vcmask 736256
        %v10429 = vsel %vm10428, %v10408, %v10075
        %v10430 = vsel %vm10428, %v10409, %v10077
        %v10431 = vsel %vm10428, %v10410, %v10079
        %v10432 = vsel %vm10428, %v10411, %v10081
        %v10433 = vsel %vm10428, %v10412, %v10083
        %v10434 = vsel %vm10428, %v10413, %v10085
        %v10435 = vsel %vm10428, %v10414, %v10087
        %v10436 = vsel %vm10428, %v10415, %v10089
        %v10437 = vsel %vm10428, %v10416, %v10091
        %v10438 = vsel %vm10428, %v10417, %v10093
        %v10439 = vsel %vm10428, %v10418, %v10095
        %v10440 = vsel %vm10428, %v10419, %v10097
        %v10441 = vsel %vm10428, %v10420, %v10099
        %v10442 = vsel %vm10428, %v10421, %v10101
        %v10443 = vsel %vm10428, %v10422, %v10103
        %v10444 = vsel %vm10428, %v10423, %v10105
        %v10445 = vsel %vm10428, %v10424, %v10107
        %v10446 = vsel %vm10428, %v10425, %v10109
        %v10447 = vsel %vm10428, %v10426, %v10111
        %v10448 = vsel %vm10428, %v10427, %v10113
        %v10450 = vlaneseq
        %v10451 = vshrl.u32 %v10450, 7
        %v10452 = vsub.s32 0, %v10451
        %v10453 = vrot.slane %v7811, %v10452
        %v10454 = vsel %vm8329, %v10037, %v10033
        %v10455 = vsel %vm8331, %v10041, %v10454
        %v10456 = vsel %vm8333, %v10045, %v10455
        %v10457 = vsel %vm8335, %v10049, %v10456
        %v10458 = vsel %vm8337, %v10053, %v10457
        %v10459 = vsel %vm8339, %v10057, %v10458
        %v10460 = vsel %vm8341, %v10061, %v10459
        %v10461 = vsel %vm8329, %v10453, %v10065
        %v10483 = vlaneseq
        %v10484 = vshrl.u32 %v10483, 7
        %v10485 = vsub.s32 0, %v10484
        %v10486 = vrot.slane %v7812, %v10485
        %v10487 = vsel %vm8329, %v10041, %v10037
        %v10488 = vsel %vm8331, %v10045, %v10487
        %v10489 = vsel %vm8333, %v10049, %v10488
        %v10490 = vsel %vm8335, %v10053, %v10489
        %v10491 = vsel %vm8337, %v10057, %v10490
        %v10492 = vsel %vm8339, %v10061, %v10491
        %v10493 = vsel %vm8341, %v10065, %v10492
        %v10494 = vsel %vm8329, %v10486, %v10453
        %10495 = vrot.lane.b32.xlu0 %v8706, 6
        %v10496 = vpop.permute.xlu0 %10495
        %10497 = vrot.lane.b32.xlu0 %v8707, 6
        %v10498 = vpop.permute.xlu0 %10497
        %10499 = vrot.lane.b32.xlu0 %v8714, 6
        %v10500 = vpop.permute.xlu0 %10499
        %10501 = vrot.lane.b32.xlu0 %v8715, 6
        %v10502 = vpop.permute.xlu0 %10501
        %10503 = vrot.lane.b32.xlu0 %v8722, 6
        %v10504 = vpop.permute.xlu0 %10503
        %10505 = vrot.lane.b32.xlu0 %v8723, 6
        %v10506 = vpop.permute.xlu0 %10505
        %10507 = vrot.lane.b32.xlu0 %v8730, 6
        %v10508 = vpop.permute.xlu0 %10507
        %10509 = vrot.lane.b32.xlu0 %v8731, 6
        %v10510 = vpop.permute.xlu0 %10509
        %10511 = vrot.lane.b32.xlu0 %v8738, 6
        %v10512 = vpop.permute.xlu0 %10511
        %10513 = vrot.lane.b32.xlu0 %v8739, 6
        %v10514 = vpop.permute.xlu0 %10513
        %10515 = vrot.lane.b32.xlu0 %v8746, 6
        %v10516 = vpop.permute.xlu0 %10515
        %10517 = vrot.lane.b32.xlu0 %v8747, 6
        %v10518 = vpop.permute.xlu0 %10517
        %10519 = vrot.lane.b32.xlu0 %v8754, 6
        %v10520 = vpop.permute.xlu0 %10519
        %10521 = vrot.lane.b32.xlu0 %v8755, 6
        %v10522 = vpop.permute.xlu0 %10521
        %10523 = vrot.lane.b32.xlu0 %v9398, 6
        %v10524 = vpop.permute.xlu0 %10523
        %10525 = vrot.lane.b32.xlu0 %v9399, 6
        %v10526 = vpop.permute.xlu0 %10525
        %10527 = vrot.lane.b32.xlu0 %v9808, 6
        %v10528 = vpop.permute.xlu0 %10527
        %10529 = vrot.lane.b32.xlu0 %v9809, 6
        %v10530 = vpop.permute.xlu0 %10529
        %10531 = vrot.lane.b32.xlu0 %v10493, 6
        %v10532 = vpop.permute.xlu0 %10531
        %10533 = vrot.lane.b32.xlu0 %v10494, 6
        %v10534 = vpop.permute.xlu0 %10533
        %v10556 = vlaneseq
        %v10557 = vshrl.u32 %v10556, 7
        %v10558 = vsub.s32 0, %v10557
        %v10559 = vrot.slane %v7813, %v10558
        %v10560 = vsel %vm8329, %v10045, %v10041
        %v10561 = vsel %vm8331, %v10049, %v10560
        %v10562 = vsel %vm8333, %v10053, %v10561
        %v10563 = vsel %vm8335, %v10057, %v10562
        %v10564 = vsel %vm8337, %v10061, %v10563
        %v10565 = vsel %vm8339, %v10065, %v10564
        %v10566 = vsel %vm8341, %v10453, %v10565
        %v10567 = vsel %vm8329, %v10559, %v10486
        %10568 = vrot.lane.b32.xlu0 %v8896, 12
        %v10569 = vpop.permute.xlu0 %10568
        %10570 = vrot.lane.b32.xlu0 %v8897, 12
        %v10571 = vpop.permute.xlu0 %10570
        %10572 = vrot.lane.b32.xlu0 %v8904, 12
        %v10573 = vpop.permute.xlu0 %10572
        %10574 = vrot.lane.b32.xlu0 %v8905, 12
        %v10575 = vpop.permute.xlu0 %10574
        %10576 = vrot.lane.b32.xlu0 %v8912, 12
        %v10577 = vpop.permute.xlu0 %10576
        %10578 = vrot.lane.b32.xlu0 %v8913, 12
        %v10579 = vpop.permute.xlu0 %10578
        %10580 = vrot.lane.b32.xlu0 %v8920, 12
        %v10581 = vpop.permute.xlu0 %10580
        %10582 = vrot.lane.b32.xlu0 %v8921, 12
        %v10583 = vpop.permute.xlu0 %10582
        %10584 = vrot.lane.b32.xlu0 %v8928, 12
        %v10585 = vpop.permute.xlu0 %10584
        %10586 = vrot.lane.b32.xlu0 %v8929, 12
        %v10587 = vpop.permute.xlu0 %10586
        %10588 = vrot.lane.b32.xlu0 %v8936, 12
        %v10589 = vpop.permute.xlu0 %10588
        %10590 = vrot.lane.b32.xlu0 %v8937, 12
        %v10591 = vpop.permute.xlu0 %10590
        %10592 = vrot.lane.b32.xlu0 %v8944, 12
        %v10593 = vpop.permute.xlu0 %10592
        %10594 = vrot.lane.b32.xlu0 %v8945, 12
        %v10595 = vpop.permute.xlu0 %10594
        %10596 = vrot.lane.b32.xlu0 %v9471, 12
        %v10597 = vpop.permute.xlu0 %10596
        %10598 = vrot.lane.b32.xlu0 %v9472, 12
        %v10599 = vpop.permute.xlu0 %10598
        %10600 = vrot.lane.b32.xlu0 %v9881, 12
        %v10601 = vpop.permute.xlu0 %10600
        %10602 = vrot.lane.b32.xlu0 %v9882, 12
        %v10603 = vpop.permute.xlu0 %10602
        %10604 = vrot.lane.b32.xlu0 %v10566, 12
        %v10605 = vpop.permute.xlu0 %10604
        %10606 = vrot.lane.b32.xlu0 %v10567, 12
        %v10607 = vpop.permute.xlu0 %10606
        %v10629 = vlaneseq
        %v10630 = vshrl.u32 %v10629, 7
        %v10631 = vsub.s32 0, %v10630
        %v10632 = vrot.slane %v7814, %v10631
        %v10633 = vsel %vm8329, %v10049, %v10045
        %v10634 = vsel %vm8331, %v10053, %v10633
        %v10635 = vsel %vm8333, %v10057, %v10634
        %v10636 = vsel %vm8335, %v10061, %v10635
        %v10637 = vsel %vm8337, %v10065, %v10636
        %v10638 = vsel %vm8339, %v10453, %v10637
        %v10639 = vsel %vm8341, %v10486, %v10638
        %v10640 = vsel %vm8329, %v10632, %v10559
        %10641 = vrot.lane.b32.xlu0 %v9086, 18
        %v10642 = vpop.permute.xlu0 %10641
        %10643 = vrot.lane.b32.xlu0 %v9087, 18
        %v10644 = vpop.permute.xlu0 %10643
        %10645 = vrot.lane.b32.xlu0 %v9094, 18
        %v10646 = vpop.permute.xlu0 %10645
        %10647 = vrot.lane.b32.xlu0 %v9095, 18
        %v10648 = vpop.permute.xlu0 %10647
        %10649 = vrot.lane.b32.xlu0 %v9102, 18
        %v10650 = vpop.permute.xlu0 %10649
        %10651 = vrot.lane.b32.xlu0 %v9103, 18
        %v10652 = vpop.permute.xlu0 %10651
        %10653 = vrot.lane.b32.xlu0 %v9110, 18
        %v10654 = vpop.permute.xlu0 %10653
        %10655 = vrot.lane.b32.xlu0 %v9111, 18
        %v10656 = vpop.permute.xlu0 %10655
        %10657 = vrot.lane.b32.xlu0 %v9118, 18
        %v10658 = vpop.permute.xlu0 %10657
        %10659 = vrot.lane.b32.xlu0 %v9119, 18
        %v10660 = vpop.permute.xlu0 %10659
        %10661 = vrot.lane.b32.xlu0 %v9126, 18
        %v10662 = vpop.permute.xlu0 %10661
        %10663 = vrot.lane.b32.xlu0 %v9127, 18
        %v10664 = vpop.permute.xlu0 %10663
        %10665 = vrot.lane.b32.xlu0 %v9134, 18
        %v10666 = vpop.permute.xlu0 %10665
        %10667 = vrot.lane.b32.xlu0 %v9135, 18
        %v10668 = vpop.permute.xlu0 %10667
        %10669 = vrot.lane.b32.xlu0 %v9544, 18
        %v10670 = vpop.permute.xlu0 %10669
        %10671 = vrot.lane.b32.xlu0 %v9545, 18
        %v10672 = vpop.permute.xlu0 %10671
        %10673 = vrot.lane.b32.xlu0 %v9954, 18
        %v10674 = vpop.permute.xlu0 %10673
        %10675 = vrot.lane.b32.xlu0 %v9955, 18
        %v10676 = vpop.permute.xlu0 %10675
        %10677 = vrot.lane.b32.xlu0 %v10639, 18
        %v10678 = vpop.permute.xlu0 %10677
        %10679 = vrot.lane.b32.xlu0 %v10640, 18
        %v10680 = vpop.permute.xlu0 %10679
        %v10711 = vlaneseq
        %v10712 = vshrl.u32 %v10711, 7
        %v10713 = vsub.s32 0, %v10712
        %v10714 = vrot.slane %v7815, %v10713
        %v10715 = vlaneseq
        %v10716 = vshrl.u32 %v10715, 7
        %v10717 = vsub.s32 0, %v10716
        %v10718 = vrot.slane %v7816, %v10717
        %v10719 = vlaneseq
        %v10720 = vshrl.u32 %v10719, 7
        %v10721 = vsub.s32 0, %v10720
        %v10722 = vrot.slane %v7817, %v10721
        %v10723 = vlaneseq
        %v10724 = vshrl.u32 %v10723, 7
        %v10725 = vsub.s32 0, %v10724
        %v10726 = vrot.slane %v7818, %v10725
        %v10727 = vlaneseq
        %v10728 = vshrl.u32 %v10727, 7
        %v10729 = vsub.s32 0, %v10728
        %v10730 = vrot.slane %v7819, %v10729
        %v10731 = vlaneseq
        %v10732 = vshrl.u32 %v10731, 7
        %v10733 = vsub.s32 0, %v10732
        %v10734 = vrot.slane %v7820, %v10733
        %v10735 = vlaneseq
        %v10736 = vshrl.u32 %v10735, 7
        %v10737 = vsub.s32 0, %v10736
        %v10738 = vrot.slane %v7821, %v10737
        %v10739 = vlaneseq
        %v10740 = vshrl.u32 %v10739, 7
        %v10741 = vsub.s32 0, %v10740
        %v10742 = vrot.slane %v7822, %v10741
        %v10743 = vlaneseq
        %v10744 = vshrl.u32 %v10743, 7
        %v10745 = vsub.s32 0, %v10744
        %v10746 = vrot.slane %v7823, %v10745
        %v10747 = vlaneseq
        %v10748 = vshrl.u32 %v10747, 7
        %v10749 = vsub.s32 0, %v10748
        %v10750 = vrot.slane %v7824, %v10749
        %v10751 = vsel %vm8329, %v10718, %v10714
        %v10752 = vsel %vm8331, %v10722, %v10751
        %v10753 = vsel %vm8333, %v10726, %v10752
        %v10754 = vsel %vm8335, %v10730, %v10753
        %v10755 = vsel %vm8337, %v10734, %v10754
        %v10756 = vsel %vm8339, %v10738, %v10755
        %v10757 = vsel %vm8341, %v10742, %v10756
        %v10758 = vsel %vm8329, %v10750, %v10746
        %10759 = vrot.lane.b32.xlu0 %v8374, 24
        %v10760 = vpop.permute.xlu0 %10759
        %10761 = vrot.lane.b32.xlu0 %v8375, 24
        %v10762 = vpop.permute.xlu0 %10761
        %10763 = vrot.lane.b32.xlu0 %v8382, 24
        %v10764 = vpop.permute.xlu0 %10763
        %10765 = vrot.lane.b32.xlu0 %v8383, 24
        %v10766 = vpop.permute.xlu0 %10765
        %10767 = vrot.lane.b32.xlu0 %v8390, 24
        %v10768 = vpop.permute.xlu0 %10767
        %10769 = vrot.lane.b32.xlu0 %v8391, 24
        %v10770 = vpop.permute.xlu0 %10769
        %10771 = vrot.lane.b32.xlu0 %v8398, 24
        %v10772 = vpop.permute.xlu0 %10771
        %10773 = vrot.lane.b32.xlu0 %v8399, 24
        %v10774 = vpop.permute.xlu0 %10773
        %10775 = vrot.lane.b32.xlu0 %v8406, 24
        %v10776 = vpop.permute.xlu0 %10775
        %10777 = vrot.lane.b32.xlu0 %v8407, 24
        %v10778 = vpop.permute.xlu0 %10777
        %10779 = vrot.lane.b32.xlu0 %v8414, 24
        %v10780 = vpop.permute.xlu0 %10779
        %10781 = vrot.lane.b32.xlu0 %v8415, 24
        %v10782 = vpop.permute.xlu0 %10781
        %10783 = vrot.lane.b32.xlu0 %v9252, 24
        %v10784 = vpop.permute.xlu0 %10783
        %10785 = vrot.lane.b32.xlu0 %v9253, 24
        %v10786 = vpop.permute.xlu0 %10785
        %10787 = vrot.lane.b32.xlu0 %v9662, 24
        %v10788 = vpop.permute.xlu0 %10787
        %10789 = vrot.lane.b32.xlu0 %v9663, 24
        %v10790 = vpop.permute.xlu0 %10789
        %10791 = vrot.lane.b32.xlu0 %v10072, 24
        %v10792 = vpop.permute.xlu0 %10791
        %10793 = vrot.lane.b32.xlu0 %v10073, 24
        %v10794 = vpop.permute.xlu0 %10793
        %10795 = vrot.lane.b32.xlu0 %v10757, 24
        %v10796 = vpop.permute.xlu0 %10795
        %10797 = vrot.lane.b32.xlu0 %v10758, 24
        %v10798 = vpop.permute.xlu0 %10797
        %v10820 = vlaneseq
        %v10821 = vshrl.u32 %v10820, 7
        %v10822 = vsub.s32 0, %v10821
        %v10823 = vrot.slane %v7825, %v10822
        %v10824 = vsel %vm8329, %v10722, %v10718
        %v10825 = vsel %vm8331, %v10726, %v10824
        %v10826 = vsel %vm8333, %v10730, %v10825
        %v10827 = vsel %vm8335, %v10734, %v10826
        %v10828 = vsel %vm8337, %v10738, %v10827
        %v10829 = vsel %vm8339, %v10742, %v10828
        %v10830 = vsel %vm8341, %v10746, %v10829
        %v10831 = vsel %vm8329, %v10823, %v10750
        %10832 = vrot.lane.b32.xlu0 %v8524, 30
        %v10833 = vpop.permute.xlu0 %10832
        %10834 = vrot.lane.b32.xlu0 %v8525, 30
        %v10835 = vpop.permute.xlu0 %10834
        %10836 = vrot.lane.b32.xlu0 %v8532, 30
        %v10837 = vpop.permute.xlu0 %10836
        %10838 = vrot.lane.b32.xlu0 %v8533, 30
        %v10839 = vpop.permute.xlu0 %10838
        %10840 = vrot.lane.b32.xlu0 %v8540, 30
        %v10841 = vpop.permute.xlu0 %10840
        %10842 = vrot.lane.b32.xlu0 %v8541, 30
        %v10843 = vpop.permute.xlu0 %10842
        %10844 = vrot.lane.b32.xlu0 %v8548, 30
        %v10845 = vpop.permute.xlu0 %10844
        %10846 = vrot.lane.b32.xlu0 %v8549, 30
        %v10847 = vpop.permute.xlu0 %10846
        %10848 = vrot.lane.b32.xlu0 %v8556, 30
        %v10849 = vpop.permute.xlu0 %10848
        %10850 = vrot.lane.b32.xlu0 %v8557, 30
        %v10851 = vpop.permute.xlu0 %10850
        %10852 = vrot.lane.b32.xlu0 %v8564, 30
        %v10853 = vpop.permute.xlu0 %10852
        %10854 = vrot.lane.b32.xlu0 %v8565, 30
        %v10855 = vpop.permute.xlu0 %10854
        %10856 = vrot.lane.b32.xlu0 %v9325, 30
        %v10857 = vpop.permute.xlu0 %10856
        %10858 = vrot.lane.b32.xlu0 %v9326, 30
        %v10859 = vpop.permute.xlu0 %10858
        %10860 = vrot.lane.b32.xlu0 %v9735, 30
        %v10861 = vpop.permute.xlu0 %10860
        %10862 = vrot.lane.b32.xlu0 %v9736, 30
        %v10863 = vpop.permute.xlu0 %10862
        %10864 = vrot.lane.b32.xlu0 %v10460, 30
        %v10865 = vpop.permute.xlu0 %10864
        %10866 = vrot.lane.b32.xlu0 %v10461, 30
        %v10867 = vpop.permute.xlu0 %10866
        %10868 = vrot.lane.b32.xlu0 %v10830, 30
        %v10869 = vpop.permute.xlu0 %10868
        %10870 = vrot.lane.b32.xlu0 %v10831, 30
        %v10871 = vpop.permute.xlu0 %10870
        %v10893 = vlaneseq
        %v10894 = vshrl.u32 %v10893, 7
        %v10895 = vsub.s32 0, %v10894
        %v10896 = vrot.slane %v7826, %v10895
        %v10897 = vsel %vm8329, %v10726, %v10722
        %v10898 = vsel %vm8331, %v10730, %v10897
        %v10899 = vsel %vm8333, %v10734, %v10898
        %v10900 = vsel %vm8335, %v10738, %v10899
        %v10901 = vsel %vm8337, %v10742, %v10900
        %v10902 = vsel %vm8339, %v10746, %v10901
        %v10903 = vsel %vm8341, %v10750, %v10902
        %v10904 = vsel %vm8329, %v10896, %v10823
        %10905 = vrot.lane.b32.xlu0 %v8714, 36
        %v10906 = vpop.permute.xlu0 %10905
        %10907 = vrot.lane.b32.xlu0 %v8715, 36
        %v10908 = vpop.permute.xlu0 %10907
        %10909 = vrot.lane.b32.xlu0 %v8722, 36
        %v10910 = vpop.permute.xlu0 %10909
        %10911 = vrot.lane.b32.xlu0 %v8723, 36
        %v10912 = vpop.permute.xlu0 %10911
        %10913 = vrot.lane.b32.xlu0 %v8730, 36
        %v10914 = vpop.permute.xlu0 %10913
        %10915 = vrot.lane.b32.xlu0 %v8731, 36
        %v10916 = vpop.permute.xlu0 %10915
        %10917 = vrot.lane.b32.xlu0 %v8738, 36
        %v10918 = vpop.permute.xlu0 %10917
        %10919 = vrot.lane.b32.xlu0 %v8739, 36
        %v10920 = vpop.permute.xlu0 %10919
        %10921 = vrot.lane.b32.xlu0 %v8746, 36
        %v10922 = vpop.permute.xlu0 %10921
        %10923 = vrot.lane.b32.xlu0 %v8747, 36
        %v10924 = vpop.permute.xlu0 %10923
        %10925 = vrot.lane.b32.xlu0 %v8754, 36
        %v10926 = vpop.permute.xlu0 %10925
        %10927 = vrot.lane.b32.xlu0 %v8755, 36
        %v10928 = vpop.permute.xlu0 %10927
        %10929 = vrot.lane.b32.xlu0 %v9398, 36
        %v10930 = vpop.permute.xlu0 %10929
        %10931 = vrot.lane.b32.xlu0 %v9399, 36
        %v10932 = vpop.permute.xlu0 %10931
        %10933 = vrot.lane.b32.xlu0 %v9808, 36
        %v10934 = vpop.permute.xlu0 %10933
        %10935 = vrot.lane.b32.xlu0 %v9809, 36
        %v10936 = vpop.permute.xlu0 %10935
        %10937 = vrot.lane.b32.xlu0 %v10493, 36
        %v10938 = vpop.permute.xlu0 %10937
        %10939 = vrot.lane.b32.xlu0 %v10494, 36
        %v10940 = vpop.permute.xlu0 %10939
        %10941 = vrot.lane.b32.xlu0 %v10903, 36
        %v10942 = vpop.permute.xlu0 %10941
        %10943 = vrot.lane.b32.xlu0 %v10904, 36
        %v10944 = vpop.permute.xlu0 %10943
        %v10966 = vlaneseq
        %v10967 = vshrl.u32 %v10966, 7
        %v10968 = vsub.s32 0, %v10967
        %v10969 = vrot.slane %v7827, %v10968
        %v10970 = vsel %vm8329, %v10730, %v10726
        %v10971 = vsel %vm8331, %v10734, %v10970
        %v10972 = vsel %vm8333, %v10738, %v10971
        %v10973 = vsel %vm8335, %v10742, %v10972
        %v10974 = vsel %vm8337, %v10746, %v10973
        %v10975 = vsel %vm8339, %v10750, %v10974
        %v10976 = vsel %vm8341, %v10823, %v10975
        %v10977 = vsel %vm8329, %v10969, %v10896
        %10978 = vrot.lane.b32.xlu0 %v8904, 42
        %v10979 = vpop.permute.xlu0 %10978
        %10980 = vrot.lane.b32.xlu0 %v8905, 42
        %v10981 = vpop.permute.xlu0 %10980
        %10982 = vrot.lane.b32.xlu0 %v8912, 42
        %v10983 = vpop.permute.xlu0 %10982
        %10984 = vrot.lane.b32.xlu0 %v8913, 42
        %v10985 = vpop.permute.xlu0 %10984
        %10986 = vrot.lane.b32.xlu0 %v8920, 42
        %v10987 = vpop.permute.xlu0 %10986
        %10988 = vrot.lane.b32.xlu0 %v8921, 42
        %v10989 = vpop.permute.xlu0 %10988
        %10990 = vrot.lane.b32.xlu0 %v8928, 42
        %v10991 = vpop.permute.xlu0 %10990
        %10992 = vrot.lane.b32.xlu0 %v8929, 42
        %v10993 = vpop.permute.xlu0 %10992
        %10994 = vrot.lane.b32.xlu0 %v8936, 42
        %v10995 = vpop.permute.xlu0 %10994
        %10996 = vrot.lane.b32.xlu0 %v8937, 42
        %v10997 = vpop.permute.xlu0 %10996
        %10998 = vrot.lane.b32.xlu0 %v8944, 42
        %v10999 = vpop.permute.xlu0 %10998
        %11000 = vrot.lane.b32.xlu0 %v8945, 42
        %v11001 = vpop.permute.xlu0 %11000
        %11002 = vrot.lane.b32.xlu0 %v9471, 42
        %v11003 = vpop.permute.xlu0 %11002
        %11004 = vrot.lane.b32.xlu0 %v9472, 42
        %v11005 = vpop.permute.xlu0 %11004
        %11006 = vrot.lane.b32.xlu0 %v9881, 42
        %v11007 = vpop.permute.xlu0 %11006
        %11008 = vrot.lane.b32.xlu0 %v9882, 42
        %v11009 = vpop.permute.xlu0 %11008
        %11010 = vrot.lane.b32.xlu0 %v10566, 42
        %v11011 = vpop.permute.xlu0 %11010
        %11012 = vrot.lane.b32.xlu0 %v10567, 42
        %v11013 = vpop.permute.xlu0 %11012
        %11014 = vrot.lane.b32.xlu0 %v10976, 42
        %v11015 = vpop.permute.xlu0 %11014
        %11016 = vrot.lane.b32.xlu0 %v10977, 42
        %v11017 = vpop.permute.xlu0 %11016
        %v11039 = vlaneseq
        %v11040 = vshrl.u32 %v11039, 7
        %v11041 = vsub.s32 0, %v11040
        %v11042 = vrot.slane %v7828, %v11041
        %v11043 = vsel %vm8329, %v10734, %v10730
        %v11044 = vsel %vm8331, %v10738, %v11043
        %v11045 = vsel %vm8333, %v10742, %v11044
        %v11046 = vsel %vm8335, %v10746, %v11045
        %v11047 = vsel %vm8337, %v10750, %v11046
        %v11048 = vsel %vm8339, %v10823, %v11047
        %v11049 = vsel %vm8341, %v10896, %v11048
        %v11050 = vsel %vm8329, %v11042, %v10969
        %11051 = vrot.lane.b32.xlu0 %v9094, 48
        %v11052 = vpop.permute.xlu0 %11051
        %11053 = vrot.lane.b32.xlu0 %v9095, 48
        %v11054 = vpop.permute.xlu0 %11053
        %11055 = vrot.lane.b32.xlu0 %v9102, 48
        %v11056 = vpop.permute.xlu0 %11055
        %11057 = vrot.lane.b32.xlu0 %v9103, 48
        %v11058 = vpop.permute.xlu0 %11057
        %11059 = vrot.lane.b32.xlu0 %v9110, 48
        %v11060 = vpop.permute.xlu0 %11059
        %11061 = vrot.lane.b32.xlu0 %v9111, 48
        %v11062 = vpop.permute.xlu0 %11061
        %11063 = vrot.lane.b32.xlu0 %v9118, 48
        %v11064 = vpop.permute.xlu0 %11063
        %11065 = vrot.lane.b32.xlu0 %v9119, 48
        %v11066 = vpop.permute.xlu0 %11065
        %11067 = vrot.lane.b32.xlu0 %v9126, 48
        %v11068 = vpop.permute.xlu0 %11067
        %11069 = vrot.lane.b32.xlu0 %v9127, 48
        %v11070 = vpop.permute.xlu0 %11069
        %11071 = vrot.lane.b32.xlu0 %v9134, 48
        %v11072 = vpop.permute.xlu0 %11071
        %11073 = vrot.lane.b32.xlu0 %v9135, 48
        %v11074 = vpop.permute.xlu0 %11073
        %11075 = vrot.lane.b32.xlu0 %v9544, 48
        %v11076 = vpop.permute.xlu0 %11075
        %11077 = vrot.lane.b32.xlu0 %v9545, 48
        %v11078 = vpop.permute.xlu0 %11077
        %11079 = vrot.lane.b32.xlu0 %v9954, 48
        %v11080 = vpop.permute.xlu0 %11079
        %11081 = vrot.lane.b32.xlu0 %v9955, 48
        %v11082 = vpop.permute.xlu0 %11081
        %11083 = vrot.lane.b32.xlu0 %v10639, 48
        %v11084 = vpop.permute.xlu0 %11083
        %11085 = vrot.lane.b32.xlu0 %v10640, 48
        %v11086 = vpop.permute.xlu0 %11085
        %11087 = vrot.lane.b32.xlu0 %v11049, 48
        %v11088 = vpop.permute.xlu0 %11087
        %11089 = vrot.lane.b32.xlu0 %v11050, 48
        %v11090 = vpop.permute.xlu0 %11089
        %v11111 = vsel %vm10134, %v8516, %v10496
        %v11112 = vsel %vm10134, %v8517, %v10498
        %v11113 = vsel %vm10134, %v8524, %v10500
        %v11114 = vsel %vm10134, %v8525, %v10502
        %v11115 = vsel %vm10134, %v8532, %v10504
        %v11116 = vsel %vm10134, %v8533, %v10506
        %v11117 = vsel %vm10134, %v8540, %v10508
        %v11118 = vsel %vm10134, %v8541, %v10510
        %v11119 = vsel %vm10134, %v8548, %v10512
        %v11120 = vsel %vm10134, %v8549, %v10514
        %v11121 = vsel %vm10134, %v8556, %v10516
        %v11122 = vsel %vm10134, %v8557, %v10518
        %v11123 = vsel %vm10134, %v8564, %v10520
        %v11124 = vsel %vm10134, %v8565, %v10522
        %v11125 = vsel %vm10134, %v9325, %v10524
        %v11126 = vsel %vm10134, %v9326, %v10526
        %v11127 = vsel %vm10134, %v9735, %v10528
        %v11128 = vsel %vm10134, %v9736, %v10530
        %v11129 = vsel %vm10134, %v10460, %v10532
        %v11130 = vsel %vm10134, %v10461, %v10534
        %v11131 = vsel %vm10155, %v11111, %v10569
        %v11132 = vsel %vm10155, %v11112, %v10571
        %v11133 = vsel %vm10155, %v11113, %v10573
        %v11134 = vsel %vm10155, %v11114, %v10575
        %v11135 = vsel %vm10155, %v11115, %v10577
        %v11136 = vsel %vm10155, %v11116, %v10579
        %v11137 = vsel %vm10155, %v11117, %v10581
        %v11138 = vsel %vm10155, %v11118, %v10583
        %v11139 = vsel %vm10155, %v11119, %v10585
        %v11140 = vsel %vm10155, %v11120, %v10587
        %v11141 = vsel %vm10155, %v11121, %v10589
        %v11142 = vsel %vm10155, %v11122, %v10591
        %v11143 = vsel %vm10155, %v11123, %v10593
        %v11144 = vsel %vm10155, %v11124, %v10595
        %v11145 = vsel %vm10155, %v11125, %v10597
        %v11146 = vsel %vm10155, %v11126, %v10599
        %v11147 = vsel %vm10155, %v11127, %v10601
        %v11148 = vsel %vm10155, %v11128, %v10603
        %v11149 = vsel %vm10155, %v11129, %v10605
        %v11150 = vsel %vm10155, %v11130, %v10607
        %v11151 = vsel %vm10176, %v11131, %v10642
        %v11152 = vsel %vm10176, %v11132, %v10644
        %v11153 = vsel %vm10176, %v11133, %v10646
        %v11154 = vsel %vm10176, %v11134, %v10648
        %v11155 = vsel %vm10176, %v11135, %v10650
        %v11156 = vsel %vm10176, %v11136, %v10652
        %v11157 = vsel %vm10176, %v11137, %v10654
        %v11158 = vsel %vm10176, %v11138, %v10656
        %v11159 = vsel %vm10176, %v11139, %v10658
        %v11160 = vsel %vm10176, %v11140, %v10660
        %v11161 = vsel %vm10176, %v11141, %v10662
        %v11162 = vsel %vm10176, %v11142, %v10664
        %v11163 = vsel %vm10176, %v11143, %v10666
        %v11164 = vsel %vm10176, %v11144, %v10668
        %v11165 = vsel %vm10176, %v11145, %v10670
        %v11166 = vsel %vm10176, %v11146, %v10672
        %v11167 = vsel %vm10176, %v11147, %v10674
        %v11168 = vsel %vm10176, %v11148, %v10676
        %v11169 = vsel %vm10176, %v11149, %v10678
        %v11170 = vsel %vm10176, %v11150, %v10680
        %v11171 = vsel %vm10197, %v11151, %v10760
        %v11172 = vsel %vm10197, %v11152, %v10762
        %v11173 = vsel %vm10197, %v11153, %v10764
        %v11174 = vsel %vm10197, %v11154, %v10766
        %v11175 = vsel %vm10197, %v11155, %v10768
        %v11176 = vsel %vm10197, %v11156, %v10770
        %v11177 = vsel %vm10197, %v11157, %v10772
        %v11178 = vsel %vm10197, %v11158, %v10774
        %v11179 = vsel %vm10197, %v11159, %v10776
        %v11180 = vsel %vm10197, %v11160, %v10778
        %v11181 = vsel %vm10197, %v11161, %v10780
        %v11182 = vsel %vm10197, %v11162, %v10782
        %v11183 = vsel %vm10197, %v11163, %v10784
        %v11184 = vsel %vm10197, %v11164, %v10786
        %v11185 = vsel %vm10197, %v11165, %v10788
        %v11186 = vsel %vm10197, %v11166, %v10790
        %v11187 = vsel %vm10197, %v11167, %v10792
        %v11188 = vsel %vm10197, %v11168, %v10794
        %v11189 = vsel %vm10197, %v11169, %v10796
        %v11190 = vsel %vm10197, %v11170, %v10798
        %v11191 = vsel %vm10218, %v11171, %v10833
        %v11192 = vsel %vm10218, %v11172, %v10835
        %v11193 = vsel %vm10218, %v11173, %v10837
        %v11194 = vsel %vm10218, %v11174, %v10839
        %v11195 = vsel %vm10218, %v11175, %v10841
        %v11196 = vsel %vm10218, %v11176, %v10843
        %v11197 = vsel %vm10218, %v11177, %v10845
        %v11198 = vsel %vm10218, %v11178, %v10847
        %v11199 = vsel %vm10218, %v11179, %v10849
        %v11200 = vsel %vm10218, %v11180, %v10851
        %v11201 = vsel %vm10218, %v11181, %v10853
        %v11202 = vsel %vm10218, %v11182, %v10855
        %v11203 = vsel %vm10218, %v11183, %v10857
        %v11204 = vsel %vm10218, %v11184, %v10859
        %v11205 = vsel %vm10218, %v11185, %v10861
        %v11206 = vsel %vm10218, %v11186, %v10863
        %v11207 = vsel %vm10218, %v11187, %v10865
        %v11208 = vsel %vm10218, %v11188, %v10867
        %v11209 = vsel %vm10218, %v11189, %v10869
        %v11210 = vsel %vm10218, %v11190, %v10871
        %v11211 = vsel %vm10239, %v11191, %v10906
        %v11212 = vsel %vm10239, %v11192, %v10908
        %v11213 = vsel %vm10239, %v11193, %v10910
        %v11214 = vsel %vm10239, %v11194, %v10912
        %v11215 = vsel %vm10239, %v11195, %v10914
        %v11216 = vsel %vm10239, %v11196, %v10916
        %v11217 = vsel %vm10239, %v11197, %v10918
        %v11218 = vsel %vm10239, %v11198, %v10920
        %v11219 = vsel %vm10239, %v11199, %v10922
        %v11220 = vsel %vm10239, %v11200, %v10924
        %v11221 = vsel %vm10239, %v11201, %v10926
        %v11222 = vsel %vm10239, %v11202, %v10928
        %v11223 = vsel %vm10239, %v11203, %v10930
        %v11224 = vsel %vm10239, %v11204, %v10932
        %v11225 = vsel %vm10239, %v11205, %v10934
        %v11226 = vsel %vm10239, %v11206, %v10936
        %v11227 = vsel %vm10239, %v11207, %v10938
        %v11228 = vsel %vm10239, %v11208, %v10940
        %v11229 = vsel %vm10239, %v11209, %v10942
        %v11230 = vsel %vm10239, %v11210, %v10944
        %v11231 = vsel %vm10260, %v11211, %v10979
        %v11232 = vsel %vm10260, %v11212, %v10981
        %v11233 = vsel %vm10260, %v11213, %v10983
        %v11234 = vsel %vm10260, %v11214, %v10985
        %v11235 = vsel %vm10260, %v11215, %v10987
        %v11236 = vsel %vm10260, %v11216, %v10989
        %v11237 = vsel %vm10260, %v11217, %v10991
        %v11238 = vsel %vm10260, %v11218, %v10993
        %v11239 = vsel %vm10260, %v11219, %v10995
        %v11240 = vsel %vm10260, %v11220, %v10997
        %v11241 = vsel %vm10260, %v11221, %v10999
        %v11242 = vsel %vm10260, %v11222, %v11001
        %v11243 = vsel %vm10260, %v11223, %v11003
        %v11244 = vsel %vm10260, %v11224, %v11005
        %v11245 = vsel %vm10260, %v11225, %v11007
        %v11246 = vsel %vm10260, %v11226, %v11009
        %v11247 = vsel %vm10260, %v11227, %v11011
        %v11248 = vsel %vm10260, %v11228, %v11013
        %v11249 = vsel %vm10260, %v11229, %v11015
        %v11250 = vsel %vm10260, %v11230, %v11017
        %v11251 = vsel %vm10281, %v11231, %v11052
        %v11252 = vsel %vm10281, %v11232, %v11054
        %v11253 = vsel %vm10281, %v11233, %v11056
        %v11254 = vsel %vm10281, %v11234, %v11058
        %v11255 = vsel %vm10281, %v11235, %v11060
        %v11256 = vsel %vm10281, %v11236, %v11062
        %v11257 = vsel %vm10281, %v11237, %v11064
        %v11258 = vsel %vm10281, %v11238, %v11066
        %v11259 = vsel %vm10281, %v11239, %v11068
        %v11260 = vsel %vm10281, %v11240, %v11070
        %v11261 = vsel %vm10281, %v11241, %v11072
        %v11262 = vsel %vm10281, %v11242, %v11074
        %v11263 = vsel %vm10281, %v11243, %v11076
        %v11264 = vsel %vm10281, %v11244, %v11078
        %v11265 = vsel %vm10281, %v11245, %v11080
        %v11266 = vsel %vm10281, %v11246, %v11082
        %v11267 = vsel %vm10281, %v11247, %v11084
        %v11268 = vsel %vm10281, %v11248, %v11086
        %v11269 = vsel %vm10281, %v11249, %v11088
        %v11270 = vsel %vm10281, %v11250, %v11090
        %11291 = vrot.lane.b32.xlu0 %v11251, 96
        %v11292 = vpop.permute.xlu0 %11291
        %11293 = vrot.lane.b32.xlu0 %v11252, 96
        %v11294 = vpop.permute.xlu0 %11293
        %11295 = vrot.lane.b32.xlu0 %v11253, 96
        %v11296 = vpop.permute.xlu0 %11295
        %11297 = vrot.lane.b32.xlu0 %v11254, 96
        %v11298 = vpop.permute.xlu0 %11297
        %11299 = vrot.lane.b32.xlu0 %v11255, 96
        %v11300 = vpop.permute.xlu0 %11299
        %11301 = vrot.lane.b32.xlu0 %v11256, 96
        %v11302 = vpop.permute.xlu0 %11301
        %11303 = vrot.lane.b32.xlu0 %v11257, 96
        %v11304 = vpop.permute.xlu0 %11303
        %11305 = vrot.lane.b32.xlu0 %v11258, 96
        %v11306 = vpop.permute.xlu0 %11305
        %11307 = vrot.lane.b32.xlu0 %v11259, 96
        %v11308 = vpop.permute.xlu0 %11307
        %11309 = vrot.lane.b32.xlu0 %v11260, 96
        %v11310 = vpop.permute.xlu0 %11309
        %11311 = vrot.lane.b32.xlu0 %v11261, 96
        %v11312 = vpop.permute.xlu0 %11311
        %11313 = vrot.lane.b32.xlu0 %v11262, 96
        %v11314 = vpop.permute.xlu0 %11313
        %11315 = vrot.lane.b32.xlu0 %v11263, 96
        %v11316 = vpop.permute.xlu0 %11315
        %11317 = vrot.lane.b32.xlu0 %v11264, 96
        %v11318 = vpop.permute.xlu0 %11317
        %11319 = vrot.lane.b32.xlu0 %v11265, 96
        %v11320 = vpop.permute.xlu0 %11319
        %11321 = vrot.lane.b32.xlu0 %v11266, 96
        %v11322 = vpop.permute.xlu0 %11321
        %11323 = vrot.lane.b32.xlu0 %v11267, 96
        %v11324 = vpop.permute.xlu0 %11323
        %11325 = vrot.lane.b32.xlu0 %v11268, 96
        %v11326 = vpop.permute.xlu0 %11325
        %11327 = vrot.lane.b32.xlu0 %v11269, 96
        %v11328 = vpop.permute.xlu0 %11327
        %11329 = vrot.lane.b32.xlu0 %v11270, 96
        %v11330 = vpop.permute.xlu0 %11329
        %vm11351 = vcmask 785408
        %v11352 = vsel %vm11351, %v10429, %v11292
        %v11353 = vsel %vm11351, %v10430, %v11294
        %v11354 = vsel %vm11351, %v10431, %v11296
        %v11355 = vsel %vm11351, %v10432, %v11298
        %v11356 = vsel %vm11351, %v10433, %v11300
        %v11357 = vsel %vm11351, %v10434, %v11302
        %v11358 = vsel %vm11351, %v10435, %v11304
        %v11359 = vsel %vm11351, %v10436, %v11306
        %v11360 = vsel %vm11351, %v10437, %v11308
        %v11361 = vsel %vm11351, %v10438, %v11310
        %v11362 = vsel %vm11351, %v10439, %v11312
        %v11363 = vsel %vm11351, %v10440, %v11314
        %v11364 = vsel %vm11351, %v10441, %v11316
        %v11365 = vsel %vm11351, %v10442, %v11318
        %v11366 = vsel %vm11351, %v10443, %v11320
        %v11367 = vsel %vm11351, %v10444, %v11322
        %v11368 = vsel %vm11351, %v10445, %v11324
        %v11369 = vsel %vm11351, %v10446, %v11326
        %v11370 = vsel %vm11351, %v10447, %v11328
        %v11371 = vsel %vm11351, %v10448, %v11330
        %v11392 = vcombine.low %v11352, %v11292
        %v11393 = vcombine.high %v11352, %v11292
        %v11395 = vunpack.c.l.s4 1983009808
        %v11396 = vunpack.c.0.s8 %v11395
        %v11397 = vlaneseq
        %v11398 = vshrl.u32 %v11397, 7
        %v11399 = vsub.s32 %v11396, %v11398
        %v11400 = vrot.slane %v11392, %v11399
        %v11402 = vunpack.c.l.s4 1983009808
        %v11403 = vunpack.c.0.s8 %v11402
        %v11404 = vlaneseq
        %v11405 = vshrl.u32 %v11404, 7
        %v11406 = vsub.s32 %v11403, %v11405
        %v11407 = vrot.slane %v11393, %v11406
        %v11408 = vcombine.high %v11400, %v11400
        %v11409 = vcombine.high %v11407, %v11407
        %v11410 = vcombine.low %v11353, %v11294
        %v11412 = vunpack.c.l.s4 1983009808
        %v11413 = vunpack.c.0.s8 %v11412
        %v11414 = vlaneseq
        %v11415 = vshrl.u32 %v11414, 7
        %v11416 = vsub.s32 %v11413, %v11415
        %v11417 = vrot.slane %v11410, %v11416
        %v11418 = vcombine.low %v11354, %v11296
        %v11419 = vcombine.high %v11354, %v11296
        %v11421 = vunpack.c.l.s4 1983009808
        %v11422 = vunpack.c.0.s8 %v11421
        %v11423 = vlaneseq
        %v11424 = vshrl.u32 %v11423, 7
        %v11425 = vsub.s32 %v11422, %v11424
        %v11426 = vrot.slane %v11418, %v11425
        %v11428 = vunpack.c.l.s4 1983009808
        %v11429 = vunpack.c.0.s8 %v11428
        %v11430 = vlaneseq
        %v11431 = vshrl.u32 %v11430, 7
        %v11432 = vsub.s32 %v11429, %v11431
        %v11433 = vrot.slane %v11419, %v11432
        %v11434 = vcombine.high %v11426, %v11426
        %v11435 = vcombine.high %v11433, %v11433
        %v11436 = vcombine.low %v11355, %v11298
        %v11438 = vunpack.c.l.s4 1983009808
        %v11439 = vunpack.c.0.s8 %v11438
        %v11440 = vlaneseq
        %v11441 = vshrl.u32 %v11440, 7
        %v11442 = vsub.s32 %v11439, %v11441
        %v11443 = vrot.slane %v11436, %v11442
        %v11444 = vcombine.low %v11356, %v11300
        %v11445 = vcombine.high %v11356, %v11300
        %v11447 = vunpack.c.l.s4 1983009808
        %v11448 = vunpack.c.0.s8 %v11447
        %v11449 = vlaneseq
        %v11450 = vshrl.u32 %v11449, 7
        %v11451 = vsub.s32 %v11448, %v11450
        %v11452 = vrot.slane %v11444, %v11451
        %v11454 = vunpack.c.l.s4 1983009808
        %v11455 = vunpack.c.0.s8 %v11454
        %v11456 = vlaneseq
        %v11457 = vshrl.u32 %v11456, 7
        %v11458 = vsub.s32 %v11455, %v11457
        %v11459 = vrot.slane %v11445, %v11458
        %v11460 = vcombine.high %v11452, %v11452
        %v11461 = vcombine.high %v11459, %v11459
        %v11462 = vcombine.low %v11357, %v11302
        %v11464 = vunpack.c.l.s4 1983009808
        %v11465 = vunpack.c.0.s8 %v11464
        %v11466 = vlaneseq
        %v11467 = vshrl.u32 %v11466, 7
        %v11468 = vsub.s32 %v11465, %v11467
        %v11469 = vrot.slane %v11462, %v11468
        %v11470 = vcombine.low %v11358, %v11304
        %v11471 = vcombine.high %v11358, %v11304
        %v11473 = vunpack.c.l.s4 1983009808
        %v11474 = vunpack.c.0.s8 %v11473
        %v11475 = vlaneseq
        %v11476 = vshrl.u32 %v11475, 7
        %v11477 = vsub.s32 %v11474, %v11476
        %v11478 = vrot.slane %v11470, %v11477
        %v11480 = vunpack.c.l.s4 1983009808
        %v11481 = vunpack.c.0.s8 %v11480
        %v11482 = vlaneseq
        %v11483 = vshrl.u32 %v11482, 7
        %v11484 = vsub.s32 %v11481, %v11483
        %v11485 = vrot.slane %v11471, %v11484
        %v11486 = vcombine.high %v11478, %v11478
        %v11487 = vcombine.high %v11485, %v11485
        %v11488 = vcombine.low %v11359, %v11306
        %v11490 = vunpack.c.l.s4 1983009808
        %v11491 = vunpack.c.0.s8 %v11490
        %v11492 = vlaneseq
        %v11493 = vshrl.u32 %v11492, 7
        %v11494 = vsub.s32 %v11491, %v11493
        %v11495 = vrot.slane %v11488, %v11494
        %v11496 = vcombine.low %v11360, %v11308
        %v11497 = vcombine.high %v11360, %v11308
        %v11499 = vunpack.c.l.s4 1983009808
        %v11500 = vunpack.c.0.s8 %v11499
        %v11501 = vlaneseq
        %v11502 = vshrl.u32 %v11501, 7
        %v11503 = vsub.s32 %v11500, %v11502
        %v11504 = vrot.slane %v11496, %v11503
        %v11506 = vunpack.c.l.s4 1983009808
        %v11507 = vunpack.c.0.s8 %v11506
        %v11508 = vlaneseq
        %v11509 = vshrl.u32 %v11508, 7
        %v11510 = vsub.s32 %v11507, %v11509
        %v11511 = vrot.slane %v11497, %v11510
        %v11512 = vcombine.high %v11504, %v11504
        %v11513 = vcombine.high %v11511, %v11511
        %v11514 = vcombine.low %v11361, %v11310
        %v11516 = vunpack.c.l.s4 1983009808
        %v11517 = vunpack.c.0.s8 %v11516
        %v11518 = vlaneseq
        %v11519 = vshrl.u32 %v11518, 7
        %v11520 = vsub.s32 %v11517, %v11519
        %v11521 = vrot.slane %v11514, %v11520
        %v11522 = vcombine.low %v11362, %v11312
        %v11523 = vcombine.high %v11362, %v11312
        %v11525 = vunpack.c.l.s4 1983009808
        %v11526 = vunpack.c.0.s8 %v11525
        %v11527 = vlaneseq
        %v11528 = vshrl.u32 %v11527, 7
        %v11529 = vsub.s32 %v11526, %v11528
        %v11530 = vrot.slane %v11522, %v11529
        %v11532 = vunpack.c.l.s4 1983009808
        %v11533 = vunpack.c.0.s8 %v11532
        %v11534 = vlaneseq
        %v11535 = vshrl.u32 %v11534, 7
        %v11536 = vsub.s32 %v11533, %v11535
        %v11537 = vrot.slane %v11523, %v11536
        %v11538 = vcombine.high %v11530, %v11530
        %v11539 = vcombine.high %v11537, %v11537
        %v11540 = vcombine.low %v11363, %v11314
        %v11542 = vunpack.c.l.s4 1983009808
        %v11543 = vunpack.c.0.s8 %v11542
        %v11544 = vlaneseq
        %v11545 = vshrl.u32 %v11544, 7
        %v11546 = vsub.s32 %v11543, %v11545
        %v11547 = vrot.slane %v11540, %v11546
        %v11548 = vcombine.low %v11364, %v11316
        %v11549 = vcombine.high %v11364, %v11316
        %v11551 = vunpack.c.l.s4 1983009808
        %v11552 = vunpack.c.0.s8 %v11551
        %v11553 = vlaneseq
        %v11554 = vshrl.u32 %v11553, 7
        %v11555 = vsub.s32 %v11552, %v11554
        %v11556 = vrot.slane %v11548, %v11555
        %v11558 = vunpack.c.l.s4 1983009808
        %v11559 = vunpack.c.0.s8 %v11558
        %v11560 = vlaneseq
        %v11561 = vshrl.u32 %v11560, 7
        %v11562 = vsub.s32 %v11559, %v11561
        %v11563 = vrot.slane %v11549, %v11562
        %v11564 = vcombine.high %v11556, %v11556
        %v11565 = vcombine.high %v11563, %v11563
        %v11566 = vcombine.low %v11365, %v11318
        %v11568 = vunpack.c.l.s4 1983009808
        %v11569 = vunpack.c.0.s8 %v11568
        %v11570 = vlaneseq
        %v11571 = vshrl.u32 %v11570, 7
        %v11572 = vsub.s32 %v11569, %v11571
        %v11573 = vrot.slane %v11566, %v11572
        %v11574 = vcombine.low %v11366, %v11320
        %v11575 = vcombine.high %v11366, %v11320
        %v11577 = vunpack.c.l.s4 1983009808
        %v11578 = vunpack.c.0.s8 %v11577
        %v11579 = vlaneseq
        %v11580 = vshrl.u32 %v11579, 7
        %v11581 = vsub.s32 %v11578, %v11580
        %v11582 = vrot.slane %v11574, %v11581
        %v11584 = vunpack.c.l.s4 1983009808
        %v11585 = vunpack.c.0.s8 %v11584
        %v11586 = vlaneseq
        %v11587 = vshrl.u32 %v11586, 7
        %v11588 = vsub.s32 %v11585, %v11587
        %v11589 = vrot.slane %v11575, %v11588
        %v11590 = vcombine.high %v11582, %v11582
        %v11591 = vcombine.high %v11589, %v11589
        %v11592 = vcombine.low %v11367, %v11322
        %v11594 = vunpack.c.l.s4 1983009808
        %v11595 = vunpack.c.0.s8 %v11594
        %v11596 = vlaneseq
        %v11597 = vshrl.u32 %v11596, 7
        %v11598 = vsub.s32 %v11595, %v11597
        %v11599 = vrot.slane %v11592, %v11598
        %v11600 = vcombine.low %v11368, %v11324
        %v11601 = vcombine.high %v11368, %v11324
        %v11603 = vunpack.c.l.s4 1983009808
        %v11604 = vunpack.c.0.s8 %v11603
        %v11605 = vlaneseq
        %v11606 = vshrl.u32 %v11605, 7
        %v11607 = vsub.s32 %v11604, %v11606
        %v11608 = vrot.slane %v11600, %v11607
        %v11610 = vunpack.c.l.s4 1983009808
        %v11611 = vunpack.c.0.s8 %v11610
        %v11612 = vlaneseq
        %v11613 = vshrl.u32 %v11612, 7
        %v11614 = vsub.s32 %v11611, %v11613
        %v11615 = vrot.slane %v11601, %v11614
        %v11616 = vcombine.high %v11608, %v11608
        %v11617 = vcombine.high %v11615, %v11615
        %v11618 = vcombine.low %v11369, %v11326
        %v11620 = vunpack.c.l.s4 1983009808
        %v11621 = vunpack.c.0.s8 %v11620
        %v11622 = vlaneseq
        %v11623 = vshrl.u32 %v11622, 7
        %v11624 = vsub.s32 %v11621, %v11623
        %v11625 = vrot.slane %v11618, %v11624
        %v11626 = vcombine.low %v11370, %v11328
        %v11627 = vcombine.high %v11370, %v11328
        %v11629 = vunpack.c.l.s4 1983009808
        %v11630 = vunpack.c.0.s8 %v11629
        %v11631 = vlaneseq
        %v11632 = vshrl.u32 %v11631, 7
        %v11633 = vsub.s32 %v11630, %v11632
        %v11634 = vrot.slane %v11626, %v11633
        %v11636 = vunpack.c.l.s4 1983009808
        %v11637 = vunpack.c.0.s8 %v11636
        %v11638 = vlaneseq
        %v11639 = vshrl.u32 %v11638, 7
        %v11640 = vsub.s32 %v11637, %v11639
        %v11641 = vrot.slane %v11627, %v11640
        %v11642 = vcombine.high %v11634, %v11634
        %v11643 = vcombine.high %v11641, %v11641
        %v11644 = vcombine.low %v11371, %v11330
        %v11646 = vunpack.c.l.s4 1983009808
        %v11647 = vunpack.c.0.s8 %v11646
        %v11648 = vlaneseq
        %v11649 = vshrl.u32 %v11648, 7
        %v11650 = vsub.s32 %v11647, %v11649
        %v11651 = vrot.slane %v11644, %v11650
        %v11652 = vld [vmem:[%s3] sm:$0xff]
        %v11653 = vld [vmem:[%s3 + $0x8] sm:$0xff]
        %v11654 = vld [vmem:[%s3 + $0x10] sm:$0xff]
        %v11655 = vld [vmem:[%s3 + $0x18] sm:$0xff]
        %v11656 = vld [vmem:[%s3 + $0x20] sm:$0xff]
        %v11657 = vld [vmem:[%s3 + $0x28] sm:$0xff]
        %v11658 = vld [vmem:[%s3 + $0x30] sm:$0xff]
        %v11659 = vld [vmem:[%s3 + $0x38] sm:$0xff]
        %v11660 = vld [vmem:[%s3 + $0x40] sm:$0xff]
        %v11661 = vld [vmem:[%s3 + $0x48] sm:$0xff]
        %v11662 = vld [vmem:[%s3 + $0x50] sm:$0xff]
        %v11663 = vld [vmem:[%s3 + $0x58] sm:$0xff]
        %v11664 = vld [vmem:[%s3 + $0x60] sm:$0xff]
        %v11665 = vld [vmem:[%s3 + $0x68] sm:$0xff]
        %v11666 = vld [vmem:[%s3 + $0x70] sm:$0xff]
        %v11667 = vld [vmem:[%s3 + $0x78] sm:$0xff]
        %v11668 = vld [vmem:[%s3 + $0x80] sm:$0xff]
        %v11669 = vld [vmem:[%s3 + $0x88] sm:$0xff]
        %v11670 = vld [vmem:[%s3 + $0x90] sm:$0x3f]
        %v11671 = vld [vmem:[%s4] sm:$0x1]
        %v11673 = vlaneseq
        %v11674 = vshrl.u32 %v11673, 7
        %v11675 = vsub.s32 0, %v11674
        %v11676 = vrot.slane %v11671, %v11675
        %v11678 = vcombine.low %v11400, %v11408
        %v11679 = vcombine.low %v11407, %v11409
        %v11681 = vunpack.c.l.s4 1983009808
        %v11682 = vunpack.c.0.s8 %v11681
        %v11683 = vlaneseq
        %v11684 = vshrl.u32 %v11683, 7
        %v11685 = vsub.s32 %v11682, %v11684
        %v11686 = vrot.slane %v11678, %v11685
        %v11688 = vunpack.c.l.s4 1983009808
        %v11689 = vunpack.c.0.s8 %v11688
        %v11690 = vlaneseq
        %v11691 = vshrl.u32 %v11690, 7
        %v11692 = vsub.s32 %v11689, %v11691
        %v11693 = vrot.slane %v11679, %v11692
        %v11694 = vcombine.low %v11686, %v11693
        %v11695 = vcombine.high %v11686, %v11693
        %v11696 = vcombine.low %v11417, %v11426
        %v11697 = vcombine.low %v11434, %v11433
        %v11699 = vunpack.c.l.s4 1983009808
        %v11700 = vunpack.c.0.s8 %v11699
        %v11701 = vlaneseq
        %v11702 = vshrl.u32 %v11701, 7
        %v11703 = vsub.s32 %v11700, %v11702
        %v11704 = vrot.slane %v11696, %v11703
        %v11706 = vunpack.c.l.s4 1983009808
        %v11707 = vunpack.c.0.s8 %v11706
        %v11708 = vlaneseq
        %v11709 = vshrl.u32 %v11708, 7
        %v11710 = vsub.s32 %v11707, %v11709
        %v11711 = vrot.slane %v11697, %v11710
        %v11712 = vcombine.low %v11704, %v11711
        %v11713 = vcombine.high %v11704, %v11711
        %v11714 = vcombine.low %v11435, %v11443
        %v11715 = vcombine.low %v11452, %v11460
        %v11717 = vunpack.c.l.s4 1983009808
        %v11718 = vunpack.c.0.s8 %v11717
        %v11719 = vlaneseq
        %v11720 = vshrl.u32 %v11719, 7
        %v11721 = vsub.s32 %v11718, %v11720
        %v11722 = vrot.slane %v11714, %v11721
        %v11724 = vunpack.c.l.s4 1983009808
        %v11725 = vunpack.c.0.s8 %v11724
        %v11726 = vlaneseq
        %v11727 = vshrl.u32 %v11726, 7
        %v11728 = vsub.s32 %v11725, %v11727
        %v11729 = vrot.slane %v11715, %v11728
        %v11730 = vcombine.low %v11722, %v11729
        %v11731 = vcombine.high %v11722, %v11729
        %v11732 = vcombine.low %v11459, %v11461
        %v11733 = vcombine.low %v11469, %v11478
        %v11735 = vunpack.c.l.s4 1983009808
        %v11736 = vunpack.c.0.s8 %v11735
        %v11737 = vlaneseq
        %v11738 = vshrl.u32 %v11737, 7
        %v11739 = vsub.s32 %v11736, %v11738
        %v11740 = vrot.slane %v11732, %v11739
        %v11742 = vunpack.c.l.s4 1983009808
        %v11743 = vunpack.c.0.s8 %v11742
        %v11744 = vlaneseq
        %v11745 = vshrl.u32 %v11744, 7
        %v11746 = vsub.s32 %v11743, %v11745
        %v11747 = vrot.slane %v11733, %v11746
        %v11748 = vcombine.low %v11740, %v11747
        %v11749 = vcombine.high %v11740, %v11747
        %v11750 = vcombine.low %v11486, %v11485
        %v11751 = vcombine.low %v11487, %v11495
        %v11753 = vunpack.c.l.s4 1983009808
        %v11754 = vunpack.c.0.s8 %v11753
        %v11755 = vlaneseq
        %v11756 = vshrl.u32 %v11755, 7
        %v11757 = vsub.s32 %v11754, %v11756
        %v11758 = vrot.slane %v11750, %v11757
        %v11760 = vunpack.c.l.s4 1983009808
        %v11761 = vunpack.c.0.s8 %v11760
        %v11762 = vlaneseq
        %v11763 = vshrl.u32 %v11762, 7
        %v11764 = vsub.s32 %v11761, %v11763
        %v11765 = vrot.slane %v11751, %v11764
        %v11766 = vcombine.low %v11758, %v11765
        %v11767 = vcombine.high %v11758, %v11765
        %v11768 = vcombine.low %v11504, %v11512
        %v11769 = vcombine.low %v11511, %v11513
        %v11771 = vunpack.c.l.s4 1983009808
        %v11772 = vunpack.c.0.s8 %v11771
        %v11773 = vlaneseq
        %v11774 = vshrl.u32 %v11773, 7
        %v11775 = vsub.s32 %v11772, %v11774
        %v11776 = vrot.slane %v11768, %v11775
        %v11778 = vunpack.c.l.s4 1983009808
        %v11779 = vunpack.c.0.s8 %v11778
        %v11780 = vlaneseq
        %v11781 = vshrl.u32 %v11780, 7
        %v11782 = vsub.s32 %v11779, %v11781
        %v11783 = vrot.slane %v11769, %v11782
        %v11784 = vcombine.low %v11776, %v11783
        %v11785 = vcombine.high %v11776, %v11783
        %v11786 = vcombine.low %v11521, %v11530
        %v11787 = vcombine.low %v11538, %v11537
        %v11789 = vunpack.c.l.s4 1983009808
        %v11790 = vunpack.c.0.s8 %v11789
        %v11791 = vlaneseq
        %v11792 = vshrl.u32 %v11791, 7
        %v11793 = vsub.s32 %v11790, %v11792
        %v11794 = vrot.slane %v11786, %v11793
        %v11796 = vunpack.c.l.s4 1983009808
        %v11797 = vunpack.c.0.s8 %v11796
        %v11798 = vlaneseq
        %v11799 = vshrl.u32 %v11798, 7
        %v11800 = vsub.s32 %v11797, %v11799
        %v11801 = vrot.slane %v11787, %v11800
        %v11802 = vcombine.low %v11794, %v11801
        %v11803 = vcombine.high %v11794, %v11801
        %v11804 = vcombine.low %v11539, %v11547
        %v11805 = vcombine.low %v11556, %v11564
        %v11807 = vunpack.c.l.s4 1983009808
        %v11808 = vunpack.c.0.s8 %v11807
        %v11809 = vlaneseq
        %v11810 = vshrl.u32 %v11809, 7
        %v11811 = vsub.s32 %v11808, %v11810
        %v11812 = vrot.slane %v11804, %v11811
        %v11814 = vunpack.c.l.s4 1983009808
        %v11815 = vunpack.c.0.s8 %v11814
        %v11816 = vlaneseq
        %v11817 = vshrl.u32 %v11816, 7
        %v11818 = vsub.s32 %v11815, %v11817
        %v11819 = vrot.slane %v11805, %v11818
        %v11820 = vcombine.low %v11812, %v11819
        %v11821 = vcombine.high %v11812, %v11819
        %v11822 = vcombine.low %v11563, %v11565
        %v11823 = vcombine.low %v11573, %v11582
        %v11825 = vunpack.c.l.s4 1983009808
        %v11826 = vunpack.c.0.s8 %v11825
        %v11827 = vlaneseq
        %v11828 = vshrl.u32 %v11827, 7
        %v11829 = vsub.s32 %v11826, %v11828
        %v11830 = vrot.slane %v11822, %v11829
        %v11832 = vunpack.c.l.s4 1983009808
        %v11833 = vunpack.c.0.s8 %v11832
        %v11834 = vlaneseq
        %v11835 = vshrl.u32 %v11834, 7
        %v11836 = vsub.s32 %v11833, %v11835
        %v11837 = vrot.slane %v11823, %v11836
        %v11838 = vcombine.low %v11830, %v11837
        %v11839 = vcombine.high %v11830, %v11837
        %v11840 = vcombine.low %v11590, %v11589
        %v11841 = vcombine.low %v11591, %v11599
        %v11843 = vunpack.c.l.s4 1983009808
        %v11844 = vunpack.c.0.s8 %v11843
        %v11845 = vlaneseq
        %v11846 = vshrl.u32 %v11845, 7
        %v11847 = vsub.s32 %v11844, %v11846
        %v11848 = vrot.slane %v11840, %v11847
        %v11850 = vunpack.c.l.s4 1983009808
        %v11851 = vunpack.c.0.s8 %v11850
        %v11852 = vlaneseq
        %v11853 = vshrl.u32 %v11852, 7
        %v11854 = vsub.s32 %v11851, %v11853
        %v11855 = vrot.slane %v11841, %v11854
        %v11856 = vcombine.low %v11848, %v11855
        %v11857 = vcombine.high %v11848, %v11855
        %v11858 = vcombine.low %v11608, %v11616
        %v11859 = vcombine.low %v11615, %v11617
        %v11861 = vunpack.c.l.s4 1983009808
        %v11862 = vunpack.c.0.s8 %v11861
        %v11863 = vlaneseq
        %v11864 = vshrl.u32 %v11863, 7
        %v11865 = vsub.s32 %v11862, %v11864
        %v11866 = vrot.slane %v11858, %v11865
        %v11868 = vunpack.c.l.s4 1983009808
        %v11869 = vunpack.c.0.s8 %v11868
        %v11870 = vlaneseq
        %v11871 = vshrl.u32 %v11870, 7
        %v11872 = vsub.s32 %v11869, %v11871
        %v11873 = vrot.slane %v11859, %v11872
        %v11874 = vcombine.low %v11866, %v11873
        %v11875 = vcombine.high %v11866, %v11873
        %v11876 = vcombine.low %v11625, %v11634
        %v11877 = vcombine.low %v11642, %v11641
        %v11879 = vunpack.c.l.s4 1983009808
        %v11880 = vunpack.c.0.s8 %v11879
        %v11881 = vlaneseq
        %v11882 = vshrl.u32 %v11881, 7
        %v11883 = vsub.s32 %v11880, %v11882
        %v11884 = vrot.slane %v11876, %v11883
        %v11886 = vunpack.c.l.s4 1983009808
        %v11887 = vunpack.c.0.s8 %v11886
        %v11888 = vlaneseq
        %v11889 = vshrl.u32 %v11888, 7
        %v11890 = vsub.s32 %v11887, %v11889
        %v11891 = vrot.slane %v11877, %v11890
        %v11892 = vcombine.low %v11884, %v11891
        %v11893 = vcombine.high %v11884, %v11891
        %v11894 = vcombine.low %v11643, %v11651
        %v11896 = vunpack.c.l.s4 1983009808
        %v11897 = vunpack.c.0.s8 %v11896
        %v11898 = vlaneseq
        %v11899 = vshrl.u32 %v11898, 7
        %v11900 = vsub.s32 %v11897, %v11899
        %v11901 = vrot.slane %v11894, %v11900
        %v11902 = vcombine.high %v11901, %v11901
        %vm11916 = vcmask 179200
        %v11917 = vsel %vm11916, %v11695, 0
        %v11919 = vsel %vm11916, %v11713, 0
        %v11921 = vsel %vm11916, %v11731, 0
        %v11923 = vsel %vm11916, %v11749, 0
        %v11925 = vsel %vm11916, %v11767, 0
        %v11927 = vsel %vm11916, %v11785, 0
        %v11929 = vsel %vm11916, %v11803, 0
        %v11931 = vsel %vm11916, %v11821, 0
        %v11933 = vsel %vm11916, %v11839, 0
        %v11935 = vsel %vm11916, %v11857, 0
        %v11937 = vsel %vm11916, %v11875, 0
        %v11939 = vsel %vm11916, %v11893, 0
        %v11941 = vsel %vm11916, %v11902, 0
        %v11944 = vsel %vm2171, %v11670, 0
        %11946 = vmatprep.subr.mxu0 0.0
        %11947 = vmatpush1.msra.mxu0 %v11652
        %11948 = vmatprep.subr.mxu0 0.0
        %11949 = vmatpush1.msra.mxu0 %v11653
        %11950 = vmatprep.subr.mxu0 0.0
        %11951 = vmatpush1.msra.mxu0 %v11654
        %11952 = vmatprep.subr.mxu0 0.0
        %11953 = vmatpush1.msra.mxu0 %v11655
        %11954 = vmatprep.subr.mxu0 0.0
        %11955 = vmatpush1.msra.mxu0 %v11656
        %11956 = vmatprep.subr.mxu0 0.0
        %11957 = vmatpush1.msra.mxu0 %v11657
        %11958 = vmatprep.subr.mxu0 0.0
        %11959 = vmatpush1.msra.mxu0 %v11658
        %11960 = vmatprep.subr.mxu0 0.0
        %11961 = vmatpush1.msra.mxu0 %v11659
        %11962 = vmatprep.subr.mxu0 0.0
        %11963 = vmatpush1.msra.mxu0 %v11660
        %11964 = vmatprep.subr.mxu0 0.0
        %11965 = vmatpush1.msra.mxu0 %v11661
        %11966 = vmatprep.subr.mxu0 0.0
        %11967 = vmatpush1.msra.mxu0 %v11662
        %11968 = vmatprep.subr.mxu0 0.0
        %11969 = vmatpush1.msra.mxu0 %v11663
        %11970 = vmatprep.subr.mxu0 0.0
        %11971 = vmatpush1.msra.mxu0 %v11664
        %11972 = vmatprep.subr.mxu0 0.0
        %11973 = vmatpush1.msra.mxu0 %v11665
        %11974 = vmatprep.subr.mxu0 0.0
        %11975 = vmatpush1.msra.mxu0 %v11666
        %11976 = vmatprep.subr.mxu0 0.0
        %11977 = vmatpush1.msra.mxu0 %v11667
        %11978 = vmatprep.subr.mxu0 0.0
        %11979 = vmatpush1.msra.mxu0 %v11668
        %11980 = vmatprep.subr.mxu0 0.0
        %11981 = vmatpush1.msra.mxu0 %v11669
        %11982 = vmatprep.subr.mxu0 0.0
        %11983 = vmatpush1.msra.mxu0 %v11944
        %11984 = vmatprep.subr.mxu0 0.0
        %11985 = vmatpush1.msra.mxu0 0.0
        %11986 = vmatprep.subr.mxu0 0.0
        %11987 = vmatpush1.msra.mxu0 0.0
        %11988 = vmatprep.subr.mxu0 0.0
        %11989 = vmatpush1.msra.mxu0 0.0
        %11990 = vmatprep.subr.mxu0 0.0
        %11991 = vmatpush1.msra.mxu0 0.0
        %11992 = vmatprep.subr.mxu0 0.0
        %11993 = vmatpush1.msra.mxu0 0.0
        %11994 = vmatprep.subr.mxu0 0.0
        %11995 = vmatpush1.msra.mxu0 0.0
        %11996 = vmatprep.subr.mxu0 0.0
        %11997 = vmatpush1.msra.mxu0 0.0
        %11998 = vmatprep.subr.mxu0 0.0
        %11999 = vmatpush1.msra.mxu0 0.0
        %12000 = vmatprep.subr.mxu0 0.0
        %12001 = vmatpush1.msra.mxu0 0.0
        %12002 = vmatprep.subr.mxu0 0.0
        %12003 = vmatpush1.msra.mxu0 0.0
        %12004 = vmatprep.subr.mxu0 0.0
        %12005 = vmatpush1.msra.mxu0 0.0
        %12006 = vmatprep.subr.mxu0 0.0
        %12007 = vmatpush1.msra.mxu0 0.0
        %12008 = vmatprep.subr.mxu0 0.0
        %12009 = vmatpush1.msra.mxu0 0.0
        %12010 = vmatprep.mubr.f32.mxu0 %v11917
        %12011 = vmatmul.mubr.f32.gmra.mrb[0].mxu0 %v11694
        %v12012 = vpop.f32.mrb[0].mxu0
        %v12013 = vadd.f32 %v11676, %v12012
        %v12014 = vpop.f32.mrb[0].mxu0
        %12015 = vmatprep.mubr.f32.mxu0 %v11919
        %12016 = vmatmul.mubr.f32.gmra.mrb[0].mxu0 %v11712
        %v12017 = vpop.f32.mrb[0].mxu0
        %v12018 = vadd.f32 %v11676, %v12017
        %v12019 = vpop.f32.mrb[0].mxu0
        %12020 = vmatprep.mubr.f32.mxu0 %v11921
        %12021 = vmatmul.mubr.f32.gmra.mrb[0].mxu0 %v11730
        %v12022 = vpop.f32.mrb[0].mxu0
        %v12023 = vadd.f32 %v11676, %v12022
        %v12024 = vpop.f32.mrb[0].mxu0
        %12025 = vmatprep.mubr.f32.mxu0 %v11923
        %12026 = vmatmul.mubr.f32.gmra.mrb[0].mxu0 %v11748
        %v12027 = vpop.f32.mrb[0].mxu0
        %v12028 = vadd.f32 %v11676, %v12027
        %v12029 = vpop.f32.mrb[0].mxu0
        %12030 = vmatprep.mubr.f32.mxu0 %v11925
        %12031 = vmatmul.mubr.f32.gmra.mrb[0].mxu0 %v11766
        %v12032 = vpop.f32.mrb[0].mxu0
        %v12033 = vadd.f32 %v11676, %v12032
        %v12034 = vpop.f32.mrb[0].mxu0
        %12035 = vmatprep.mubr.f32.mxu0 %v11927
        %12036 = vmatmul.mubr.f32.gmra.mrb[0].mxu0 %v11784
        %v12037 = vpop.f32.mrb[0].mxu0
        %v12038 = vadd.f32 %v11676, %v12037
        %v12039 = vpop.f32.mrb[0].mxu0
        %12040 = vmatprep.mubr.f32.mxu0 %v11929
        %12041 = vmatmul.mubr.f32.gmra.mrb[0].mxu0 %v11802
        %v12042 = vpop.f32.mrb[0].mxu0
        %v12043 = vadd.f32 %v11676, %v12042
        %v12044 = vpop.f32.mrb[0].mxu0
        %12045 = vmatprep.mubr.f32.mxu0 %v11931
        %12046 = vmatmul.mubr.f32.gmra.mrb[0].mxu0 %v11820
        %v12047 = vpop.f32.mrb[0].mxu0
        %v12048 = vadd.f32 %v11676, %v12047
        %v12049 = vpop.f32.mrb[0].mxu0
        %12050 = vmatprep.mubr.f32.mxu0 %v11933
        %12051 = vmatmul.mubr.f32.gmra.mrb[0].mxu0 %v11838
        %v12052 = vpop.f32.mrb[0].mxu0
        %v12053 = vadd.f32 %v11676, %v12052
        %v12054 = vpop.f32.mrb[0].mxu0
        %12055 = vmatprep.mubr.f32.mxu0 %v11935
        %12056 = vmatmul.mubr.f32.gmra.mrb[0].mxu0 %v11856
        %v12057 = vpop.f32.mrb[0].mxu0
        %v12058 = vadd.f32 %v11676, %v12057
        %v12059 = vpop.f32.mrb[0].mxu0
        %12060 = vmatprep.mubr.f32.mxu0 %v11937
        %12061 = vmatmul.mubr.f32.gmra.mrb[0].mxu0 %v11874
        %v12062 = vpop.f32.mrb[0].mxu0
        %v12063 = vadd.f32 %v11676, %v12062
        %v12064 = vpop.f32.mrb[0].mxu0
        %12065 = vmatprep.mubr.f32.mxu0 %v11939
        %12066 = vmatmul.mubr.f32.gmra.mrb[0].mxu0 %v11892
        %v12067 = vpop.f32.mrb[0].mxu0
        %v12068 = vadd.f32 %v11676, %v12067
        %v12069 = vpop.f32.mrb[0].mxu0
        %12070 = vmatprep.mubr.f32.mxu0 %v11941
        %12071 = vmatmul.mubr.f32.gmra.mrb[0].mxu0 %v11901
        %v12072 = vpop.f32.mrb[0].mxu0
        %v12073 = vadd.f32 %v11676, %v12072
        %v12074 = vpop.f32.mrb[0].mxu0
        %12075 = vdwg.mxu0
        %v12076 = vmax.f32 %v12013, 0.0
        %v12077 = vmax.f32 %v12018, 0.0
        %v12078 = vmax.f32 %v12023, 0.0
        %v12079 = vmax.f32 %v12028, 0.0
        %v12080 = vmax.f32 %v12033, 0.0
        %v12081 = vmax.f32 %v12038, 0.0
        %v12082 = vmax.f32 %v12043, 0.0
        %v12083 = vmax.f32 %v12048, 0.0
        %v12084 = vmax.f32 %v12053, 0.0
        %v12085 = vmax.f32 %v12058, 0.0
        %v12086 = vmax.f32 %v12063, 0.0
        %v12087 = vmax.f32 %v12068, 0.0
        %v12088 = vmax.f32 %v12073, 0.0
        %v12102 = vcombine.high %v12076, %v12076
        %v12104 = vunpack.c.l.s4 1983009808
        %v12105 = vunpack.c.0.s8 %v12104
        %v12106 = vlaneseq
        %v12107 = vshrl.u32 %v12106, 7
        %v12108 = vsub.s32 %v12105, %v12107
        %v12109 = vrot.slane %v12076, %v12108
        %v12111 = vunpack.c.l.s4 1983009808
        %v12112 = vunpack.c.0.s8 %v12111
        %v12113 = vlaneseq
        %v12114 = vshrl.u32 %v12113, 7
        %v12115 = vsub.s32 %v12112, %v12114
        %v12116 = vrot.slane %v12102, %v12115
        %v12117 = vcombine.high %v12109, %v12109
        %v12118 = vcombine.high %v12116, %v12116
        %v12119 = vcombine.high %v12077, %v12077
        %v12121 = vunpack.c.l.s4 1983009808
        %v12122 = vunpack.c.0.s8 %v12121
        %v12123 = vlaneseq
        %v12124 = vshrl.u32 %v12123, 7
        %v12125 = vsub.s32 %v12122, %v12124
        %v12126 = vrot.slane %v12077, %v12125
        %v12128 = vunpack.c.l.s4 1983009808
        %v12129 = vunpack.c.0.s8 %v12128
        %v12130 = vlaneseq
        %v12131 = vshrl.u32 %v12130, 7
        %v12132 = vsub.s32 %v12129, %v12131
        %v12133 = vrot.slane %v12119, %v12132
        %v12134 = vcombine.high %v12126, %v12126
        %v12135 = vcombine.high %v12133, %v12133
        %v12136 = vcombine.high %v12078, %v12078
        %v12138 = vunpack.c.l.s4 1983009808
        %v12139 = vunpack.c.0.s8 %v12138
        %v12140 = vlaneseq
        %v12141 = vshrl.u32 %v12140, 7
        %v12142 = vsub.s32 %v12139, %v12141
        %v12143 = vrot.slane %v12078, %v12142
        %v12145 = vunpack.c.l.s4 1983009808
        %v12146 = vunpack.c.0.s8 %v12145
        %v12147 = vlaneseq
        %v12148 = vshrl.u32 %v12147, 7
        %v12149 = vsub.s32 %v12146, %v12148
        %v12150 = vrot.slane %v12136, %v12149
        %v12151 = vcombine.high %v12143, %v12143
        %v12152 = vcombine.high %v12150, %v12150
        %v12153 = vcombine.high %v12079, %v12079
        %v12155 = vunpack.c.l.s4 1983009808
        %v12156 = vunpack.c.0.s8 %v12155
        %v12157 = vlaneseq
        %v12158 = vshrl.u32 %v12157, 7
        %v12159 = vsub.s32 %v12156, %v12158
        %v12160 = vrot.slane %v12079, %v12159
        %v12162 = vunpack.c.l.s4 1983009808
        %v12163 = vunpack.c.0.s8 %v12162
        %v12164 = vlaneseq
        %v12165 = vshrl.u32 %v12164, 7
        %v12166 = vsub.s32 %v12163, %v12165
        %v12167 = vrot.slane %v12153, %v12166
        %v12168 = vcombine.high %v12160, %v12160
        %v12169 = vcombine.high %v12167, %v12167
        %v12170 = vcombine.high %v12080, %v12080
        %v12172 = vunpack.c.l.s4 1983009808
        %v12173 = vunpack.c.0.s8 %v12172
        %v12174 = vlaneseq
        %v12175 = vshrl.u32 %v12174, 7
        %v12176 = vsub.s32 %v12173, %v12175
        %v12177 = vrot.slane %v12080, %v12176
        %v12179 = vunpack.c.l.s4 1983009808
        %v12180 = vunpack.c.0.s8 %v12179
        %v12181 = vlaneseq
        %v12182 = vshrl.u32 %v12181, 7
        %v12183 = vsub.s32 %v12180, %v12182
        %v12184 = vrot.slane %v12170, %v12183
        %v12185 = vcombine.high %v12177, %v12177
        %v12186 = vcombine.high %v12184, %v12184
        %v12187 = vcombine.high %v12081, %v12081
        %v12189 = vunpack.c.l.s4 1983009808
        %v12190 = vunpack.c.0.s8 %v12189
        %v12191 = vlaneseq
        %v12192 = vshrl.u32 %v12191, 7
        %v12193 = vsub.s32 %v12190, %v12192
        %v12194 = vrot.slane %v12081, %v12193
        %v12196 = vunpack.c.l.s4 1983009808
        %v12197 = vunpack.c.0.s8 %v12196
        %v12198 = vlaneseq
        %v12199 = vshrl.u32 %v12198, 7
        %v12200 = vsub.s32 %v12197, %v12199
        %v12201 = vrot.slane %v12187, %v12200
        %v12202 = vcombine.high %v12194, %v12194
        %v12203 = vcombine.high %v12201, %v12201
        %v12204 = vcombine.high %v12082, %v12082
        %v12206 = vunpack.c.l.s4 1983009808
        %v12207 = vunpack.c.0.s8 %v12206
        %v12208 = vlaneseq
        %v12209 = vshrl.u32 %v12208, 7
        %v12210 = vsub.s32 %v12207, %v12209
        %v12211 = vrot.slane %v12082, %v12210
        %v12213 = vunpack.c.l.s4 1983009808
        %v12214 = vunpack.c.0.s8 %v12213
        %v12215 = vlaneseq
        %v12216 = vshrl.u32 %v12215, 7
        %v12217 = vsub.s32 %v12214, %v12216
        %v12218 = vrot.slane %v12204, %v12217
        %v12219 = vcombine.high %v12211, %v12211
        %v12220 = vcombine.high %v12218, %v12218
        %v12221 = vcombine.high %v12083, %v12083
        %v12223 = vunpack.c.l.s4 1983009808
        %v12224 = vunpack.c.0.s8 %v12223
        %v12225 = vlaneseq
        %v12226 = vshrl.u32 %v12225, 7
        %v12227 = vsub.s32 %v12224, %v12226
        %v12228 = vrot.slane %v12083, %v12227
        %v12230 = vunpack.c.l.s4 1983009808
        %v12231 = vunpack.c.0.s8 %v12230
        %v12232 = vlaneseq
        %v12233 = vshrl.u32 %v12232, 7
        %v12234 = vsub.s32 %v12231, %v12233
        %v12235 = vrot.slane %v12221, %v12234
        %v12236 = vcombine.high %v12228, %v12228
        %v12237 = vcombine.high %v12235, %v12235
        %v12238 = vcombine.high %v12084, %v12084
        %v12240 = vunpack.c.l.s4 1983009808
        %v12241 = vunpack.c.0.s8 %v12240
        %v12242 = vlaneseq
        %v12243 = vshrl.u32 %v12242, 7
        %v12244 = vsub.s32 %v12241, %v12243
        %v12245 = vrot.slane %v12084, %v12244
        %v12247 = vunpack.c.l.s4 1983009808
        %v12248 = vunpack.c.0.s8 %v12247
        %v12249 = vlaneseq
        %v12250 = vshrl.u32 %v12249, 7
        %v12251 = vsub.s32 %v12248, %v12250
        %v12252 = vrot.slane %v12238, %v12251
        %v12253 = vcombine.high %v12245, %v12245
        %v12254 = vcombine.high %v12252, %v12252
        %v12255 = vcombine.high %v12085, %v12085
        %v12257 = vunpack.c.l.s4 1983009808
        %v12258 = vunpack.c.0.s8 %v12257
        %v12259 = vlaneseq
        %v12260 = vshrl.u32 %v12259, 7
        %v12261 = vsub.s32 %v12258, %v12260
        %v12262 = vrot.slane %v12085, %v12261
        %v12264 = vunpack.c.l.s4 1983009808
        %v12265 = vunpack.c.0.s8 %v12264
        %v12266 = vlaneseq
        %v12267 = vshrl.u32 %v12266, 7
        %v12268 = vsub.s32 %v12265, %v12267
        %v12269 = vrot.slane %v12255, %v12268
        %v12270 = vcombine.high %v12262, %v12262
        %v12271 = vcombine.high %v12269, %v12269
        %v12272 = vcombine.high %v12086, %v12086
        %v12274 = vunpack.c.l.s4 1983009808
        %v12275 = vunpack.c.0.s8 %v12274
        %v12276 = vlaneseq
        %v12277 = vshrl.u32 %v12276, 7
        %v12278 = vsub.s32 %v12275, %v12277
        %v12279 = vrot.slane %v12086, %v12278
        %v12281 = vunpack.c.l.s4 1983009808
        %v12282 = vunpack.c.0.s8 %v12281
        %v12283 = vlaneseq
        %v12284 = vshrl.u32 %v12283, 7
        %v12285 = vsub.s32 %v12282, %v12284
        %v12286 = vrot.slane %v12272, %v12285
        %v12287 = vcombine.high %v12279, %v12279
        %v12288 = vcombine.high %v12286, %v12286
        %v12289 = vcombine.high %v12087, %v12087
        %v12291 = vunpack.c.l.s4 1983009808
        %v12292 = vunpack.c.0.s8 %v12291
        %v12293 = vlaneseq
        %v12294 = vshrl.u32 %v12293, 7
        %v12295 = vsub.s32 %v12292, %v12294
        %v12296 = vrot.slane %v12087, %v12295
        %v12298 = vunpack.c.l.s4 1983009808
        %v12299 = vunpack.c.0.s8 %v12298
        %v12300 = vlaneseq
        %v12301 = vshrl.u32 %v12300, 7
        %v12302 = vsub.s32 %v12299, %v12301
        %v12303 = vrot.slane %v12289, %v12302
        %v12304 = vcombine.high %v12296, %v12296
        %v12305 = vcombine.high %v12303, %v12303
        %v12307 = vunpack.c.l.s4 1983009808
        %v12308 = vunpack.c.0.s8 %v12307
        %v12309 = vlaneseq
        %v12310 = vshrl.u32 %v12309, 7
        %v12311 = vsub.s32 %v12308, %v12310
        %v12312 = vrot.slane %v12088, %v12311
        %v12313 = vcombine.high %v12312, %v12312
        %v12364 = vmax.f32 %v12109, %v12134
        %v12365 = vmax.f32 %v12117, %v12133
        %v12366 = vmax.f32 %v12116, %v12135
        %v12367 = vmax.f32 %v12118, %v12143
        %v12368 = vmax.f32 %v12126, %v12151
        %v12369 = vmax.f32 %v12150, %v12169
        %v12370 = vmax.f32 %v12152, %v12177
        %v12371 = vmax.f32 %v12160, %v12185
        %v12372 = vmax.f32 %v12168, %v12184
        %v12373 = vmax.f32 %v12167, %v12186
        %v12374 = vmax.f32 %v12194, %v12219
        %v12375 = vmax.f32 %v12202, %v12218
        %v12376 = vmax.f32 %v12201, %v12220
        %v12377 = vmax.f32 %v12203, %v12228
        %v12378 = vmax.f32 %v12211, %v12236
        %v12379 = vmax.f32 %v12235, %v12254
        %v12380 = vmax.f32 %v12237, %v12262
        %v12381 = vmax.f32 %v12245, %v12270
        %v12382 = vmax.f32 %v12253, %v12269
        %v12383 = vmax.f32 %v12252, %v12271
        %v12384 = vmax.f32 %v12279, %v12304
        %v12385 = vmax.f32 %v12287, %v12303
        %v12386 = vmax.f32 %v12286, %v12305
        %v12387 = vmax.f32 %v12288, %v12312
        %v12388 = vmax.f32 %v12296, %v12313
        %v12414 = vrot.slane %v12364, 7
        %v12415 = vrot.slane %v12414, 2
        %v12416 = vrot.slane %v12365, 7
        %v12417 = vrot.slane %v12416, 2
        %v12418 = vrot.slane %v12366, 7
        %v12419 = vrot.slane %v12418, 2
        %v12420 = vrot.slane %v12367, 7
        %v12421 = vrot.slane %v12420, 2
        %v12422 = vrot.slane %v12368, 7
        %v12423 = vrot.slane %v12422, 2
        %v12424 = vrot.slane %v12369, 7
        %v12425 = vrot.slane %v12424, 2
        %v12426 = vrot.slane %v12370, 7
        %v12427 = vrot.slane %v12426, 2
        %v12428 = vrot.slane %v12371, 7
        %v12429 = vrot.slane %v12428, 2
        %v12430 = vrot.slane %v12372, 7
        %v12431 = vrot.slane %v12430, 2
        %v12432 = vrot.slane %v12373, 7
        %v12433 = vrot.slane %v12432, 2
        %v12434 = vrot.slane %v12374, 7
        %v12435 = vrot.slane %v12434, 2
        %v12436 = vrot.slane %v12375, 7
        %v12437 = vrot.slane %v12436, 2
        %v12438 = vrot.slane %v12376, 7
        %v12439 = vrot.slane %v12438, 2
        %v12440 = vrot.slane %v12377, 7
        %v12441 = vrot.slane %v12440, 2
        %v12442 = vrot.slane %v12378, 7
        %v12443 = vrot.slane %v12442, 2
        %v12444 = vrot.slane %v12379, 7
        %v12445 = vrot.slane %v12444, 2
        %v12446 = vrot.slane %v12380, 7
        %v12447 = vrot.slane %v12446, 2
        %v12448 = vrot.slane %v12381, 7
        %v12449 = vrot.slane %v12448, 2
        %v12450 = vrot.slane %v12382, 7
        %v12451 = vrot.slane %v12450, 2
        %v12452 = vrot.slane %v12383, 7
        %v12453 = vrot.slane %v12452, 2
        %v12454 = vrot.slane %v12384, 7
        %v12455 = vrot.slane %v12454, 2
        %v12456 = vrot.slane %v12385, 7
        %v12457 = vrot.slane %v12456, 2
        %v12458 = vrot.slane %v12386, 7
        %v12459 = vrot.slane %v12458, 2
        %v12460 = vrot.slane %v12387, 7
        %v12461 = vrot.slane %v12460, 2
        %v12462 = vrot.slane %v12388, 7
        %v12463 = vrot.slane %v12462, 2
        %v12489 = vmax.f32 %v12364, %v12415
        %v12490 = vmax.f32 %v12365, %v12417
        %v12491 = vmax.f32 %v12366, %v12419
        %v12492 = vmax.f32 %v12367, %v12421
        %v12493 = vmax.f32 %v12368, %v12423
        %v12494 = vmax.f32 %v12369, %v12425
        %v12495 = vmax.f32 %v12370, %v12427
        %v12496 = vmax.f32 %v12371, %v12429
        %v12497 = vmax.f32 %v12372, %v12431
        %v12498 = vmax.f32 %v12373, %v12433
        %v12499 = vmax.f32 %v12374, %v12435
        %v12500 = vmax.f32 %v12375, %v12437
        %v12501 = vmax.f32 %v12376, %v12439
        %v12502 = vmax.f32 %v12377, %v12441
        %v12503 = vmax.f32 %v12378, %v12443
        %v12504 = vmax.f32 %v12379, %v12445
        %v12505 = vmax.f32 %v12380, %v12447
        %v12506 = vmax.f32 %v12381, %v12449
        %v12507 = vmax.f32 %v12382, %v12451
        %v12508 = vmax.f32 %v12383, %v12453
        %v12509 = vmax.f32 %v12384, %v12455
        %v12510 = vmax.f32 %v12385, %v12457
        %v12511 = vmax.f32 %v12386, %v12459
        %v12512 = vmax.f32 %v12387, %v12461
        %v12513 = vmax.f32 %v12388, %v12463
        %v12515 = vlaneseq
        %v12516 = vshrl.u32 %v12515, 7
        %v12517 = vsub.s32 0, %v12516
        %v12518 = vrot.slane %v12490, %v12517
        %12519 = vrot.lane.b32.xlu0 %v12518, 16
        %v12520 = vpop.permute.xlu0 %12519
        %v12523 = vlaneseq
        %v12524 = vshrl.u32 %v12523, 7
        %v12525 = vsub.s32 0, %v12524
        %v12526 = vrot.slane %v12491, %v12525
        %12527 = vrot.lane.b32.xlu0 %v12526, 32
        %v12528 = vpop.permute.xlu0 %12527
        %v12531 = vlaneseq
        %v12532 = vshrl.u32 %v12531, 7
        %v12533 = vsub.s32 0, %v12532
        %v12534 = vrot.slane %v12492, %v12533
        %12535 = vrot.lane.b32.xlu0 %v12534, 48
        %v12536 = vpop.permute.xlu0 %12535
        %v12539 = vlaneseq
        %v12540 = vshrl.u32 %v12539, 7
        %v12541 = vsub.s32 0, %v12540
        %v12542 = vrot.slane %v12493, %v12541
        %12543 = vrot.lane.b32.xlu0 %v12542, 64
        %v12544 = vpop.permute.xlu0 %12543
        %v12547 = vlaneseq
        %v12548 = vshrl.u32 %v12547, 7
        %v12549 = vsub.s32 0, %v12548
        %v12550 = vrot.slane %v12494, %v12549
        %12551 = vrot.lane.b32.xlu0 %v12550, 80
        %v12552 = vpop.permute.xlu0 %12551
        %v12555 = vlaneseq
        %v12556 = vshrl.u32 %v12555, 7
        %v12557 = vsub.s32 0, %v12556
        %v12558 = vrot.slane %v12495, %v12557
        %12559 = vrot.lane.b32.xlu0 %v12558, 96
        %v12560 = vpop.permute.xlu0 %12559
        %v12563 = vlaneseq
        %v12564 = vshrl.u32 %v12563, 7
        %v12565 = vsub.s32 0, %v12564
        %v12566 = vrot.slane %v12496, %v12565
        %12567 = vrot.lane.b32.xlu0 %v12566, 112
        %v12568 = vpop.permute.xlu0 %12567
        %v12571 = vlaneseq
        %v12572 = vshrl.u32 %v12571, 7
        %v12573 = vsub.s32 0, %v12572
        %v12574 = vrot.slane %v12498, %v12573
        %12575 = vrot.lane.b32.xlu0 %v12574, 16
        %v12576 = vpop.permute.xlu0 %12575
        %v12579 = vlaneseq
        %v12580 = vshrl.u32 %v12579, 7
        %v12581 = vsub.s32 0, %v12580
        %v12582 = vrot.slane %v12499, %v12581
        %12583 = vrot.lane.b32.xlu0 %v12582, 32
        %v12584 = vpop.permute.xlu0 %12583
        %v12587 = vlaneseq
        %v12588 = vshrl.u32 %v12587, 7
        %v12589 = vsub.s32 0, %v12588
        %v12590 = vrot.slane %v12500, %v12589
        %12591 = vrot.lane.b32.xlu0 %v12590, 48
        %v12592 = vpop.permute.xlu0 %12591
        %v12595 = vlaneseq
        %v12596 = vshrl.u32 %v12595, 7
        %v12597 = vsub.s32 0, %v12596
        %v12598 = vrot.slane %v12501, %v12597
        %12599 = vrot.lane.b32.xlu0 %v12598, 64
        %v12600 = vpop.permute.xlu0 %12599
        %v12603 = vlaneseq
        %v12604 = vshrl.u32 %v12603, 7
        %v12605 = vsub.s32 0, %v12604
        %v12606 = vrot.slane %v12502, %v12605
        %12607 = vrot.lane.b32.xlu0 %v12606, 80
        %v12608 = vpop.permute.xlu0 %12607
        %v12611 = vlaneseq
        %v12612 = vshrl.u32 %v12611, 7
        %v12613 = vsub.s32 0, %v12612
        %v12614 = vrot.slane %v12503, %v12613
        %12615 = vrot.lane.b32.xlu0 %v12614, 96
        %v12616 = vpop.permute.xlu0 %12615
        %v12619 = vlaneseq
        %v12620 = vshrl.u32 %v12619, 7
        %v12621 = vsub.s32 0, %v12620
        %v12622 = vrot.slane %v12504, %v12621
        %12623 = vrot.lane.b32.xlu0 %v12622, 112
        %v12624 = vpop.permute.xlu0 %12623
        %vm12626 = vcmask 130048
        %v12627 = vsel %vm12626, %v12489, %v12520
        %vm12628 = vcmask 261120
        %v12629 = vsel %vm12628, %v12627, %v12528
        %v12630 = vsel %vm10281, %v12629, %v12536
        %vm12631 = vcmask 523264
        %v12632 = vsel %vm12631, %v12630, %v12544
        %vm12633 = vcmask 654336
        %v12634 = vsel %vm12633, %v12632, %v12552
        %v12635 = vsel %vm11351, %v12634, %v12560
        %vm12636 = vcmask 916480
        %v12637 = vsel %vm12636, %v12635, %v12568
        %v12638 = vsel %vm12626, %v12497, %v12576
        %v12639 = vsel %vm12628, %v12638, %v12584
        %v12640 = vsel %vm10281, %v12639, %v12592
        %v12641 = vsel %vm12631, %v12640, %v12600
        %v12642 = vsel %vm12633, %v12641, %v12608
        %v12643 = vsel %vm11351, %v12642, %v12616
        %v12644 = vsel %vm12636, %v12643, %v12624
        %v12646 = vlaneseq
        %v12647 = vshrl.u32 %v12646, 7
        %v12648 = vsub.s32 0, %v12647
        %v12649 = vrot.slane %v12506, %v12648
        %12650 = vrot.lane.b32.xlu0 %v12649, 16
        %v12651 = vpop.permute.xlu0 %12650
        %v12654 = vlaneseq
        %v12655 = vshrl.u32 %v12654, 7
        %v12656 = vsub.s32 0, %v12655
        %v12657 = vrot.slane %v12507, %v12656
        %12658 = vrot.lane.b32.xlu0 %v12657, 32
        %v12659 = vpop.permute.xlu0 %12658
        %v12662 = vlaneseq
        %v12663 = vshrl.u32 %v12662, 7
        %v12664 = vsub.s32 0, %v12663
        %v12665 = vrot.slane %v12508, %v12664
        %12666 = vrot.lane.b32.xlu0 %v12665, 48
        %v12667 = vpop.permute.xlu0 %12666
        %v12670 = vlaneseq
        %v12671 = vshrl.u32 %v12670, 7
        %v12672 = vsub.s32 0, %v12671
        %v12673 = vrot.slane %v12509, %v12672
        %12674 = vrot.lane.b32.xlu0 %v12673, 64
        %v12675 = vpop.permute.xlu0 %12674
        %v12678 = vlaneseq
        %v12679 = vshrl.u32 %v12678, 7
        %v12680 = vsub.s32 0, %v12679
        %v12681 = vrot.slane %v12510, %v12680
        %12682 = vrot.lane.b32.xlu0 %v12681, 80
        %v12683 = vpop.permute.xlu0 %12682
        %v12686 = vlaneseq
        %v12687 = vshrl.u32 %v12686, 7
        %v12688 = vsub.s32 0, %v12687
        %v12689 = vrot.slane %v12511, %v12688
        %12690 = vrot.lane.b32.xlu0 %v12689, 96
        %v12691 = vpop.permute.xlu0 %12690
        %v12694 = vlaneseq
        %v12695 = vshrl.u32 %v12694, 7
        %v12696 = vsub.s32 0, %v12695
        %v12697 = vrot.slane %v12512, %v12696
        %12698 = vrot.lane.b32.xlu0 %v12697, 112
        %v12699 = vpop.permute.xlu0 %12698
        %v12701 = vsel %vm12626, %v12505, %v12651
        %v12702 = vsel %vm12628, %v12701, %v12659
        %v12703 = vsel %vm10281, %v12702, %v12667
        %v12704 = vsel %vm12631, %v12703, %v12675
        %v12705 = vsel %vm12633, %v12704, %v12683
        %v12706 = vsel %vm11351, %v12705, %v12691
        %v12707 = vsel %vm12636, %v12706, %v12699
        %v12708 = vld [vmem:[%s5] sm:$0xff]
        %v12709 = vld [vmem:[%s5 + $0x8] sm:$0xff]
        %v12710 = vld [vmem:[%s5 + $0x10] sm:$0xff]
        %v12711 = vld [vmem:[%s5 + $0x18] sm:$0xff]
        %v12712 = vld [vmem:[%s5 + $0x20] sm:$0xff]
        %v12713 = vld [vmem:[%s5 + $0x28] sm:$0xff]
        %v12714 = vld [vmem:[%s5 + $0x30] sm:$0xff]
        %v12715 = vld [vmem:[%s5 + $0x38] sm:$0xff]
        %v12716 = vld [vmem:[%s5 + $0x40] sm:$0xff]
        %v12717 = vld [vmem:[%s5 + $0x48] sm:$0xff]
        %v12718 = vld [vmem:[%s5 + $0x50] sm:$0xff]
        %v12719 = vld [vmem:[%s5 + $0x58] sm:$0xff]
        %v12720 = vld [vmem:[%s5 + $0x60] sm:$0xff]
        %v12721 = vld [vmem:[%s5 + $0x68] sm:$0xff]
        %v12722 = vld [vmem:[%s5 + $0x70] sm:$0xff]
        %v12723 = vld [vmem:[%s5 + $0x78] sm:$0xff]
        %v12724 = vld [vmem:[%s5 + $0x80] sm:$0xff]
        %v12725 = vld [vmem:[%s5 + $0x88] sm:$0xff]
        %v12726 = vld [vmem:[%s5 + $0x90] sm:$0xff]
        %v12727 = vld [vmem:[%s5 + $0x98] sm:$0xff]
        %v12728 = vld [vmem:[%s5 + $0xa0] sm:$0xff]
        %v12729 = vld [vmem:[%s5 + $0xa8] sm:$0xff]
        %v12730 = vld [vmem:[%s5 + $0xb0] sm:$0xff]
        %v12731 = vld [vmem:[%s5 + $0xb8] sm:$0xff]
        %v12732 = vld [vmem:[%s5 + $0xc0] sm:$0xff]
        %v12733 = vld [vmem:[%s5 + $0xc8] sm:$0xff]
        %v12734 = vld [vmem:[%s5 + $0xd0] sm:$0xff]
        %v12735 = vld [vmem:[%s5 + $0xd8] sm:$0xff]
        %v12736 = vld [vmem:[%s5 + $0xe0] sm:$0xff]
        %v12737 = vld [vmem:[%s5 + $0xe8] sm:$0xff]
        %v12738 = vld [vmem:[%s5 + $0xf0] sm:$0xff]
        %v12739 = vld [vmem:[%s5 + $0xf8] sm:$0xff]
        %v12740 = vld [vmem:[%s5 + $0x100] sm:$0xff]
        %v12741 = vld [vmem:[%s5 + $0x108] sm:$0xff]
        %v12742 = vld [vmem:[%s5 + $0x110] sm:$0xff]
        %v12743 = vld [vmem:[%s5 + $0x118] sm:$0xff]
        %v12744 = vld [vmem:[%s5 + $0x120] sm:$0xff]
        %v12745 = vld [vmem:[%s5 + $0x128] sm:$0xff]
        %v12746 = vld [vmem:[%s5 + $0x130] sm:$0xff]
        %v12747 = vld [vmem:[%s5 + $0x138] sm:$0xff]
        %v12748 = vld [vmem:[%s5 + $0x140] sm:$0xff]
        %v12749 = vld [vmem:[%s5 + $0x148] sm:$0xff]
        %v12750 = vld [vmem:[%s5 + $0x150] sm:$0xff]
        %v12751 = vld [vmem:[%s5 + $0x158] sm:$0xff]
        %v12752 = vld [vmem:[%s5 + $0x160] sm:$0xff]
        %v12753 = vld [vmem:[%s5 + $0x168] sm:$0xff]
        %v12754 = vld [vmem:[%s5 + $0x170] sm:$0xff]
        %v12755 = vld [vmem:[%s5 + $0x178] sm:$0xff]
        %v12756 = vld [vmem:[%s5 + $0x180] sm:$0xff]
        %v12757 = vld [vmem:[%s5 + $0x188] sm:$0xff]
        %v12758 = vld [vmem:[%s6] sm:$0x1]
        %v12760 = vsel %vm12626, %v12513, 0
        %12762 = vmatprep.subr.mxu0 0.0
        %12763 = vmatpush1.msra.mxu0 %v12708
        %12764 = vmatprep.subr.mxu0 0.0
        %12765 = vmatpush1.msra.mxu0 %v12709
        %12766 = vmatprep.subr.mxu0 0.0
        %12767 = vmatpush1.msra.mxu0 %v12710
        %12768 = vmatprep.subr.mxu0 0.0
        %12769 = vmatpush1.msra.mxu0 %v12711
        %12770 = vmatprep.subr.mxu0 0.0
        %12771 = vmatpush1.msra.mxu0 %v12712
        %12772 = vmatprep.subr.mxu0 0.0
        %12773 = vmatpush1.msra.mxu0 %v12713
        %12774 = vmatprep.subr.mxu0 0.0
        %12775 = vmatpush1.msra.mxu0 %v12714
        %12776 = vmatprep.subr.mxu0 0.0
        %12777 = vmatpush1.msra.mxu0 %v12715
        %12778 = vmatprep.subr.mxu0 0.0
        %12779 = vmatpush1.msra.mxu0 %v12716
        %12780 = vmatprep.subr.mxu0 0.0
        %12781 = vmatpush1.msra.mxu0 %v12717
        %12782 = vmatprep.subr.mxu0 0.0
        %12783 = vmatpush1.msra.mxu0 %v12718
        %12784 = vmatprep.subr.mxu0 0.0
        %12785 = vmatpush1.msra.mxu0 %v12719
        %12786 = vmatprep.subr.mxu0 0.0
        %12787 = vmatpush1.msra.mxu0 %v12720
        %12788 = vmatprep.subr.mxu0 0.0
        %12789 = vmatpush1.msra.mxu0 %v12721
        %12790 = vmatprep.subr.mxu0 0.0
        %12791 = vmatpush1.msra.mxu0 %v12722
        %12792 = vmatprep.subr.mxu0 0.0
        %12793 = vmatpush1.msra.mxu0 %v12723
        %12794 = vmatprep.subr.mxu0 0.0
        %12795 = vmatpush1.msra.mxu0 %v12724
        %12796 = vmatprep.subr.mxu0 0.0
        %12797 = vmatpush1.msra.mxu0 %v12725
        %12798 = vmatprep.subr.mxu0 0.0
        %12799 = vmatpush1.msra.mxu0 %v12726
        %12800 = vmatprep.subr.mxu0 0.0
        %12801 = vmatpush1.msra.mxu0 %v12727
        %12802 = vmatprep.subr.mxu0 0.0
        %12803 = vmatpush1.msra.mxu0 %v12728
        %12804 = vmatprep.subr.mxu0 0.0
        %12805 = vmatpush1.msra.mxu0 %v12729
        %12806 = vmatprep.subr.mxu0 0.0
        %12807 = vmatpush1.msra.mxu0 %v12730
        %12808 = vmatprep.subr.mxu0 0.0
        %12809 = vmatpush1.msra.mxu0 %v12731
        %12810 = vmatprep.subr.mxu0 0.0
        %12811 = vmatpush1.msra.mxu0 %v12732
        %12812 = vmatprep.subr.mxu0 0.0
        %12813 = vmatpush1.msra.mxu0 %v12733
        %12814 = vmatprep.subr.mxu0 0.0
        %12815 = vmatpush1.msra.mxu0 %v12734
        %12816 = vmatprep.subr.mxu0 0.0
        %12817 = vmatpush1.msra.mxu0 %v12735
        %12818 = vmatprep.subr.mxu0 0.0
        %12819 = vmatpush1.msra.mxu0 %v12736
        %12820 = vmatprep.subr.mxu0 0.0
        %12821 = vmatpush1.msra.mxu0 %v12737
        %12822 = vmatprep.subr.mxu0 0.0
        %12823 = vmatpush1.msra.mxu0 %v12738
        %12824 = vmatprep.subr.mxu0 0.0
        %12825 = vmatpush1.msra.mxu0 %v12739
        %12826 = vmatprep.mubr.f32.mxu0 %v12644
        %12827 = vmatmul.mubr.f32.gmra.mrb[0].mxu0 %v12637
        %v12828 = vpop.f32.mrb[0].mxu0
        %v12829 = vadd.f32 %v12758, %v12828
        %v12830 = vpop.f32.mrb[0].mxu0
        %12831 = vdwg.mxu0
        %12832 = vmatprep.subr.mxu0 0.0
        %12833 = vmatpush1.msra.mxu0 %v12740
        %12834 = vmatprep.subr.mxu0 0.0
        %12835 = vmatpush1.msra.mxu0 %v12741
        %12836 = vmatprep.subr.mxu0 0.0
        %12837 = vmatpush1.msra.mxu0 %v12742
        %12838 = vmatprep.subr.mxu0 0.0
        %12839 = vmatpush1.msra.mxu0 %v12743
        %12840 = vmatprep.subr.mxu0 0.0
        %12841 = vmatpush1.msra.mxu0 %v12744
        %12842 = vmatprep.subr.mxu0 0.0
        %12843 = vmatpush1.msra.mxu0 %v12745
        %12844 = vmatprep.subr.mxu0 0.0
        %12845 = vmatpush1.msra.mxu0 %v12746
        %12846 = vmatprep.subr.mxu0 0.0
        %12847 = vmatpush1.msra.mxu0 %v12747
        %12848 = vmatprep.subr.mxu0 0.0
        %12849 = vmatpush1.msra.mxu0 %v12748
        %12850 = vmatprep.subr.mxu0 0.0
        %12851 = vmatpush1.msra.mxu0 %v12749
        %12852 = vmatprep.subr.mxu0 0.0
        %12853 = vmatpush1.msra.mxu0 %v12750
        %12854 = vmatprep.subr.mxu0 0.0
        %12855 = vmatpush1.msra.mxu0 %v12751
        %12856 = vmatprep.subr.mxu0 0.0
        %12857 = vmatpush1.msra.mxu0 %v12752
        %12858 = vmatprep.subr.mxu0 0.0
        %12859 = vmatpush1.msra.mxu0 %v12753
        %12860 = vmatprep.subr.mxu0 0.0
        %12861 = vmatpush1.msra.mxu0 %v12754
        %12862 = vmatprep.subr.mxu0 0.0
        %12863 = vmatpush1.msra.mxu0 %v12755
        %12864 = vmatprep.subr.mxu0 0.0
        %12865 = vmatpush1.msra.mxu0 %v12756
        %12866 = vmatprep.subr.mxu0 0.0
        %12867 = vmatpush1.msra.mxu0 %v12757
        %12868 = vmatprep.subr.mxu0 0.0
        %12869 = vmatpush1.msra.mxu0 0.0
        %12870 = vmatprep.subr.mxu0 0.0
        %12871 = vmatpush1.msra.mxu0 0.0
        %12872 = vmatprep.subr.mxu0 0.0
        %12873 = vmatpush1.msra.mxu0 0.0
        %12874 = vmatprep.subr.mxu0 0.0
        %12875 = vmatpush1.msra.mxu0 0.0
        %12876 = vmatprep.subr.mxu0 0.0
        %12877 = vmatpush1.msra.mxu0 0.0
        %12878 = vmatprep.subr.mxu0 0.0
        %12879 = vmatpush1.msra.mxu0 0.0
        %12880 = vmatprep.subr.mxu0 0.0
        %12881 = vmatpush1.msra.mxu0 0.0
        %12882 = vmatprep.subr.mxu0 0.0
        %12883 = vmatpush1.msra.mxu0 0.0
        %12884 = vmatprep.subr.mxu0 0.0
        %12885 = vmatpush1.msra.mxu0 0.0
        %12886 = vmatprep.subr.mxu0 0.0
        %12887 = vmatpush1.msra.mxu0 0.0
        %12888 = vmatprep.subr.mxu0 0.0
        %12889 = vmatpush1.msra.mxu0 0.0
        %12890 = vmatprep.subr.mxu0 0.0
        %12891 = vmatpush1.msra.mxu0 0.0
        %12892 = vmatprep.subr.mxu0 0.0
        %12893 = vmatpush1.msra.mxu0 0.0
        %12894 = vmatprep.subr.mxu0 0.0
        %12895 = vmatpush1.msra.mxu0 0.0
        %12896 = vmatprep.mubr.f32.mxu0 %v12760
        %12897 = vmatmul.mubr.f32.gmra.mrb[0].mxu0 %v12707
        %v12898 = vpop.f32.mrb[0].mxu0
        %v12899 = vadd.f32 %v12829, %v12898
        %v12900 = vpop.f32.mrb[0].mxu0
        %12901 = vdwg.mxu0
        %v12902 = vld [vmem:[%s7] sm:$0xff]
        %v12903 = vld [vmem:[%s7 + $0x8] sm:$0xff]
        %v12904 = vld [vmem:[%s7 + $0x10] sm:$0xff]
        %v12905 = vld [vmem:[%s7 + $0x18] sm:$0xff]
        %v12906 = vld [vmem:[%s7 + $0x20] sm:$0xff]
        %v12907 = vld [vmem:[%s7 + $0x28] sm:$0xff]
        %v12908 = vld [vmem:[%s7 + $0x30] sm:$0xff]
        %v12909 = vld [vmem:[%s7 + $0x38] sm:$0xff]
        %v12910 = vld [vmem:[%s7 + $0x40] sm:$0xff]
        %v12911 = vld [vmem:[%s7 + $0x48] sm:$0xff]
        %v12912 = vld [vmem:[%s7 + $0x50] sm:$0xff]
        %v12913 = vld [vmem:[%s7 + $0x58] sm:$0xff]
        %v12914 = vld [vmem:[%s7 + $0x60] sm:$0xff]
        %v12915 = vld [vmem:[%s7 + $0x68] sm:$0xff]
        %v12916 = vld [vmem:[%s7 + $0x70] sm:$0xff]
        %v12917 = vld [vmem:[%s8] sm:$0x1]
        %vm12918 = vcmask 982016
        %v12920 = vsel %vm12918, %v12899, 0
        %12922 = vmatprep.subr.mxu0 0.0
        %12923 = vmatpush1.msra.mxu0 %v12902
        %12924 = vmatprep.subr.mxu0 0.0
        %12925 = vmatpush1.msra.mxu0 %v12903
        %12926 = vmatprep.subr.mxu0 0.0
        %12927 = vmatpush1.msra.mxu0 %v12904
        %12928 = vmatprep.subr.mxu0 0.0
        %12929 = vmatpush1.msra.mxu0 %v12905
        %12930 = vmatprep.subr.mxu0 0.0
        %12931 = vmatpush1.msra.mxu0 %v12906
        %12932 = vmatprep.subr.mxu0 0.0
        %12933 = vmatpush1.msra.mxu0 %v12907
        %12934 = vmatprep.subr.mxu0 0.0
        %12935 = vmatpush1.msra.mxu0 %v12908
        %12936 = vmatprep.subr.mxu0 0.0
        %12937 = vmatpush1.msra.mxu0 %v12909
        %12938 = vmatprep.subr.mxu0 0.0
        %12939 = vmatpush1.msra.mxu0 %v12910
        %12940 = vmatprep.subr.mxu0 0.0
        %12941 = vmatpush1.msra.mxu0 %v12911
        %12942 = vmatprep.subr.mxu0 0.0
        %12943 = vmatpush1.msra.mxu0 %v12912
        %12944 = vmatprep.subr.mxu0 0.0
        %12945 = vmatpush1.msra.mxu0 %v12913
        %12946 = vmatprep.subr.mxu0 0.0
        %12947 = vmatpush1.msra.mxu0 %v12914
        %12948 = vmatprep.subr.mxu0 0.0
        %12949 = vmatpush1.msra.mxu0 %v12915
        %12950 = vmatprep.subr.mxu0 0.0
        %12951 = vmatpush1.msra.mxu0 %v12916
        %12952 = vmatprep.subr.mxu0 0.0
        %12953 = vmatpush1.msra.mxu0 0.0
        %12954 = vmatprep.subr.mxu0 0.0
        %12955 = vmatpush1.msra.mxu0 0.0
        %12956 = vmatprep.subr.mxu0 0.0
        %12957 = vmatpush1.msra.mxu0 0.0
        %12958 = vmatprep.subr.mxu0 0.0
        %12959 = vmatpush1.msra.mxu0 0.0
        %12960 = vmatprep.subr.mxu0 0.0
        %12961 = vmatpush1.msra.mxu0 0.0
        %12962 = vmatprep.subr.mxu0 0.0
        %12963 = vmatpush1.msra.mxu0 0.0
        %12964 = vmatprep.subr.mxu0 0.0
        %12965 = vmatpush1.msra.mxu0 0.0
        %12966 = vmatprep.subr.mxu0 0.0
        %12967 = vmatpush1.msra.mxu0 0.0
        %12968 = vmatprep.subr.mxu0 0.0
        %12969 = vmatpush1.msra.mxu0 0.0
        %12970 = vmatprep.subr.mxu0 0.0
        %12971 = vmatpush1.msra.mxu0 0.0
        %12972 = vmatprep.subr.mxu0 0.0
        %12973 = vmatpush1.msra.mxu0 0.0
        %12974 = vmatprep.subr.mxu0 0.0
        %12975 = vmatpush1.msra.mxu0 0.0
        %12976 = vmatprep.subr.mxu0 0.0
        %12977 = vmatpush1.msra.mxu0 0.0
        %12978 = vmatprep.subr.mxu0 0.0
        %12979 = vmatpush1.msra.mxu0 0.0
        %12980 = vmatprep.subr.mxu0 0.0
        %12981 = vmatpush1.msra.mxu0 0.0
        %12982 = vmatprep.subr.mxu0 0.0
        %12983 = vmatpush1.msra.mxu0 0.0
        %12984 = vmatprep.subr.mxu0 0.0
        %12985 = vmatpush1.msra.mxu0 0.0
        %12986 = vmatprep.mubr.f32.mxu0 0.0
        %12987 = vmatmul.mubr.f32.gmra.mrb[0].mxu0 %v12920
        %v12988 = vpop.f32.mrb[0].mxu0
        %v12989 = vadd.f32 %v12917, %v12988
        %v12990 = vpop.f32.mrb[0].mxu0
        %12991 = vdwg.mxu0
        %v12992 = vld [vmem:[%s9] sm:$0xff]
        %v12993 = vld [vmem:[%s9 + $0x8] sm:$0xff]
        %v12994 = vld [vmem:[%s9 + $0x10] sm:$0xff]
        %v12995 = vld [vmem:[%s9 + $0x18] sm:$0xff]
        %v12996 = vld [vmem:[%s9 + $0x20] sm:$0xff]
        %v12997 = vld [vmem:[%s9 + $0x28] sm:$0xff]
        %v12998 = vld [vmem:[%s9 + $0x30] sm:$0xff]
        %v12999 = vld [vmem:[%s9 + $0x38] sm:$0xff]
        %v13000 = vld [vmem:[%s9 + $0x40] sm:$0xff]
        %v13001 = vld [vmem:[%s9 + $0x48] sm:$0xff]
        %v13002 = vld [vmem:[%s9 + $0x50] sm:$0xf]
        %v13003 = vld [vmem:[%s10] sm:$0x1]
        %v13005 = vsel %vm10407, %v12989, 0
        %vm13007 = vcmask 1043456
        %v13009 = vsel %vm13007, %v13002, 0
        %13011 = vmatprep.subr.mxu0 0.0
        %13012 = vmatpush1.msra.mxu0 %v12992
        %13013 = vmatprep.subr.mxu0 0.0
        %13014 = vmatpush1.msra.mxu0 %v12993
        %13015 = vmatprep.subr.mxu0 0.0
        %13016 = vmatpush1.msra.mxu0 %v12994
        %13017 = vmatprep.subr.mxu0 0.0
        %13018 = vmatpush1.msra.mxu0 %v12995
        %13019 = vmatprep.subr.mxu0 0.0
        %13020 = vmatpush1.msra.mxu0 %v12996
        %13021 = vmatprep.subr.mxu0 0.0
        %13022 = vmatpush1.msra.mxu0 %v12997
        %13023 = vmatprep.subr.mxu0 0.0
        %13024 = vmatpush1.msra.mxu0 %v12998
        %13025 = vmatprep.subr.mxu0 0.0
        %13026 = vmatpush1.msra.mxu0 %v12999
        %13027 = vmatprep.subr.mxu0 0.0
        %13028 = vmatpush1.msra.mxu0 %v13000
        %13029 = vmatprep.subr.mxu0 0.0
        %13030 = vmatpush1.msra.mxu0 %v13001
        %13031 = vmatprep.subr.mxu0 0.0
        %13032 = vmatpush1.msra.mxu0 %v13009
        %13033 = vmatprep.subr.mxu0 0.0
        %13034 = vmatpush1.msra.mxu0 0.0
        %13035 = vmatprep.subr.mxu0 0.0
        %13036 = vmatpush1.msra.mxu0 0.0
        %13037 = vmatprep.subr.mxu0 0.0
        %13038 = vmatpush1.msra.mxu0 0.0
        %13039 = vmatprep.subr.mxu0 0.0
        %13040 = vmatpush1.msra.mxu0 0.0
        %13041 = vmatprep.subr.mxu0 0.0
        %13042 = vmatpush1.msra.mxu0 0.0
        %13043 = vmatprep.subr.mxu0 0.0
        %13044 = vmatpush1.msra.mxu0 0.0
        %13045 = vmatprep.subr.mxu0 0.0
        %13046 = vmatpush1.msra.mxu0 0.0
        %13047 = vmatprep.subr.mxu0 0.0
        %13048 = vmatpush1.msra.mxu0 0.0
        %13049 = vmatprep.subr.mxu0 0.0
        %13050 = vmatpush1.msra.mxu0 0.0
        %13051 = vmatprep.subr.mxu0 0.0
        %13052 = vmatpush1.msra.mxu0 0.0
        %13053 = vmatprep.subr.mxu0 0.0
        %13054 = vmatpush1.msra.mxu0 0.0
        %13055 = vmatprep.subr.mxu0 0.0
        %13056 = vmatpush1.msra.mxu0 0.0
        %13057 = vmatprep.subr.mxu0 0.0
        %13058 = vmatpush1.msra.mxu0 0.0
        %13059 = vmatprep.subr.mxu0 0.0
        %13060 = vmatpush1.msra.mxu0 0.0
        %13061 = vmatprep.subr.mxu0 0.0
        %13062 = vmatpush1.msra.mxu0 0.0
        %13063 = vmatprep.subr.mxu0 0.0
        %13064 = vmatpush1.msra.mxu0 0.0
        %13065 = vmatprep.subr.mxu0 0.0
        %13066 = vmatpush1.msra.mxu0 0.0
        %13067 = vmatprep.subr.mxu0 0.0
        %13068 = vmatpush1.msra.mxu0 0.0
        %13069 = vmatprep.subr.mxu0 0.0
        %13070 = vmatpush1.msra.mxu0 0.0
        %13071 = vmatprep.subr.mxu0 0.0
        %13072 = vmatpush1.msra.mxu0 0.0
        %13073 = vmatprep.subr.mxu0 0.0
        %13074 = vmatpush1.msra.mxu0 0.0
        %13075 = vmatprep.mubr.f32.mxu0 0.0
        %13076 = vmatmul.mubr.f32.gmra.mrb[0].mxu0 %v13005
        %v13077 = vpop.f32.mrb[0].mxu0
        %v13078 = vadd.f32 %v13003, %v13077
        %v13079 = vpop.f32.mrb[0].mxu0
        %13080 = vdwg.mxu0
        %vm13081 = vcmask 73728
        %13082 = vst.msk [vmem:[%s378] sm:$0x1] %vm13081, %v13078
        %s13083 = sand.u32 %s269, 1
        %s13084 = scalar_lea.sflag [#allocation3], %s13083
        %s13085 = sand.u32 %s269, 1
        %s13086 = scalar_lea.vmem [#allocation2], %s13085
        // Predicated region
        $region65: #{cnn_forward.1} parent=63 // pred_check
          %p13087 = pneg %p279
        $region66: #{cnn_forward.1} parent=63 // pred_check_branch
          %13089 = sbr.rel (%p13087) target = $region68
        $region67: #{cnn_forward.1} parent=63 // pred_region
          %s13091 = ssub.s32 16, 16
          %13092 = vsyncadd %s13084, %s13091
          %s13093 = smul.addr %s25, 16
          %s13094 = scalar_lea.hbm %s11, %s13093
          %s13096 = sshll.u32 %s13086, 4
          %s13097 = int_to_ptr.vmem [resolvable:$true] %s13096
          %13099 = dma.vmem_to_hbm [thread:$0]  %s13097, 16, %s13094, %s13084
        $region68: #{cnn_forward.1} parent=63 // pred_fallthru
          _
      $region64: #{cnn_forward.1} parent=5 // pred_fallthru
        _
      %p13100 = scmp.le.s32.totalorder 2, %s20
      // Predicated region
      $region69: #{cnn_forward.1} parent=5 // pred_check
        %p13101 = pneg %p13100
      $region70: #{cnn_forward.1} parent=5 // pred_check_branch
        %13103 = sbr.rel (%p13101) target = $region72
      $region71: #{cnn_forward.1} parent=5 // pred_region
        %s13104 = ssub.s32 %s20, 2
        // Predicated region
        $region73: #{cnn_forward.1} parent=71 // pred_check
          %p13105 = pneg %p285
        $region74: #{cnn_forward.1} parent=71 // pred_check_branch
          %13107 = sbr.rel (%p13105) target = $region76
        $region75: #{cnn_forward.1} parent=71 // pred_region
          %s13108 = sand.u32 %s270, 1
          %s13109 = scalar_lea.sflag [#allocation3], %s13108
          %s13110 = sand.u32 %s270, 1
          %s13111 = scalar_lea.vmem [#allocation2], %s13110
          %13112 = dma.done %s13109, 16
        $region76: #{cnn_forward.1} parent=71 // pred_fallthru
          _
      $region72: #{cnn_forward.1} parent=5 // pred_fallthru
        _
    $region6: #{cnn_forward.1} parent=1 // loop_footer
      %s24 = sadd.s32 1, %s20
    $region7: #{cnn_forward.1} parent=1 // loop_footer_branch
      %19 = sbr.rel target = $region3
    $region8: #{cnn_forward.1} parent=1 // loop_exit
      _
    %13113 = vsyncpa [#allocation3], 1
    %s13114 = scalar_lea.sflag [#allocation3], 1
    %13115 = vsyncpa %s13114, 1

</llo_original>
